<compile_context>
chip_gen: v6e
topology: v6e:2x2x1
jax: 0.10.0
libtpu: 0.0.40
codegen_flags: <defaults>
</compile_context>

<pallas_src>
import functools

import jax
import jax.numpy as jnp
from jax.experimental import pallas as pl
from jax.experimental.pallas import tpu as pltpu

LEAKY_SLOPE = 0.01  # PyTorch nn.LeakyReLU default
C1, C2, C3, C4 = 32, 64, 128, 10
C4P = 128  # layer-4 output channels padded to a full lane block


def _leaky(v):
    return jnp.where(v > 0, v, LEAKY_SLOPE * v)


# ------------------------------ fused kernel --------------------------------

def _fused_kernel(p_ref, w1_ref, b1_ref, w2_ref, b2_ref, w3_ref, b3_ref,
                  w4_ref, b4_ref, o_ref, a1_ref, a2_ref, a3_ref, *, dims):
    """One grid step == one image.  All activations live in VMEM scratch."""
    oh1, ow1, oh2, ow2, oh3, ow3, oh4, ow4 = dims
    n_even = (ow1 + 1) // 2  # number of even columns in the layer-1 output

    # ---- layer 1: all output positions in a single MXU matmul --------------
    patches = p_ref[0]                                        # (oh1*ow1, 9)
    y1 = jnp.dot(patches, w1_ref[...], preferred_element_type=jnp.float32)
    a1_ref[...] = _leaky(y1 + b1_ref[...])

    # ---- layer 2: k3 s2 -- 9-tap accumulation per output row ---------------
    # a1 rows are stored as (row, permuted col): even cols first then odd, so
    # the stride-2 column taps below are contiguous slices.
    for h in range(oh2):
        acc = jnp.zeros((ow2, C2), jnp.float32)
        for i in range(3):
            row = 2 * h + i
            for j in range(3):
                s = j // 2 if j % 2 == 0 else n_even + j // 2
                blk = a1_ref[pl.ds(row * ow1 + s, ow2), :]        # (ow2, C1)
                wt = w2_ref[pl.ds((i * 3 + j) * C1, C1), :]       # (C1, C2)
                acc = acc + jnp.dot(blk, wt,
                                    preferred_element_type=jnp.float32)
        a2_ref[pl.ds(h * ow2, ow2), :] = _leaky(acc + b2_ref[...])

    # ---- layer 3: k3 s1 ------------------------------------------------------
    for h in range(oh3):
        acc = jnp.zeros((ow3, C3), jnp.float32)
        for i in range(3):
            for j in range(3):
                blk = a2_ref[pl.ds((h + i) * ow2 + j, ow3), :]    # (ow3, C2)
                wt = w3_ref[pl.ds((i * 3 + j) * C2, C2), :]       # (C2, C3)
                acc = acc + jnp.dot(blk, wt,
                                    preferred_element_type=jnp.float32)
        a3_ref[pl.ds(h * ow3, ow3), :] = _leaky(acc + b3_ref[...])

    # ---- layer 4 (k3 s1, no activation) + fused spatial mean ----------------
    total = jnp.zeros((1, C4P), jnp.float32)
    for h in range(oh4):
        acc = jnp.zeros((ow4, C4P), jnp.float32)
        for i in range(3):
            for j in range(3):
                blk = a3_ref[pl.ds((h + i) * ow3 + j, ow4), :]    # (ow4, C3)
                wt = w4_ref[pl.ds((i * 3 + j) * C3, C3), :]       # (C3, C4P)
                acc = acc + jnp.dot(blk, wt,
                                    preferred_element_type=jnp.float32)
        total = total + jnp.sum(acc, axis=0, keepdims=True)
    inv = 1.0 / float(oh4 * ow4)
    o_ref[0] = (total * inv + b4_ref[...]).astype(o_ref.dtype)


# ------------------------------ JAX wrapper ----------------------------------

def _conv_out(n, k, s):
    return (n - k) // s + 1


def _layer1_patches(x_nhwc, oh1, ow1):
    """im2col for conv1 (stride 2, cin=1) with even/odd column reordering."""
    n = x_nhwc.shape[0]
    cols = []
    for i in range(3):
        for j in range(3):
            cols.append(x_nhwc[:, i:i + 2 * oh1:2, j:j + 2 * ow1:2, :])
    p = jnp.concatenate(cols, axis=-1)                 # (N, oh1, ow1, 9)
    perm = jnp.array(list(range(0, ow1, 2)) + list(range(1, ow1, 2)),
                     dtype=jnp.int32)
    p = jnp.take(p, perm, axis=2)                      # even cols then odd
    return p.reshape(n, oh1 * ow1, 9)


def forward(x_nchw, params):
    """Pallas forward pass. x_nchw: (N, 1, H, W) float32 -> (N, 10)."""
    x = jnp.transpose(x_nchw, (0, 2, 3, 1)).astype(jnp.float32)   # NHWC
    n, h, w, _ = x.shape
    oh1, ow1 = _conv_out(h, 3, 2), _conv_out(w, 3, 2)
    oh2, ow2 = _conv_out(oh1, 3, 2), _conv_out(ow1, 3, 2)
    oh3, ow3 = _conv_out(oh2, 3, 1), _conv_out(ow2, 3, 1)
    oh4, ow4 = _conv_out(oh3, 3, 1), _conv_out(ow3, 3, 1)
    dims = (oh1, ow1, oh2, ow2, oh3, ow3, oh4, ow4)
    m1 = oh1 * ow1

    (w1, b1), (w2, b2), (w3, b3), (w4, b4) = params
    w1f = w1.reshape(9 * 1, C1)
    w2f = w2.reshape(9 * C1, C2)
    w3f = w3.reshape(9 * C2, C3)
    w4p = jnp.zeros((3, 3, C3, C4P), jnp.float32).at[..., :C4].set(w4)
    w4f = w4p.reshape(9 * C3, C4P)
    b4p = jnp.zeros((C4P,), jnp.float32).at[:C4].set(b4)

    patches = _layer1_patches(x, oh1, ow1)             # (N, m1, 9)

    flops_per_img = 2 * (m1 * 9 * C1 + oh2 * ow2 * 9 * C1 * C2
                         + oh3 * ow3 * 9 * C2 * C3 + oh4 * ow4 * 9 * C3 * C4P)
    bytes_accessed = 4 * (n * m1 * 9 + w1f.size + w2f.size + w3f.size
                          + w4f.size + C1 + C2 + C3 + C4P + n * C4P)

    kern = functools.partial(_fused_kernel, dims=dims)
    out = pl.pallas_call(
        kern,
        out_shape=jax.ShapeDtypeStruct((n, 1, C4P), jnp.float32),
        grid=(n,),
        in_specs=[
            pl.BlockSpec((1, m1, 9), lambda b: (b, 0, 0)),        # patches
            pl.BlockSpec((9, C1), lambda b: (0, 0)),              # w1
            pl.BlockSpec((1, C1), lambda b: (0, 0)),              # b1
            pl.BlockSpec((9 * C1, C2), lambda b: (0, 0)),         # w2
            pl.BlockSpec((1, C2), lambda b: (0, 0)),              # b2
            pl.BlockSpec((9 * C2, C3), lambda b: (0, 0)),         # w3
            pl.BlockSpec((1, C3), lambda b: (0, 0)),              # b3
            pl.BlockSpec((9 * C3, C4P), lambda b: (0, 0)),        # w4 (padded)
            pl.BlockSpec((1, C4P), lambda b: (0, 0)),             # b4 (padded)
        ],
        out_specs=pl.BlockSpec((1, 1, C4P), lambda b: (b, 0, 0)),
        scratch_shapes=[
            pltpu.VMEM((m1, C1), jnp.float32),           # layer-1 activations
            pltpu.VMEM((oh2 * ow2, C2), jnp.float32),    # layer-2 activations
            pltpu.VMEM((oh3 * ow3, C3), jnp.float32),    # layer-3 activations
        ],
        compiler_params=pltpu.CompilerParams(
            dimension_semantics=("parallel",),
            vmem_limit_bytes=32 * 1024 * 1024),
        cost_estimate=pl.CostEstimate(
            flops=n * flops_per_img, transcendentals=0,
            bytes_accessed=int(bytes_accessed)),
    )(patches, w1f, b1.reshape(1, C1), w2f, b2.reshape(1, C2),
      w3f, b3.reshape(1, C3), w4f, b4p.reshape(1, C4P))

    return out.reshape(n, C4P)[:, :C4]


# ------------------------------ params & reference --------------------------

_LAYER_SPECS = [(3, 3, 1, C1), (3, 3, C1, C2), (3, 3, C2, C3), (3, 3, C3, C4)]
_STRIDES = [2, 2, 1, 1]
_LEAKY = [True, True, True, False]


def init_params(key):
    """PyTorch-like uniform(-1/sqrt(fan_in), 1/sqrt(fan_in)), HWIO layout."""
    params = []
    for kh, kw, cin, cout in _LAYER_SPECS:
        key, k1, k2 = jax.random.split(key, 3)
        bound = 1.0 / float((kh * kw * cin) ** 0.5)
        wgt = jax.random.uniform(k1, (kh, kw, cin, cout), jnp.float32,
                                 -bound, bound)
        bias = jax.random.uniform(k2, (cout,), jnp.float32, -bound, bound)
        params.append((wgt, bias))
    return params


def reference(x_nchw, params):
    """Pure-JAX reference (lax conv) for verification."""
    x = x_nchw.astype(jnp.float32)
    for (wgt, bias), stride, act in zip(params, _STRIDES, _LEAKY):
        y = jax.lax.conv_general_dilated(
            x, wgt, window_strides=(stride, stride), padding="VALID",
            dimension_numbers=("NCHW", "HWIO", "NCHW"))
        y = y + bias.reshape(1, -1, 1, 1)
        if act:
            y = jnp.where(y > 0, y, LEAKY_SLOPE * y)
        x = y
    return jnp.mean(x, axis=(2, 3))


if __name__ == "__main__":
    key = jax.random.PRNGKey(0)
    k_x, k_p = jax.random.split(key)
    # MNIST-sized input, small batch.
    x = jax.random.normal(k_x, (2, 1, 28, 28), dtype=jnp.float32)
    params = init_params(k_p)

    fwd = jax.jit(forward)
    out = jax.block_until_ready(fwd(x, params))
    assert out.shape == (2, 10), out.shape

    ref = jax.block_until_ready(reference(x, params))
    assert jnp.allclose(out, ref, atol=1e-4, rtol=1e-4), (
        "mismatch vs reference, max abs diff = %g"
        % float(jnp.max(jnp.abs(out - ref))))

    print("KERNEL_OK")
</pallas_src>

<mosaic_0001>
module attributes {stable_mosaic.version = 11 : i64} {
  func.func @_fused_kernel(%arg0: i32, %arg1: memref<1x169x9xf32, #tpu.memory_space<vmem>>, %arg2: memref<9x32xf32, #tpu.memory_space<vmem>>, %arg3: memref<1x32xf32, #tpu.memory_space<vmem>>, %arg4: memref<288x64xf32, #tpu.memory_space<vmem>>, %arg5: memref<1x64xf32, #tpu.memory_space<vmem>>, %arg6: memref<576x128xf32, #tpu.memory_space<vmem>>, %arg7: memref<1x128xf32, #tpu.memory_space<vmem>>, %arg8: memref<1152x128xf32, #tpu.memory_space<vmem>>, %arg9: memref<1x128xf32, #tpu.memory_space<vmem>>, %arg10: memref<1x1x128xf32, #tpu.memory_space<vmem>>, %arg11: memref<169x32xf32, #tpu.memory_space<vmem>>, %arg12: memref<36x64xf32, #tpu.memory_space<vmem>>, %arg13: memref<16x128xf32, #tpu.memory_space<vmem>>) attributes {dimension_semantics = [#tpu.dimension_semantics<parallel>], iteration_bounds = array<i64: 2>, scalar_prefetch = 0 : i64, scratch_operands = 3 : i64, tpu.core_type = #tpu.core_type<tc>, window_params = [{transform_indices = @transform_0, window_bounds = array<i64: 1, 169, 9>}, {pipeline_mode = #tpu.pipeline_mode<synchronous>, transform_indices = @transform_1, window_bounds = array<i64: 9, 32>}, {pipeline_mode = #tpu.pipeline_mode<synchronous>, transform_indices = @transform_2, window_bounds = array<i64: 1, 32>}, {pipeline_mode = #tpu.pipeline_mode<synchronous>, transform_indices = @transform_3, window_bounds = array<i64: 288, 64>}, {pipeline_mode = #tpu.pipeline_mode<synchronous>, transform_indices = @transform_4, window_bounds = array<i64: 1, 64>}, {pipeline_mode = #tpu.pipeline_mode<synchronous>, transform_indices = @transform_5, window_bounds = array<i64: 576, 128>}, {pipeline_mode = #tpu.pipeline_mode<synchronous>, transform_indices = @transform_6, window_bounds = array<i64: 1, 128>}, {pipeline_mode = #tpu.pipeline_mode<synchronous>, transform_indices = @transform_7, window_bounds = array<i64: 1152, 128>}, {pipeline_mode = #tpu.pipeline_mode<synchronous>, transform_indices = @transform_8, window_bounds = array<i64: 1, 128>}, {transform_indices = @transform_9, window_bounds = array<i64: 1, 1, 128>}]} {
    %c0 = arith.constant 0 : index
    %c0_0 = arith.constant 0 : index
    %c0_1 = arith.constant 0 : index
    %0 = vector.load %arg1[%c0, %c0_0, %c0_1] : memref<1x169x9xf32, #tpu.memory_space<vmem>>, vector<1x169x9xf32>
    %1 = vector.shape_cast %0 : vector<1x169x9xf32> to vector<169x9xf32>
    %c0_2 = arith.constant 0 : index
    %c0_3 = arith.constant 0 : index
    %2 = vector.load %arg2[%c0_2, %c0_3] : memref<9x32xf32, #tpu.memory_space<vmem>>, vector<9x32xf32>
    %cst = arith.constant dense<0.000000e+00> : vector<169x32xf32>
    %3 = tpu.matmul %1, %2, %cst {dimension_numbers = #tpu.dot_dimension_numbers<[1], [0], [0], [1], [0, 0, 1, 1], [], []>} : vector<169x9xf32>, vector<9x32xf32>, vector<169x32xf32> -> vector<169x32xf32>
    %c0_4 = arith.constant 0 : index
    %c0_5 = arith.constant 0 : index
    %4 = vector.load %arg3[%c0_4, %c0_5] : memref<1x32xf32, #tpu.memory_space<vmem>>, vector<1x32xf32>
    %5 = vector.broadcast %4 : vector<1x32xf32> to vector<169x32xf32>
    %6 = arith.addf %3, %5 : vector<169x32xf32>
    %cst_6 = arith.constant 0.000000e+00 : f32
    %7 = vector.broadcast %cst_6 : f32 to vector<169x32xf32>
    %8 = arith.cmpf ogt, %6, %7 : vector<169x32xf32>
    %cst_7 = arith.constant 0.00999999977 : f32
    %9 = vector.broadcast %cst_7 : f32 to vector<169x32xf32>
    %10 = arith.mulf %9, %6 : vector<169x32xf32>
    %11 = arith.select %8, %6, %10 : vector<169x32xi1>, vector<169x32xf32>
    %c0_8 = arith.constant 0 : index
    %c0_9 = arith.constant 0 : index
    %12 = vector.load %arg11[%c0_8, %c0_9] : memref<169x32xf32, #tpu.memory_space<vmem>>, vector<169x32xf32>
    tpu.vector_store %arg11[%c0_8, %c0_9], %11 {strides = array<i32>} : memref<169x32xf32, #tpu.memory_space<vmem>>, vector<169x32xf32>,
    %cst_10 = arith.constant 0.000000e+00 : f32
    %13 = vector.broadcast %cst_10 : f32 to vector<6x64xf32>
    %c0_11 = arith.constant 0 : index
    %c0_12 = arith.constant 0 : index
    %14 = vector.load %arg11[%c0_11, %c0_12] : memref<169x32xf32, #tpu.memory_space<vmem>>, vector<6x32xf32>
    %c0_13 = arith.constant 0 : index
    %c0_14 = arith.constant 0 : index
    %15 = vector.load %arg4[%c0_13, %c0_14] : memref<288x64xf32, #tpu.memory_space<vmem>>, vector<32x64xf32>
    %cst_15 = arith.constant dense<0.000000e+00> : vector<6x64xf32>
    %16 = tpu.matmul %14, %15, %cst_15 {dimension_numbers = #tpu.dot_dimension_numbers<[1], [0], [0], [1], [0, 0, 1, 1], [], []>} : vector<6x32xf32>, vector<32x64xf32>, vector<6x64xf32> -> vector<6x64xf32>
    %17 = arith.addf %13, %16 : vector<6x64xf32>
    %c7 = arith.constant 7 : index
    %c0_16 = arith.constant 0 : index
    %18 = vector.load %arg11[%c7, %c0_16] : memref<169x32xf32, #tpu.memory_space<vmem>>, vector<6x32xf32>
    %c32 = arith.constant 32 : index
    %c0_17 = arith.constant 0 : index
    %19 = vector.load %arg4[%c32, %c0_17] : memref<288x64xf32, #tpu.memory_space<vmem>>, vector<32x64xf32>
    %cst_18 = arith.constant dense<0.000000e+00> : vector<6x64xf32>
    %20 = tpu.matmul %18, %19, %cst_18 {dimension_numbers = #tpu.dot_dimension_numbers<[1], [0], [0], [1], [0, 0, 1, 1], [], []>} : vector<6x32xf32>, vector<32x64xf32>, vector<6x64xf32> -> vector<6x64xf32>
    %21 = arith.addf %17, %20 : vector<6x64xf32>
    %c1 = arith.constant 1 : index
    %c0_19 = arith.constant 0 : index
    %22 = vector.load %arg11[%c1, %c0_19] : memref<169x32xf32, #tpu.memory_space<vmem>>, vector<6x32xf32>
    %c64 = arith.constant 64 : index
    %c0_20 = arith.constant 0 : index
    %23 = vector.load %arg4[%c64, %c0_20] : memref<288x64xf32, #tpu.memory_space<vmem>>, vector<32x64xf32>
    %cst_21 = arith.constant dense<0.000000e+00> : vector<6x64xf32>
    %24 = tpu.matmul %22, %23, %cst_21 {dimension_numbers = #tpu.dot_dimension_numbers<[1], [0], [0], [1], [0, 0, 1, 1], [], []>} : vector<6x32xf32>, vector<32x64xf32>, vector<6x64xf32> -> vector<6x64xf32>
    %25 = arith.addf %21, %24 : vector<6x64xf32>
    %c13 = arith.constant 13 : index
    %c0_22 = arith.constant 0 : index
    %26 = vector.load %arg11[%c13, %c0_22] : memref<169x32xf32, #tpu.memory_space<vmem>>, vector<6x32xf32>
    %c96 = arith.constant 96 : index
    %c0_23 = arith.constant 0 : index
    %27 = vector.load %arg4[%c96, %c0_23] : memref<288x64xf32, #tpu.memory_space<vmem>>, vector<32x64xf32>
    %cst_24 = arith.constant dense<0.000000e+00> : vector<6x64xf32>
    %28 = tpu.matmul %26, %27, %cst_24 {dimension_numbers = #tpu.dot_dimension_numbers<[1], [0], [0], [1], [0, 0, 1, 1], [], []>} : vector<6x32xf32>, vector<32x64xf32>, vector<6x64xf32> -> vector<6x64xf32>
    %29 = arith.addf %25, %28 : vector<6x64xf32>
    %c20 = arith.constant 20 : index
    %c0_25 = arith.constant 0 : index
    %30 = vector.load %arg11[%c20, %c0_25] : memref<169x32xf32, #tpu.memory_space<vmem>>, vector<6x32xf32>
    %c128 = arith.constant 128 : index
    %c0_26 = arith.constant 0 : index
    %31 = vector.load %arg4[%c128, %c0_26] : memref<288x64xf32, #tpu.memory_space<vmem>>, vector<32x64xf32>
    %cst_27 = arith.constant dense<0.000000e+00> : vector<6x64xf32>
    %32 = tpu.matmul %30, %31, %cst_27 {dimension_numbers = #tpu.dot_dimension_numbers<[1], [0], [0], [1], [0, 0, 1, 1], [], []>} : vector<6x32xf32>, vector<32x64xf32>, vector<6x64xf32> -> vector<6x64xf32>
    %33 = arith.addf %29, %32 : vector<6x64xf32>
    %c14 = arith.constant 14 : index
    %c0_28 = arith.constant 0 : index
    %34 = vector.load %arg11[%c14, %c0_28] : memref<169x32xf32, #tpu.memory_space<vmem>>, vector<6x32xf32>
    %c160 = arith.constant 160 : index
    %c0_29 = arith.constant 0 : index
    %35 = vector.load %arg4[%c160, %c0_29] : memref<288x64xf32, #tpu.memory_space<vmem>>, vector<32x64xf32>
    %cst_30 = arith.constant dense<0.000000e+00> : vector<6x64xf32>
    %36 = tpu.matmul %34, %35, %cst_30 {dimension_numbers = #tpu.dot_dimension_numbers<[1], [0], [0], [1], [0, 0, 1, 1], [], []>} : vector<6x32xf32>, vector<32x64xf32>, vector<6x64xf32> -> vector<6x64xf32>
    %37 = arith.addf %33, %36 : vector<6x64xf32>
    %c26 = arith.constant 26 : index
    %c0_31 = arith.constant 0 : index
    %38 = vector.load %arg11[%c26, %c0_31] : memref<169x32xf32, #tpu.memory_space<vmem>>, vector<6x32xf32>
    %c192 = arith.constant 192 : index
    %c0_32 = arith.constant 0 : index
    %39 = vector.load %arg4[%c192, %c0_32] : memref<288x64xf32, #tpu.memory_space<vmem>>, vector<32x64xf32>
    %cst_33 = arith.constant dense<0.000000e+00> : vector<6x64xf32>
    %40 = tpu.matmul %38, %39, %cst_33 {dimension_numbers = #tpu.dot_dimension_numbers<[1], [0], [0], [1], [0, 0, 1, 1], [], []>} : vector<6x32xf32>, vector<32x64xf32>, vector<6x64xf32> -> vector<6x64xf32>
    %41 = arith.addf %37, %40 : vector<6x64xf32>
    %c33 = arith.constant 33 : index
    %c0_34 = arith.constant 0 : index
    %42 = vector.load %arg11[%c33, %c0_34] : memref<169x32xf32, #tpu.memory_space<vmem>>, vector<6x32xf32>
    %c224 = arith.constant 224 : index
    %c0_35 = arith.constant 0 : index
    %43 = vector.load %arg4[%c224, %c0_35] : memref<288x64xf32, #tpu.memory_space<vmem>>, vector<32x64xf32>
    %cst_36 = arith.constant dense<0.000000e+00> : vector<6x64xf32>
    %44 = tpu.matmul %42, %43, %cst_36 {dimension_numbers = #tpu.dot_dimension_numbers<[1], [0], [0], [1], [0, 0, 1, 1], [], []>} : vector<6x32xf32>, vector<32x64xf32>, vector<6x64xf32> -> vector<6x64xf32>
    %45 = arith.addf %41, %44 : vector<6x64xf32>
    %c27 = arith.constant 27 : index
    %c0_37 = arith.constant 0 : index
    %46 = vector.load %arg11[%c27, %c0_37] : memref<169x32xf32, #tpu.memory_space<vmem>>, vector<6x32xf32>
    %c256 = arith.constant 256 : index
    %c0_38 = arith.constant 0 : index
    %47 = vector.load %arg4[%c256, %c0_38] : memref<288x64xf32, #tpu.memory_space<vmem>>, vector<32x64xf32>
    %cst_39 = arith.constant dense<0.000000e+00> : vector<6x64xf32>
    %48 = tpu.matmul %46, %47, %cst_39 {dimension_numbers = #tpu.dot_dimension_numbers<[1], [0], [0], [1], [0, 0, 1, 1], [], []>} : vector<6x32xf32>, vector<32x64xf32>, vector<6x64xf32> -> vector<6x64xf32>
    %49 = arith.addf %45, %48 : vector<6x64xf32>
    %c0_40 = arith.constant 0 : index
    %c0_41 = arith.constant 0 : index
    %50 = vector.load %arg5[%c0_40, %c0_41] : memref<1x64xf32, #tpu.memory_space<vmem>>, vector<1x64xf32>
    %51 = vector.broadcast %50 : vector<1x64xf32> to vector<6x64xf32>
    %52 = arith.addf %49, %51 : vector<6x64xf32>
    %cst_42 = arith.constant 0.000000e+00 : f32
    %53 = vector.broadcast %cst_42 : f32 to vector<6x64xf32>
    %54 = arith.cmpf ogt, %52, %53 : vector<6x64xf32>
    %cst_43 = arith.constant 0.00999999977 : f32
    %55 = vector.broadcast %cst_43 : f32 to vector<6x64xf32>
    %56 = arith.mulf %55, %52 : vector<6x64xf32>
    %57 = arith.select %54, %52, %56 : vector<6x64xi1>, vector<6x64xf32>
    %c0_44 = arith.constant 0 : index
    %c0_45 = arith.constant 0 : index
    %58 = vector.load %arg12[%c0_44, %c0_45] : memref<36x64xf32, #tpu.memory_space<vmem>>, vector<6x64xf32>
    tpu.vector_store %arg12[%c0_44, %c0_45], %57 {strides = array<i32>} : memref<36x64xf32, #tpu.memory_space<vmem>>, vector<6x64xf32>,
    %cst_46 = arith.constant 0.000000e+00 : f32
    %59 = vector.broadcast %cst_46 : f32 to vector<6x64xf32>
    %c26_47 = arith.constant 26 : index
    %c0_48 = arith.constant 0 : index
    %60 = vector.load %arg11[%c26_47, %c0_48] : memref<169x32xf32, #tpu.memory_space<vmem>>, vector<6x32xf32>
    %c0_49 = arith.constant 0 : index
    %c0_50 = arith.constant 0 : index
    %61 = vector.load %arg4[%c0_49, %c0_50] : memref<288x64xf32, #tpu.memory_space<vmem>>, vector<32x64xf32>
    %cst_51 = arith.constant dense<0.000000e+00> : vector<6x64xf32>
    %62 = tpu.matmul %60, %61, %cst_51 {dimension_numbers = #tpu.dot_dimension_numbers<[1], [0], [0], [1], [0, 0, 1, 1], [], []>} : vector<6x32xf32>, vector<32x64xf32>, vector<6x64xf32> -> vector<6x64xf32>
    %63 = arith.addf %59, %62 : vector<6x64xf32>
    %c33_52 = arith.constant 33 : index
    %c0_53 = arith.constant 0 : index
    %64 = vector.load %arg11[%c33_52, %c0_53] : memref<169x32xf32, #tpu.memory_space<vmem>>, vector<6x32xf32>
    %c32_54 = arith.constant 32 : index
    %c0_55 = arith.constant 0 : index
    %65 = vector.load %arg4[%c32_54, %c0_55] : memref<288x64xf32, #tpu.memory_space<vmem>>, vector<32x64xf32>
    %cst_56 = arith.constant dense<0.000000e+00> : vector<6x64xf32>
    %66 = tpu.matmul %64, %65, %cst_56 {dimension_numbers = #tpu.dot_dimension_numbers<[1], [0], [0], [1], [0, 0, 1, 1], [], []>} : vector<6x32xf32>, vector<32x64xf32>, vector<6x64xf32> -> vector<6x64xf32>
    %67 = arith.addf %63, %66 : vector<6x64xf32>
    %c27_57 = arith.constant 27 : index
    %c0_58 = arith.constant 0 : index
    %68 = vector.load %arg11[%c27_57, %c0_58] : memref<169x32xf32, #tpu.memory_space<vmem>>, vector<6x32xf32>
    %c64_59 = arith.constant 64 : index
    %c0_60 = arith.constant 0 : index
    %69 = vector.load %arg4[%c64_59, %c0_60] : memref<288x64xf32, #tpu.memory_space<vmem>>, vector<32x64xf32>
    %cst_61 = arith.constant dense<0.000000e+00> : vector<6x64xf32>
    %70 = tpu.matmul %68, %69, %cst_61 {dimension_numbers = #tpu.dot_dimension_numbers<[1], [0], [0], [1], [0, 0, 1, 1], [], []>} : vector<6x32xf32>, vector<32x64xf32>, vector<6x64xf32> -> vector<6x64xf32>
    %71 = arith.addf %67, %70 : vector<6x64xf32>
    %c39 = arith.constant 39 : index
    %c0_62 = arith.constant 0 : index
    %72 = vector.load %arg11[%c39, %c0_62] : memref<169x32xf32, #tpu.memory_space<vmem>>, vector<6x32xf32>
    %c96_63 = arith.constant 96 : index
    %c0_64 = arith.constant 0 : index
    %73 = vector.load %arg4[%c96_63, %c0_64] : memref<288x64xf32, #tpu.memory_space<vmem>>, vector<32x64xf32>
    %cst_65 = arith.constant dense<0.000000e+00> : vector<6x64xf32>
    %74 = tpu.matmul %72, %73, %cst_65 {dimension_numbers = #tpu.dot_dimension_numbers<[1], [0], [0], [1], [0, 0, 1, 1], [], []>} : vector<6x32xf32>, vector<32x64xf32>, vector<6x64xf32> -> vector<6x64xf32>
    %75 = arith.addf %71, %74 : vector<6x64xf32>
    %c46 = arith.constant 46 : index
    %c0_66 = arith.constant 0 : index
    %76 = vector.load %arg11[%c46, %c0_66] : memref<169x32xf32, #tpu.memory_space<vmem>>, vector<6x32xf32>
    %c128_67 = arith.constant 128 : index
    %c0_68 = arith.constant 0 : index
    %77 = vector.load %arg4[%c128_67, %c0_68] : memref<288x64xf32, #tpu.memory_space<vmem>>, vector<32x64xf32>
    %cst_69 = arith.constant dense<0.000000e+00> : vector<6x64xf32>
    %78 = tpu.matmul %76, %77, %cst_69 {dimension_numbers = #tpu.dot_dimension_numbers<[1], [0], [0], [1], [0, 0, 1, 1], [], []>} : vector<6x32xf32>, vector<32x64xf32>, vector<6x64xf32> -> vector<6x64xf32>
    %79 = arith.addf %75, %78 : vector<6x64xf32>
    %c40 = arith.constant 40 : index
    %c0_70 = arith.constant 0 : index
    %80 = vector.load %arg11[%c40, %c0_70] : memref<169x32xf32, #tpu.memory_space<vmem>>, vector<6x32xf32>
    %c160_71 = arith.constant 160 : index
    %c0_72 = arith.constant 0 : index
    %81 = vector.load %arg4[%c160_71, %c0_72] : memref<288x64xf32, #tpu.memory_space<vmem>>, vector<32x64xf32>
    %cst_73 = arith.constant dense<0.000000e+00> : vector<6x64xf32>
    %82 = tpu.matmul %80, %81, %cst_73 {dimension_numbers = #tpu.dot_dimension_numbers<[1], [0], [0], [1], [0, 0, 1, 1], [], []>} : vector<6x32xf32>, vector<32x64xf32>, vector<6x64xf32> -> vector<6x64xf32>
    %83 = arith.addf %79, %82 : vector<6x64xf32>
    %c52 = arith.constant 52 : index
    %c0_74 = arith.constant 0 : index
    %84 = vector.load %arg11[%c52, %c0_74] : memref<169x32xf32, #tpu.memory_space<vmem>>, vector<6x32xf32>
    %c192_75 = arith.constant 192 : index
    %c0_76 = arith.constant 0 : index
    %85 = vector.load %arg4[%c192_75, %c0_76] : memref<288x64xf32, #tpu.memory_space<vmem>>, vector<32x64xf32>
    %cst_77 = arith.constant dense<0.000000e+00> : vector<6x64xf32>
    %86 = tpu.matmul %84, %85, %cst_77 {dimension_numbers = #tpu.dot_dimension_numbers<[1], [0], [0], [1], [0, 0, 1, 1], [], []>} : vector<6x32xf32>, vector<32x64xf32>, vector<6x64xf32> -> vector<6x64xf32>
    %87 = arith.addf %83, %86 : vector<6x64xf32>
    %c59 = arith.constant 59 : index
    %c0_78 = arith.constant 0 : index
    %88 = vector.load %arg11[%c59, %c0_78] : memref<169x32xf32, #tpu.memory_space<vmem>>, vector<6x32xf32>
    %c224_79 = arith.constant 224 : index
    %c0_80 = arith.constant 0 : index
    %89 = vector.load %arg4[%c224_79, %c0_80] : memref<288x64xf32, #tpu.memory_space<vmem>>, vector<32x64xf32>
    %cst_81 = arith.constant dense<0.000000e+00> : vector<6x64xf32>
    %90 = tpu.matmul %88, %89, %cst_81 {dimension_numbers = #tpu.dot_dimension_numbers<[1], [0], [0], [1], [0, 0, 1, 1], [], []>} : vector<6x32xf32>, vector<32x64xf32>, vector<6x64xf32> -> vector<6x64xf32>
    %91 = arith.addf %87, %90 : vector<6x64xf32>
    %c53 = arith.constant 53 : index
    %c0_82 = arith.constant 0 : index
    %92 = vector.load %arg11[%c53, %c0_82] : memref<169x32xf32, #tpu.memory_space<vmem>>, vector<6x32xf32>
    %c256_83 = arith.constant 256 : index
    %c0_84 = arith.constant 0 : index
    %93 = vector.load %arg4[%c256_83, %c0_84] : memref<288x64xf32, #tpu.memory_space<vmem>>, vector<32x64xf32>
    %cst_85 = arith.constant dense<0.000000e+00> : vector<6x64xf32>
    %94 = tpu.matmul %92, %93, %cst_85 {dimension_numbers = #tpu.dot_dimension_numbers<[1], [0], [0], [1], [0, 0, 1, 1], [], []>} : vector<6x32xf32>, vector<32x64xf32>, vector<6x64xf32> -> vector<6x64xf32>
    %95 = arith.addf %91, %94 : vector<6x64xf32>
    %c0_86 = arith.constant 0 : index
    %c0_87 = arith.constant 0 : index
    %96 = vector.load %arg5[%c0_86, %c0_87] : memref<1x64xf32, #tpu.memory_space<vmem>>, vector<1x64xf32>
    %97 = vector.broadcast %96 : vector<1x64xf32> to vector<6x64xf32>
    %98 = arith.addf %95, %97 : vector<6x64xf32>
    %cst_88 = arith.constant 0.000000e+00 : f32
    %99 = vector.broadcast %cst_88 : f32 to vector<6x64xf32>
    %100 = arith.cmpf ogt, %98, %99 : vector<6x64xf32>
    %cst_89 = arith.constant 0.00999999977 : f32
    %101 = vector.broadcast %cst_89 : f32 to vector<6x64xf32>
    %102 = arith.mulf %101, %98 : vector<6x64xf32>
    %103 = arith.select %100, %98, %102 : vector<6x64xi1>, vector<6x64xf32>
    %c6 = arith.constant 6 : index
    %c0_90 = arith.constant 0 : index
    %104 = vector.load %arg12[%c6, %c0_90] : memref<36x64xf32, #tpu.memory_space<vmem>>, vector<6x64xf32>
    tpu.vector_store %arg12[%c6, %c0_90], %103 {strides = array<i32>} : memref<36x64xf32, #tpu.memory_space<vmem>>, vector<6x64xf32>,
    %cst_91 = arith.constant 0.000000e+00 : f32
    %105 = vector.broadcast %cst_91 : f32 to vector<6x64xf32>
    %c52_92 = arith.constant 52 : index
    %c0_93 = arith.constant 0 : index
    %106 = vector.load %arg11[%c52_92, %c0_93] : memref<169x32xf32, #tpu.memory_space<vmem>>, vector<6x32xf32>
    %c0_94 = arith.constant 0 : index
    %c0_95 = arith.constant 0 : index
    %107 = vector.load %arg4[%c0_94, %c0_95] : memref<288x64xf32, #tpu.memory_space<vmem>>, vector<32x64xf32>
    %cst_96 = arith.constant dense<0.000000e+00> : vector<6x64xf32>
    %108 = tpu.matmul %106, %107, %cst_96 {dimension_numbers = #tpu.dot_dimension_numbers<[1], [0], [0], [1], [0, 0, 1, 1], [], []>} : vector<6x32xf32>, vector<32x64xf32>, vector<6x64xf32> -> vector<6x64xf32>
    %109 = arith.addf %105, %108 : vector<6x64xf32>
    %c59_97 = arith.constant 59 : index
    %c0_98 = arith.constant 0 : index
    %110 = vector.load %arg11[%c59_97, %c0_98] : memref<169x32xf32, #tpu.memory_space<vmem>>, vector<6x32xf32>
    %c32_99 = arith.constant 32 : index
    %c0_100 = arith.constant 0 : index
    %111 = vector.load %arg4[%c32_99, %c0_100] : memref<288x64xf32, #tpu.memory_space<vmem>>, vector<32x64xf32>
    %cst_101 = arith.constant dense<0.000000e+00> : vector<6x64xf32>
    %112 = tpu.matmul %110, %111, %cst_101 {dimension_numbers = #tpu.dot_dimension_numbers<[1], [0], [0], [1], [0, 0, 1, 1], [], []>} : vector<6x32xf32>, vector<32x64xf32>, vector<6x64xf32> -> vector<6x64xf32>
    %113 = arith.addf %109, %112 : vector<6x64xf32>
    %c53_102 = arith.constant 53 : index
    %c0_103 = arith.constant 0 : index
    %114 = vector.load %arg11[%c53_102, %c0_103] : memref<169x32xf32, #tpu.memory_space<vmem>>, vector<6x32xf32>
    %c64_104 = arith.constant 64 : index
    %c0_105 = arith.constant 0 : index
    %115 = vector.load %arg4[%c64_104, %c0_105] : memref<288x64xf32, #tpu.memory_space<vmem>>, vector<32x64xf32>
    %cst_106 = arith.constant dense<0.000000e+00> : vector<6x64xf32>
    %116 = tpu.matmul %114, %115, %cst_106 {dimension_numbers = #tpu.dot_dimension_numbers<[1], [0], [0], [1], [0, 0, 1, 1], [], []>} : vector<6x32xf32>, vector<32x64xf32>, vector<6x64xf32> -> vector<6x64xf32>
    %117 = arith.addf %113, %116 : vector<6x64xf32>
    %c65 = arith.constant 65 : index
    %c0_107 = arith.constant 0 : index
    %118 = vector.load %arg11[%c65, %c0_107] : memref<169x32xf32, #tpu.memory_space<vmem>>, vector<6x32xf32>
    %c96_108 = arith.constant 96 : index
    %c0_109 = arith.constant 0 : index
    %119 = vector.load %arg4[%c96_108, %c0_109] : memref<288x64xf32, #tpu.memory_space<vmem>>, vector<32x64xf32>
    %cst_110 = arith.constant dense<0.000000e+00> : vector<6x64xf32>
    %120 = tpu.matmul %118, %119, %cst_110 {dimension_numbers = #tpu.dot_dimension_numbers<[1], [0], [0], [1], [0, 0, 1, 1], [], []>} : vector<6x32xf32>, vector<32x64xf32>, vector<6x64xf32> -> vector<6x64xf32>
    %121 = arith.addf %117, %120 : vector<6x64xf32>
    %c72 = arith.constant 72 : index
    %c0_111 = arith.constant 0 : index
    %122 = vector.load %arg11[%c72, %c0_111] : memref<169x32xf32, #tpu.memory_space<vmem>>, vector<6x32xf32>
    %c128_112 = arith.constant 128 : index
    %c0_113 = arith.constant 0 : index
    %123 = vector.load %arg4[%c128_112, %c0_113] : memref<288x64xf32, #tpu.memory_space<vmem>>, vector<32x64xf32>
    %cst_114 = arith.constant dense<0.000000e+00> : vector<6x64xf32>
    %124 = tpu.matmul %122, %123, %cst_114 {dimension_numbers = #tpu.dot_dimension_numbers<[1], [0], [0], [1], [0, 0, 1, 1], [], []>} : vector<6x32xf32>, vector<32x64xf32>, vector<6x64xf32> -> vector<6x64xf32>
    %125 = arith.addf %121, %124 : vector<6x64xf32>
    %c66 = arith.constant 66 : index
    %c0_115 = arith.constant 0 : index
    %126 = vector.load %arg11[%c66, %c0_115] : memref<169x32xf32, #tpu.memory_space<vmem>>, vector<6x32xf32>
    %c160_116 = arith.constant 160 : index
    %c0_117 = arith.constant 0 : index
    %127 = vector.load %arg4[%c160_116, %c0_117] : memref<288x64xf32, #tpu.memory_space<vmem>>, vector<32x64xf32>
    %cst_118 = arith.constant dense<0.000000e+00> : vector<6x64xf32>
    %128 = tpu.matmul %126, %127, %cst_118 {dimension_numbers = #tpu.dot_dimension_numbers<[1], [0], [0], [1], [0, 0, 1, 1], [], []>} : vector<6x32xf32>, vector<32x64xf32>, vector<6x64xf32> -> vector<6x64xf32>
    %129 = arith.addf %125, %128 : vector<6x64xf32>
    %c78 = arith.constant 78 : index
    %c0_119 = arith.constant 0 : index
    %130 = vector.load %arg11[%c78, %c0_119] : memref<169x32xf32, #tpu.memory_space<vmem>>, vector<6x32xf32>
    %c192_120 = arith.constant 192 : index
    %c0_121 = arith.constant 0 : index
    %131 = vector.load %arg4[%c192_120, %c0_121] : memref<288x64xf32, #tpu.memory_space<vmem>>, vector<32x64xf32>
    %cst_122 = arith.constant dense<0.000000e+00> : vector<6x64xf32>
    %132 = tpu.matmul %130, %131, %cst_122 {dimension_numbers = #tpu.dot_dimension_numbers<[1], [0], [0], [1], [0, 0, 1, 1], [], []>} : vector<6x32xf32>, vector<32x64xf32>, vector<6x64xf32> -> vector<6x64xf32>
    %133 = arith.addf %129, %132 : vector<6x64xf32>
    %c85 = arith.constant 85 : index
    %c0_123 = arith.constant 0 : index
    %134 = vector.load %arg11[%c85, %c0_123] : memref<169x32xf32, #tpu.memory_space<vmem>>, vector<6x32xf32>
    %c224_124 = arith.constant 224 : index
    %c0_125 = arith.constant 0 : index
    %135 = vector.load %arg4[%c224_124, %c0_125] : memref<288x64xf32, #tpu.memory_space<vmem>>, vector<32x64xf32>
    %cst_126 = arith.constant dense<0.000000e+00> : vector<6x64xf32>
    %136 = tpu.matmul %134, %135, %cst_126 {dimension_numbers = #tpu.dot_dimension_numbers<[1], [0], [0], [1], [0, 0, 1, 1], [], []>} : vector<6x32xf32>, vector<32x64xf32>, vector<6x64xf32> -> vector<6x64xf32>
    %137 = arith.addf %133, %136 : vector<6x64xf32>
    %c79 = arith.constant 79 : index
    %c0_127 = arith.constant 0 : index
    %138 = vector.load %arg11[%c79, %c0_127] : memref<169x32xf32, #tpu.memory_space<vmem>>, vector<6x32xf32>
    %c256_128 = arith.constant 256 : index
    %c0_129 = arith.constant 0 : index
    %139 = vector.load %arg4[%c256_128, %c0_129] : memref<288x64xf32, #tpu.memory_space<vmem>>, vector<32x64xf32>
    %cst_130 = arith.constant dense<0.000000e+00> : vector<6x64xf32>
    %140 = tpu.matmul %138, %139, %cst_130 {dimension_numbers = #tpu.dot_dimension_numbers<[1], [0], [0], [1], [0, 0, 1, 1], [], []>} : vector<6x32xf32>, vector<32x64xf32>, vector<6x64xf32> -> vector<6x64xf32>
    %141 = arith.addf %137, %140 : vector<6x64xf32>
    %c0_131 = arith.constant 0 : index
    %c0_132 = arith.constant 0 : index
    %142 = vector.load %arg5[%c0_131, %c0_132] : memref<1x64xf32, #tpu.memory_space<vmem>>, vector<1x64xf32>
    %143 = vector.broadcast %142 : vector<1x64xf32> to vector<6x64xf32>
    %144 = arith.addf %141, %143 : vector<6x64xf32>
    %cst_133 = arith.constant 0.000000e+00 : f32
    %145 = vector.broadcast %cst_133 : f32 to vector<6x64xf32>
    %146 = arith.cmpf ogt, %144, %145 : vector<6x64xf32>
    %cst_134 = arith.constant 0.00999999977 : f32
    %147 = vector.broadcast %cst_134 : f32 to vector<6x64xf32>
    %148 = arith.mulf %147, %144 : vector<6x64xf32>
    %149 = arith.select %146, %144, %148 : vector<6x64xi1>, vector<6x64xf32>
    %c12 = arith.constant 12 : index
    %c0_135 = arith.constant 0 : index
    %150 = vector.load %arg12[%c12, %c0_135] : memref<36x64xf32, #tpu.memory_space<vmem>>, vector<6x64xf32>
    tpu.vector_store %arg12[%c12, %c0_135], %149 {strides = array<i32>} : memref<36x64xf32, #tpu.memory_space<vmem>>, vector<6x64xf32>,
    %cst_136 = arith.constant 0.000000e+00 : f32
    %151 = vector.broadcast %cst_136 : f32 to vector<6x64xf32>
    %c78_137 = arith.constant 78 : index
    %c0_138 = arith.constant 0 : index
    %152 = vector.load %arg11[%c78_137, %c0_138] : memref<169x32xf32, #tpu.memory_space<vmem>>, vector<6x32xf32>
    %c0_139 = arith.constant 0 : index
    %c0_140 = arith.constant 0 : index
    %153 = vector.load %arg4[%c0_139, %c0_140] : memref<288x64xf32, #tpu.memory_space<vmem>>, vector<32x64xf32>
    %cst_141 = arith.constant dense<0.000000e+00> : vector<6x64xf32>
    %154 = tpu.matmul %152, %153, %cst_141 {dimension_numbers = #tpu.dot_dimension_numbers<[1], [0], [0], [1], [0, 0, 1, 1], [], []>} : vector<6x32xf32>, vector<32x64xf32>, vector<6x64xf32> -> vector<6x64xf32>
    %155 = arith.addf %151, %154 : vector<6x64xf32>
    %c85_142 = arith.constant 85 : index
    %c0_143 = arith.constant 0 : index
    %156 = vector.load %arg11[%c85_142, %c0_143] : memref<169x32xf32, #tpu.memory_space<vmem>>, vector<6x32xf32>
    %c32_144 = arith.constant 32 : index
    %c0_145 = arith.constant 0 : index
    %157 = vector.load %arg4[%c32_144, %c0_145] : memref<288x64xf32, #tpu.memory_space<vmem>>, vector<32x64xf32>
    %cst_146 = arith.constant dense<0.000000e+00> : vector<6x64xf32>
    %158 = tpu.matmul %156, %157, %cst_146 {dimension_numbers = #tpu.dot_dimension_numbers<[1], [0], [0], [1], [0, 0, 1, 1], [], []>} : vector<6x32xf32>, vector<32x64xf32>, vector<6x64xf32> -> vector<6x64xf32>
    %159 = arith.addf %155, %158 : vector<6x64xf32>
    %c79_147 = arith.constant 79 : index
    %c0_148 = arith.constant 0 : index
    %160 = vector.load %arg11[%c79_147, %c0_148] : memref<169x32xf32, #tpu.memory_space<vmem>>, vector<6x32xf32>
    %c64_149 = arith.constant 64 : index
    %c0_150 = arith.constant 0 : index
    %161 = vector.load %arg4[%c64_149, %c0_150] : memref<288x64xf32, #tpu.memory_space<vmem>>, vector<32x64xf32>
    %cst_151 = arith.constant dense<0.000000e+00> : vector<6x64xf32>
    %162 = tpu.matmul %160, %161, %cst_151 {dimension_numbers = #tpu.dot_dimension_numbers<[1], [0], [0], [1], [0, 0, 1, 1], [], []>} : vector<6x32xf32>, vector<32x64xf32>, vector<6x64xf32> -> vector<6x64xf32>
    %163 = arith.addf %159, %162 : vector<6x64xf32>
    %c91 = arith.constant 91 : index
    %c0_152 = arith.constant 0 : index
    %164 = vector.load %arg11[%c91, %c0_152] : memref<169x32xf32, #tpu.memory_space<vmem>>, vector<6x32xf32>
    %c96_153 = arith.constant 96 : index
    %c0_154 = arith.constant 0 : index
    %165 = vector.load %arg4[%c96_153, %c0_154] : memref<288x64xf32, #tpu.memory_space<vmem>>, vector<32x64xf32>
    %cst_155 = arith.constant dense<0.000000e+00> : vector<6x64xf32>
    %166 = tpu.matmul %164, %165, %cst_155 {dimension_numbers = #tpu.dot_dimension_numbers<[1], [0], [0], [1], [0, 0, 1, 1], [], []>} : vector<6x32xf32>, vector<32x64xf32>, vector<6x64xf32> -> vector<6x64xf32>
    %167 = arith.addf %163, %166 : vector<6x64xf32>
    %c98 = arith.constant 98 : index
    %c0_156 = arith.constant 0 : index
    %168 = vector.load %arg11[%c98, %c0_156] : memref<169x32xf32, #tpu.memory_space<vmem>>, vector<6x32xf32>
    %c128_157 = arith.constant 128 : index
    %c0_158 = arith.constant 0 : index
    %169 = vector.load %arg4[%c128_157, %c0_158] : memref<288x64xf32, #tpu.memory_space<vmem>>, vector<32x64xf32>
    %cst_159 = arith.constant dense<0.000000e+00> : vector<6x64xf32>
    %170 = tpu.matmul %168, %169, %cst_159 {dimension_numbers = #tpu.dot_dimension_numbers<[1], [0], [0], [1], [0, 0, 1, 1], [], []>} : vector<6x32xf32>, vector<32x64xf32>, vector<6x64xf32> -> vector<6x64xf32>
    %171 = arith.addf %167, %170 : vector<6x64xf32>
    %c92 = arith.constant 92 : index
    %c0_160 = arith.constant 0 : index
    %172 = vector.load %arg11[%c92, %c0_160] : memref<169x32xf32, #tpu.memory_space<vmem>>, vector<6x32xf32>
    %c160_161 = arith.constant 160 : index
    %c0_162 = arith.constant 0 : index
    %173 = vector.load %arg4[%c160_161, %c0_162] : memref<288x64xf32, #tpu.memory_space<vmem>>, vector<32x64xf32>
    %cst_163 = arith.constant dense<0.000000e+00> : vector<6x64xf32>
    %174 = tpu.matmul %172, %173, %cst_163 {dimension_numbers = #tpu.dot_dimension_numbers<[1], [0], [0], [1], [0, 0, 1, 1], [], []>} : vector<6x32xf32>, vector<32x64xf32>, vector<6x64xf32> -> vector<6x64xf32>
    %175 = arith.addf %171, %174 : vector<6x64xf32>
    %c104 = arith.constant 104 : index
    %c0_164 = arith.constant 0 : index
    %176 = vector.load %arg11[%c104, %c0_164] : memref<169x32xf32, #tpu.memory_space<vmem>>, vector<6x32xf32>
    %c192_165 = arith.constant 192 : index
    %c0_166 = arith.constant 0 : index
    %177 = vector.load %arg4[%c192_165, %c0_166] : memref<288x64xf32, #tpu.memory_space<vmem>>, vector<32x64xf32>
    %cst_167 = arith.constant dense<0.000000e+00> : vector<6x64xf32>
    %178 = tpu.matmul %176, %177, %cst_167 {dimension_numbers = #tpu.dot_dimension_numbers<[1], [0], [0], [1], [0, 0, 1, 1], [], []>} : vector<6x32xf32>, vector<32x64xf32>, vector<6x64xf32> -> vector<6x64xf32>
    %179 = arith.addf %175, %178 : vector<6x64xf32>
    %c111 = arith.constant 111 : index
    %c0_168 = arith.constant 0 : index
    %180 = vector.load %arg11[%c111, %c0_168] : memref<169x32xf32, #tpu.memory_space<vmem>>, vector<6x32xf32>
    %c224_169 = arith.constant 224 : index
    %c0_170 = arith.constant 0 : index
    %181 = vector.load %arg4[%c224_169, %c0_170] : memref<288x64xf32, #tpu.memory_space<vmem>>, vector<32x64xf32>
    %cst_171 = arith.constant dense<0.000000e+00> : vector<6x64xf32>
    %182 = tpu.matmul %180, %181, %cst_171 {dimension_numbers = #tpu.dot_dimension_numbers<[1], [0], [0], [1], [0, 0, 1, 1], [], []>} : vector<6x32xf32>, vector<32x64xf32>, vector<6x64xf32> -> vector<6x64xf32>
    %183 = arith.addf %179, %182 : vector<6x64xf32>
    %c105 = arith.constant 105 : index
    %c0_172 = arith.constant 0 : index
    %184 = vector.load %arg11[%c105, %c0_172] : memref<169x32xf32, #tpu.memory_space<vmem>>, vector<6x32xf32>
    %c256_173 = arith.constant 256 : index
    %c0_174 = arith.constant 0 : index
    %185 = vector.load %arg4[%c256_173, %c0_174] : memref<288x64xf32, #tpu.memory_space<vmem>>, vector<32x64xf32>
    %cst_175 = arith.constant dense<0.000000e+00> : vector<6x64xf32>
    %186 = tpu.matmul %184, %185, %cst_175 {dimension_numbers = #tpu.dot_dimension_numbers<[1], [0], [0], [1], [0, 0, 1, 1], [], []>} : vector<6x32xf32>, vector<32x64xf32>, vector<6x64xf32> -> vector<6x64xf32>
    %187 = arith.addf %183, %186 : vector<6x64xf32>
    %c0_176 = arith.constant 0 : index
    %c0_177 = arith.constant 0 : index
    %188 = vector.load %arg5[%c0_176, %c0_177] : memref<1x64xf32, #tpu.memory_space<vmem>>, vector<1x64xf32>
    %189 = vector.broadcast %188 : vector<1x64xf32> to vector<6x64xf32>
    %190 = arith.addf %187, %189 : vector<6x64xf32>
    %cst_178 = arith.constant 0.000000e+00 : f32
    %191 = vector.broadcast %cst_178 : f32 to vector<6x64xf32>
    %192 = arith.cmpf ogt, %190, %191 : vector<6x64xf32>
    %cst_179 = arith.constant 0.00999999977 : f32
    %193 = vector.broadcast %cst_179 : f32 to vector<6x64xf32>
    %194 = arith.mulf %193, %190 : vector<6x64xf32>
    %195 = arith.select %192, %190, %194 : vector<6x64xi1>, vector<6x64xf32>
    %c18 = arith.constant 18 : index
    %c0_180 = arith.constant 0 : index
    %196 = vector.load %arg12[%c18, %c0_180] : memref<36x64xf32, #tpu.memory_space<vmem>>, vector<6x64xf32>
    tpu.vector_store %arg12[%c18, %c0_180], %195 {strides = array<i32>} : memref<36x64xf32, #tpu.memory_space<vmem>>, vector<6x64xf32>,
    %cst_181 = arith.constant 0.000000e+00 : f32
    %197 = vector.broadcast %cst_181 : f32 to vector<6x64xf32>
    %c104_182 = arith.constant 104 : index
    %c0_183 = arith.constant 0 : index
    %198 = vector.load %arg11[%c104_182, %c0_183] : memref<169x32xf32, #tpu.memory_space<vmem>>, vector<6x32xf32>
    %c0_184 = arith.constant 0 : index
    %c0_185 = arith.constant 0 : index
    %199 = vector.load %arg4[%c0_184, %c0_185] : memref<288x64xf32, #tpu.memory_space<vmem>>, vector<32x64xf32>
    %cst_186 = arith.constant dense<0.000000e+00> : vector<6x64xf32>
    %200 = tpu.matmul %198, %199, %cst_186 {dimension_numbers = #tpu.dot_dimension_numbers<[1], [0], [0], [1], [0, 0, 1, 1], [], []>} : vector<6x32xf32>, vector<32x64xf32>, vector<6x64xf32> -> vector<6x64xf32>
    %201 = arith.addf %197, %200 : vector<6x64xf32>
    %c111_187 = arith.constant 111 : index
    %c0_188 = arith.constant 0 : index
    %202 = vector.load %arg11[%c111_187, %c0_188] : memref<169x32xf32, #tpu.memory_space<vmem>>, vector<6x32xf32>
    %c32_189 = arith.constant 32 : index
    %c0_190 = arith.constant 0 : index
    %203 = vector.load %arg4[%c32_189, %c0_190] : memref<288x64xf32, #tpu.memory_space<vmem>>, vector<32x64xf32>
    %cst_191 = arith.constant dense<0.000000e+00> : vector<6x64xf32>
    %204 = tpu.matmul %202, %203, %cst_191 {dimension_numbers = #tpu.dot_dimension_numbers<[1], [0], [0], [1], [0, 0, 1, 1], [], []>} : vector<6x32xf32>, vector<32x64xf32>, vector<6x64xf32> -> vector<6x64xf32>
    %205 = arith.addf %201, %204 : vector<6x64xf32>
    %c105_192 = arith.constant 105 : index
    %c0_193 = arith.constant 0 : index
    %206 = vector.load %arg11[%c105_192, %c0_193] : memref<169x32xf32, #tpu.memory_space<vmem>>, vector<6x32xf32>
    %c64_194 = arith.constant 64 : index
    %c0_195 = arith.constant 0 : index
    %207 = vector.load %arg4[%c64_194, %c0_195] : memref<288x64xf32, #tpu.memory_space<vmem>>, vector<32x64xf32>
    %cst_196 = arith.constant dense<0.000000e+00> : vector<6x64xf32>
    %208 = tpu.matmul %206, %207, %cst_196 {dimension_numbers = #tpu.dot_dimension_numbers<[1], [0], [0], [1], [0, 0, 1, 1], [], []>} : vector<6x32xf32>, vector<32x64xf32>, vector<6x64xf32> -> vector<6x64xf32>
    %209 = arith.addf %205, %208 : vector<6x64xf32>
    %c117 = arith.constant 117 : index
    %c0_197 = arith.constant 0 : index
    %210 = vector.load %arg11[%c117, %c0_197] : memref<169x32xf32, #tpu.memory_space<vmem>>, vector<6x32xf32>
    %c96_198 = arith.constant 96 : index
    %c0_199 = arith.constant 0 : index
    %211 = vector.load %arg4[%c96_198, %c0_199] : memref<288x64xf32, #tpu.memory_space<vmem>>, vector<32x64xf32>
    %cst_200 = arith.constant dense<0.000000e+00> : vector<6x64xf32>
    %212 = tpu.matmul %210, %211, %cst_200 {dimension_numbers = #tpu.dot_dimension_numbers<[1], [0], [0], [1], [0, 0, 1, 1], [], []>} : vector<6x32xf32>, vector<32x64xf32>, vector<6x64xf32> -> vector<6x64xf32>
    %213 = arith.addf %209, %212 : vector<6x64xf32>
    %c124 = arith.constant 124 : index
    %c0_201 = arith.constant 0 : index
    %214 = vector.load %arg11[%c124, %c0_201] : memref<169x32xf32, #tpu.memory_space<vmem>>, vector<6x32xf32>
    %c128_202 = arith.constant 128 : index
    %c0_203 = arith.constant 0 : index
    %215 = vector.load %arg4[%c128_202, %c0_203] : memref<288x64xf32, #tpu.memory_space<vmem>>, vector<32x64xf32>
    %cst_204 = arith.constant dense<0.000000e+00> : vector<6x64xf32>
    %216 = tpu.matmul %214, %215, %cst_204 {dimension_numbers = #tpu.dot_dimension_numbers<[1], [0], [0], [1], [0, 0, 1, 1], [], []>} : vector<6x32xf32>, vector<32x64xf32>, vector<6x64xf32> -> vector<6x64xf32>
    %217 = arith.addf %213, %216 : vector<6x64xf32>
    %c118 = arith.constant 118 : index
    %c0_205 = arith.constant 0 : index
    %218 = vector.load %arg11[%c118, %c0_205] : memref<169x32xf32, #tpu.memory_space<vmem>>, vector<6x32xf32>
    %c160_206 = arith.constant 160 : index
    %c0_207 = arith.constant 0 : index
    %219 = vector.load %arg4[%c160_206, %c0_207] : memref<288x64xf32, #tpu.memory_space<vmem>>, vector<32x64xf32>
    %cst_208 = arith.constant dense<0.000000e+00> : vector<6x64xf32>
    %220 = tpu.matmul %218, %219, %cst_208 {dimension_numbers = #tpu.dot_dimension_numbers<[1], [0], [0], [1], [0, 0, 1, 1], [], []>} : vector<6x32xf32>, vector<32x64xf32>, vector<6x64xf32> -> vector<6x64xf32>
    %221 = arith.addf %217, %220 : vector<6x64xf32>
    %c130 = arith.constant 130 : index
    %c0_209 = arith.constant 0 : index
    %222 = vector.load %arg11[%c130, %c0_209] : memref<169x32xf32, #tpu.memory_space<vmem>>, vector<6x32xf32>
    %c192_210 = arith.constant 192 : index
    %c0_211 = arith.constant 0 : index
    %223 = vector.load %arg4[%c192_210, %c0_211] : memref<288x64xf32, #tpu.memory_space<vmem>>, vector<32x64xf32>
    %cst_212 = arith.constant dense<0.000000e+00> : vector<6x64xf32>
    %224 = tpu.matmul %222, %223, %cst_212 {dimension_numbers = #tpu.dot_dimension_numbers<[1], [0], [0], [1], [0, 0, 1, 1], [], []>} : vector<6x32xf32>, vector<32x64xf32>, vector<6x64xf32> -> vector<6x64xf32>
    %225 = arith.addf %221, %224 : vector<6x64xf32>
    %c137 = arith.constant 137 : index
    %c0_213 = arith.constant 0 : index
    %226 = vector.load %arg11[%c137, %c0_213] : memref<169x32xf32, #tpu.memory_space<vmem>>, vector<6x32xf32>
    %c224_214 = arith.constant 224 : index
    %c0_215 = arith.constant 0 : index
    %227 = vector.load %arg4[%c224_214, %c0_215] : memref<288x64xf32, #tpu.memory_space<vmem>>, vector<32x64xf32>
    %cst_216 = arith.constant dense<0.000000e+00> : vector<6x64xf32>
    %228 = tpu.matmul %226, %227, %cst_216 {dimension_numbers = #tpu.dot_dimension_numbers<[1], [0], [0], [1], [0, 0, 1, 1], [], []>} : vector<6x32xf32>, vector<32x64xf32>, vector<6x64xf32> -> vector<6x64xf32>
    %229 = arith.addf %225, %228 : vector<6x64xf32>
    %c131 = arith.constant 131 : index
    %c0_217 = arith.constant 0 : index
    %230 = vector.load %arg11[%c131, %c0_217] : memref<169x32xf32, #tpu.memory_space<vmem>>, vector<6x32xf32>
    %c256_218 = arith.constant 256 : index
    %c0_219 = arith.constant 0 : index
    %231 = vector.load %arg4[%c256_218, %c0_219] : memref<288x64xf32, #tpu.memory_space<vmem>>, vector<32x64xf32>
    %cst_220 = arith.constant dense<0.000000e+00> : vector<6x64xf32>
    %232 = tpu.matmul %230, %231, %cst_220 {dimension_numbers = #tpu.dot_dimension_numbers<[1], [0], [0], [1], [0, 0, 1, 1], [], []>} : vector<6x32xf32>, vector<32x64xf32>, vector<6x64xf32> -> vector<6x64xf32>
    %233 = arith.addf %229, %232 : vector<6x64xf32>
    %c0_221 = arith.constant 0 : index
    %c0_222 = arith.constant 0 : index
    %234 = vector.load %arg5[%c0_221, %c0_222] : memref<1x64xf32, #tpu.memory_space<vmem>>, vector<1x64xf32>
    %235 = vector.broadcast %234 : vector<1x64xf32> to vector<6x64xf32>
    %236 = arith.addf %233, %235 : vector<6x64xf32>
    %cst_223 = arith.constant 0.000000e+00 : f32
    %237 = vector.broadcast %cst_223 : f32 to vector<6x64xf32>
    %238 = arith.cmpf ogt, %236, %237 : vector<6x64xf32>
    %cst_224 = arith.constant 0.00999999977 : f32
    %239 = vector.broadcast %cst_224 : f32 to vector<6x64xf32>
    %240 = arith.mulf %239, %236 : vector<6x64xf32>
    %241 = arith.select %238, %236, %240 : vector<6x64xi1>, vector<6x64xf32>
    %c24 = arith.constant 24 : index
    %c0_225 = arith.constant 0 : index
    %242 = vector.load %arg12[%c24, %c0_225] : memref<36x64xf32, #tpu.memory_space<vmem>>, vector<6x64xf32>
    tpu.vector_store %arg12[%c24, %c0_225], %241 {strides = array<i32>} : memref<36x64xf32, #tpu.memory_space<vmem>>, vector<6x64xf32>,
    %cst_226 = arith.constant 0.000000e+00 : f32
    %243 = vector.broadcast %cst_226 : f32 to vector<6x64xf32>
    %c130_227 = arith.constant 130 : index
    %c0_228 = arith.constant 0 : index
    %244 = vector.load %arg11[%c130_227, %c0_228] : memref<169x32xf32, #tpu.memory_space<vmem>>, vector<6x32xf32>
    %c0_229 = arith.constant 0 : index
    %c0_230 = arith.constant 0 : index
    %245 = vector.load %arg4[%c0_229, %c0_230] : memref<288x64xf32, #tpu.memory_space<vmem>>, vector<32x64xf32>
    %cst_231 = arith.constant dense<0.000000e+00> : vector<6x64xf32>
    %246 = tpu.matmul %244, %245, %cst_231 {dimension_numbers = #tpu.dot_dimension_numbers<[1], [0], [0], [1], [0, 0, 1, 1], [], []>} : vector<6x32xf32>, vector<32x64xf32>, vector<6x64xf32> -> vector<6x64xf32>
    %247 = arith.addf %243, %246 : vector<6x64xf32>
    %c137_232 = arith.constant 137 : index
    %c0_233 = arith.constant 0 : index
    %248 = vector.load %arg11[%c137_232, %c0_233] : memref<169x32xf32, #tpu.memory_space<vmem>>, vector<6x32xf32>
    %c32_234 = arith.constant 32 : index
    %c0_235 = arith.constant 0 : index
    %249 = vector.load %arg4[%c32_234, %c0_235] : memref<288x64xf32, #tpu.memory_space<vmem>>, vector<32x64xf32>
    %cst_236 = arith.constant dense<0.000000e+00> : vector<6x64xf32>
    %250 = tpu.matmul %248, %249, %cst_236 {dimension_numbers = #tpu.dot_dimension_numbers<[1], [0], [0], [1], [0, 0, 1, 1], [], []>} : vector<6x32xf32>, vector<32x64xf32>, vector<6x64xf32> -> vector<6x64xf32>
    %251 = arith.addf %247, %250 : vector<6x64xf32>
    %c131_237 = arith.constant 131 : index
    %c0_238 = arith.constant 0 : index
    %252 = vector.load %arg11[%c131_237, %c0_238] : memref<169x32xf32, #tpu.memory_space<vmem>>, vector<6x32xf32>
    %c64_239 = arith.constant 64 : index
    %c0_240 = arith.constant 0 : index
    %253 = vector.load %arg4[%c64_239, %c0_240] : memref<288x64xf32, #tpu.memory_space<vmem>>, vector<32x64xf32>
    %cst_241 = arith.constant dense<0.000000e+00> : vector<6x64xf32>
    %254 = tpu.matmul %252, %253, %cst_241 {dimension_numbers = #tpu.dot_dimension_numbers<[1], [0], [0], [1], [0, 0, 1, 1], [], []>} : vector<6x32xf32>, vector<32x64xf32>, vector<6x64xf32> -> vector<6x64xf32>
    %255 = arith.addf %251, %254 : vector<6x64xf32>
    %c143 = arith.constant 143 : index
    %c0_242 = arith.constant 0 : index
    %256 = vector.load %arg11[%c143, %c0_242] : memref<169x32xf32, #tpu.memory_space<vmem>>, vector<6x32xf32>
    %c96_243 = arith.constant 96 : index
    %c0_244 = arith.constant 0 : index
    %257 = vector.load %arg4[%c96_243, %c0_244] : memref<288x64xf32, #tpu.memory_space<vmem>>, vector<32x64xf32>
    %cst_245 = arith.constant dense<0.000000e+00> : vector<6x64xf32>
    %258 = tpu.matmul %256, %257, %cst_245 {dimension_numbers = #tpu.dot_dimension_numbers<[1], [0], [0], [1], [0, 0, 1, 1], [], []>} : vector<6x32xf32>, vector<32x64xf32>, vector<6x64xf32> -> vector<6x64xf32>
    %259 = arith.addf %255, %258 : vector<6x64xf32>
    %c150 = arith.constant 150 : index
    %c0_246 = arith.constant 0 : index
    %260 = vector.load %arg11[%c150, %c0_246] : memref<169x32xf32, #tpu.memory_space<vmem>>, vector<6x32xf32>
    %c128_247 = arith.constant 128 : index
    %c0_248 = arith.constant 0 : index
    %261 = vector.load %arg4[%c128_247, %c0_248] : memref<288x64xf32, #tpu.memory_space<vmem>>, vector<32x64xf32>
    %cst_249 = arith.constant dense<0.000000e+00> : vector<6x64xf32>
    %262 = tpu.matmul %260, %261, %cst_249 {dimension_numbers = #tpu.dot_dimension_numbers<[1], [0], [0], [1], [0, 0, 1, 1], [], []>} : vector<6x32xf32>, vector<32x64xf32>, vector<6x64xf32> -> vector<6x64xf32>
    %263 = arith.addf %259, %262 : vector<6x64xf32>
    %c144 = arith.constant 144 : index
    %c0_250 = arith.constant 0 : index
    %264 = vector.load %arg11[%c144, %c0_250] : memref<169x32xf32, #tpu.memory_space<vmem>>, vector<6x32xf32>
    %c160_251 = arith.constant 160 : index
    %c0_252 = arith.constant 0 : index
    %265 = vector.load %arg4[%c160_251, %c0_252] : memref<288x64xf32, #tpu.memory_space<vmem>>, vector<32x64xf32>
    %cst_253 = arith.constant dense<0.000000e+00> : vector<6x64xf32>
    %266 = tpu.matmul %264, %265, %cst_253 {dimension_numbers = #tpu.dot_dimension_numbers<[1], [0], [0], [1], [0, 0, 1, 1], [], []>} : vector<6x32xf32>, vector<32x64xf32>, vector<6x64xf32> -> vector<6x64xf32>
    %267 = arith.addf %263, %266 : vector<6x64xf32>
    %c156 = arith.constant 156 : index
    %c0_254 = arith.constant 0 : index
    %268 = vector.load %arg11[%c156, %c0_254] : memref<169x32xf32, #tpu.memory_space<vmem>>, vector<6x32xf32>
    %c192_255 = arith.constant 192 : index
    %c0_256 = arith.constant 0 : index
    %269 = vector.load %arg4[%c192_255, %c0_256] : memref<288x64xf32, #tpu.memory_space<vmem>>, vector<32x64xf32>
    %cst_257 = arith.constant dense<0.000000e+00> : vector<6x64xf32>
    %270 = tpu.matmul %268, %269, %cst_257 {dimension_numbers = #tpu.dot_dimension_numbers<[1], [0], [0], [1], [0, 0, 1, 1], [], []>} : vector<6x32xf32>, vector<32x64xf32>, vector<6x64xf32> -> vector<6x64xf32>
    %271 = arith.addf %267, %270 : vector<6x64xf32>
    %c163 = arith.constant 163 : index
    %c0_258 = arith.constant 0 : index
    %272 = vector.load %arg11[%c163, %c0_258] : memref<169x32xf32, #tpu.memory_space<vmem>>, vector<6x32xf32>
    %c224_259 = arith.constant 224 : index
    %c0_260 = arith.constant 0 : index
    %273 = vector.load %arg4[%c224_259, %c0_260] : memref<288x64xf32, #tpu.memory_space<vmem>>, vector<32x64xf32>
    %cst_261 = arith.constant dense<0.000000e+00> : vector<6x64xf32>
    %274 = tpu.matmul %272, %273, %cst_261 {dimension_numbers = #tpu.dot_dimension_numbers<[1], [0], [0], [1], [0, 0, 1, 1], [], []>} : vector<6x32xf32>, vector<32x64xf32>, vector<6x64xf32> -> vector<6x64xf32>
    %275 = arith.addf %271, %274 : vector<6x64xf32>
    %c157 = arith.constant 157 : index
    %c0_262 = arith.constant 0 : index
    %276 = vector.load %arg11[%c157, %c0_262] : memref<169x32xf32, #tpu.memory_space<vmem>>, vector<6x32xf32>
    %c256_263 = arith.constant 256 : index
    %c0_264 = arith.constant 0 : index
    %277 = vector.load %arg4[%c256_263, %c0_264] : memref<288x64xf32, #tpu.memory_space<vmem>>, vector<32x64xf32>
    %cst_265 = arith.constant dense<0.000000e+00> : vector<6x64xf32>
    %278 = tpu.matmul %276, %277, %cst_265 {dimension_numbers = #tpu.dot_dimension_numbers<[1], [0], [0], [1], [0, 0, 1, 1], [], []>} : vector<6x32xf32>, vector<32x64xf32>, vector<6x64xf32> -> vector<6x64xf32>
    %279 = arith.addf %275, %278 : vector<6x64xf32>
    %c0_266 = arith.constant 0 : index
    %c0_267 = arith.constant 0 : index
    %280 = vector.load %arg5[%c0_266, %c0_267] : memref<1x64xf32, #tpu.memory_space<vmem>>, vector<1x64xf32>
    %281 = vector.broadcast %280 : vector<1x64xf32> to vector<6x64xf32>
    %282 = arith.addf %279, %281 : vector<6x64xf32>
    %cst_268 = arith.constant 0.000000e+00 : f32
    %283 = vector.broadcast %cst_268 : f32 to vector<6x64xf32>
    %284 = arith.cmpf ogt, %282, %283 : vector<6x64xf32>
    %cst_269 = arith.constant 0.00999999977 : f32
    %285 = vector.broadcast %cst_269 : f32 to vector<6x64xf32>
    %286 = arith.mulf %285, %282 : vector<6x64xf32>
    %287 = arith.select %284, %282, %286 : vector<6x64xi1>, vector<6x64xf32>
    %c30 = arith.constant 30 : index
    %c0_270 = arith.constant 0 : index
    %288 = vector.load %arg12[%c30, %c0_270] : memref<36x64xf32, #tpu.memory_space<vmem>>, vector<6x64xf32>
    tpu.vector_store %arg12[%c30, %c0_270], %287 {strides = array<i32>} : memref<36x64xf32, #tpu.memory_space<vmem>>, vector<6x64xf32>,
    %cst_271 = arith.constant 0.000000e+00 : f32
    %289 = vector.broadcast %cst_271 : f32 to vector<4x128xf32>
    %c0_272 = arith.constant 0 : index
    %c0_273 = arith.constant 0 : index
    %290 = vector.load %arg12[%c0_272, %c0_273] : memref<36x64xf32, #tpu.memory_space<vmem>>, vector<4x64xf32>
    %c0_274 = arith.constant 0 : index
    %c0_275 = arith.constant 0 : index
    %291 = vector.load %arg6[%c0_274, %c0_275] : memref<576x128xf32, #tpu.memory_space<vmem>>, vector<64x128xf32>
    %cst_276 = arith.constant dense<0.000000e+00> : vector<4x128xf32>
    %292 = tpu.matmul %290, %291, %cst_276 {dimension_numbers = #tpu.dot_dimension_numbers<[1], [0], [0], [1], [0, 0, 1, 1], [], []>} : vector<4x64xf32>, vector<64x128xf32>, vector<4x128xf32> -> vector<4x128xf32>
    %293 = arith.addf %289, %292 : vector<4x128xf32>
    %c1_277 = arith.constant 1 : index
    %c0_278 = arith.constant 0 : index
    %294 = vector.load %arg12[%c1_277, %c0_278] : memref<36x64xf32, #tpu.memory_space<vmem>>, vector<4x64xf32>
    %c64_279 = arith.constant 64 : index
    %c0_280 = arith.constant 0 : index
    %295 = vector.load %arg6[%c64_279, %c0_280] : memref<576x128xf32, #tpu.memory_space<vmem>>, vector<64x128xf32>
    %cst_281 = arith.constant dense<0.000000e+00> : vector<4x128xf32>
    %296 = tpu.matmul %294, %295, %cst_281 {dimension_numbers = #tpu.dot_dimension_numbers<[1], [0], [0], [1], [0, 0, 1, 1], [], []>} : vector<4x64xf32>, vector<64x128xf32>, vector<4x128xf32> -> vector<4x128xf32>
    %297 = arith.addf %293, %296 : vector<4x128xf32>
    %c2 = arith.constant 2 : index
    %c0_282 = arith.constant 0 : index
    %298 = vector.load %arg12[%c2, %c0_282] : memref<36x64xf32, #tpu.memory_space<vmem>>, vector<4x64xf32>
    %c128_283 = arith.constant 128 : index
    %c0_284 = arith.constant 0 : index
    %299 = vector.load %arg6[%c128_283, %c0_284] : memref<576x128xf32, #tpu.memory_space<vmem>>, vector<64x128xf32>
    %cst_285 = arith.constant dense<0.000000e+00> : vector<4x128xf32>
    %300 = tpu.matmul %298, %299, %cst_285 {dimension_numbers = #tpu.dot_dimension_numbers<[1], [0], [0], [1], [0, 0, 1, 1], [], []>} : vector<4x64xf32>, vector<64x128xf32>, vector<4x128xf32> -> vector<4x128xf32>
    %301 = arith.addf %297, %300 : vector<4x128xf32>
    %c6_286 = arith.constant 6 : index
    %c0_287 = arith.constant 0 : index
    %302 = vector.load %arg12[%c6_286, %c0_287] : memref<36x64xf32, #tpu.memory_space<vmem>>, vector<4x64xf32>
    %c192_288 = arith.constant 192 : index
    %c0_289 = arith.constant 0 : index
    %303 = vector.load %arg6[%c192_288, %c0_289] : memref<576x128xf32, #tpu.memory_space<vmem>>, vector<64x128xf32>
    %cst_290 = arith.constant dense<0.000000e+00> : vector<4x128xf32>
    %304 = tpu.matmul %302, %303, %cst_290 {dimension_numbers = #tpu.dot_dimension_numbers<[1], [0], [0], [1], [0, 0, 1, 1], [], []>} : vector<4x64xf32>, vector<64x128xf32>, vector<4x128xf32> -> vector<4x128xf32>
    %305 = arith.addf %301, %304 : vector<4x128xf32>
    %c7_291 = arith.constant 7 : index
    %c0_292 = arith.constant 0 : index
    %306 = vector.load %arg12[%c7_291, %c0_292] : memref<36x64xf32, #tpu.memory_space<vmem>>, vector<4x64xf32>
    %c256_293 = arith.constant 256 : index
    %c0_294 = arith.constant 0 : index
    %307 = vector.load %arg6[%c256_293, %c0_294] : memref<576x128xf32, #tpu.memory_space<vmem>>, vector<64x128xf32>
    %cst_295 = arith.constant dense<0.000000e+00> : vector<4x128xf32>
    %308 = tpu.matmul %306, %307, %cst_295 {dimension_numbers = #tpu.dot_dimension_numbers<[1], [0], [0], [1], [0, 0, 1, 1], [], []>} : vector<4x64xf32>, vector<64x128xf32>, vector<4x128xf32> -> vector<4x128xf32>
    %309 = arith.addf %305, %308 : vector<4x128xf32>
    %c8 = arith.constant 8 : index
    %c0_296 = arith.constant 0 : index
    %310 = vector.load %arg12[%c8, %c0_296] : memref<36x64xf32, #tpu.memory_space<vmem>>, vector<4x64xf32>
    %c320 = arith.constant 320 : index
    %c0_297 = arith.constant 0 : index
    %311 = vector.load %arg6[%c320, %c0_297] : memref<576x128xf32, #tpu.memory_space<vmem>>, vector<64x128xf32>
    %cst_298 = arith.constant dense<0.000000e+00> : vector<4x128xf32>
    %312 = tpu.matmul %310, %311, %cst_298 {dimension_numbers = #tpu.dot_dimension_numbers<[1], [0], [0], [1], [0, 0, 1, 1], [], []>} : vector<4x64xf32>, vector<64x128xf32>, vector<4x128xf32> -> vector<4x128xf32>
    %313 = arith.addf %309, %312 : vector<4x128xf32>
    %c12_299 = arith.constant 12 : index
    %c0_300 = arith.constant 0 : index
    %314 = vector.load %arg12[%c12_299, %c0_300] : memref<36x64xf32, #tpu.memory_space<vmem>>, vector<4x64xf32>
    %c384 = arith.constant 384 : index
    %c0_301 = arith.constant 0 : index
    %315 = vector.load %arg6[%c384, %c0_301] : memref<576x128xf32, #tpu.memory_space<vmem>>, vector<64x128xf32>
    %cst_302 = arith.constant dense<0.000000e+00> : vector<4x128xf32>
    %316 = tpu.matmul %314, %315, %cst_302 {dimension_numbers = #tpu.dot_dimension_numbers<[1], [0], [0], [1], [0, 0, 1, 1], [], []>} : vector<4x64xf32>, vector<64x128xf32>, vector<4x128xf32> -> vector<4x128xf32>
    %317 = arith.addf %313, %316 : vector<4x128xf32>
    %c13_303 = arith.constant 13 : index
    %c0_304 = arith.constant 0 : index
    %318 = vector.load %arg12[%c13_303, %c0_304] : memref<36x64xf32, #tpu.memory_space<vmem>>, vector<4x64xf32>
    %c448 = arith.constant 448 : index
    %c0_305 = arith.constant 0 : index
    %319 = vector.load %arg6[%c448, %c0_305] : memref<576x128xf32, #tpu.memory_space<vmem>>, vector<64x128xf32>
    %cst_306 = arith.constant dense<0.000000e+00> : vector<4x128xf32>
    %320 = tpu.matmul %318, %319, %cst_306 {dimension_numbers = #tpu.dot_dimension_numbers<[1], [0], [0], [1], [0, 0, 1, 1], [], []>} : vector<4x64xf32>, vector<64x128xf32>, vector<4x128xf32> -> vector<4x128xf32>
    %321 = arith.addf %317, %320 : vector<4x128xf32>
    %c14_307 = arith.constant 14 : index
    %c0_308 = arith.constant 0 : index
    %322 = vector.load %arg12[%c14_307, %c0_308] : memref<36x64xf32, #tpu.memory_space<vmem>>, vector<4x64xf32>
    %c512 = arith.constant 512 : index
    %c0_309 = arith.constant 0 : index
    %323 = vector.load %arg6[%c512, %c0_309] : memref<576x128xf32, #tpu.memory_space<vmem>>, vector<64x128xf32>
    %cst_310 = arith.constant dense<0.000000e+00> : vector<4x128xf32>
    %324 = tpu.matmul %322, %323, %cst_310 {dimension_numbers = #tpu.dot_dimension_numbers<[1], [0], [0], [1], [0, 0, 1, 1], [], []>} : vector<4x64xf32>, vector<64x128xf32>, vector<4x128xf32> -> vector<4x128xf32>
    %325 = arith.addf %321, %324 : vector<4x128xf32>
    %c0_311 = arith.constant 0 : index
    %c0_312 = arith.constant 0 : index
    %326 = vector.load %arg7[%c0_311, %c0_312] : memref<1x128xf32, #tpu.memory_space<vmem>>, vector<1x128xf32>
    %327 = vector.broadcast %326 : vector<1x128xf32> to vector<4x128xf32>
    %328 = arith.addf %325, %327 : vector<4x128xf32>
    %cst_313 = arith.constant 0.000000e+00 : f32
    %329 = vector.broadcast %cst_313 : f32 to vector<4x128xf32>
    %330 = arith.cmpf ogt, %328, %329 : vector<4x128xf32>
    %cst_314 = arith.constant 0.00999999977 : f32
    %331 = vector.broadcast %cst_314 : f32 to vector<4x128xf32>
    %332 = arith.mulf %331, %328 : vector<4x128xf32>
    %333 = arith.select %330, %328, %332 : vector<4x128xi1>, vector<4x128xf32>
    %c0_315 = arith.constant 0 : index
    %c0_316 = arith.constant 0 : index
    %334 = vector.load %arg13[%c0_315, %c0_316] : memref<16x128xf32, #tpu.memory_space<vmem>>, vector<4x128xf32>
    tpu.vector_store %arg13[%c0_315, %c0_316], %333 {strides = array<i32>} : memref<16x128xf32, #tpu.memory_space<vmem>>, vector<4x128xf32>,
    %cst_317 = arith.constant 0.000000e+00 : f32
    %335 = vector.broadcast %cst_317 : f32 to vector<4x128xf32>
    %c6_318 = arith.constant 6 : index
    %c0_319 = arith.constant 0 : index
    %336 = vector.load %arg12[%c6_318, %c0_319] : memref<36x64xf32, #tpu.memory_space<vmem>>, vector<4x64xf32>
    %c0_320 = arith.constant 0 : index
    %c0_321 = arith.constant 0 : index
    %337 = vector.load %arg6[%c0_320, %c0_321] : memref<576x128xf32, #tpu.memory_space<vmem>>, vector<64x128xf32>
    %cst_322 = arith.constant dense<0.000000e+00> : vector<4x128xf32>
    %338 = tpu.matmul %336, %337, %cst_322 {dimension_numbers = #tpu.dot_dimension_numbers<[1], [0], [0], [1], [0, 0, 1, 1], [], []>} : vector<4x64xf32>, vector<64x128xf32>, vector<4x128xf32> -> vector<4x128xf32>
    %339 = arith.addf %335, %338 : vector<4x128xf32>
    %c7_323 = arith.constant 7 : index
    %c0_324 = arith.constant 0 : index
    %340 = vector.load %arg12[%c7_323, %c0_324] : memref<36x64xf32, #tpu.memory_space<vmem>>, vector<4x64xf32>
    %c64_325 = arith.constant 64 : index
    %c0_326 = arith.constant 0 : index
    %341 = vector.load %arg6[%c64_325, %c0_326] : memref<576x128xf32, #tpu.memory_space<vmem>>, vector<64x128xf32>
    %cst_327 = arith.constant dense<0.000000e+00> : vector<4x128xf32>
    %342 = tpu.matmul %340, %341, %cst_327 {dimension_numbers = #tpu.dot_dimension_numbers<[1], [0], [0], [1], [0, 0, 1, 1], [], []>} : vector<4x64xf32>, vector<64x128xf32>, vector<4x128xf32> -> vector<4x128xf32>
    %343 = arith.addf %339, %342 : vector<4x128xf32>
    %c8_328 = arith.constant 8 : index
    %c0_329 = arith.constant 0 : index
    %344 = vector.load %arg12[%c8_328, %c0_329] : memref<36x64xf32, #tpu.memory_space<vmem>>, vector<4x64xf32>
    %c128_330 = arith.constant 128 : index
    %c0_331 = arith.constant 0 : index
    %345 = vector.load %arg6[%c128_330, %c0_331] : memref<576x128xf32, #tpu.memory_space<vmem>>, vector<64x128xf32>
    %cst_332 = arith.constant dense<0.000000e+00> : vector<4x128xf32>
    %346 = tpu.matmul %344, %345, %cst_332 {dimension_numbers = #tpu.dot_dimension_numbers<[1], [0], [0], [1], [0, 0, 1, 1], [], []>} : vector<4x64xf32>, vector<64x128xf32>, vector<4x128xf32> -> vector<4x128xf32>
    %347 = arith.addf %343, %346 : vector<4x128xf32>
    %c12_333 = arith.constant 12 : index
    %c0_334 = arith.constant 0 : index
    %348 = vector.load %arg12[%c12_333, %c0_334] : memref<36x64xf32, #tpu.memory_space<vmem>>, vector<4x64xf32>
    %c192_335 = arith.constant 192 : index
    %c0_336 = arith.constant 0 : index
    %349 = vector.load %arg6[%c192_335, %c0_336] : memref<576x128xf32, #tpu.memory_space<vmem>>, vector<64x128xf32>
    %cst_337 = arith.constant dense<0.000000e+00> : vector<4x128xf32>
    %350 = tpu.matmul %348, %349, %cst_337 {dimension_numbers = #tpu.dot_dimension_numbers<[1], [0], [0], [1], [0, 0, 1, 1], [], []>} : vector<4x64xf32>, vector<64x128xf32>, vector<4x128xf32> -> vector<4x128xf32>
    %351 = arith.addf %347, %350 : vector<4x128xf32>
    %c13_338 = arith.constant 13 : index
    %c0_339 = arith.constant 0 : index
    %352 = vector.load %arg12[%c13_338, %c0_339] : memref<36x64xf32, #tpu.memory_space<vmem>>, vector<4x64xf32>
    %c256_340 = arith.constant 256 : index
    %c0_341 = arith.constant 0 : index
    %353 = vector.load %arg6[%c256_340, %c0_341] : memref<576x128xf32, #tpu.memory_space<vmem>>, vector<64x128xf32>
    %cst_342 = arith.constant dense<0.000000e+00> : vector<4x128xf32>
    %354 = tpu.matmul %352, %353, %cst_342 {dimension_numbers = #tpu.dot_dimension_numbers<[1], [0], [0], [1], [0, 0, 1, 1], [], []>} : vector<4x64xf32>, vector<64x128xf32>, vector<4x128xf32> -> vector<4x128xf32>
    %355 = arith.addf %351, %354 : vector<4x128xf32>
    %c14_343 = arith.constant 14 : index
    %c0_344 = arith.constant 0 : index
    %356 = vector.load %arg12[%c14_343, %c0_344] : memref<36x64xf32, #tpu.memory_space<vmem>>, vector<4x64xf32>
    %c320_345 = arith.constant 320 : index
    %c0_346 = arith.constant 0 : index
    %357 = vector.load %arg6[%c320_345, %c0_346] : memref<576x128xf32, #tpu.memory_space<vmem>>, vector<64x128xf32>
    %cst_347 = arith.constant dense<0.000000e+00> : vector<4x128xf32>
    %358 = tpu.matmul %356, %357, %cst_347 {dimension_numbers = #tpu.dot_dimension_numbers<[1], [0], [0], [1], [0, 0, 1, 1], [], []>} : vector<4x64xf32>, vector<64x128xf32>, vector<4x128xf32> -> vector<4x128xf32>
    %359 = arith.addf %355, %358 : vector<4x128xf32>
    %c18_348 = arith.constant 18 : index
    %c0_349 = arith.constant 0 : index
    %360 = vector.load %arg12[%c18_348, %c0_349] : memref<36x64xf32, #tpu.memory_space<vmem>>, vector<4x64xf32>
    %c384_350 = arith.constant 384 : index
    %c0_351 = arith.constant 0 : index
    %361 = vector.load %arg6[%c384_350, %c0_351] : memref<576x128xf32, #tpu.memory_space<vmem>>, vector<64x128xf32>
    %cst_352 = arith.constant dense<0.000000e+00> : vector<4x128xf32>
    %362 = tpu.matmul %360, %361, %cst_352 {dimension_numbers = #tpu.dot_dimension_numbers<[1], [0], [0], [1], [0, 0, 1, 1], [], []>} : vector<4x64xf32>, vector<64x128xf32>, vector<4x128xf32> -> vector<4x128xf32>
    %363 = arith.addf %359, %362 : vector<4x128xf32>
    %c19 = arith.constant 19 : index
    %c0_353 = arith.constant 0 : index
    %364 = vector.load %arg12[%c19, %c0_353] : memref<36x64xf32, #tpu.memory_space<vmem>>, vector<4x64xf32>
    %c448_354 = arith.constant 448 : index
    %c0_355 = arith.constant 0 : index
    %365 = vector.load %arg6[%c448_354, %c0_355] : memref<576x128xf32, #tpu.memory_space<vmem>>, vector<64x128xf32>
    %cst_356 = arith.constant dense<0.000000e+00> : vector<4x128xf32>
    %366 = tpu.matmul %364, %365, %cst_356 {dimension_numbers = #tpu.dot_dimension_numbers<[1], [0], [0], [1], [0, 0, 1, 1], [], []>} : vector<4x64xf32>, vector<64x128xf32>, vector<4x128xf32> -> vector<4x128xf32>
    %367 = arith.addf %363, %366 : vector<4x128xf32>
    %c20_357 = arith.constant 20 : index
    %c0_358 = arith.constant 0 : index
    %368 = vector.load %arg12[%c20_357, %c0_358] : memref<36x64xf32, #tpu.memory_space<vmem>>, vector<4x64xf32>
    %c512_359 = arith.constant 512 : index
    %c0_360 = arith.constant 0 : index
    %369 = vector.load %arg6[%c512_359, %c0_360] : memref<576x128xf32, #tpu.memory_space<vmem>>, vector<64x128xf32>
    %cst_361 = arith.constant dense<0.000000e+00> : vector<4x128xf32>
    %370 = tpu.matmul %368, %369, %cst_361 {dimension_numbers = #tpu.dot_dimension_numbers<[1], [0], [0], [1], [0, 0, 1, 1], [], []>} : vector<4x64xf32>, vector<64x128xf32>, vector<4x128xf32> -> vector<4x128xf32>
    %371 = arith.addf %367, %370 : vector<4x128xf32>
    %c0_362 = arith.constant 0 : index
    %c0_363 = arith.constant 0 : index
    %372 = vector.load %arg7[%c0_362, %c0_363] : memref<1x128xf32, #tpu.memory_space<vmem>>, vector<1x128xf32>
    %373 = vector.broadcast %372 : vector<1x128xf32> to vector<4x128xf32>
    %374 = arith.addf %371, %373 : vector<4x128xf32>
    %cst_364 = arith.constant 0.000000e+00 : f32
    %375 = vector.broadcast %cst_364 : f32 to vector<4x128xf32>
    %376 = arith.cmpf ogt, %374, %375 : vector<4x128xf32>
    %cst_365 = arith.constant 0.00999999977 : f32
    %377 = vector.broadcast %cst_365 : f32 to vector<4x128xf32>
    %378 = arith.mulf %377, %374 : vector<4x128xf32>
    %379 = arith.select %376, %374, %378 : vector<4x128xi1>, vector<4x128xf32>
    %c4 = arith.constant 4 : index
    %c0_366 = arith.constant 0 : index
    %380 = vector.load %arg13[%c4, %c0_366] : memref<16x128xf32, #tpu.memory_space<vmem>>, vector<4x128xf32>
    tpu.vector_store %arg13[%c4, %c0_366], %379 {strides = array<i32>} : memref<16x128xf32, #tpu.memory_space<vmem>>, vector<4x128xf32>,
    %cst_367 = arith.constant 0.000000e+00 : f32
    %381 = vector.broadcast %cst_367 : f32 to vector<4x128xf32>
    %c12_368 = arith.constant 12 : index
    %c0_369 = arith.constant 0 : index
    %382 = vector.load %arg12[%c12_368, %c0_369] : memref<36x64xf32, #tpu.memory_space<vmem>>, vector<4x64xf32>
    %c0_370 = arith.constant 0 : index
    %c0_371 = arith.constant 0 : index
    %383 = vector.load %arg6[%c0_370, %c0_371] : memref<576x128xf32, #tpu.memory_space<vmem>>, vector<64x128xf32>
    %cst_372 = arith.constant dense<0.000000e+00> : vector<4x128xf32>
    %384 = tpu.matmul %382, %383, %cst_372 {dimension_numbers = #tpu.dot_dimension_numbers<[1], [0], [0], [1], [0, 0, 1, 1], [], []>} : vector<4x64xf32>, vector<64x128xf32>, vector<4x128xf32> -> vector<4x128xf32>
    %385 = arith.addf %381, %384 : vector<4x128xf32>
    %c13_373 = arith.constant 13 : index
    %c0_374 = arith.constant 0 : index
    %386 = vector.load %arg12[%c13_373, %c0_374] : memref<36x64xf32, #tpu.memory_space<vmem>>, vector<4x64xf32>
    %c64_375 = arith.constant 64 : index
    %c0_376 = arith.constant 0 : index
    %387 = vector.load %arg6[%c64_375, %c0_376] : memref<576x128xf32, #tpu.memory_space<vmem>>, vector<64x128xf32>
    %cst_377 = arith.constant dense<0.000000e+00> : vector<4x128xf32>
    %388 = tpu.matmul %386, %387, %cst_377 {dimension_numbers = #tpu.dot_dimension_numbers<[1], [0], [0], [1], [0, 0, 1, 1], [], []>} : vector<4x64xf32>, vector<64x128xf32>, vector<4x128xf32> -> vector<4x128xf32>
    %389 = arith.addf %385, %388 : vector<4x128xf32>
    %c14_378 = arith.constant 14 : index
    %c0_379 = arith.constant 0 : index
    %390 = vector.load %arg12[%c14_378, %c0_379] : memref<36x64xf32, #tpu.memory_space<vmem>>, vector<4x64xf32>
    %c128_380 = arith.constant 128 : index
    %c0_381 = arith.constant 0 : index
    %391 = vector.load %arg6[%c128_380, %c0_381] : memref<576x128xf32, #tpu.memory_space<vmem>>, vector<64x128xf32>
    %cst_382 = arith.constant dense<0.000000e+00> : vector<4x128xf32>
    %392 = tpu.matmul %390, %391, %cst_382 {dimension_numbers = #tpu.dot_dimension_numbers<[1], [0], [0], [1], [0, 0, 1, 1], [], []>} : vector<4x64xf32>, vector<64x128xf32>, vector<4x128xf32> -> vector<4x128xf32>
    %393 = arith.addf %389, %392 : vector<4x128xf32>
    %c18_383 = arith.constant 18 : index
    %c0_384 = arith.constant 0 : index
    %394 = vector.load %arg12[%c18_383, %c0_384] : memref<36x64xf32, #tpu.memory_space<vmem>>, vector<4x64xf32>
    %c192_385 = arith.constant 192 : index
    %c0_386 = arith.constant 0 : index
    %395 = vector.load %arg6[%c192_385, %c0_386] : memref<576x128xf32, #tpu.memory_space<vmem>>, vector<64x128xf32>
    %cst_387 = arith.constant dense<0.000000e+00> : vector<4x128xf32>
    %396 = tpu.matmul %394, %395, %cst_387 {dimension_numbers = #tpu.dot_dimension_numbers<[1], [0], [0], [1], [0, 0, 1, 1], [], []>} : vector<4x64xf32>, vector<64x128xf32>, vector<4x128xf32> -> vector<4x128xf32>
    %397 = arith.addf %393, %396 : vector<4x128xf32>
    %c19_388 = arith.constant 19 : index
    %c0_389 = arith.constant 0 : index
    %398 = vector.load %arg12[%c19_388, %c0_389] : memref<36x64xf32, #tpu.memory_space<vmem>>, vector<4x64xf32>
    %c256_390 = arith.constant 256 : index
    %c0_391 = arith.constant 0 : index
    %399 = vector.load %arg6[%c256_390, %c0_391] : memref<576x128xf32, #tpu.memory_space<vmem>>, vector<64x128xf32>
    %cst_392 = arith.constant dense<0.000000e+00> : vector<4x128xf32>
    %400 = tpu.matmul %398, %399, %cst_392 {dimension_numbers = #tpu.dot_dimension_numbers<[1], [0], [0], [1], [0, 0, 1, 1], [], []>} : vector<4x64xf32>, vector<64x128xf32>, vector<4x128xf32> -> vector<4x128xf32>
    %401 = arith.addf %397, %400 : vector<4x128xf32>
    %c20_393 = arith.constant 20 : index
    %c0_394 = arith.constant 0 : index
    %402 = vector.load %arg12[%c20_393, %c0_394] : memref<36x64xf32, #tpu.memory_space<vmem>>, vector<4x64xf32>
    %c320_395 = arith.constant 320 : index
    %c0_396 = arith.constant 0 : index
    %403 = vector.load %arg6[%c320_395, %c0_396] : memref<576x128xf32, #tpu.memory_space<vmem>>, vector<64x128xf32>
    %cst_397 = arith.constant dense<0.000000e+00> : vector<4x128xf32>
    %404 = tpu.matmul %402, %403, %cst_397 {dimension_numbers = #tpu.dot_dimension_numbers<[1], [0], [0], [1], [0, 0, 1, 1], [], []>} : vector<4x64xf32>, vector<64x128xf32>, vector<4x128xf32> -> vector<4x128xf32>
    %405 = arith.addf %401, %404 : vector<4x128xf32>
    %c24_398 = arith.constant 24 : index
    %c0_399 = arith.constant 0 : index
    %406 = vector.load %arg12[%c24_398, %c0_399] : memref<36x64xf32, #tpu.memory_space<vmem>>, vector<4x64xf32>
    %c384_400 = arith.constant 384 : index
    %c0_401 = arith.constant 0 : index
    %407 = vector.load %arg6[%c384_400, %c0_401] : memref<576x128xf32, #tpu.memory_space<vmem>>, vector<64x128xf32>
    %cst_402 = arith.constant dense<0.000000e+00> : vector<4x128xf32>
    %408 = tpu.matmul %406, %407, %cst_402 {dimension_numbers = #tpu.dot_dimension_numbers<[1], [0], [0], [1], [0, 0, 1, 1], [], []>} : vector<4x64xf32>, vector<64x128xf32>, vector<4x128xf32> -> vector<4x128xf32>
    %409 = arith.addf %405, %408 : vector<4x128xf32>
    %c25 = arith.constant 25 : index
    %c0_403 = arith.constant 0 : index
    %410 = vector.load %arg12[%c25, %c0_403] : memref<36x64xf32, #tpu.memory_space<vmem>>, vector<4x64xf32>
    %c448_404 = arith.constant 448 : index
    %c0_405 = arith.constant 0 : index
    %411 = vector.load %arg6[%c448_404, %c0_405] : memref<576x128xf32, #tpu.memory_space<vmem>>, vector<64x128xf32>
    %cst_406 = arith.constant dense<0.000000e+00> : vector<4x128xf32>
    %412 = tpu.matmul %410, %411, %cst_406 {dimension_numbers = #tpu.dot_dimension_numbers<[1], [0], [0], [1], [0, 0, 1, 1], [], []>} : vector<4x64xf32>, vector<64x128xf32>, vector<4x128xf32> -> vector<4x128xf32>
    %413 = arith.addf %409, %412 : vector<4x128xf32>
    %c26_407 = arith.constant 26 : index
    %c0_408 = arith.constant 0 : index
    %414 = vector.load %arg12[%c26_407, %c0_408] : memref<36x64xf32, #tpu.memory_space<vmem>>, vector<4x64xf32>
    %c512_409 = arith.constant 512 : index
    %c0_410 = arith.constant 0 : index
    %415 = vector.load %arg6[%c512_409, %c0_410] : memref<576x128xf32, #tpu.memory_space<vmem>>, vector<64x128xf32>
    %cst_411 = arith.constant dense<0.000000e+00> : vector<4x128xf32>
    %416 = tpu.matmul %414, %415, %cst_411 {dimension_numbers = #tpu.dot_dimension_numbers<[1], [0], [0], [1], [0, 0, 1, 1], [], []>} : vector<4x64xf32>, vector<64x128xf32>, vector<4x128xf32> -> vector<4x128xf32>
    %417 = arith.addf %413, %416 : vector<4x128xf32>
    %c0_412 = arith.constant 0 : index
    %c0_413 = arith.constant 0 : index
    %418 = vector.load %arg7[%c0_412, %c0_413] : memref<1x128xf32, #tpu.memory_space<vmem>>, vector<1x128xf32>
    %419 = vector.broadcast %418 : vector<1x128xf32> to vector<4x128xf32>
    %420 = arith.addf %417, %419 : vector<4x128xf32>
    %cst_414 = arith.constant 0.000000e+00 : f32
    %421 = vector.broadcast %cst_414 : f32 to vector<4x128xf32>
    %422 = arith.cmpf ogt, %420, %421 : vector<4x128xf32>
    %cst_415 = arith.constant 0.00999999977 : f32
    %423 = vector.broadcast %cst_415 : f32 to vector<4x128xf32>
    %424 = arith.mulf %423, %420 : vector<4x128xf32>
    %425 = arith.select %422, %420, %424 : vector<4x128xi1>, vector<4x128xf32>
    %c8_416 = arith.constant 8 : index
    %c0_417 = arith.constant 0 : index
    %426 = vector.load %arg13[%c8_416, %c0_417] : memref<16x128xf32, #tpu.memory_space<vmem>>, vector<4x128xf32>
    tpu.vector_store %arg13[%c8_416, %c0_417], %425 {strides = array<i32>} : memref<16x128xf32, #tpu.memory_space<vmem>>, vector<4x128xf32>,
    %cst_418 = arith.constant 0.000000e+00 : f32
    %427 = vector.broadcast %cst_418 : f32 to vector<4x128xf32>
    %c18_419 = arith.constant 18 : index
    %c0_420 = arith.constant 0 : index
    %428 = vector.load %arg12[%c18_419, %c0_420] : memref<36x64xf32, #tpu.memory_space<vmem>>, vector<4x64xf32>
    %c0_421 = arith.constant 0 : index
    %c0_422 = arith.constant 0 : index
    %429 = vector.load %arg6[%c0_421, %c0_422] : memref<576x128xf32, #tpu.memory_space<vmem>>, vector<64x128xf32>
    %cst_423 = arith.constant dense<0.000000e+00> : vector<4x128xf32>
    %430 = tpu.matmul %428, %429, %cst_423 {dimension_numbers = #tpu.dot_dimension_numbers<[1], [0], [0], [1], [0, 0, 1, 1], [], []>} : vector<4x64xf32>, vector<64x128xf32>, vector<4x128xf32> -> vector<4x128xf32>
    %431 = arith.addf %427, %430 : vector<4x128xf32>
    %c19_424 = arith.constant 19 : index
    %c0_425 = arith.constant 0 : index
    %432 = vector.load %arg12[%c19_424, %c0_425] : memref<36x64xf32, #tpu.memory_space<vmem>>, vector<4x64xf32>
    %c64_426 = arith.constant 64 : index
    %c0_427 = arith.constant 0 : index
    %433 = vector.load %arg6[%c64_426, %c0_427] : memref<576x128xf32, #tpu.memory_space<vmem>>, vector<64x128xf32>
    %cst_428 = arith.constant dense<0.000000e+00> : vector<4x128xf32>
    %434 = tpu.matmul %432, %433, %cst_428 {dimension_numbers = #tpu.dot_dimension_numbers<[1], [0], [0], [1], [0, 0, 1, 1], [], []>} : vector<4x64xf32>, vector<64x128xf32>, vector<4x128xf32> -> vector<4x128xf32>
    %435 = arith.addf %431, %434 : vector<4x128xf32>
    %c20_429 = arith.constant 20 : index
    %c0_430 = arith.constant 0 : index
    %436 = vector.load %arg12[%c20_429, %c0_430] : memref<36x64xf32, #tpu.memory_space<vmem>>, vector<4x64xf32>
    %c128_431 = arith.constant 128 : index
    %c0_432 = arith.constant 0 : index
    %437 = vector.load %arg6[%c128_431, %c0_432] : memref<576x128xf32, #tpu.memory_space<vmem>>, vector<64x128xf32>
    %cst_433 = arith.constant dense<0.000000e+00> : vector<4x128xf32>
    %438 = tpu.matmul %436, %437, %cst_433 {dimension_numbers = #tpu.dot_dimension_numbers<[1], [0], [0], [1], [0, 0, 1, 1], [], []>} : vector<4x64xf32>, vector<64x128xf32>, vector<4x128xf32> -> vector<4x128xf32>
    %439 = arith.addf %435, %438 : vector<4x128xf32>
    %c24_434 = arith.constant 24 : index
    %c0_435 = arith.constant 0 : index
    %440 = vector.load %arg12[%c24_434, %c0_435] : memref<36x64xf32, #tpu.memory_space<vmem>>, vector<4x64xf32>
    %c192_436 = arith.constant 192 : index
    %c0_437 = arith.constant 0 : index
    %441 = vector.load %arg6[%c192_436, %c0_437] : memref<576x128xf32, #tpu.memory_space<vmem>>, vector<64x128xf32>
    %cst_438 = arith.constant dense<0.000000e+00> : vector<4x128xf32>
    %442 = tpu.matmul %440, %441, %cst_438 {dimension_numbers = #tpu.dot_dimension_numbers<[1], [0], [0], [1], [0, 0, 1, 1], [], []>} : vector<4x64xf32>, vector<64x128xf32>, vector<4x128xf32> -> vector<4x128xf32>
    %443 = arith.addf %439, %442 : vector<4x128xf32>
    %c25_439 = arith.constant 25 : index
    %c0_440 = arith.constant 0 : index
    %444 = vector.load %arg12[%c25_439, %c0_440] : memref<36x64xf32, #tpu.memory_space<vmem>>, vector<4x64xf32>
    %c256_441 = arith.constant 256 : index
    %c0_442 = arith.constant 0 : index
    %445 = vector.load %arg6[%c256_441, %c0_442] : memref<576x128xf32, #tpu.memory_space<vmem>>, vector<64x128xf32>
    %cst_443 = arith.constant dense<0.000000e+00> : vector<4x128xf32>
    %446 = tpu.matmul %444, %445, %cst_443 {dimension_numbers = #tpu.dot_dimension_numbers<[1], [0], [0], [1], [0, 0, 1, 1], [], []>} : vector<4x64xf32>, vector<64x128xf32>, vector<4x128xf32> -> vector<4x128xf32>
    %447 = arith.addf %443, %446 : vector<4x128xf32>
    %c26_444 = arith.constant 26 : index
    %c0_445 = arith.constant 0 : index
    %448 = vector.load %arg12[%c26_444, %c0_445] : memref<36x64xf32, #tpu.memory_space<vmem>>, vector<4x64xf32>
    %c320_446 = arith.constant 320 : index
    %c0_447 = arith.constant 0 : index
    %449 = vector.load %arg6[%c320_446, %c0_447] : memref<576x128xf32, #tpu.memory_space<vmem>>, vector<64x128xf32>
    %cst_448 = arith.constant dense<0.000000e+00> : vector<4x128xf32>
    %450 = tpu.matmul %448, %449, %cst_448 {dimension_numbers = #tpu.dot_dimension_numbers<[1], [0], [0], [1], [0, 0, 1, 1], [], []>} : vector<4x64xf32>, vector<64x128xf32>, vector<4x128xf32> -> vector<4x128xf32>
    %451 = arith.addf %447, %450 : vector<4x128xf32>
    %c30_449 = arith.constant 30 : index
    %c0_450 = arith.constant 0 : index
    %452 = vector.load %arg12[%c30_449, %c0_450] : memref<36x64xf32, #tpu.memory_space<vmem>>, vector<4x64xf32>
    %c384_451 = arith.constant 384 : index
    %c0_452 = arith.constant 0 : index
    %453 = vector.load %arg6[%c384_451, %c0_452] : memref<576x128xf32, #tpu.memory_space<vmem>>, vector<64x128xf32>
    %cst_453 = arith.constant dense<0.000000e+00> : vector<4x128xf32>
    %454 = tpu.matmul %452, %453, %cst_453 {dimension_numbers = #tpu.dot_dimension_numbers<[1], [0], [0], [1], [0, 0, 1, 1], [], []>} : vector<4x64xf32>, vector<64x128xf32>, vector<4x128xf32> -> vector<4x128xf32>
    %455 = arith.addf %451, %454 : vector<4x128xf32>
    %c31 = arith.constant 31 : index
    %c0_454 = arith.constant 0 : index
    %456 = vector.load %arg12[%c31, %c0_454] : memref<36x64xf32, #tpu.memory_space<vmem>>, vector<4x64xf32>
    %c448_455 = arith.constant 448 : index
    %c0_456 = arith.constant 0 : index
    %457 = vector.load %arg6[%c448_455, %c0_456] : memref<576x128xf32, #tpu.memory_space<vmem>>, vector<64x128xf32>
    %cst_457 = arith.constant dense<0.000000e+00> : vector<4x128xf32>
    %458 = tpu.matmul %456, %457, %cst_457 {dimension_numbers = #tpu.dot_dimension_numbers<[1], [0], [0], [1], [0, 0, 1, 1], [], []>} : vector<4x64xf32>, vector<64x128xf32>, vector<4x128xf32> -> vector<4x128xf32>
    %459 = arith.addf %455, %458 : vector<4x128xf32>
    %c32_458 = arith.constant 32 : index
    %c0_459 = arith.constant 0 : index
    %460 = vector.load %arg12[%c32_458, %c0_459] : memref<36x64xf32, #tpu.memory_space<vmem>>, vector<4x64xf32>
    %c512_460 = arith.constant 512 : index
    %c0_461 = arith.constant 0 : index
    %461 = vector.load %arg6[%c512_460, %c0_461] : memref<576x128xf32, #tpu.memory_space<vmem>>, vector<64x128xf32>
    %cst_462 = arith.constant dense<0.000000e+00> : vector<4x128xf32>
    %462 = tpu.matmul %460, %461, %cst_462 {dimension_numbers = #tpu.dot_dimension_numbers<[1], [0], [0], [1], [0, 0, 1, 1], [], []>} : vector<4x64xf32>, vector<64x128xf32>, vector<4x128xf32> -> vector<4x128xf32>
    %463 = arith.addf %459, %462 : vector<4x128xf32>
    %c0_463 = arith.constant 0 : index
    %c0_464 = arith.constant 0 : index
    %464 = vector.load %arg7[%c0_463, %c0_464] : memref<1x128xf32, #tpu.memory_space<vmem>>, vector<1x128xf32>
    %465 = vector.broadcast %464 : vector<1x128xf32> to vector<4x128xf32>
    %466 = arith.addf %463, %465 : vector<4x128xf32>
    %cst_465 = arith.constant 0.000000e+00 : f32
    %467 = vector.broadcast %cst_465 : f32 to vector<4x128xf32>
    %468 = arith.cmpf ogt, %466, %467 : vector<4x128xf32>
    %cst_466 = arith.constant 0.00999999977 : f32
    %469 = vector.broadcast %cst_466 : f32 to vector<4x128xf32>
    %470 = arith.mulf %469, %466 : vector<4x128xf32>
    %471 = arith.select %468, %466, %470 : vector<4x128xi1>, vector<4x128xf32>
    %c12_467 = arith.constant 12 : index
    %c0_468 = arith.constant 0 : index
    %472 = vector.load %arg13[%c12_467, %c0_468] : memref<16x128xf32, #tpu.memory_space<vmem>>, vector<4x128xf32>
    tpu.vector_store %arg13[%c12_467, %c0_468], %471 {strides = array<i32>} : memref<16x128xf32, #tpu.memory_space<vmem>>, vector<4x128xf32>,
    %cst_469 = arith.constant 0.000000e+00 : f32
    %473 = vector.broadcast %cst_469 : f32 to vector<1x128xf32>
    %cst_470 = arith.constant 0.000000e+00 : f32
    %474 = vector.broadcast %cst_470 : f32 to vector<2x128xf32>
    %c0_471 = arith.constant 0 : index
    %c0_472 = arith.constant 0 : index
    %475 = vector.load %arg13[%c0_471, %c0_472] : memref<16x128xf32, #tpu.memory_space<vmem>>, vector<2x128xf32>
    %c0_473 = arith.constant 0 : index
    %c0_474 = arith.constant 0 : index
    %476 = vector.load %arg8[%c0_473, %c0_474] : memref<1152x128xf32, #tpu.memory_space<vmem>>, vector<128x128xf32>
    %cst_475 = arith.constant dense<0.000000e+00> : vector<2x128xf32>
    %477 = tpu.matmul %475, %476, %cst_475 {dimension_numbers = #tpu.dot_dimension_numbers<[1], [0], [0], [1], [0, 0, 1, 1], [], []>} : vector<2x128xf32>, vector<128x128xf32>, vector<2x128xf32> -> vector<2x128xf32>
    %478 = arith.addf %474, %477 : vector<2x128xf32>
    %c1_476 = arith.constant 1 : index
    %c0_477 = arith.constant 0 : index
    %479 = vector.load %arg13[%c1_476, %c0_477] : memref<16x128xf32, #tpu.memory_space<vmem>>, vector<2x128xf32>
    %c128_478 = arith.constant 128 : index
    %c0_479 = arith.constant 0 : index
    %480 = vector.load %arg8[%c128_478, %c0_479] : memref<1152x128xf32, #tpu.memory_space<vmem>>, vector<128x128xf32>
    %cst_480 = arith.constant dense<0.000000e+00> : vector<2x128xf32>
    %481 = tpu.matmul %479, %480, %cst_480 {dimension_numbers = #tpu.dot_dimension_numbers<[1], [0], [0], [1], [0, 0, 1, 1], [], []>} : vector<2x128xf32>, vector<128x128xf32>, vector<2x128xf32> -> vector<2x128xf32>
    %482 = arith.addf %478, %481 : vector<2x128xf32>
    %c2_481 = arith.constant 2 : index
    %c0_482 = arith.constant 0 : index
    %483 = vector.load %arg13[%c2_481, %c0_482] : memref<16x128xf32, #tpu.memory_space<vmem>>, vector<2x128xf32>
    %c256_483 = arith.constant 256 : index
    %c0_484 = arith.constant 0 : index
    %484 = vector.load %arg8[%c256_483, %c0_484] : memref<1152x128xf32, #tpu.memory_space<vmem>>, vector<128x128xf32>
    %cst_485 = arith.constant dense<0.000000e+00> : vector<2x128xf32>
    %485 = tpu.matmul %483, %484, %cst_485 {dimension_numbers = #tpu.dot_dimension_numbers<[1], [0], [0], [1], [0, 0, 1, 1], [], []>} : vector<2x128xf32>, vector<128x128xf32>, vector<2x128xf32> -> vector<2x128xf32>
    %486 = arith.addf %482, %485 : vector<2x128xf32>
    %c4_486 = arith.constant 4 : index
    %c0_487 = arith.constant 0 : index
    %487 = vector.load %arg13[%c4_486, %c0_487] : memref<16x128xf32, #tpu.memory_space<vmem>>, vector<2x128xf32>
    %c384_488 = arith.constant 384 : index
    %c0_489 = arith.constant 0 : index
    %488 = vector.load %arg8[%c384_488, %c0_489] : memref<1152x128xf32, #tpu.memory_space<vmem>>, vector<128x128xf32>
    %cst_490 = arith.constant dense<0.000000e+00> : vector<2x128xf32>
    %489 = tpu.matmul %487, %488, %cst_490 {dimension_numbers = #tpu.dot_dimension_numbers<[1], [0], [0], [1], [0, 0, 1, 1], [], []>} : vector<2x128xf32>, vector<128x128xf32>, vector<2x128xf32> -> vector<2x128xf32>
    %490 = arith.addf %486, %489 : vector<2x128xf32>
    %c5 = arith.constant 5 : index
    %c0_491 = arith.constant 0 : index
    %491 = vector.load %arg13[%c5, %c0_491] : memref<16x128xf32, #tpu.memory_space<vmem>>, vector<2x128xf32>
    %c512_492 = arith.constant 512 : index
    %c0_493 = arith.constant 0 : index
    %492 = vector.load %arg8[%c512_492, %c0_493] : memref<1152x128xf32, #tpu.memory_space<vmem>>, vector<128x128xf32>
    %cst_494 = arith.constant dense<0.000000e+00> : vector<2x128xf32>
    %493 = tpu.matmul %491, %492, %cst_494 {dimension_numbers = #tpu.dot_dimension_numbers<[1], [0], [0], [1], [0, 0, 1, 1], [], []>} : vector<2x128xf32>, vector<128x128xf32>, vector<2x128xf32> -> vector<2x128xf32>
    %494 = arith.addf %490, %493 : vector<2x128xf32>
    %c6_495 = arith.constant 6 : index
    %c0_496 = arith.constant 0 : index
    %495 = vector.load %arg13[%c6_495, %c0_496] : memref<16x128xf32, #tpu.memory_space<vmem>>, vector<2x128xf32>
    %c640 = arith.constant 640 : index
    %c0_497 = arith.constant 0 : index
    %496 = vector.load %arg8[%c640, %c0_497] : memref<1152x128xf32, #tpu.memory_space<vmem>>, vector<128x128xf32>
    %cst_498 = arith.constant dense<0.000000e+00> : vector<2x128xf32>
    %497 = tpu.matmul %495, %496, %cst_498 {dimension_numbers = #tpu.dot_dimension_numbers<[1], [0], [0], [1], [0, 0, 1, 1], [], []>} : vector<2x128xf32>, vector<128x128xf32>, vector<2x128xf32> -> vector<2x128xf32>
    %498 = arith.addf %494, %497 : vector<2x128xf32>
    %c8_499 = arith.constant 8 : index
    %c0_500 = arith.constant 0 : index
    %499 = vector.load %arg13[%c8_499, %c0_500] : memref<16x128xf32, #tpu.memory_space<vmem>>, vector<2x128xf32>
    %c768 = arith.constant 768 : index
    %c0_501 = arith.constant 0 : index
    %500 = vector.load %arg8[%c768, %c0_501] : memref<1152x128xf32, #tpu.memory_space<vmem>>, vector<128x128xf32>
    %cst_502 = arith.constant dense<0.000000e+00> : vector<2x128xf32>
    %501 = tpu.matmul %499, %500, %cst_502 {dimension_numbers = #tpu.dot_dimension_numbers<[1], [0], [0], [1], [0, 0, 1, 1], [], []>} : vector<2x128xf32>, vector<128x128xf32>, vector<2x128xf32> -> vector<2x128xf32>
    %502 = arith.addf %498, %501 : vector<2x128xf32>
    %c9 = arith.constant 9 : index
    %c0_503 = arith.constant 0 : index
    %503 = vector.load %arg13[%c9, %c0_503] : memref<16x128xf32, #tpu.memory_space<vmem>>, vector<2x128xf32>
    %c896 = arith.constant 896 : index
    %c0_504 = arith.constant 0 : index
    %504 = vector.load %arg8[%c896, %c0_504] : memref<1152x128xf32, #tpu.memory_space<vmem>>, vector<128x128xf32>
    %cst_505 = arith.constant dense<0.000000e+00> : vector<2x128xf32>
    %505 = tpu.matmul %503, %504, %cst_505 {dimension_numbers = #tpu.dot_dimension_numbers<[1], [0], [0], [1], [0, 0, 1, 1], [], []>} : vector<2x128xf32>, vector<128x128xf32>, vector<2x128xf32> -> vector<2x128xf32>
    %506 = arith.addf %502, %505 : vector<2x128xf32>
    %c10 = arith.constant 10 : index
    %c0_506 = arith.constant 0 : index
    %507 = vector.load %arg13[%c10, %c0_506] : memref<16x128xf32, #tpu.memory_space<vmem>>, vector<2x128xf32>
    %c1024 = arith.constant 1024 : index
    %c0_507 = arith.constant 0 : index
    %508 = vector.load %arg8[%c1024, %c0_507] : memref<1152x128xf32, #tpu.memory_space<vmem>>, vector<128x128xf32>
    %cst_508 = arith.constant dense<0.000000e+00> : vector<2x128xf32>
    %509 = tpu.matmul %507, %508, %cst_508 {dimension_numbers = #tpu.dot_dimension_numbers<[1], [0], [0], [1], [0, 0, 1, 1], [], []>} : vector<2x128xf32>, vector<128x128xf32>, vector<2x128xf32> -> vector<2x128xf32>
    %510 = arith.addf %506, %509 : vector<2x128xf32>
    %cst_509 = arith.constant dense<0.000000e+00> : vector<128xf32>
    %511 = vector.multi_reduction <add>, %510, %cst_509 [0] : vector<2x128xf32> to vector<128xf32>
    %512 = vector.shape_cast %511 : vector<128xf32> to vector<1x128xf32>
    %513 = arith.addf %473, %512 : vector<1x128xf32>
    %cst_510 = arith.constant 0.000000e+00 : f32
    %514 = vector.broadcast %cst_510 : f32 to vector<2x128xf32>
    %c4_511 = arith.constant 4 : index
    %c0_512 = arith.constant 0 : index
    %515 = vector.load %arg13[%c4_511, %c0_512] : memref<16x128xf32, #tpu.memory_space<vmem>>, vector<2x128xf32>
    %c0_513 = arith.constant 0 : index
    %c0_514 = arith.constant 0 : index
    %516 = vector.load %arg8[%c0_513, %c0_514] : memref<1152x128xf32, #tpu.memory_space<vmem>>, vector<128x128xf32>
    %cst_515 = arith.constant dense<0.000000e+00> : vector<2x128xf32>
    %517 = tpu.matmul %515, %516, %cst_515 {dimension_numbers = #tpu.dot_dimension_numbers<[1], [0], [0], [1], [0, 0, 1, 1], [], []>} : vector<2x128xf32>, vector<128x128xf32>, vector<2x128xf32> -> vector<2x128xf32>
    %518 = arith.addf %514, %517 : vector<2x128xf32>
    %c5_516 = arith.constant 5 : index
    %c0_517 = arith.constant 0 : index
    %519 = vector.load %arg13[%c5_516, %c0_517] : memref<16x128xf32, #tpu.memory_space<vmem>>, vector<2x128xf32>
    %c128_518 = arith.constant 128 : index
    %c0_519 = arith.constant 0 : index
    %520 = vector.load %arg8[%c128_518, %c0_519] : memref<1152x128xf32, #tpu.memory_space<vmem>>, vector<128x128xf32>
    %cst_520 = arith.constant dense<0.000000e+00> : vector<2x128xf32>
    %521 = tpu.matmul %519, %520, %cst_520 {dimension_numbers = #tpu.dot_dimension_numbers<[1], [0], [0], [1], [0, 0, 1, 1], [], []>} : vector<2x128xf32>, vector<128x128xf32>, vector<2x128xf32> -> vector<2x128xf32>
    %522 = arith.addf %518, %521 : vector<2x128xf32>
    %c6_521 = arith.constant 6 : index
    %c0_522 = arith.constant 0 : index
    %523 = vector.load %arg13[%c6_521, %c0_522] : memref<16x128xf32, #tpu.memory_space<vmem>>, vector<2x128xf32>
    %c256_523 = arith.constant 256 : index
    %c0_524 = arith.constant 0 : index
    %524 = vector.load %arg8[%c256_523, %c0_524] : memref<1152x128xf32, #tpu.memory_space<vmem>>, vector<128x128xf32>
    %cst_525 = arith.constant dense<0.000000e+00> : vector<2x128xf32>
    %525 = tpu.matmul %523, %524, %cst_525 {dimension_numbers = #tpu.dot_dimension_numbers<[1], [0], [0], [1], [0, 0, 1, 1], [], []>} : vector<2x128xf32>, vector<128x128xf32>, vector<2x128xf32> -> vector<2x128xf32>
    %526 = arith.addf %522, %525 : vector<2x128xf32>
    %c8_526 = arith.constant 8 : index
    %c0_527 = arith.constant 0 : index
    %527 = vector.load %arg13[%c8_526, %c0_527] : memref<16x128xf32, #tpu.memory_space<vmem>>, vector<2x128xf32>
    %c384_528 = arith.constant 384 : index
    %c0_529 = arith.constant 0 : index
    %528 = vector.load %arg8[%c384_528, %c0_529] : memref<1152x128xf32, #tpu.memory_space<vmem>>, vector<128x128xf32>
    %cst_530 = arith.constant dense<0.000000e+00> : vector<2x128xf32>
    %529 = tpu.matmul %527, %528, %cst_530 {dimension_numbers = #tpu.dot_dimension_numbers<[1], [0], [0], [1], [0, 0, 1, 1], [], []>} : vector<2x128xf32>, vector<128x128xf32>, vector<2x128xf32> -> vector<2x128xf32>
    %530 = arith.addf %526, %529 : vector<2x128xf32>
    %c9_531 = arith.constant 9 : index
    %c0_532 = arith.constant 0 : index
    %531 = vector.load %arg13[%c9_531, %c0_532] : memref<16x128xf32, #tpu.memory_space<vmem>>, vector<2x128xf32>
    %c512_533 = arith.constant 512 : index
    %c0_534 = arith.constant 0 : index
    %532 = vector.load %arg8[%c512_533, %c0_534] : memref<1152x128xf32, #tpu.memory_space<vmem>>, vector<128x128xf32>
    %cst_535 = arith.constant dense<0.000000e+00> : vector<2x128xf32>
    %533 = tpu.matmul %531, %532, %cst_535 {dimension_numbers = #tpu.dot_dimension_numbers<[1], [0], [0], [1], [0, 0, 1, 1], [], []>} : vector<2x128xf32>, vector<128x128xf32>, vector<2x128xf32> -> vector<2x128xf32>
    %534 = arith.addf %530, %533 : vector<2x128xf32>
    %c10_536 = arith.constant 10 : index
    %c0_537 = arith.constant 0 : index
    %535 = vector.load %arg13[%c10_536, %c0_537] : memref<16x128xf32, #tpu.memory_space<vmem>>, vector<2x128xf32>
    %c640_538 = arith.constant 640 : index
    %c0_539 = arith.constant 0 : index
    %536 = vector.load %arg8[%c640_538, %c0_539] : memref<1152x128xf32, #tpu.memory_space<vmem>>, vector<128x128xf32>
    %cst_540 = arith.constant dense<0.000000e+00> : vector<2x128xf32>
    %537 = tpu.matmul %535, %536, %cst_540 {dimension_numbers = #tpu.dot_dimension_numbers<[1], [0], [0], [1], [0, 0, 1, 1], [], []>} : vector<2x128xf32>, vector<128x128xf32>, vector<2x128xf32> -> vector<2x128xf32>
    %538 = arith.addf %534, %537 : vector<2x128xf32>
    %c12_541 = arith.constant 12 : index
    %c0_542 = arith.constant 0 : index
    %539 = vector.load %arg13[%c12_541, %c0_542] : memref<16x128xf32, #tpu.memory_space<vmem>>, vector<2x128xf32>
    %c768_543 = arith.constant 768 : index
    %c0_544 = arith.constant 0 : index
    %540 = vector.load %arg8[%c768_543, %c0_544] : memref<1152x128xf32, #tpu.memory_space<vmem>>, vector<128x128xf32>
    %cst_545 = arith.constant dense<0.000000e+00> : vector<2x128xf32>
    %541 = tpu.matmul %539, %540, %cst_545 {dimension_numbers = #tpu.dot_dimension_numbers<[1], [0], [0], [1], [0, 0, 1, 1], [], []>} : vector<2x128xf32>, vector<128x128xf32>, vector<2x128xf32> -> vector<2x128xf32>
    %542 = arith.addf %538, %541 : vector<2x128xf32>
    %c13_546 = arith.constant 13 : index
    %c0_547 = arith.constant 0 : index
    %543 = vector.load %arg13[%c13_546, %c0_547] : memref<16x128xf32, #tpu.memory_space<vmem>>, vector<2x128xf32>
    %c896_548 = arith.constant 896 : index
    %c0_549 = arith.constant 0 : index
    %544 = vector.load %arg8[%c896_548, %c0_549] : memref<1152x128xf32, #tpu.memory_space<vmem>>, vector<128x128xf32>
    %cst_550 = arith.constant dense<0.000000e+00> : vector<2x128xf32>
    %545 = tpu.matmul %543, %544, %cst_550 {dimension_numbers = #tpu.dot_dimension_numbers<[1], [0], [0], [1], [0, 0, 1, 1], [], []>} : vector<2x128xf32>, vector<128x128xf32>, vector<2x128xf32> -> vector<2x128xf32>
    %546 = arith.addf %542, %545 : vector<2x128xf32>
    %c14_551 = arith.constant 14 : index
    %c0_552 = arith.constant 0 : index
    %547 = vector.load %arg13[%c14_551, %c0_552] : memref<16x128xf32, #tpu.memory_space<vmem>>, vector<2x128xf32>
    %c1024_553 = arith.constant 1024 : index
    %c0_554 = arith.constant 0 : index
    %548 = vector.load %arg8[%c1024_553, %c0_554] : memref<1152x128xf32, #tpu.memory_space<vmem>>, vector<128x128xf32>
    %cst_555 = arith.constant dense<0.000000e+00> : vector<2x128xf32>
    %549 = tpu.matmul %547, %548, %cst_555 {dimension_numbers = #tpu.dot_dimension_numbers<[1], [0], [0], [1], [0, 0, 1, 1], [], []>} : vector<2x128xf32>, vector<128x128xf32>, vector<2x128xf32> -> vector<2x128xf32>
    %550 = arith.addf %546, %549 : vector<2x128xf32>
    %cst_556 = arith.constant dense<0.000000e+00> : vector<128xf32>
    %551 = vector.multi_reduction <add>, %550, %cst_556 [0] : vector<2x128xf32> to vector<128xf32>
    %552 = vector.shape_cast %551 : vector<128xf32> to vector<1x128xf32>
    %553 = arith.addf %513, %552 : vector<1x128xf32>
    %cst_557 = arith.constant 2.500000e-01 : f32
    %554 = vector.broadcast %cst_557 : f32 to vector<1x128xf32>
    %555 = arith.mulf %553, %554 : vector<1x128xf32>
    %c0_558 = arith.constant 0 : index
    %c0_559 = arith.constant 0 : index
    %556 = vector.load %arg9[%c0_558, %c0_559] : memref<1x128xf32, #tpu.memory_space<vmem>>, vector<1x128xf32>
    %557 = arith.addf %555, %556 : vector<1x128xf32>
    %c0_560 = arith.constant 0 : index
    %c0_561 = arith.constant 0 : index
    %c0_562 = arith.constant 0 : index
    %558 = vector.load %arg10[%c0_560, %c0_561, %c0_562] : memref<1x1x128xf32, #tpu.memory_space<vmem>>, vector<1x1x128xf32>
    %559 = vector.shape_cast %558 : vector<1x1x128xf32> to vector<1x128xf32>
    %560 = vector.shape_cast %557 : vector<1x128xf32> to vector<1x1x128xf32>
    tpu.vector_store %arg10[%c0_560, %c0_561, %c0_562], %560 {strides = array<i32>} : memref<1x1x128xf32, #tpu.memory_space<vmem>>, vector<1x1x128xf32>,
    return
  }
  func.func @transform_0(%arg0: i32) -> (i32, i32, i32) {
    %c0_i32 = arith.constant 0 : i32
    %c0_i32_0 = arith.constant 0 : i32
    %c0_i32_1 = arith.constant 0 : i32
    return %arg0, %c0_i32, %c0_i32_0 : i32, i32, i32
  }
  func.func @transform_1(%arg0: i32) -> (i32, i32) {
    %c0_i32 = arith.constant 0 : i32
    %c0_i32_0 = arith.constant 0 : i32
    %c0_i32_1 = arith.constant 0 : i32
    return %c0_i32, %c0_i32_0 : i32, i32
  }
  func.func @transform_2(%arg0: i32) -> (i32, i32) {
    %c0_i32 = arith.constant 0 : i32
    %c0_i32_0 = arith.constant 0 : i32
    %c0_i32_1 = arith.constant 0 : i32
    return %c0_i32, %c0_i32_0 : i32, i32
  }
  func.func @transform_3(%arg0: i32) -> (i32, i32) {
    %c0_i32 = arith.constant 0 : i32
    %c0_i32_0 = arith.constant 0 : i32
    %c0_i32_1 = arith.constant 0 : i32
    return %c0_i32, %c0_i32_0 : i32, i32
  }
  func.func @transform_4(%arg0: i32) -> (i32, i32) {
    %c0_i32 = arith.constant 0 : i32
    %c0_i32_0 = arith.constant 0 : i32
    %c0_i32_1 = arith.constant 0 : i32
    return %c0_i32, %c0_i32_0 : i32, i32
  }
  func.func @transform_5(%arg0: i32) -> (i32, i32) {
    %c0_i32 = arith.constant 0 : i32
    %c0_i32_0 = arith.constant 0 : i32
    %c0_i32_1 = arith.constant 0 : i32
    return %c0_i32, %c0_i32_0 : i32, i32
  }
  func.func @transform_6(%arg0: i32) -> (i32, i32) {
    %c0_i32 = arith.constant 0 : i32
    %c0_i32_0 = arith.constant 0 : i32
    %c0_i32_1 = arith.constant 0 : i32
    return %c0_i32, %c0_i32_0 : i32, i32
  }
  func.func @transform_7(%arg0: i32) -> (i32, i32) {
    %c0_i32 = arith.constant 0 : i32
    %c0_i32_0 = arith.constant 0 : i32
    %c0_i32_1 = arith.constant 0 : i32
    return %c0_i32, %c0_i32_0 : i32, i32
  }
  func.func @transform_8(%arg0: i32) -> (i32, i32) {
    %c0_i32 = arith.constant 0 : i32
    %c0_i32_0 = arith.constant 0 : i32
    %c0_i32_1 = arith.constant 0 : i32
    return %c0_i32, %c0_i32_0 : i32, i32
  }
  func.func @transform_9(%arg0: i32) -> (i32, i32, i32) {
    %c0_i32 = arith.constant 0 : i32
    %c0_i32_0 = arith.constant 0 : i32
    %c0_i32_1 = arith.constant 0 : i32
    return %arg0, %c0_i32, %c0_i32_0 : i32, i32, i32
  }
}

</mosaic_0001>

<llo_original>
// kernel: forward.1
$region0: #{forward.1}
  #allocation0 [shape = 'u32[]', space=smem, size = 0x4, offset = 0x4, fixed_abs, tag = 'smem constant byte address 0x4 - core index']
  #allocation1 [shape = 'u32[144,128]{1,0:T(1,128)}', space=vmem, size = 0x12000, scoped, tag = 'internal scratch']
  #allocation2 [shape = 'f32[169,32]{1,0:T(8,128)}', space=vmem, size = 0x16000, scoped, tag = 'scratch operand']
  #allocation3 [shape = 'f32[36,64]{1,0:T(8,128)}', space=vmem, size = 0x5000, scoped, tag = 'scratch operand']
  #allocation4 [shape = 'f32[16,128]{1,0:T(8,128)}', space=vmem, size = 0x2000, scoped, tag = 'scratch operand']
  %s0 = inlined_call_operand.vmem [shape: f32[2,169,9], index: 0, kind: input, shape index: {}]
  %s1 = inlined_call_operand.vmem [shape: f32[9,32], index: 1, kind: input, shape index: {}]
  %s2 = inlined_call_operand.vmem [shape: f32[1,32], index: 2, kind: input, shape index: {}]
  %s3 = inlined_call_operand.vmem [shape: f32[288,64], index: 3, kind: input, shape index: {}]
  %s4 = inlined_call_operand.vmem [shape: f32[1,64], index: 4, kind: input, shape index: {}]
  %s5 = inlined_call_operand.vmem [shape: f32[576,128], index: 5, kind: input, shape index: {}]
  %s6 = inlined_call_operand.vmem [shape: f32[1,128], index: 6, kind: input, shape index: {}]
  %s7 = inlined_call_operand.vmem [shape: f32[1152,128], index: 7, kind: input, shape index: {}]
  %s8 = inlined_call_operand.vmem [shape: f32[1,128], index: 8, kind: input, shape index: {}]
  %s9 = inlined_call_operand.hbm [shape: f32[2,1,128], index: 9, kind: output, shape index: {}]
  %s10 = sld [smem:[#allocation0]]
  $region69: #{forward.1} parent=0
    _
  %s12 = ssub.s32 1, %s10
  %s13 = scalar_select 0, %s12, %s10
  $region1: #{forward.1} parent=0
    #allocation5 [shape = 'u8[1024]{0}', space=vmem, size = 0x400, scoped, tag = 'output window, operand 0']
    #allocation6 [shape = 's32[2]{0}', space=sflag, size = 0x8, scoped, tag = 'scoped memory for forward.1']
    %14 = vsyncpa [#allocation6], 0
    %s15 = scalar_lea.sflag [#allocation6], 1
    %16 = vsyncpa %s15, 0
    loop: start=0, step=1, limit=4
    $region2: #{forward.1} parent=1 // loop_pre_header
      _
    $region3: #{forward.1} parent=1 // loop_header
      %s18 = sphi 0, %s22
      %p19 = scmp.ge.s32.totalorder %s18, 4
      %s28 = sphi 0, %s30
      %s31 = sphi 0, %s28
      %s32 = sphi 0, %s31
      %s48 = sphi 0, %s32
      %s52 = sphi 0, %s52
      %s54 = sphi 0, %s52
      %s55 = sphi 0, %s54
      %s69 = sphi 0, %s55
      %s73 = sphi 0, %s73
      %s75 = sphi 0, %s73
      %s76 = sphi 0, %s75
      %s90 = sphi 0, %s76
      %s94 = sphi 0, %s94
      %s96 = sphi 0, %s94
      %s97 = sphi 0, %s96
      %s111 = sphi 0, %s97
      %s115 = sphi 0, %s115
      %s117 = sphi 0, %s115
      %s118 = sphi 0, %s117
      %s132 = sphi 0, %s118
      %s136 = sphi 0, %s136
      %s138 = sphi 0, %s136
      %s139 = sphi 0, %s138
      %s153 = sphi 0, %s139
      %s157 = sphi 0, %s157
      %s159 = sphi 0, %s157
      %s160 = sphi 0, %s159
      %s174 = sphi 0, %s160
      %s178 = sphi 0, %s178
      %s180 = sphi 0, %s178
      %s181 = sphi 0, %s180
      %s195 = sphi 0, %s181
      %s199 = sphi 0, %s199
      %s201 = sphi 0, %s199
      %s202 = sphi 0, %s201
      %s216 = sphi 0, %s202
      %s222 = sphi 0, %s224
      %s225 = sphi 0, %s222
      %s226 = sphi 0, %s225
      %s242 = sphi 0, %s226
    $region4: #{forward.1} parent=1 // loop_header_branch
      %21 = sbr.rel (%p19) target = $region8
    $region5: #{forward.1} parent=1 // loop_body
      %s23 = ssub.s32 %s18, 1
      %s24 = ssub.s32 %s18, 2
      %s25 = sadd.s32 %s18, 1
      %s26 = ssub.s32 %s18, %s25
      %p27 = scmp.eq.s32.totalorder %s26, 0
      %s29 = sadd.s32 %s28, 1
      %s30 = scalar_select %p27, %s28, %s29
      %p33 = pneg %p27
      %p34 = scmp.eq.s32.totalorder %s18, 1
      %p35 = por %p33, %p34
      %p36 = scmp.ne.s32.totalorder %s28, %s31
      %p37 = scmp.eq.s32.totalorder %s18, 0
      %p38 = por %p36, %p37
      %p39 = scmp.ne.s32.totalorder %s28, %s31
      %p40 = scmp.eq.s32.totalorder %s23, 1
      %p41 = por %p39, %p40
      %p42 = scmp.ne.s32.totalorder %s31, %s32
      %p43 = scmp.eq.s32.totalorder %s23, 0
      %p44 = por %p42, %p43
      %p45 = scmp.ne.s32.totalorder %s31, %s32
      %p46 = scmp.eq.s32.totalorder %s24, 1
      %p47 = por %p45, %p46
      %p49 = scmp.ne.s32.totalorder %s32, %s48
      %p50 = scmp.eq.s32.totalorder %s24, 0
      %p51 = por %p49, %p50
      %s53 = sadd.s32 %s52, 1
      %p56 = scmp.eq.s32.totalorder %s18, 1
      %p57 = scmp.ne.s32.totalorder %s52, %s54
      %p58 = scmp.eq.s32.totalorder %s18, 0
      %p59 = por %p57, %p58
      %p60 = scmp.ne.s32.totalorder %s52, %s54
      %p61 = scmp.eq.s32.totalorder %s23, 1
      %p62 = por %p60, %p61
      %p63 = scmp.ne.s32.totalorder %s54, %s55
      %p64 = scmp.eq.s32.totalorder %s23, 0
      %p65 = por %p63, %p64
      %p66 = scmp.ne.s32.totalorder %s54, %s55
      %p67 = scmp.eq.s32.totalorder %s24, 1
      %p68 = por %p66, %p67
      %p70 = scmp.ne.s32.totalorder %s55, %s69
      %p71 = scmp.eq.s32.totalorder %s24, 0
      %p72 = por %p70, %p71
      %s74 = sadd.s32 %s73, 1
      %p77 = scmp.eq.s32.totalorder %s18, 1
      %p78 = scmp.ne.s32.totalorder %s73, %s75
      %p79 = scmp.eq.s32.totalorder %s18, 0
      %p80 = por %p78, %p79
      %p81 = scmp.ne.s32.totalorder %s73, %s75
      %p82 = scmp.eq.s32.totalorder %s23, 1
      %p83 = por %p81, %p82
      %p84 = scmp.ne.s32.totalorder %s75, %s76
      %p85 = scmp.eq.s32.totalorder %s23, 0
      %p86 = por %p84, %p85
      %p87 = scmp.ne.s32.totalorder %s75, %s76
      %p88 = scmp.eq.s32.totalorder %s24, 1
      %p89 = por %p87, %p88
      %p91 = scmp.ne.s32.totalorder %s76, %s90
      %p92 = scmp.eq.s32.totalorder %s24, 0
      %p93 = por %p91, %p92
      %s95 = sadd.s32 %s94, 1
      %p98 = scmp.eq.s32.totalorder %s18, 1
      %p99 = scmp.ne.s32.totalorder %s94, %s96
      %p100 = scmp.eq.s32.totalorder %s18, 0
      %p101 = por %p99, %p100
      %p102 = scmp.ne.s32.totalorder %s94, %s96
      %p103 = scmp.eq.s32.totalorder %s23, 1
      %p104 = por %p102, %p103
      %p105 = scmp.ne.s32.totalorder %s96, %s97
      %p106 = scmp.eq.s32.totalorder %s23, 0
      %p107 = por %p105, %p106
      %p108 = scmp.ne.s32.totalorder %s96, %s97
      %p109 = scmp.eq.s32.totalorder %s24, 1
      %p110 = por %p108, %p109
      %p112 = scmp.ne.s32.totalorder %s97, %s111
      %p113 = scmp.eq.s32.totalorder %s24, 0
      %p114 = por %p112, %p113
      %s116 = sadd.s32 %s115, 1
      %p119 = scmp.eq.s32.totalorder %s18, 1
      %p120 = scmp.ne.s32.totalorder %s115, %s117
      %p121 = scmp.eq.s32.totalorder %s18, 0
      %p122 = por %p120, %p121
      %p123 = scmp.ne.s32.totalorder %s115, %s117
      %p124 = scmp.eq.s32.totalorder %s23, 1
      %p125 = por %p123, %p124
      %p126 = scmp.ne.s32.totalorder %s117, %s118
      %p127 = scmp.eq.s32.totalorder %s23, 0
      %p128 = por %p126, %p127
      %p129 = scmp.ne.s32.totalorder %s117, %s118
      %p130 = scmp.eq.s32.totalorder %s24, 1
      %p131 = por %p129, %p130
      %p133 = scmp.ne.s32.totalorder %s118, %s132
      %p134 = scmp.eq.s32.totalorder %s24, 0
      %p135 = por %p133, %p134
      %s137 = sadd.s32 %s136, 1
      %p140 = scmp.eq.s32.totalorder %s18, 1
      %p141 = scmp.ne.s32.totalorder %s136, %s138
      %p142 = scmp.eq.s32.totalorder %s18, 0
      %p143 = por %p141, %p142
      %p144 = scmp.ne.s32.totalorder %s136, %s138
      %p145 = scmp.eq.s32.totalorder %s23, 1
      %p146 = por %p144, %p145
      %p147 = scmp.ne.s32.totalorder %s138, %s139
      %p148 = scmp.eq.s32.totalorder %s23, 0
      %p149 = por %p147, %p148
      %p150 = scmp.ne.s32.totalorder %s138, %s139
      %p151 = scmp.eq.s32.totalorder %s24, 1
      %p152 = por %p150, %p151
      %p154 = scmp.ne.s32.totalorder %s139, %s153
      %p155 = scmp.eq.s32.totalorder %s24, 0
      %p156 = por %p154, %p155
      %s158 = sadd.s32 %s157, 1
      %p161 = scmp.eq.s32.totalorder %s18, 1
      %p162 = scmp.ne.s32.totalorder %s157, %s159
      %p163 = scmp.eq.s32.totalorder %s18, 0
      %p164 = por %p162, %p163
      %p165 = scmp.ne.s32.totalorder %s157, %s159
      %p166 = scmp.eq.s32.totalorder %s23, 1
      %p167 = por %p165, %p166
      %p168 = scmp.ne.s32.totalorder %s159, %s160
      %p169 = scmp.eq.s32.totalorder %s23, 0
      %p170 = por %p168, %p169
      %p171 = scmp.ne.s32.totalorder %s159, %s160
      %p172 = scmp.eq.s32.totalorder %s24, 1
      %p173 = por %p171, %p172
      %p175 = scmp.ne.s32.totalorder %s160, %s174
      %p176 = scmp.eq.s32.totalorder %s24, 0
      %p177 = por %p175, %p176
      %s179 = sadd.s32 %s178, 1
      %p182 = scmp.eq.s32.totalorder %s18, 1
      %p183 = scmp.ne.s32.totalorder %s178, %s180
      %p184 = scmp.eq.s32.totalorder %s18, 0
      %p185 = por %p183, %p184
      %p186 = scmp.ne.s32.totalorder %s178, %s180
      %p187 = scmp.eq.s32.totalorder %s23, 1
      %p188 = por %p186, %p187
      %p189 = scmp.ne.s32.totalorder %s180, %s181
      %p190 = scmp.eq.s32.totalorder %s23, 0
      %p191 = por %p189, %p190
      %p192 = scmp.ne.s32.totalorder %s180, %s181
      %p193 = scmp.eq.s32.totalorder %s24, 1
      %p194 = por %p192, %p193
      %p196 = scmp.ne.s32.totalorder %s181, %s195
      %p197 = scmp.eq.s32.totalorder %s24, 0
      %p198 = por %p196, %p197
      %s200 = sadd.s32 %s199, 1
      %p203 = scmp.eq.s32.totalorder %s18, 1
      %p204 = scmp.ne.s32.totalorder %s199, %s201
      %p205 = scmp.eq.s32.totalorder %s18, 0
      %p206 = por %p204, %p205
      %p207 = scmp.ne.s32.totalorder %s199, %s201
      %p208 = scmp.eq.s32.totalorder %s23, 1
      %p209 = por %p207, %p208
      %p210 = scmp.ne.s32.totalorder %s201, %s202
      %p211 = scmp.eq.s32.totalorder %s23, 0
      %p212 = por %p210, %p211
      %p213 = scmp.ne.s32.totalorder %s201, %s202
      %p214 = scmp.eq.s32.totalorder %s24, 1
      %p215 = por %p213, %p214
      %p217 = scmp.ne.s32.totalorder %s202, %s216
      %p218 = scmp.eq.s32.totalorder %s24, 0
      %p219 = por %p217, %p218
      %s220 = ssub.s32 %s18, %s25
      %p221 = scmp.eq.s32.totalorder %s220, 0
      %s223 = sadd.s32 %s222, 1
      %s224 = scalar_select %p221, %s222, %s223
      %p227 = pneg %p221
      %p228 = scmp.eq.s32.totalorder %s18, 1
      %p229 = por %p227, %p228
      %p230 = scmp.ne.s32.totalorder %s222, %s225
      %p231 = scmp.eq.s32.totalorder %s18, 0
      %p232 = por %p230, %p231
      %p233 = scmp.ne.s32.totalorder %s222, %s225
      %p234 = scmp.eq.s32.totalorder %s23, 1
      %p235 = por %p233, %p234
      %p236 = scmp.ne.s32.totalorder %s225, %s226
      %p237 = scmp.eq.s32.totalorder %s23, 0
      %p238 = por %p236, %p237
      %p239 = scmp.ne.s32.totalorder %s225, %s226
      %p240 = scmp.eq.s32.totalorder %s24, 1
      %p241 = por %p239, %p240
      %p243 = scmp.ne.s32.totalorder %s226, %s242
      %p244 = scmp.eq.s32.totalorder %s24, 0
      %p245 = por %p243, %p244
      %p246 = scmp.le.s32.totalorder 1, %s18
      %p247 = scmp.lt.s32.totalorder %s18, 3
      %p248 = pnand %p246, %p247
      %p249 = pneg %p248
      // Predicated region
      $region9: #{forward.1} parent=5 // pred_check
        _
      $region10: #{forward.1} parent=5 // pred_check_branch
        %251 = sbr.rel (%p248) target = $region12
      $region11: #{forward.1} parent=5 // pred_region
        %s252 = ssub.s32 %s18, 1
        // Predicated region
        $region13: #{forward.1} parent=11 // pred_check
          %p253 = pneg %p65
        $region14: #{forward.1} parent=11 // pred_check_branch
          %255 = sbr.rel (%p253) target = $region16
        $region15: #{forward.1} parent=11 // pred_region
          _
        $region16: #{forward.1} parent=11 // pred_fallthru
          _
        // Predicated region
        $region17: #{forward.1} parent=11 // pred_check
          %p256 = pneg %p86
        $region18: #{forward.1} parent=11 // pred_check_branch
          %258 = sbr.rel (%p256) target = $region20
        $region19: #{forward.1} parent=11 // pred_region
          _
        $region20: #{forward.1} parent=11 // pred_fallthru
          _
        // Predicated region
        $region21: #{forward.1} parent=11 // pred_check
          %p259 = pneg %p107
        $region22: #{forward.1} parent=11 // pred_check_branch
          %261 = sbr.rel (%p259) target = $region24
        $region23: #{forward.1} parent=11 // pred_region
          _
        $region24: #{forward.1} parent=11 // pred_fallthru
          _
        // Predicated region
        $region25: #{forward.1} parent=11 // pred_check
          %p262 = pneg %p128
        $region26: #{forward.1} parent=11 // pred_check_branch
          %264 = sbr.rel (%p262) target = $region28
        $region27: #{forward.1} parent=11 // pred_region
          _
        $region28: #{forward.1} parent=11 // pred_fallthru
          _
        // Predicated region
        $region29: #{forward.1} parent=11 // pred_check
          %p265 = pneg %p149
        $region30: #{forward.1} parent=11 // pred_check_branch
          %267 = sbr.rel (%p265) target = $region32
        $region31: #{forward.1} parent=11 // pred_region
          _
        $region32: #{forward.1} parent=11 // pred_fallthru
          _
        // Predicated region
        $region33: #{forward.1} parent=11 // pred_check
          %p268 = pneg %p170
        $region34: #{forward.1} parent=11 // pred_check_branch
          %270 = sbr.rel (%p268) target = $region36
        $region35: #{forward.1} parent=11 // pred_region
          _
        $region36: #{forward.1} parent=11 // pred_fallthru
          _
        // Predicated region
        $region37: #{forward.1} parent=11 // pred_check
          %p271 = pneg %p191
        $region38: #{forward.1} parent=11 // pred_check_branch
          %273 = sbr.rel (%p271) target = $region40
        $region39: #{forward.1} parent=11 // pred_region
          _
        $region40: #{forward.1} parent=11 // pred_fallthru
          _
        // Predicated region
        $region41: #{forward.1} parent=11 // pred_check
          %p274 = pneg %p212
        $region42: #{forward.1} parent=11 // pred_check_branch
          %276 = sbr.rel (%p274) target = $region44
        $region43: #{forward.1} parent=11 // pred_region
          _
        $region44: #{forward.1} parent=11 // pred_fallthru
          _
      $region12: #{forward.1} parent=5 // pred_fallthru
        _
      %p277 = scmp.lt.s32.totalorder %s18, 2
      // Predicated region
      $region45: #{forward.1} parent=5 // pred_check
        %p278 = pneg %p277
      $region46: #{forward.1} parent=5 // pred_check_branch
        %280 = sbr.rel (%p278) target = $region48
      $region47: #{forward.1} parent=5 // pred_region
        // Predicated region
        $region49: #{forward.1} parent=47 // pred_check
          %p281 = pneg %p38
        $region50: #{forward.1} parent=47 // pred_check_branch
          %283 = sbr.rel (%p281) target = $region52
        $region51: #{forward.1} parent=47 // pred_region
          %p284 = scmp.lt.s32.totalorder %s18, 1
          %s285 = scalar_select %p284, %s18, 1
          %s286 = smul.addr %s285, 22
          %s287 = smul.addr %s286, 8
          %s288 = scalar_lea.vmem %s0, %s287
        $region52: #{forward.1} parent=47 // pred_fallthru
          _
      $region48: #{forward.1} parent=5 // pred_fallthru
        _
      %p289 = scmp.le.s32.totalorder 1, %s18
      %p290 = scmp.lt.s32.totalorder %s18, 3
      %p291 = pnand %p289, %p290
      %p292 = pneg %p291
      // Predicated region
      $region53: #{forward.1} parent=5 // pred_check
        _
      $region54: #{forward.1} parent=5 // pred_check_branch
        %294 = sbr.rel (%p291) target = $region56
      $region55: #{forward.1} parent=5 // pred_region
        %s295 = ssub.s32 %s18, 1
        %p296 = scmp.lt.s32.totalorder %s23, 1
        %s297 = scalar_select %p296, %s23, 1
        %s298 = smul.addr %s297, 22
        %s299 = smul.addr %s298, 8
        %s300 = scalar_lea.vmem %s0, %s299
        %p301 = pneg %p44
        %p302 = pneg %p41
        %p303 = pneg %p65
        %p304 = pneg %p62
        %p305 = pneg %p86
        %p306 = pneg %p83
        %p307 = pneg %p107
        %p308 = pneg %p104
        %p309 = pneg %p128
        %p310 = pneg %p125
        %p311 = pneg %p149
        %p312 = pneg %p146
        %p313 = pneg %p170
        %p314 = pneg %p167
        %p315 = pneg %p191
        %p316 = pneg %p188
        %p317 = pneg %p212
        %p318 = pneg %p209
        %p319 = pneg %p238
        %p320 = pneg %p235
        %s321 = sand.u32 %s225, 1
        %s322 = scalar_lea.sflag [#allocation6], %s321
        %s323 = sand.u32 %s225, 1
        %s324 = scalar_lea.vmem [#allocation5], %s323
        %p325 = scmp.lt.s32.totalorder %s23, 1
        %s326 = scalar_select %p325, %s23, 1
        %s327 = smul.addr %s326, 22
        %s328 = smul.addr %s327, 8
        %s329 = scalar_lea.vmem %s0, %s328
        %v330 = vld [vmem:[%s329] sm:$0xff]
        %v331 = vld [vmem:[%s329 + $0x8] sm:$0xff]
        %v332 = vld [vmem:[%s329 + $0x10] sm:$0xff]
        %v333 = vld [vmem:[%s329 + $0x18] sm:$0xff]
        %v334 = vld [vmem:[%s329 + $0x20] sm:$0xff]
        %v335 = vld [vmem:[%s329 + $0x28] sm:$0xff]
        %v336 = vld [vmem:[%s329 + $0x30] sm:$0xff]
        %v337 = vld [vmem:[%s329 + $0x38] sm:$0xff]
        %v338 = vld [vmem:[%s329 + $0x40] sm:$0xff]
        %v339 = vld [vmem:[%s329 + $0x48] sm:$0xff]
        %v340 = vld [vmem:[%s329 + $0x50] sm:$0xff]
        %v341 = vld [vmem:[%s329 + $0x58] sm:$0xff]
        %v342 = vld [vmem:[%s329 + $0x60] sm:$0xff]
        %v343 = vld [vmem:[%s329 + $0x68] sm:$0xff]
        %v344 = vld [vmem:[%s329 + $0x70] sm:$0xff]
        %v345 = vld [vmem:[%s329 + $0x78] sm:$0xff]
        %v346 = vld [vmem:[%s329 + $0x80] sm:$0xff]
        %v347 = vld [vmem:[%s329 + $0x88] sm:$0xff]
        %v348 = vld [vmem:[%s329 + $0x90] sm:$0xff]
        %v349 = vld [vmem:[%s329 + $0x98] sm:$0xff]
        %v350 = vld [vmem:[%s329 + $0xa0] sm:$0xff]
        %v351 = vld [vmem:[%s329 + $0xa8] sm:$0x1]
        %v352 = vld [vmem:[%s1] sm:$0xff]
        %v353 = vld [vmem:[%s1 + $0x8] sm:$0x1]
        %v354 = vld [vmem:[%s2] sm:$0x1]
        %v356 = vlaneseq
        %v357 = vshrl.u32 %v356, 7
        %v358 = vsub.s32 0, %v357
        %v359 = vrot.slane %v354, %v358
        %vm361 = vcmask 72704
        %v363 = vsel %vm361, %v330, 0
        %v366 = vsel %vm361, %v331, 0
        %v369 = vsel %vm361, %v332, 0
        %v372 = vsel %vm361, %v333, 0
        %v375 = vsel %vm361, %v334, 0
        %v378 = vsel %vm361, %v335, 0
        %v381 = vsel %vm361, %v336, 0
        %v384 = vsel %vm361, %v337, 0
        %v387 = vsel %vm361, %v338, 0
        %v390 = vsel %vm361, %v339, 0
        %v393 = vsel %vm361, %v340, 0
        %v396 = vsel %vm361, %v341, 0
        %v399 = vsel %vm361, %v342, 0
        %v402 = vsel %vm361, %v343, 0
        %v405 = vsel %vm361, %v344, 0
        %v408 = vsel %vm361, %v345, 0
        %v411 = vsel %vm361, %v346, 0
        %v414 = vsel %vm361, %v347, 0
        %v417 = vsel %vm361, %v348, 0
        %v420 = vsel %vm361, %v349, 0
        %v423 = vsel %vm361, %v350, 0
        %v426 = vsel %vm361, %v351, 0
        %vm428 = vcmask 1040384
        %v430 = vsel %vm428, %v353, 0
        %432 = vmatprep.subr.mxu0 0.0
        %433 = vmatpush1.msra.mxu0 0.0
        %434 = vmatprep.subr.mxu0 0.0
        %435 = vmatpush1.msra.mxu0 0.0
        %436 = vmatprep.subr.mxu0 0.0
        %437 = vmatpush1.msra.mxu0 0.0
        %438 = vmatprep.subr.mxu0 0.0
        %439 = vmatpush1.msra.mxu0 0.0
        %440 = vmatprep.subr.mxu0 0.0
        %441 = vmatpush1.msra.mxu0 0.0
        %442 = vmatprep.subr.mxu0 0.0
        %443 = vmatpush1.msra.mxu0 0.0
        %444 = vmatprep.subr.mxu0 0.0
        %445 = vmatpush1.msra.mxu0 0.0
        %446 = vmatprep.subr.mxu0 0.0
        %447 = vmatpush1.msra.mxu0 0.0
        %448 = vmatprep.subr.mxu0 0.0
        %449 = vmatpush1.msra.mxu0 0.0
        %450 = vmatprep.subr.mxu0 0.0
        %451 = vmatpush1.msra.mxu0 0.0
        %452 = vmatprep.subr.mxu0 0.0
        %453 = vmatpush1.msra.mxu0 0.0
        %454 = vmatprep.subr.mxu0 0.0
        %455 = vmatpush1.msra.mxu0 0.0
        %456 = vmatprep.subr.mxu0 0.0
        %457 = vmatpush1.msra.mxu0 0.0
        %458 = vmatprep.subr.mxu0 0.0
        %459 = vmatpush1.msra.mxu0 0.0
        %460 = vmatprep.subr.mxu0 0.0
        %461 = vmatpush1.msra.mxu0 %v430
        %462 = vmatprep.subr.mxu0 0.0
        %463 = vmatpush1.msra.mxu0 %v352
        %464 = vmatprep.subr.mxu0 0.0
        %465 = vmatpush2.msra.mxu0 0.0
        %466 = vmatprep.subr.mxu0 0.0
        %467 = vmatpush2.msra.mxu0 0.0
        %468 = vmatprep.subr.mxu0 0.0
        %469 = vmatpush2.msra.mxu0 0.0
        %470 = vmatprep.subr.mxu0 0.0
        %471 = vmatpush2.msra.mxu0 0.0
        %472 = vmatprep.subr.mxu0 0.0
        %473 = vmatpush2.msra.mxu0 0.0
        %474 = vmatprep.subr.mxu0 0.0
        %475 = vmatpush2.msra.mxu0 0.0
        %476 = vmatprep.subr.mxu0 0.0
        %477 = vmatpush2.msra.mxu0 0.0
        %478 = vmatprep.subr.mxu0 0.0
        %479 = vmatpush2.msra.mxu0 0.0
        %480 = vmatprep.subr.mxu0 0.0
        %481 = vmatpush2.msra.mxu0 0.0
        %482 = vmatprep.subr.mxu0 0.0
        %483 = vmatpush2.msra.mxu0 0.0
        %484 = vmatprep.subr.mxu0 0.0
        %485 = vmatpush2.msra.mxu0 0.0
        %486 = vmatprep.subr.mxu0 0.0
        %487 = vmatpush2.msra.mxu0 0.0
        %488 = vmatprep.subr.mxu0 0.0
        %489 = vmatpush2.msra.mxu0 0.0
        %490 = vmatprep.subr.mxu0 0.0
        %491 = vmatpush2.msra.mxu0 0.0
        %492 = vmatprep.subr.mxu0 0.0
        %493 = vmatpush2.msra.mxu0 0.0
        %494 = vmatprep.subr.mxu0 0.0
        %495 = vmatpush2.msra.mxu0 0.0
        %496 = vmatprep.mubr.f32.mxu0 0.0
        %497 = vmatmul.mubr.f32.gmra.mxu0 %v363
        %v498 = vpop.f32.mrf.mxu0
        %v499 = vadd.f32 %v359, %v498
        %v500 = vpop.f32.mrf.mxu0
        %501 = vmatprep.mubr.f32.mxu0 0.0
        %502 = vmatmul.mubr.f32.gmra.mxu0 %v366
        %v503 = vpop.f32.mrf.mxu0
        %v504 = vadd.f32 %v359, %v503
        %v505 = vpop.f32.mrf.mxu0
        %506 = vmatprep.mubr.f32.mxu0 0.0
        %507 = vmatmul.mubr.f32.gmra.mxu0 %v369
        %v508 = vpop.f32.mrf.mxu0
        %v509 = vadd.f32 %v359, %v508
        %v510 = vpop.f32.mrf.mxu0
        %511 = vmatprep.mubr.f32.mxu0 0.0
        %512 = vmatmul.mubr.f32.gmra.mxu0 %v372
        %v513 = vpop.f32.mrf.mxu0
        %v514 = vadd.f32 %v359, %v513
        %v515 = vpop.f32.mrf.mxu0
        %516 = vmatprep.mubr.f32.mxu0 0.0
        %517 = vmatmul.mubr.f32.gmra.mxu0 %v375
        %v518 = vpop.f32.mrf.mxu0
        %v519 = vadd.f32 %v359, %v518
        %v520 = vpop.f32.mrf.mxu0
        %521 = vmatprep.mubr.f32.mxu0 0.0
        %522 = vmatmul.mubr.f32.gmra.mxu0 %v378
        %v523 = vpop.f32.mrf.mxu0
        %v524 = vadd.f32 %v359, %v523
        %v525 = vpop.f32.mrf.mxu0
        %526 = vmatprep.mubr.f32.mxu0 0.0
        %527 = vmatmul.mubr.f32.gmra.mxu0 %v381
        %v528 = vpop.f32.mrf.mxu0
        %v529 = vadd.f32 %v359, %v528
        %v530 = vpop.f32.mrf.mxu0
        %531 = vmatprep.mubr.f32.mxu0 0.0
        %532 = vmatmul.mubr.f32.gmra.mxu0 %v384
        %v533 = vpop.f32.mrf.mxu0
        %v534 = vadd.f32 %v359, %v533
        %v535 = vpop.f32.mrf.mxu0
        %536 = vmatprep.mubr.f32.mxu0 0.0
        %537 = vmatmul.mubr.f32.gmra.mxu0 %v387
        %v538 = vpop.f32.mrf.mxu0
        %v539 = vadd.f32 %v359, %v538
        %v540 = vpop.f32.mrf.mxu0
        %541 = vmatprep.mubr.f32.mxu0 0.0
        %542 = vmatmul.mubr.f32.gmra.mxu0 %v390
        %v543 = vpop.f32.mrf.mxu0
        %v544 = vadd.f32 %v359, %v543
        %v545 = vpop.f32.mrf.mxu0
        %546 = vmatprep.mubr.f32.mxu0 0.0
        %547 = vmatmul.mubr.f32.gmra.mxu0 %v393
        %v548 = vpop.f32.mrf.mxu0
        %v549 = vadd.f32 %v359, %v548
        %v550 = vpop.f32.mrf.mxu0
        %551 = vmatprep.mubr.f32.mxu0 0.0
        %552 = vmatmul.mubr.f32.gmra.mxu0 %v396
        %v553 = vpop.f32.mrf.mxu0
        %v554 = vadd.f32 %v359, %v553
        %v555 = vpop.f32.mrf.mxu0
        %556 = vmatprep.mubr.f32.mxu0 0.0
        %557 = vmatmul.mubr.f32.gmra.mxu0 %v399
        %v558 = vpop.f32.mrf.mxu0
        %v559 = vadd.f32 %v359, %v558
        %v560 = vpop.f32.mrf.mxu0
        %561 = vmatprep.mubr.f32.mxu0 0.0
        %562 = vmatmul.mubr.f32.gmra.mxu0 %v402
        %v563 = vpop.f32.mrf.mxu0
        %v564 = vadd.f32 %v359, %v563
        %v565 = vpop.f32.mrf.mxu0
        %566 = vmatprep.mubr.f32.mxu0 0.0
        %567 = vmatmul.mubr.f32.gmra.mxu0 %v405
        %v568 = vpop.f32.mrf.mxu0
        %v569 = vadd.f32 %v359, %v568
        %v570 = vpop.f32.mrf.mxu0
        %571 = vmatprep.mubr.f32.mxu0 0.0
        %572 = vmatmul.mubr.f32.gmra.mxu0 %v408
        %v573 = vpop.f32.mrf.mxu0
        %v574 = vadd.f32 %v359, %v573
        %v575 = vpop.f32.mrf.mxu0
        %576 = vmatprep.mubr.f32.mxu0 0.0
        %577 = vmatmul.mubr.f32.gmra.mxu0 %v411
        %v578 = vpop.f32.mrf.mxu0
        %v579 = vadd.f32 %v359, %v578
        %v580 = vpop.f32.mrf.mxu0
        %581 = vmatprep.mubr.f32.mxu0 0.0
        %582 = vmatmul.mubr.f32.gmra.mxu0 %v414
        %v583 = vpop.f32.mrf.mxu0
        %v584 = vadd.f32 %v359, %v583
        %v585 = vpop.f32.mrf.mxu0
        %586 = vmatprep.mubr.f32.mxu0 0.0
        %587 = vmatmul.mubr.f32.gmra.mxu0 %v417
        %v588 = vpop.f32.mrf.mxu0
        %v589 = vadd.f32 %v359, %v588
        %v590 = vpop.f32.mrf.mxu0
        %591 = vmatprep.mubr.f32.mxu0 0.0
        %592 = vmatmul.mubr.f32.gmra.mxu0 %v420
        %v593 = vpop.f32.mrf.mxu0
        %v594 = vadd.f32 %v359, %v593
        %v595 = vpop.f32.mrf.mxu0
        %596 = vmatprep.mubr.f32.mxu0 0.0
        %597 = vmatmul.mubr.f32.gmra.mxu0 %v423
        %v598 = vpop.f32.mrf.mxu0
        %v599 = vadd.f32 %v359, %v598
        %v600 = vpop.f32.mrf.mxu0
        %601 = vmatprep.mubr.f32.mxu0 0.0
        %602 = vmatmul.mubr.f32.gmra.mxu0 %v426
        %v603 = vpop.f32.mrf.mxu0
        %v604 = vadd.f32 %v359, %v603
        %v605 = vpop.f32.mrf.mxu0
        %606 = vdwg.mxu0
        %vm607 = vcmp.gt.f32.partialorder %v499, 0.0
        %vm608 = vcmp.gt.f32.partialorder %v504, 0.0
        %vm609 = vcmp.gt.f32.partialorder %v509, 0.0
        %vm610 = vcmp.gt.f32.partialorder %v514, 0.0
        %vm611 = vcmp.gt.f32.partialorder %v519, 0.0
        %vm612 = vcmp.gt.f32.partialorder %v524, 0.0
        %vm613 = vcmp.gt.f32.partialorder %v529, 0.0
        %vm614 = vcmp.gt.f32.partialorder %v534, 0.0
        %vm615 = vcmp.gt.f32.partialorder %v539, 0.0
        %vm616 = vcmp.gt.f32.partialorder %v544, 0.0
        %vm617 = vcmp.gt.f32.partialorder %v549, 0.0
        %vm618 = vcmp.gt.f32.partialorder %v554, 0.0
        %vm619 = vcmp.gt.f32.partialorder %v559, 0.0
        %vm620 = vcmp.gt.f32.partialorder %v564, 0.0
        %vm621 = vcmp.gt.f32.partialorder %v569, 0.0
        %vm622 = vcmp.gt.f32.partialorder %v574, 0.0
        %vm623 = vcmp.gt.f32.partialorder %v579, 0.0
        %vm624 = vcmp.gt.f32.partialorder %v584, 0.0
        %vm625 = vcmp.gt.f32.partialorder %v589, 0.0
        %vm626 = vcmp.gt.f32.partialorder %v594, 0.0
        %vm627 = vcmp.gt.f32.partialorder %v599, 0.0
        %vm628 = vcmp.gt.f32.partialorder %v604, 0.0
        %v629 = vmul.f32 %v499, 0.01
        %v630 = vmul.f32 %v504, 0.01
        %v631 = vmul.f32 %v509, 0.01
        %v632 = vmul.f32 %v514, 0.01
        %v633 = vmul.f32 %v519, 0.01
        %v634 = vmul.f32 %v524, 0.01
        %v635 = vmul.f32 %v529, 0.01
        %v636 = vmul.f32 %v534, 0.01
        %v637 = vmul.f32 %v539, 0.01
        %v638 = vmul.f32 %v544, 0.01
        %v639 = vmul.f32 %v549, 0.01
        %v640 = vmul.f32 %v554, 0.01
        %v641 = vmul.f32 %v559, 0.01
        %v642 = vmul.f32 %v564, 0.01
        %v643 = vmul.f32 %v569, 0.01
        %v644 = vmul.f32 %v574, 0.01
        %v645 = vmul.f32 %v579, 0.01
        %v646 = vmul.f32 %v584, 0.01
        %v647 = vmul.f32 %v589, 0.01
        %v648 = vmul.f32 %v594, 0.01
        %v649 = vmul.f32 %v599, 0.01
        %v650 = vmul.f32 %v604, 0.01
        %v651 = vsel %vm607, %v499, %v629
        %v652 = vsel %vm608, %v504, %v630
        %v653 = vsel %vm609, %v509, %v631
        %v654 = vsel %vm610, %v514, %v632
        %v655 = vsel %vm611, %v519, %v633
        %v656 = vsel %vm612, %v524, %v634
        %v657 = vsel %vm613, %v529, %v635
        %v658 = vsel %vm614, %v534, %v636
        %v659 = vsel %vm615, %v539, %v637
        %v660 = vsel %vm616, %v544, %v638
        %v661 = vsel %vm617, %v549, %v639
        %v662 = vsel %vm618, %v554, %v640
        %v663 = vsel %vm619, %v559, %v641
        %v664 = vsel %vm620, %v564, %v642
        %v665 = vsel %vm621, %v569, %v643
        %v666 = vsel %vm622, %v574, %v644
        %v667 = vsel %vm623, %v579, %v645
        %v668 = vsel %vm624, %v584, %v646
        %v669 = vsel %vm625, %v589, %v647
        %v670 = vsel %vm626, %v594, %v648
        %v671 = vsel %vm627, %v599, %v649
        %v672 = vsel %vm628, %v604, %v650
        %vm673 = vcmask 261120
        %674 = vst.msk [vmem:[#allocation2] sm:$0xff] %vm673, %v651
        %675 = vst.msk [vmem:[#allocation2 + $0x8] sm:$0xff] %vm673, %v652
        %676 = vst.msk [vmem:[#allocation2 + $0x10] sm:$0xff] %vm673, %v653
        %677 = vst.msk [vmem:[#allocation2 + $0x18] sm:$0xff] %vm673, %v654
        %678 = vst.msk [vmem:[#allocation2 + $0x20] sm:$0xff] %vm673, %v655
        %679 = vst.msk [vmem:[#allocation2 + $0x28] sm:$0xff] %vm673, %v656
        %680 = vst.msk [vmem:[#allocation2 + $0x30] sm:$0xff] %vm673, %v657
        %681 = vst.msk [vmem:[#allocation2 + $0x38] sm:$0xff] %vm673, %v658
        %682 = vst.msk [vmem:[#allocation2 + $0x40] sm:$0xff] %vm673, %v659
        %683 = vst.msk [vmem:[#allocation2 + $0x48] sm:$0xff] %vm673, %v660
        %684 = vst.msk [vmem:[#allocation2 + $0x50] sm:$0xff] %vm673, %v661
        %685 = vst.msk [vmem:[#allocation2 + $0x58] sm:$0xff] %vm673, %v662
        %686 = vst.msk [vmem:[#allocation2 + $0x60] sm:$0xff] %vm673, %v663
        %687 = vst.msk [vmem:[#allocation2 + $0x68] sm:$0xff] %vm673, %v664
        %688 = vst.msk [vmem:[#allocation2 + $0x70] sm:$0xff] %vm673, %v665
        %689 = vst.msk [vmem:[#allocation2 + $0x78] sm:$0xff] %vm673, %v666
        %690 = vst.msk [vmem:[#allocation2 + $0x80] sm:$0xff] %vm673, %v667
        %691 = vst.msk [vmem:[#allocation2 + $0x88] sm:$0xff] %vm673, %v668
        %692 = vst.msk [vmem:[#allocation2 + $0x90] sm:$0xff] %vm673, %v669
        %693 = vst.msk [vmem:[#allocation2 + $0x98] sm:$0xff] %vm673, %v670
        %694 = vst.msk [vmem:[#allocation2 + $0xa0] sm:$0xff] %vm673, %v671
        %vm695 = vcmask 253952
        %696 = vst.msk [vmem:[#allocation2 + $0xa8] sm:$0x1] %vm695, %v672
        %v697 = vld [vmem:[#allocation2] sm:$0x3f]
        %v698 = vld [vmem:[%s3] sm:$0xff]
        %v699 = vld [vmem:[%s3 + $0x8] sm:$0xff]
        %v700 = vld [vmem:[%s3 + $0x10] sm:$0xff]
        %v701 = vld [vmem:[%s3 + $0x18] sm:$0xff]
        %v702 = vld [vmem:[#allocation2 + $0x7] sm:$0x3f]
        %v703 = vld [vmem:[%s3 + $0x20] sm:$0xff]
        %v704 = vld [vmem:[%s3 + $0x28] sm:$0xff]
        %v705 = vld [vmem:[%s3 + $0x30] sm:$0xff]
        %v706 = vld [vmem:[%s3 + $0x38] sm:$0xff]
        %v708 = vsel %vm673, %v702, 0
        %710 = vmatprep.subr.mxu0 0.0
        %711 = vmatpush1.msra.mxu0 0.0
        %712 = vmatprep.subr.mxu0 0.0
        %713 = vmatpush1.msra.mxu0 0.0
        %714 = vmatprep.subr.mxu0 0.0
        %715 = vmatpush1.msra.mxu0 0.0
        %716 = vmatprep.subr.mxu0 0.0
        %717 = vmatpush1.msra.mxu0 0.0
        %718 = vmatprep.subr.mxu0 0.0
        %719 = vmatpush1.msra.mxu0 0.0
        %720 = vmatprep.subr.mxu0 0.0
        %721 = vmatpush1.msra.mxu0 0.0
        %722 = vmatprep.subr.mxu0 0.0
        %723 = vmatpush1.msra.mxu0 0.0
        %724 = vmatprep.subr.mxu0 0.0
        %725 = vmatpush1.msra.mxu0 0.0
        %726 = vmatprep.subr.mxu0 0.0
        %727 = vmatpush1.msra.mxu0 0.0
        %728 = vmatprep.subr.mxu0 0.0
        %729 = vmatpush1.msra.mxu0 0.0
        %730 = vmatprep.subr.mxu0 0.0
        %731 = vmatpush1.msra.mxu0 0.0
        %732 = vmatprep.subr.mxu0 0.0
        %733 = vmatpush1.msra.mxu0 0.0
        %734 = vmatprep.subr.mxu0 0.0
        %735 = vmatpush1.msra.mxu0 %v706
        %736 = vmatprep.subr.mxu0 0.0
        %737 = vmatpush1.msra.mxu0 %v705
        %738 = vmatprep.subr.mxu0 0.0
        %739 = vmatpush1.msra.mxu0 %v704
        %740 = vmatprep.subr.mxu0 0.0
        %741 = vmatpush1.msra.mxu0 %v703
        %742 = vmatprep.subr.mxu0 0.0
        %743 = vmatpush2.msra.mxu0 0.0
        %744 = vmatprep.subr.mxu0 0.0
        %745 = vmatpush2.msra.mxu0 0.0
        %746 = vmatprep.subr.mxu0 0.0
        %747 = vmatpush2.msra.mxu0 0.0
        %748 = vmatprep.subr.mxu0 0.0
        %749 = vmatpush2.msra.mxu0 0.0
        %750 = vmatprep.subr.mxu0 0.0
        %751 = vmatpush2.msra.mxu0 0.0
        %752 = vmatprep.subr.mxu0 0.0
        %753 = vmatpush2.msra.mxu0 0.0
        %754 = vmatprep.subr.mxu0 0.0
        %755 = vmatpush2.msra.mxu0 0.0
        %756 = vmatprep.subr.mxu0 0.0
        %757 = vmatpush2.msra.mxu0 0.0
        %758 = vmatprep.subr.mxu0 0.0
        %759 = vmatpush2.msra.mxu0 0.0
        %760 = vmatprep.subr.mxu0 0.0
        %761 = vmatpush2.msra.mxu0 0.0
        %762 = vmatprep.subr.mxu0 0.0
        %763 = vmatpush2.msra.mxu0 0.0
        %764 = vmatprep.subr.mxu0 0.0
        %765 = vmatpush2.msra.mxu0 0.0
        %766 = vmatprep.subr.mxu0 0.0
        %767 = vmatpush2.msra.mxu0 0.0
        %768 = vmatprep.subr.mxu0 0.0
        %769 = vmatpush2.msra.mxu0 0.0
        %770 = vmatprep.subr.mxu0 0.0
        %771 = vmatpush2.msra.mxu0 0.0
        %772 = vmatprep.subr.mxu0 0.0
        %773 = vmatpush2.msra.mxu0 0.0
        %774 = vmatprep.mubr.f32.mxu0 0.0
        %775 = vmatmul.mubr.f32.gmra.mxu0 %v708
        %v776 = vpop.f32.mrf.mxu0
        %v777 = vadd.f32 0.0, %v776
        %v778 = vpop.f32.mrf.mxu0
        %779 = vdwg.mxu0
        %v781 = vsel %vm673, %v697, 0
        %783 = vmatprep.subr.mxu0 0.0
        %784 = vmatpush1.msra.mxu0 0.0
        %785 = vmatprep.subr.mxu0 0.0
        %786 = vmatpush1.msra.mxu0 0.0
        %787 = vmatprep.subr.mxu0 0.0
        %788 = vmatpush1.msra.mxu0 0.0
        %789 = vmatprep.subr.mxu0 0.0
        %790 = vmatpush1.msra.mxu0 0.0
        %791 = vmatprep.subr.mxu0 0.0
        %792 = vmatpush1.msra.mxu0 0.0
        %793 = vmatprep.subr.mxu0 0.0
        %794 = vmatpush1.msra.mxu0 0.0
        %795 = vmatprep.subr.mxu0 0.0
        %796 = vmatpush1.msra.mxu0 0.0
        %797 = vmatprep.subr.mxu0 0.0
        %798 = vmatpush1.msra.mxu0 0.0
        %799 = vmatprep.subr.mxu0 0.0
        %800 = vmatpush1.msra.mxu0 0.0
        %801 = vmatprep.subr.mxu0 0.0
        %802 = vmatpush1.msra.mxu0 0.0
        %803 = vmatprep.subr.mxu0 0.0
        %804 = vmatpush1.msra.mxu0 0.0
        %805 = vmatprep.subr.mxu0 0.0
        %806 = vmatpush1.msra.mxu0 0.0
        %807 = vmatprep.subr.mxu0 0.0
        %808 = vmatpush1.msra.mxu0 %v701
        %809 = vmatprep.subr.mxu0 0.0
        %810 = vmatpush1.msra.mxu0 %v700
        %811 = vmatprep.subr.mxu0 0.0
        %812 = vmatpush1.msra.mxu0 %v699
        %813 = vmatprep.subr.mxu0 0.0
        %814 = vmatpush1.msra.mxu0 %v698
        %815 = vmatprep.subr.mxu0 0.0
        %816 = vmatpush2.msra.mxu0 0.0
        %817 = vmatprep.subr.mxu0 0.0
        %818 = vmatpush2.msra.mxu0 0.0
        %819 = vmatprep.subr.mxu0 0.0
        %820 = vmatpush2.msra.mxu0 0.0
        %821 = vmatprep.subr.mxu0 0.0
        %822 = vmatpush2.msra.mxu0 0.0
        %823 = vmatprep.subr.mxu0 0.0
        %824 = vmatpush2.msra.mxu0 0.0
        %825 = vmatprep.subr.mxu0 0.0
        %826 = vmatpush2.msra.mxu0 0.0
        %827 = vmatprep.subr.mxu0 0.0
        %828 = vmatpush2.msra.mxu0 0.0
        %829 = vmatprep.subr.mxu0 0.0
        %830 = vmatpush2.msra.mxu0 0.0
        %831 = vmatprep.subr.mxu0 0.0
        %832 = vmatpush2.msra.mxu0 0.0
        %833 = vmatprep.subr.mxu0 0.0
        %834 = vmatpush2.msra.mxu0 0.0
        %835 = vmatprep.subr.mxu0 0.0
        %836 = vmatpush2.msra.mxu0 0.0
        %837 = vmatprep.subr.mxu0 0.0
        %838 = vmatpush2.msra.mxu0 0.0
        %839 = vmatprep.subr.mxu0 0.0
        %840 = vmatpush2.msra.mxu0 0.0
        %841 = vmatprep.subr.mxu0 0.0
        %842 = vmatpush2.msra.mxu0 0.0
        %843 = vmatprep.subr.mxu0 0.0
        %844 = vmatpush2.msra.mxu0 0.0
        %845 = vmatprep.subr.mxu0 0.0
        %846 = vmatpush2.msra.mxu0 0.0
        %847 = vmatprep.mubr.f32.mxu0 0.0
        %848 = vmatmul.mubr.f32.gmra.mxu0 %v781
        %v849 = vpop.f32.mrf.mxu0
        %v850 = vadd.f32 %v777, %v849
        %v851 = vpop.f32.mrf.mxu0
        %852 = vdwg.mxu0
        %v853 = vld [vmem:[#allocation2 + $0x1] sm:$0x3f]
        %v854 = vld [vmem:[%s3 + $0x40] sm:$0xff]
        %v855 = vld [vmem:[%s3 + $0x48] sm:$0xff]
        %v856 = vld [vmem:[%s3 + $0x50] sm:$0xff]
        %v857 = vld [vmem:[%s3 + $0x58] sm:$0xff]
        %v859 = vsel %vm673, %v853, 0
        %861 = vmatprep.subr.mxu0 0.0
        %862 = vmatpush1.msra.mxu0 0.0
        %863 = vmatprep.subr.mxu0 0.0
        %864 = vmatpush1.msra.mxu0 0.0
        %865 = vmatprep.subr.mxu0 0.0
        %866 = vmatpush1.msra.mxu0 0.0
        %867 = vmatprep.subr.mxu0 0.0
        %868 = vmatpush1.msra.mxu0 0.0
        %869 = vmatprep.subr.mxu0 0.0
        %870 = vmatpush1.msra.mxu0 0.0
        %871 = vmatprep.subr.mxu0 0.0
        %872 = vmatpush1.msra.mxu0 0.0
        %873 = vmatprep.subr.mxu0 0.0
        %874 = vmatpush1.msra.mxu0 0.0
        %875 = vmatprep.subr.mxu0 0.0
        %876 = vmatpush1.msra.mxu0 0.0
        %877 = vmatprep.subr.mxu0 0.0
        %878 = vmatpush1.msra.mxu0 0.0
        %879 = vmatprep.subr.mxu0 0.0
        %880 = vmatpush1.msra.mxu0 0.0
        %881 = vmatprep.subr.mxu0 0.0
        %882 = vmatpush1.msra.mxu0 0.0
        %883 = vmatprep.subr.mxu0 0.0
        %884 = vmatpush1.msra.mxu0 0.0
        %885 = vmatprep.subr.mxu0 0.0
        %886 = vmatpush1.msra.mxu0 %v857
        %887 = vmatprep.subr.mxu0 0.0
        %888 = vmatpush1.msra.mxu0 %v856
        %889 = vmatprep.subr.mxu0 0.0
        %890 = vmatpush1.msra.mxu0 %v855
        %891 = vmatprep.subr.mxu0 0.0
        %892 = vmatpush1.msra.mxu0 %v854
        %893 = vmatprep.subr.mxu0 0.0
        %894 = vmatpush2.msra.mxu0 0.0
        %895 = vmatprep.subr.mxu0 0.0
        %896 = vmatpush2.msra.mxu0 0.0
        %897 = vmatprep.subr.mxu0 0.0
        %898 = vmatpush2.msra.mxu0 0.0
        %899 = vmatprep.subr.mxu0 0.0
        %900 = vmatpush2.msra.mxu0 0.0
        %901 = vmatprep.subr.mxu0 0.0
        %902 = vmatpush2.msra.mxu0 0.0
        %903 = vmatprep.subr.mxu0 0.0
        %904 = vmatpush2.msra.mxu0 0.0
        %905 = vmatprep.subr.mxu0 0.0
        %906 = vmatpush2.msra.mxu0 0.0
        %907 = vmatprep.subr.mxu0 0.0
        %908 = vmatpush2.msra.mxu0 0.0
        %909 = vmatprep.subr.mxu0 0.0
        %910 = vmatpush2.msra.mxu0 0.0
        %911 = vmatprep.subr.mxu0 0.0
        %912 = vmatpush2.msra.mxu0 0.0
        %913 = vmatprep.subr.mxu0 0.0
        %914 = vmatpush2.msra.mxu0 0.0
        %915 = vmatprep.subr.mxu0 0.0
        %916 = vmatpush2.msra.mxu0 0.0
        %917 = vmatprep.subr.mxu0 0.0
        %918 = vmatpush2.msra.mxu0 0.0
        %919 = vmatprep.subr.mxu0 0.0
        %920 = vmatpush2.msra.mxu0 0.0
        %921 = vmatprep.subr.mxu0 0.0
        %922 = vmatpush2.msra.mxu0 0.0
        %923 = vmatprep.subr.mxu0 0.0
        %924 = vmatpush2.msra.mxu0 0.0
        %925 = vmatprep.mubr.f32.mxu0 0.0
        %926 = vmatmul.mubr.f32.gmra.mxu0 %v859
        %v927 = vpop.f32.mrf.mxu0
        %v928 = vadd.f32 0.0, %v927
        %v929 = vpop.f32.mrf.mxu0
        %930 = vdwg.mxu0
        %v931 = vadd.f32 %v850, %v928
        %v932 = vld [vmem:[#allocation2 + $0xd] sm:$0x3f]
        %v933 = vld [vmem:[%s3 + $0x60] sm:$0xff]
        %v934 = vld [vmem:[%s3 + $0x68] sm:$0xff]
        %v935 = vld [vmem:[%s3 + $0x70] sm:$0xff]
        %v936 = vld [vmem:[%s3 + $0x78] sm:$0xff]
        %v938 = vsel %vm673, %v932, 0
        %940 = vmatprep.subr.mxu0 0.0
        %941 = vmatpush1.msra.mxu0 0.0
        %942 = vmatprep.subr.mxu0 0.0
        %943 = vmatpush1.msra.mxu0 0.0
        %944 = vmatprep.subr.mxu0 0.0
        %945 = vmatpush1.msra.mxu0 0.0
        %946 = vmatprep.subr.mxu0 0.0
        %947 = vmatpush1.msra.mxu0 0.0
        %948 = vmatprep.subr.mxu0 0.0
        %949 = vmatpush1.msra.mxu0 0.0
        %950 = vmatprep.subr.mxu0 0.0
        %951 = vmatpush1.msra.mxu0 0.0
        %952 = vmatprep.subr.mxu0 0.0
        %953 = vmatpush1.msra.mxu0 0.0
        %954 = vmatprep.subr.mxu0 0.0
        %955 = vmatpush1.msra.mxu0 0.0
        %956 = vmatprep.subr.mxu0 0.0
        %957 = vmatpush1.msra.mxu0 0.0
        %958 = vmatprep.subr.mxu0 0.0
        %959 = vmatpush1.msra.mxu0 0.0
        %960 = vmatprep.subr.mxu0 0.0
        %961 = vmatpush1.msra.mxu0 0.0
        %962 = vmatprep.subr.mxu0 0.0
        %963 = vmatpush1.msra.mxu0 0.0
        %964 = vmatprep.subr.mxu0 0.0
        %965 = vmatpush1.msra.mxu0 %v936
        %966 = vmatprep.subr.mxu0 0.0
        %967 = vmatpush1.msra.mxu0 %v935
        %968 = vmatprep.subr.mxu0 0.0
        %969 = vmatpush1.msra.mxu0 %v934
        %970 = vmatprep.subr.mxu0 0.0
        %971 = vmatpush1.msra.mxu0 %v933
        %972 = vmatprep.subr.mxu0 0.0
        %973 = vmatpush2.msra.mxu0 0.0
        %974 = vmatprep.subr.mxu0 0.0
        %975 = vmatpush2.msra.mxu0 0.0
        %976 = vmatprep.subr.mxu0 0.0
        %977 = vmatpush2.msra.mxu0 0.0
        %978 = vmatprep.subr.mxu0 0.0
        %979 = vmatpush2.msra.mxu0 0.0
        %980 = vmatprep.subr.mxu0 0.0
        %981 = vmatpush2.msra.mxu0 0.0
        %982 = vmatprep.subr.mxu0 0.0
        %983 = vmatpush2.msra.mxu0 0.0
        %984 = vmatprep.subr.mxu0 0.0
        %985 = vmatpush2.msra.mxu0 0.0
        %986 = vmatprep.subr.mxu0 0.0
        %987 = vmatpush2.msra.mxu0 0.0
        %988 = vmatprep.subr.mxu0 0.0
        %989 = vmatpush2.msra.mxu0 0.0
        %990 = vmatprep.subr.mxu0 0.0
        %991 = vmatpush2.msra.mxu0 0.0
        %992 = vmatprep.subr.mxu0 0.0
        %993 = vmatpush2.msra.mxu0 0.0
        %994 = vmatprep.subr.mxu0 0.0
        %995 = vmatpush2.msra.mxu0 0.0
        %996 = vmatprep.subr.mxu0 0.0
        %997 = vmatpush2.msra.mxu0 0.0
        %998 = vmatprep.subr.mxu0 0.0
        %999 = vmatpush2.msra.mxu0 0.0
        %1000 = vmatprep.subr.mxu0 0.0
        %1001 = vmatpush2.msra.mxu0 0.0
        %1002 = vmatprep.subr.mxu0 0.0
        %1003 = vmatpush2.msra.mxu0 0.0
        %1004 = vmatprep.mubr.f32.mxu0 0.0
        %1005 = vmatmul.mubr.f32.gmra.mxu0 %v938
        %v1006 = vpop.f32.mrf.mxu0
        %v1007 = vadd.f32 0.0, %v1006
        %v1008 = vpop.f32.mrf.mxu0
        %1009 = vdwg.mxu0
        %v1010 = vadd.f32 %v931, %v1007
        %v1011 = vld [vmem:[#allocation2 + $0x14] sm:$0x3f]
        %v1012 = vld [vmem:[%s3 + $0x80] sm:$0xff]
        %v1013 = vld [vmem:[%s3 + $0x88] sm:$0xff]
        %v1014 = vld [vmem:[%s3 + $0x90] sm:$0xff]
        %v1015 = vld [vmem:[%s3 + $0x98] sm:$0xff]
        %v1017 = vsel %vm673, %v1011, 0
        %1019 = vmatprep.subr.mxu0 0.0
        %1020 = vmatpush1.msra.mxu0 0.0
        %1021 = vmatprep.subr.mxu0 0.0
        %1022 = vmatpush1.msra.mxu0 0.0
        %1023 = vmatprep.subr.mxu0 0.0
        %1024 = vmatpush1.msra.mxu0 0.0
        %1025 = vmatprep.subr.mxu0 0.0
        %1026 = vmatpush1.msra.mxu0 0.0
        %1027 = vmatprep.subr.mxu0 0.0
        %1028 = vmatpush1.msra.mxu0 0.0
        %1029 = vmatprep.subr.mxu0 0.0
        %1030 = vmatpush1.msra.mxu0 0.0
        %1031 = vmatprep.subr.mxu0 0.0
        %1032 = vmatpush1.msra.mxu0 0.0
        %1033 = vmatprep.subr.mxu0 0.0
        %1034 = vmatpush1.msra.mxu0 0.0
        %1035 = vmatprep.subr.mxu0 0.0
        %1036 = vmatpush1.msra.mxu0 0.0
        %1037 = vmatprep.subr.mxu0 0.0
        %1038 = vmatpush1.msra.mxu0 0.0
        %1039 = vmatprep.subr.mxu0 0.0
        %1040 = vmatpush1.msra.mxu0 0.0
        %1041 = vmatprep.subr.mxu0 0.0
        %1042 = vmatpush1.msra.mxu0 0.0
        %1043 = vmatprep.subr.mxu0 0.0
        %1044 = vmatpush1.msra.mxu0 %v1015
        %1045 = vmatprep.subr.mxu0 0.0
        %1046 = vmatpush1.msra.mxu0 %v1014
        %1047 = vmatprep.subr.mxu0 0.0
        %1048 = vmatpush1.msra.mxu0 %v1013
        %1049 = vmatprep.subr.mxu0 0.0
        %1050 = vmatpush1.msra.mxu0 %v1012
        %1051 = vmatprep.subr.mxu0 0.0
        %1052 = vmatpush2.msra.mxu0 0.0
        %1053 = vmatprep.subr.mxu0 0.0
        %1054 = vmatpush2.msra.mxu0 0.0
        %1055 = vmatprep.subr.mxu0 0.0
        %1056 = vmatpush2.msra.mxu0 0.0
        %1057 = vmatprep.subr.mxu0 0.0
        %1058 = vmatpush2.msra.mxu0 0.0
        %1059 = vmatprep.subr.mxu0 0.0
        %1060 = vmatpush2.msra.mxu0 0.0
        %1061 = vmatprep.subr.mxu0 0.0
        %1062 = vmatpush2.msra.mxu0 0.0
        %1063 = vmatprep.subr.mxu0 0.0
        %1064 = vmatpush2.msra.mxu0 0.0
        %1065 = vmatprep.subr.mxu0 0.0
        %1066 = vmatpush2.msra.mxu0 0.0
        %1067 = vmatprep.subr.mxu0 0.0
        %1068 = vmatpush2.msra.mxu0 0.0
        %1069 = vmatprep.subr.mxu0 0.0
        %1070 = vmatpush2.msra.mxu0 0.0
        %1071 = vmatprep.subr.mxu0 0.0
        %1072 = vmatpush2.msra.mxu0 0.0
        %1073 = vmatprep.subr.mxu0 0.0
        %1074 = vmatpush2.msra.mxu0 0.0
        %1075 = vmatprep.subr.mxu0 0.0
        %1076 = vmatpush2.msra.mxu0 0.0
        %1077 = vmatprep.subr.mxu0 0.0
        %1078 = vmatpush2.msra.mxu0 0.0
        %1079 = vmatprep.subr.mxu0 0.0
        %1080 = vmatpush2.msra.mxu0 0.0
        %1081 = vmatprep.subr.mxu0 0.0
        %1082 = vmatpush2.msra.mxu0 0.0
        %1083 = vmatprep.mubr.f32.mxu0 0.0
        %1084 = vmatmul.mubr.f32.gmra.mxu0 %v1017
        %v1085 = vpop.f32.mrf.mxu0
        %v1086 = vadd.f32 0.0, %v1085
        %v1087 = vpop.f32.mrf.mxu0
        %1088 = vdwg.mxu0
        %v1089 = vadd.f32 %v1010, %v1086
        %v1090 = vld [vmem:[#allocation2 + $0xe] sm:$0x3f]
        %v1091 = vld [vmem:[%s3 + $0xa0] sm:$0xff]
        %v1092 = vld [vmem:[%s3 + $0xa8] sm:$0xff]
        %v1093 = vld [vmem:[%s3 + $0xb0] sm:$0xff]
        %v1094 = vld [vmem:[%s3 + $0xb8] sm:$0xff]
        %v1096 = vsel %vm673, %v1090, 0
        %1098 = vmatprep.subr.mxu0 0.0
        %1099 = vmatpush1.msra.mxu0 0.0
        %1100 = vmatprep.subr.mxu0 0.0
        %1101 = vmatpush1.msra.mxu0 0.0
        %1102 = vmatprep.subr.mxu0 0.0
        %1103 = vmatpush1.msra.mxu0 0.0
        %1104 = vmatprep.subr.mxu0 0.0
        %1105 = vmatpush1.msra.mxu0 0.0
        %1106 = vmatprep.subr.mxu0 0.0
        %1107 = vmatpush1.msra.mxu0 0.0
        %1108 = vmatprep.subr.mxu0 0.0
        %1109 = vmatpush1.msra.mxu0 0.0
        %1110 = vmatprep.subr.mxu0 0.0
        %1111 = vmatpush1.msra.mxu0 0.0
        %1112 = vmatprep.subr.mxu0 0.0
        %1113 = vmatpush1.msra.mxu0 0.0
        %1114 = vmatprep.subr.mxu0 0.0
        %1115 = vmatpush1.msra.mxu0 0.0
        %1116 = vmatprep.subr.mxu0 0.0
        %1117 = vmatpush1.msra.mxu0 0.0
        %1118 = vmatprep.subr.mxu0 0.0
        %1119 = vmatpush1.msra.mxu0 0.0
        %1120 = vmatprep.subr.mxu0 0.0
        %1121 = vmatpush1.msra.mxu0 0.0
        %1122 = vmatprep.subr.mxu0 0.0
        %1123 = vmatpush1.msra.mxu0 %v1094
        %1124 = vmatprep.subr.mxu0 0.0
        %1125 = vmatpush1.msra.mxu0 %v1093
        %1126 = vmatprep.subr.mxu0 0.0
        %1127 = vmatpush1.msra.mxu0 %v1092
        %1128 = vmatprep.subr.mxu0 0.0
        %1129 = vmatpush1.msra.mxu0 %v1091
        %1130 = vmatprep.subr.mxu0 0.0
        %1131 = vmatpush2.msra.mxu0 0.0
        %1132 = vmatprep.subr.mxu0 0.0
        %1133 = vmatpush2.msra.mxu0 0.0
        %1134 = vmatprep.subr.mxu0 0.0
        %1135 = vmatpush2.msra.mxu0 0.0
        %1136 = vmatprep.subr.mxu0 0.0
        %1137 = vmatpush2.msra.mxu0 0.0
        %1138 = vmatprep.subr.mxu0 0.0
        %1139 = vmatpush2.msra.mxu0 0.0
        %1140 = vmatprep.subr.mxu0 0.0
        %1141 = vmatpush2.msra.mxu0 0.0
        %1142 = vmatprep.subr.mxu0 0.0
        %1143 = vmatpush2.msra.mxu0 0.0
        %1144 = vmatprep.subr.mxu0 0.0
        %1145 = vmatpush2.msra.mxu0 0.0
        %1146 = vmatprep.subr.mxu0 0.0
        %1147 = vmatpush2.msra.mxu0 0.0
        %1148 = vmatprep.subr.mxu0 0.0
        %1149 = vmatpush2.msra.mxu0 0.0
        %1150 = vmatprep.subr.mxu0 0.0
        %1151 = vmatpush2.msra.mxu0 0.0
        %1152 = vmatprep.subr.mxu0 0.0
        %1153 = vmatpush2.msra.mxu0 0.0
        %1154 = vmatprep.subr.mxu0 0.0
        %1155 = vmatpush2.msra.mxu0 0.0
        %1156 = vmatprep.subr.mxu0 0.0
        %1157 = vmatpush2.msra.mxu0 0.0
        %1158 = vmatprep.subr.mxu0 0.0
        %1159 = vmatpush2.msra.mxu0 0.0
        %1160 = vmatprep.subr.mxu0 0.0
        %1161 = vmatpush2.msra.mxu0 0.0
        %1162 = vmatprep.mubr.f32.mxu0 0.0
        %1163 = vmatmul.mubr.f32.gmra.mxu0 %v1096
        %v1164 = vpop.f32.mrf.mxu0
        %v1165 = vadd.f32 0.0, %v1164
        %v1166 = vpop.f32.mrf.mxu0
        %1167 = vdwg.mxu0
        %v1168 = vadd.f32 %v1089, %v1165
        %v1169 = vld [vmem:[#allocation2 + $0x1a] sm:$0x3f]
        %v1170 = vld [vmem:[%s3 + $0xc0] sm:$0xff]
        %v1171 = vld [vmem:[%s3 + $0xc8] sm:$0xff]
        %v1172 = vld [vmem:[%s3 + $0xd0] sm:$0xff]
        %v1173 = vld [vmem:[%s3 + $0xd8] sm:$0xff]
        %v1175 = vsel %vm673, %v1169, 0
        %1177 = vmatprep.subr.mxu0 0.0
        %1178 = vmatpush1.msra.mxu0 0.0
        %1179 = vmatprep.subr.mxu0 0.0
        %1180 = vmatpush1.msra.mxu0 0.0
        %1181 = vmatprep.subr.mxu0 0.0
        %1182 = vmatpush1.msra.mxu0 0.0
        %1183 = vmatprep.subr.mxu0 0.0
        %1184 = vmatpush1.msra.mxu0 0.0
        %1185 = vmatprep.subr.mxu0 0.0
        %1186 = vmatpush1.msra.mxu0 0.0
        %1187 = vmatprep.subr.mxu0 0.0
        %1188 = vmatpush1.msra.mxu0 0.0
        %1189 = vmatprep.subr.mxu0 0.0
        %1190 = vmatpush1.msra.mxu0 0.0
        %1191 = vmatprep.subr.mxu0 0.0
        %1192 = vmatpush1.msra.mxu0 0.0
        %1193 = vmatprep.subr.mxu0 0.0
        %1194 = vmatpush1.msra.mxu0 0.0
        %1195 = vmatprep.subr.mxu0 0.0
        %1196 = vmatpush1.msra.mxu0 0.0
        %1197 = vmatprep.subr.mxu0 0.0
        %1198 = vmatpush1.msra.mxu0 0.0
        %1199 = vmatprep.subr.mxu0 0.0
        %1200 = vmatpush1.msra.mxu0 0.0
        %1201 = vmatprep.subr.mxu0 0.0
        %1202 = vmatpush1.msra.mxu0 %v1173
        %1203 = vmatprep.subr.mxu0 0.0
        %1204 = vmatpush1.msra.mxu0 %v1172
        %1205 = vmatprep.subr.mxu0 0.0
        %1206 = vmatpush1.msra.mxu0 %v1171
        %1207 = vmatprep.subr.mxu0 0.0
        %1208 = vmatpush1.msra.mxu0 %v1170
        %1209 = vmatprep.subr.mxu0 0.0
        %1210 = vmatpush2.msra.mxu0 0.0
        %1211 = vmatprep.subr.mxu0 0.0
        %1212 = vmatpush2.msra.mxu0 0.0
        %1213 = vmatprep.subr.mxu0 0.0
        %1214 = vmatpush2.msra.mxu0 0.0
        %1215 = vmatprep.subr.mxu0 0.0
        %1216 = vmatpush2.msra.mxu0 0.0
        %1217 = vmatprep.subr.mxu0 0.0
        %1218 = vmatpush2.msra.mxu0 0.0
        %1219 = vmatprep.subr.mxu0 0.0
        %1220 = vmatpush2.msra.mxu0 0.0
        %1221 = vmatprep.subr.mxu0 0.0
        %1222 = vmatpush2.msra.mxu0 0.0
        %1223 = vmatprep.subr.mxu0 0.0
        %1224 = vmatpush2.msra.mxu0 0.0
        %1225 = vmatprep.subr.mxu0 0.0
        %1226 = vmatpush2.msra.mxu0 0.0
        %1227 = vmatprep.subr.mxu0 0.0
        %1228 = vmatpush2.msra.mxu0 0.0
        %1229 = vmatprep.subr.mxu0 0.0
        %1230 = vmatpush2.msra.mxu0 0.0
        %1231 = vmatprep.subr.mxu0 0.0
        %1232 = vmatpush2.msra.mxu0 0.0
        %1233 = vmatprep.subr.mxu0 0.0
        %1234 = vmatpush2.msra.mxu0 0.0
        %1235 = vmatprep.subr.mxu0 0.0
        %1236 = vmatpush2.msra.mxu0 0.0
        %1237 = vmatprep.subr.mxu0 0.0
        %1238 = vmatpush2.msra.mxu0 0.0
        %1239 = vmatprep.subr.mxu0 0.0
        %1240 = vmatpush2.msra.mxu0 0.0
        %1241 = vmatprep.mubr.f32.mxu0 0.0
        %1242 = vmatmul.mubr.f32.gmra.mxu0 %v1175
        %v1243 = vpop.f32.mrf.mxu0
        %v1244 = vadd.f32 0.0, %v1243
        %v1245 = vpop.f32.mrf.mxu0
        %1246 = vdwg.mxu0
        %v1247 = vadd.f32 %v1168, %v1244
        %v1248 = vld [vmem:[#allocation2 + $0x21] sm:$0x3f]
        %v1249 = vld [vmem:[%s3 + $0xe0] sm:$0xff]
        %v1250 = vld [vmem:[%s3 + $0xe8] sm:$0xff]
        %v1251 = vld [vmem:[%s3 + $0xf0] sm:$0xff]
        %v1252 = vld [vmem:[%s3 + $0xf8] sm:$0xff]
        %v1254 = vsel %vm673, %v1248, 0
        %1256 = vmatprep.subr.mxu0 0.0
        %1257 = vmatpush1.msra.mxu0 0.0
        %1258 = vmatprep.subr.mxu0 0.0
        %1259 = vmatpush1.msra.mxu0 0.0
        %1260 = vmatprep.subr.mxu0 0.0
        %1261 = vmatpush1.msra.mxu0 0.0
        %1262 = vmatprep.subr.mxu0 0.0
        %1263 = vmatpush1.msra.mxu0 0.0
        %1264 = vmatprep.subr.mxu0 0.0
        %1265 = vmatpush1.msra.mxu0 0.0
        %1266 = vmatprep.subr.mxu0 0.0
        %1267 = vmatpush1.msra.mxu0 0.0
        %1268 = vmatprep.subr.mxu0 0.0
        %1269 = vmatpush1.msra.mxu0 0.0
        %1270 = vmatprep.subr.mxu0 0.0
        %1271 = vmatpush1.msra.mxu0 0.0
        %1272 = vmatprep.subr.mxu0 0.0
        %1273 = vmatpush1.msra.mxu0 0.0
        %1274 = vmatprep.subr.mxu0 0.0
        %1275 = vmatpush1.msra.mxu0 0.0
        %1276 = vmatprep.subr.mxu0 0.0
        %1277 = vmatpush1.msra.mxu0 0.0
        %1278 = vmatprep.subr.mxu0 0.0
        %1279 = vmatpush1.msra.mxu0 0.0
        %1280 = vmatprep.subr.mxu0 0.0
        %1281 = vmatpush1.msra.mxu0 %v1252
        %1282 = vmatprep.subr.mxu0 0.0
        %1283 = vmatpush1.msra.mxu0 %v1251
        %1284 = vmatprep.subr.mxu0 0.0
        %1285 = vmatpush1.msra.mxu0 %v1250
        %1286 = vmatprep.subr.mxu0 0.0
        %1287 = vmatpush1.msra.mxu0 %v1249
        %1288 = vmatprep.subr.mxu0 0.0
        %1289 = vmatpush2.msra.mxu0 0.0
        %1290 = vmatprep.subr.mxu0 0.0
        %1291 = vmatpush2.msra.mxu0 0.0
        %1292 = vmatprep.subr.mxu0 0.0
        %1293 = vmatpush2.msra.mxu0 0.0
        %1294 = vmatprep.subr.mxu0 0.0
        %1295 = vmatpush2.msra.mxu0 0.0
        %1296 = vmatprep.subr.mxu0 0.0
        %1297 = vmatpush2.msra.mxu0 0.0
        %1298 = vmatprep.subr.mxu0 0.0
        %1299 = vmatpush2.msra.mxu0 0.0
        %1300 = vmatprep.subr.mxu0 0.0
        %1301 = vmatpush2.msra.mxu0 0.0
        %1302 = vmatprep.subr.mxu0 0.0
        %1303 = vmatpush2.msra.mxu0 0.0
        %1304 = vmatprep.subr.mxu0 0.0
        %1305 = vmatpush2.msra.mxu0 0.0
        %1306 = vmatprep.subr.mxu0 0.0
        %1307 = vmatpush2.msra.mxu0 0.0
        %1308 = vmatprep.subr.mxu0 0.0
        %1309 = vmatpush2.msra.mxu0 0.0
        %1310 = vmatprep.subr.mxu0 0.0
        %1311 = vmatpush2.msra.mxu0 0.0
        %1312 = vmatprep.subr.mxu0 0.0
        %1313 = vmatpush2.msra.mxu0 0.0
        %1314 = vmatprep.subr.mxu0 0.0
        %1315 = vmatpush2.msra.mxu0 0.0
        %1316 = vmatprep.subr.mxu0 0.0
        %1317 = vmatpush2.msra.mxu0 0.0
        %1318 = vmatprep.subr.mxu0 0.0
        %1319 = vmatpush2.msra.mxu0 0.0
        %1320 = vmatprep.mubr.f32.mxu0 0.0
        %1321 = vmatmul.mubr.f32.gmra.mxu0 %v1254
        %v1322 = vpop.f32.mrf.mxu0
        %v1323 = vadd.f32 0.0, %v1322
        %v1324 = vpop.f32.mrf.mxu0
        %1325 = vdwg.mxu0
        %v1326 = vadd.f32 %v1247, %v1323
        %v1327 = vld [vmem:[#allocation2 + $0x1b] sm:$0x3f]
        %v1328 = vld [vmem:[%s3 + $0x100] sm:$0xff]
        %v1329 = vld [vmem:[%s3 + $0x108] sm:$0xff]
        %v1330 = vld [vmem:[%s3 + $0x110] sm:$0xff]
        %v1331 = vld [vmem:[%s3 + $0x118] sm:$0xff]
        %v1333 = vsel %vm673, %v1327, 0
        %1335 = vmatprep.subr.mxu0 0.0
        %1336 = vmatpush1.msra.mxu0 0.0
        %1337 = vmatprep.subr.mxu0 0.0
        %1338 = vmatpush1.msra.mxu0 0.0
        %1339 = vmatprep.subr.mxu0 0.0
        %1340 = vmatpush1.msra.mxu0 0.0
        %1341 = vmatprep.subr.mxu0 0.0
        %1342 = vmatpush1.msra.mxu0 0.0
        %1343 = vmatprep.subr.mxu0 0.0
        %1344 = vmatpush1.msra.mxu0 0.0
        %1345 = vmatprep.subr.mxu0 0.0
        %1346 = vmatpush1.msra.mxu0 0.0
        %1347 = vmatprep.subr.mxu0 0.0
        %1348 = vmatpush1.msra.mxu0 0.0
        %1349 = vmatprep.subr.mxu0 0.0
        %1350 = vmatpush1.msra.mxu0 0.0
        %1351 = vmatprep.subr.mxu0 0.0
        %1352 = vmatpush1.msra.mxu0 0.0
        %1353 = vmatprep.subr.mxu0 0.0
        %1354 = vmatpush1.msra.mxu0 0.0
        %1355 = vmatprep.subr.mxu0 0.0
        %1356 = vmatpush1.msra.mxu0 0.0
        %1357 = vmatprep.subr.mxu0 0.0
        %1358 = vmatpush1.msra.mxu0 0.0
        %1359 = vmatprep.subr.mxu0 0.0
        %1360 = vmatpush1.msra.mxu0 %v1331
        %1361 = vmatprep.subr.mxu0 0.0
        %1362 = vmatpush1.msra.mxu0 %v1330
        %1363 = vmatprep.subr.mxu0 0.0
        %1364 = vmatpush1.msra.mxu0 %v1329
        %1365 = vmatprep.subr.mxu0 0.0
        %1366 = vmatpush1.msra.mxu0 %v1328
        %1367 = vmatprep.subr.mxu0 0.0
        %1368 = vmatpush2.msra.mxu0 0.0
        %1369 = vmatprep.subr.mxu0 0.0
        %1370 = vmatpush2.msra.mxu0 0.0
        %1371 = vmatprep.subr.mxu0 0.0
        %1372 = vmatpush2.msra.mxu0 0.0
        %1373 = vmatprep.subr.mxu0 0.0
        %1374 = vmatpush2.msra.mxu0 0.0
        %1375 = vmatprep.subr.mxu0 0.0
        %1376 = vmatpush2.msra.mxu0 0.0
        %1377 = vmatprep.subr.mxu0 0.0
        %1378 = vmatpush2.msra.mxu0 0.0
        %1379 = vmatprep.subr.mxu0 0.0
        %1380 = vmatpush2.msra.mxu0 0.0
        %1381 = vmatprep.subr.mxu0 0.0
        %1382 = vmatpush2.msra.mxu0 0.0
        %1383 = vmatprep.subr.mxu0 0.0
        %1384 = vmatpush2.msra.mxu0 0.0
        %1385 = vmatprep.subr.mxu0 0.0
        %1386 = vmatpush2.msra.mxu0 0.0
        %1387 = vmatprep.subr.mxu0 0.0
        %1388 = vmatpush2.msra.mxu0 0.0
        %1389 = vmatprep.subr.mxu0 0.0
        %1390 = vmatpush2.msra.mxu0 0.0
        %1391 = vmatprep.subr.mxu0 0.0
        %1392 = vmatpush2.msra.mxu0 0.0
        %1393 = vmatprep.subr.mxu0 0.0
        %1394 = vmatpush2.msra.mxu0 0.0
        %1395 = vmatprep.subr.mxu0 0.0
        %1396 = vmatpush2.msra.mxu0 0.0
        %1397 = vmatprep.subr.mxu0 0.0
        %1398 = vmatpush2.msra.mxu0 0.0
        %1399 = vmatprep.mubr.f32.mxu0 0.0
        %1400 = vmatmul.mubr.f32.gmra.mxu0 %v1333
        %v1401 = vpop.f32.mrf.mxu0
        %v1402 = vadd.f32 0.0, %v1401
        %v1403 = vpop.f32.mrf.mxu0
        %1404 = vdwg.mxu0
        %v1405 = vadd.f32 %v1326, %v1402
        %v1406 = vld [vmem:[%s4] sm:$0x1]
        %v1408 = vlaneseq
        %v1409 = vshrl.u32 %v1408, 7
        %v1410 = vsub.s32 0, %v1409
        %v1411 = vrot.slane %v1406, %v1410
        %v1413 = vadd.f32 %v1405, %v1411
        %vm1414 = vcmp.gt.f32.partialorder %v1413, 0.0
        %v1415 = vmul.f32 %v1413, 0.01
        %v1416 = vsel %vm1414, %v1413, %v1415
        %vm1417 = vcmask 521216
        %1418 = vst.msk [vmem:[#allocation3] sm:$0x3f] %vm1417, %v1416
        %v1419 = vld [vmem:[#allocation2 + $0x1a] sm:$0x3f]
        %v1420 = vld [vmem:[%s3] sm:$0xff]
        %v1421 = vld [vmem:[%s3 + $0x8] sm:$0xff]
        %v1422 = vld [vmem:[%s3 + $0x10] sm:$0xff]
        %v1423 = vld [vmem:[%s3 + $0x18] sm:$0xff]
        %v1424 = vld [vmem:[#allocation2 + $0x21] sm:$0x3f]
        %v1425 = vld [vmem:[%s3 + $0x20] sm:$0xff]
        %v1426 = vld [vmem:[%s3 + $0x28] sm:$0xff]
        %v1427 = vld [vmem:[%s3 + $0x30] sm:$0xff]
        %v1428 = vld [vmem:[%s3 + $0x38] sm:$0xff]
        %v1430 = vsel %vm673, %v1424, 0
        %1432 = vmatprep.subr.mxu0 0.0
        %1433 = vmatpush1.msra.mxu0 0.0
        %1434 = vmatprep.subr.mxu0 0.0
        %1435 = vmatpush1.msra.mxu0 0.0
        %1436 = vmatprep.subr.mxu0 0.0
        %1437 = vmatpush1.msra.mxu0 0.0
        %1438 = vmatprep.subr.mxu0 0.0
        %1439 = vmatpush1.msra.mxu0 0.0
        %1440 = vmatprep.subr.mxu0 0.0
        %1441 = vmatpush1.msra.mxu0 0.0
        %1442 = vmatprep.subr.mxu0 0.0
        %1443 = vmatpush1.msra.mxu0 0.0
        %1444 = vmatprep.subr.mxu0 0.0
        %1445 = vmatpush1.msra.mxu0 0.0
        %1446 = vmatprep.subr.mxu0 0.0
        %1447 = vmatpush1.msra.mxu0 0.0
        %1448 = vmatprep.subr.mxu0 0.0
        %1449 = vmatpush1.msra.mxu0 0.0
        %1450 = vmatprep.subr.mxu0 0.0
        %1451 = vmatpush1.msra.mxu0 0.0
        %1452 = vmatprep.subr.mxu0 0.0
        %1453 = vmatpush1.msra.mxu0 0.0
        %1454 = vmatprep.subr.mxu0 0.0
        %1455 = vmatpush1.msra.mxu0 0.0
        %1456 = vmatprep.subr.mxu0 0.0
        %1457 = vmatpush1.msra.mxu0 %v1428
        %1458 = vmatprep.subr.mxu0 0.0
        %1459 = vmatpush1.msra.mxu0 %v1427
        %1460 = vmatprep.subr.mxu0 0.0
        %1461 = vmatpush1.msra.mxu0 %v1426
        %1462 = vmatprep.subr.mxu0 0.0
        %1463 = vmatpush1.msra.mxu0 %v1425
        %1464 = vmatprep.subr.mxu0 0.0
        %1465 = vmatpush2.msra.mxu0 0.0
        %1466 = vmatprep.subr.mxu0 0.0
        %1467 = vmatpush2.msra.mxu0 0.0
        %1468 = vmatprep.subr.mxu0 0.0
        %1469 = vmatpush2.msra.mxu0 0.0
        %1470 = vmatprep.subr.mxu0 0.0
        %1471 = vmatpush2.msra.mxu0 0.0
        %1472 = vmatprep.subr.mxu0 0.0
        %1473 = vmatpush2.msra.mxu0 0.0
        %1474 = vmatprep.subr.mxu0 0.0
        %1475 = vmatpush2.msra.mxu0 0.0
        %1476 = vmatprep.subr.mxu0 0.0
        %1477 = vmatpush2.msra.mxu0 0.0
        %1478 = vmatprep.subr.mxu0 0.0
        %1479 = vmatpush2.msra.mxu0 0.0
        %1480 = vmatprep.subr.mxu0 0.0
        %1481 = vmatpush2.msra.mxu0 0.0
        %1482 = vmatprep.subr.mxu0 0.0
        %1483 = vmatpush2.msra.mxu0 0.0
        %1484 = vmatprep.subr.mxu0 0.0
        %1485 = vmatpush2.msra.mxu0 0.0
        %1486 = vmatprep.subr.mxu0 0.0
        %1487 = vmatpush2.msra.mxu0 0.0
        %1488 = vmatprep.subr.mxu0 0.0
        %1489 = vmatpush2.msra.mxu0 0.0
        %1490 = vmatprep.subr.mxu0 0.0
        %1491 = vmatpush2.msra.mxu0 0.0
        %1492 = vmatprep.subr.mxu0 0.0
        %1493 = vmatpush2.msra.mxu0 0.0
        %1494 = vmatprep.subr.mxu0 0.0
        %1495 = vmatpush2.msra.mxu0 0.0
        %1496 = vmatprep.mubr.f32.mxu0 0.0
        %1497 = vmatmul.mubr.f32.gmra.mxu0 %v1430
        %v1498 = vpop.f32.mrf.mxu0
        %v1499 = vadd.f32 0.0, %v1498
        %v1500 = vpop.f32.mrf.mxu0
        %1501 = vdwg.mxu0
        %v1503 = vsel %vm673, %v1419, 0
        %1505 = vmatprep.subr.mxu0 0.0
        %1506 = vmatpush1.msra.mxu0 0.0
        %1507 = vmatprep.subr.mxu0 0.0
        %1508 = vmatpush1.msra.mxu0 0.0
        %1509 = vmatprep.subr.mxu0 0.0
        %1510 = vmatpush1.msra.mxu0 0.0
        %1511 = vmatprep.subr.mxu0 0.0
        %1512 = vmatpush1.msra.mxu0 0.0
        %1513 = vmatprep.subr.mxu0 0.0
        %1514 = vmatpush1.msra.mxu0 0.0
        %1515 = vmatprep.subr.mxu0 0.0
        %1516 = vmatpush1.msra.mxu0 0.0
        %1517 = vmatprep.subr.mxu0 0.0
        %1518 = vmatpush1.msra.mxu0 0.0
        %1519 = vmatprep.subr.mxu0 0.0
        %1520 = vmatpush1.msra.mxu0 0.0
        %1521 = vmatprep.subr.mxu0 0.0
        %1522 = vmatpush1.msra.mxu0 0.0
        %1523 = vmatprep.subr.mxu0 0.0
        %1524 = vmatpush1.msra.mxu0 0.0
        %1525 = vmatprep.subr.mxu0 0.0
        %1526 = vmatpush1.msra.mxu0 0.0
        %1527 = vmatprep.subr.mxu0 0.0
        %1528 = vmatpush1.msra.mxu0 0.0
        %1529 = vmatprep.subr.mxu0 0.0
        %1530 = vmatpush1.msra.mxu0 %v1423
        %1531 = vmatprep.subr.mxu0 0.0
        %1532 = vmatpush1.msra.mxu0 %v1422
        %1533 = vmatprep.subr.mxu0 0.0
        %1534 = vmatpush1.msra.mxu0 %v1421
        %1535 = vmatprep.subr.mxu0 0.0
        %1536 = vmatpush1.msra.mxu0 %v1420
        %1537 = vmatprep.subr.mxu0 0.0
        %1538 = vmatpush2.msra.mxu0 0.0
        %1539 = vmatprep.subr.mxu0 0.0
        %1540 = vmatpush2.msra.mxu0 0.0
        %1541 = vmatprep.subr.mxu0 0.0
        %1542 = vmatpush2.msra.mxu0 0.0
        %1543 = vmatprep.subr.mxu0 0.0
        %1544 = vmatpush2.msra.mxu0 0.0
        %1545 = vmatprep.subr.mxu0 0.0
        %1546 = vmatpush2.msra.mxu0 0.0
        %1547 = vmatprep.subr.mxu0 0.0
        %1548 = vmatpush2.msra.mxu0 0.0
        %1549 = vmatprep.subr.mxu0 0.0
        %1550 = vmatpush2.msra.mxu0 0.0
        %1551 = vmatprep.subr.mxu0 0.0
        %1552 = vmatpush2.msra.mxu0 0.0
        %1553 = vmatprep.subr.mxu0 0.0
        %1554 = vmatpush2.msra.mxu0 0.0
        %1555 = vmatprep.subr.mxu0 0.0
        %1556 = vmatpush2.msra.mxu0 0.0
        %1557 = vmatprep.subr.mxu0 0.0
        %1558 = vmatpush2.msra.mxu0 0.0
        %1559 = vmatprep.subr.mxu0 0.0
        %1560 = vmatpush2.msra.mxu0 0.0
        %1561 = vmatprep.subr.mxu0 0.0
        %1562 = vmatpush2.msra.mxu0 0.0
        %1563 = vmatprep.subr.mxu0 0.0
        %1564 = vmatpush2.msra.mxu0 0.0
        %1565 = vmatprep.subr.mxu0 0.0
        %1566 = vmatpush2.msra.mxu0 0.0
        %1567 = vmatprep.subr.mxu0 0.0
        %1568 = vmatpush2.msra.mxu0 0.0
        %1569 = vmatprep.mubr.f32.mxu0 0.0
        %1570 = vmatmul.mubr.f32.gmra.mxu0 %v1503
        %v1571 = vpop.f32.mrf.mxu0
        %v1572 = vadd.f32 %v1499, %v1571
        %v1573 = vpop.f32.mrf.mxu0
        %1574 = vdwg.mxu0
        %v1575 = vld [vmem:[#allocation2 + $0x1b] sm:$0x3f]
        %v1576 = vld [vmem:[%s3 + $0x40] sm:$0xff]
        %v1577 = vld [vmem:[%s3 + $0x48] sm:$0xff]
        %v1578 = vld [vmem:[%s3 + $0x50] sm:$0xff]
        %v1579 = vld [vmem:[%s3 + $0x58] sm:$0xff]
        %v1581 = vsel %vm673, %v1575, 0
        %1583 = vmatprep.subr.mxu0 0.0
        %1584 = vmatpush1.msra.mxu0 0.0
        %1585 = vmatprep.subr.mxu0 0.0
        %1586 = vmatpush1.msra.mxu0 0.0
        %1587 = vmatprep.subr.mxu0 0.0
        %1588 = vmatpush1.msra.mxu0 0.0
        %1589 = vmatprep.subr.mxu0 0.0
        %1590 = vmatpush1.msra.mxu0 0.0
        %1591 = vmatprep.subr.mxu0 0.0
        %1592 = vmatpush1.msra.mxu0 0.0
        %1593 = vmatprep.subr.mxu0 0.0
        %1594 = vmatpush1.msra.mxu0 0.0
        %1595 = vmatprep.subr.mxu0 0.0
        %1596 = vmatpush1.msra.mxu0 0.0
        %1597 = vmatprep.subr.mxu0 0.0
        %1598 = vmatpush1.msra.mxu0 0.0
        %1599 = vmatprep.subr.mxu0 0.0
        %1600 = vmatpush1.msra.mxu0 0.0
        %1601 = vmatprep.subr.mxu0 0.0
        %1602 = vmatpush1.msra.mxu0 0.0
        %1603 = vmatprep.subr.mxu0 0.0
        %1604 = vmatpush1.msra.mxu0 0.0
        %1605 = vmatprep.subr.mxu0 0.0
        %1606 = vmatpush1.msra.mxu0 0.0
        %1607 = vmatprep.subr.mxu0 0.0
        %1608 = vmatpush1.msra.mxu0 %v1579
        %1609 = vmatprep.subr.mxu0 0.0
        %1610 = vmatpush1.msra.mxu0 %v1578
        %1611 = vmatprep.subr.mxu0 0.0
        %1612 = vmatpush1.msra.mxu0 %v1577
        %1613 = vmatprep.subr.mxu0 0.0
        %1614 = vmatpush1.msra.mxu0 %v1576
        %1615 = vmatprep.subr.mxu0 0.0
        %1616 = vmatpush2.msra.mxu0 0.0
        %1617 = vmatprep.subr.mxu0 0.0
        %1618 = vmatpush2.msra.mxu0 0.0
        %1619 = vmatprep.subr.mxu0 0.0
        %1620 = vmatpush2.msra.mxu0 0.0
        %1621 = vmatprep.subr.mxu0 0.0
        %1622 = vmatpush2.msra.mxu0 0.0
        %1623 = vmatprep.subr.mxu0 0.0
        %1624 = vmatpush2.msra.mxu0 0.0
        %1625 = vmatprep.subr.mxu0 0.0
        %1626 = vmatpush2.msra.mxu0 0.0
        %1627 = vmatprep.subr.mxu0 0.0
        %1628 = vmatpush2.msra.mxu0 0.0
        %1629 = vmatprep.subr.mxu0 0.0
        %1630 = vmatpush2.msra.mxu0 0.0
        %1631 = vmatprep.subr.mxu0 0.0
        %1632 = vmatpush2.msra.mxu0 0.0
        %1633 = vmatprep.subr.mxu0 0.0
        %1634 = vmatpush2.msra.mxu0 0.0
        %1635 = vmatprep.subr.mxu0 0.0
        %1636 = vmatpush2.msra.mxu0 0.0
        %1637 = vmatprep.subr.mxu0 0.0
        %1638 = vmatpush2.msra.mxu0 0.0
        %1639 = vmatprep.subr.mxu0 0.0
        %1640 = vmatpush2.msra.mxu0 0.0
        %1641 = vmatprep.subr.mxu0 0.0
        %1642 = vmatpush2.msra.mxu0 0.0
        %1643 = vmatprep.subr.mxu0 0.0
        %1644 = vmatpush2.msra.mxu0 0.0
        %1645 = vmatprep.subr.mxu0 0.0
        %1646 = vmatpush2.msra.mxu0 0.0
        %1647 = vmatprep.mubr.f32.mxu0 0.0
        %1648 = vmatmul.mubr.f32.gmra.mxu0 %v1581
        %v1649 = vpop.f32.mrf.mxu0
        %v1650 = vadd.f32 0.0, %v1649
        %v1651 = vpop.f32.mrf.mxu0
        %1652 = vdwg.mxu0
        %v1653 = vadd.f32 %v1572, %v1650
        %v1654 = vld [vmem:[#allocation2 + $0x27] sm:$0x3f]
        %v1655 = vld [vmem:[%s3 + $0x60] sm:$0xff]
        %v1656 = vld [vmem:[%s3 + $0x68] sm:$0xff]
        %v1657 = vld [vmem:[%s3 + $0x70] sm:$0xff]
        %v1658 = vld [vmem:[%s3 + $0x78] sm:$0xff]
        %v1660 = vsel %vm673, %v1654, 0
        %1662 = vmatprep.subr.mxu0 0.0
        %1663 = vmatpush1.msra.mxu0 0.0
        %1664 = vmatprep.subr.mxu0 0.0
        %1665 = vmatpush1.msra.mxu0 0.0
        %1666 = vmatprep.subr.mxu0 0.0
        %1667 = vmatpush1.msra.mxu0 0.0
        %1668 = vmatprep.subr.mxu0 0.0
        %1669 = vmatpush1.msra.mxu0 0.0
        %1670 = vmatprep.subr.mxu0 0.0
        %1671 = vmatpush1.msra.mxu0 0.0
        %1672 = vmatprep.subr.mxu0 0.0
        %1673 = vmatpush1.msra.mxu0 0.0
        %1674 = vmatprep.subr.mxu0 0.0
        %1675 = vmatpush1.msra.mxu0 0.0
        %1676 = vmatprep.subr.mxu0 0.0
        %1677 = vmatpush1.msra.mxu0 0.0
        %1678 = vmatprep.subr.mxu0 0.0
        %1679 = vmatpush1.msra.mxu0 0.0
        %1680 = vmatprep.subr.mxu0 0.0
        %1681 = vmatpush1.msra.mxu0 0.0
        %1682 = vmatprep.subr.mxu0 0.0
        %1683 = vmatpush1.msra.mxu0 0.0
        %1684 = vmatprep.subr.mxu0 0.0
        %1685 = vmatpush1.msra.mxu0 0.0
        %1686 = vmatprep.subr.mxu0 0.0
        %1687 = vmatpush1.msra.mxu0 %v1658
        %1688 = vmatprep.subr.mxu0 0.0
        %1689 = vmatpush1.msra.mxu0 %v1657
        %1690 = vmatprep.subr.mxu0 0.0
        %1691 = vmatpush1.msra.mxu0 %v1656
        %1692 = vmatprep.subr.mxu0 0.0
        %1693 = vmatpush1.msra.mxu0 %v1655
        %1694 = vmatprep.subr.mxu0 0.0
        %1695 = vmatpush2.msra.mxu0 0.0
        %1696 = vmatprep.subr.mxu0 0.0
        %1697 = vmatpush2.msra.mxu0 0.0
        %1698 = vmatprep.subr.mxu0 0.0
        %1699 = vmatpush2.msra.mxu0 0.0
        %1700 = vmatprep.subr.mxu0 0.0
        %1701 = vmatpush2.msra.mxu0 0.0
        %1702 = vmatprep.subr.mxu0 0.0
        %1703 = vmatpush2.msra.mxu0 0.0
        %1704 = vmatprep.subr.mxu0 0.0
        %1705 = vmatpush2.msra.mxu0 0.0
        %1706 = vmatprep.subr.mxu0 0.0
        %1707 = vmatpush2.msra.mxu0 0.0
        %1708 = vmatprep.subr.mxu0 0.0
        %1709 = vmatpush2.msra.mxu0 0.0
        %1710 = vmatprep.subr.mxu0 0.0
        %1711 = vmatpush2.msra.mxu0 0.0
        %1712 = vmatprep.subr.mxu0 0.0
        %1713 = vmatpush2.msra.mxu0 0.0
        %1714 = vmatprep.subr.mxu0 0.0
        %1715 = vmatpush2.msra.mxu0 0.0
        %1716 = vmatprep.subr.mxu0 0.0
        %1717 = vmatpush2.msra.mxu0 0.0
        %1718 = vmatprep.subr.mxu0 0.0
        %1719 = vmatpush2.msra.mxu0 0.0
        %1720 = vmatprep.subr.mxu0 0.0
        %1721 = vmatpush2.msra.mxu0 0.0
        %1722 = vmatprep.subr.mxu0 0.0
        %1723 = vmatpush2.msra.mxu0 0.0
        %1724 = vmatprep.subr.mxu0 0.0
        %1725 = vmatpush2.msra.mxu0 0.0
        %1726 = vmatprep.mubr.f32.mxu0 0.0
        %1727 = vmatmul.mubr.f32.gmra.mxu0 %v1660
        %v1728 = vpop.f32.mrf.mxu0
        %v1729 = vadd.f32 0.0, %v1728
        %v1730 = vpop.f32.mrf.mxu0
        %1731 = vdwg.mxu0
        %v1732 = vadd.f32 %v1653, %v1729
        %v1733 = vld [vmem:[#allocation2 + $0x2e] sm:$0x3f]
        %v1734 = vld [vmem:[%s3 + $0x80] sm:$0xff]
        %v1735 = vld [vmem:[%s3 + $0x88] sm:$0xff]
        %v1736 = vld [vmem:[%s3 + $0x90] sm:$0xff]
        %v1737 = vld [vmem:[%s3 + $0x98] sm:$0xff]
        %v1739 = vsel %vm673, %v1733, 0
        %1741 = vmatprep.subr.mxu0 0.0
        %1742 = vmatpush1.msra.mxu0 0.0
        %1743 = vmatprep.subr.mxu0 0.0
        %1744 = vmatpush1.msra.mxu0 0.0
        %1745 = vmatprep.subr.mxu0 0.0
        %1746 = vmatpush1.msra.mxu0 0.0
        %1747 = vmatprep.subr.mxu0 0.0
        %1748 = vmatpush1.msra.mxu0 0.0
        %1749 = vmatprep.subr.mxu0 0.0
        %1750 = vmatpush1.msra.mxu0 0.0
        %1751 = vmatprep.subr.mxu0 0.0
        %1752 = vmatpush1.msra.mxu0 0.0
        %1753 = vmatprep.subr.mxu0 0.0
        %1754 = vmatpush1.msra.mxu0 0.0
        %1755 = vmatprep.subr.mxu0 0.0
        %1756 = vmatpush1.msra.mxu0 0.0
        %1757 = vmatprep.subr.mxu0 0.0
        %1758 = vmatpush1.msra.mxu0 0.0
        %1759 = vmatprep.subr.mxu0 0.0
        %1760 = vmatpush1.msra.mxu0 0.0
        %1761 = vmatprep.subr.mxu0 0.0
        %1762 = vmatpush1.msra.mxu0 0.0
        %1763 = vmatprep.subr.mxu0 0.0
        %1764 = vmatpush1.msra.mxu0 0.0
        %1765 = vmatprep.subr.mxu0 0.0
        %1766 = vmatpush1.msra.mxu0 %v1737
        %1767 = vmatprep.subr.mxu0 0.0
        %1768 = vmatpush1.msra.mxu0 %v1736
        %1769 = vmatprep.subr.mxu0 0.0
        %1770 = vmatpush1.msra.mxu0 %v1735
        %1771 = vmatprep.subr.mxu0 0.0
        %1772 = vmatpush1.msra.mxu0 %v1734
        %1773 = vmatprep.subr.mxu0 0.0
        %1774 = vmatpush2.msra.mxu0 0.0
        %1775 = vmatprep.subr.mxu0 0.0
        %1776 = vmatpush2.msra.mxu0 0.0
        %1777 = vmatprep.subr.mxu0 0.0
        %1778 = vmatpush2.msra.mxu0 0.0
        %1779 = vmatprep.subr.mxu0 0.0
        %1780 = vmatpush2.msra.mxu0 0.0
        %1781 = vmatprep.subr.mxu0 0.0
        %1782 = vmatpush2.msra.mxu0 0.0
        %1783 = vmatprep.subr.mxu0 0.0
        %1784 = vmatpush2.msra.mxu0 0.0
        %1785 = vmatprep.subr.mxu0 0.0
        %1786 = vmatpush2.msra.mxu0 0.0
        %1787 = vmatprep.subr.mxu0 0.0
        %1788 = vmatpush2.msra.mxu0 0.0
        %1789 = vmatprep.subr.mxu0 0.0
        %1790 = vmatpush2.msra.mxu0 0.0
        %1791 = vmatprep.subr.mxu0 0.0
        %1792 = vmatpush2.msra.mxu0 0.0
        %1793 = vmatprep.subr.mxu0 0.0
        %1794 = vmatpush2.msra.mxu0 0.0
        %1795 = vmatprep.subr.mxu0 0.0
        %1796 = vmatpush2.msra.mxu0 0.0
        %1797 = vmatprep.subr.mxu0 0.0
        %1798 = vmatpush2.msra.mxu0 0.0
        %1799 = vmatprep.subr.mxu0 0.0
        %1800 = vmatpush2.msra.mxu0 0.0
        %1801 = vmatprep.subr.mxu0 0.0
        %1802 = vmatpush2.msra.mxu0 0.0
        %1803 = vmatprep.subr.mxu0 0.0
        %1804 = vmatpush2.msra.mxu0 0.0
        %1805 = vmatprep.mubr.f32.mxu0 0.0
        %1806 = vmatmul.mubr.f32.gmra.mxu0 %v1739
        %v1807 = vpop.f32.mrf.mxu0
        %v1808 = vadd.f32 0.0, %v1807
        %v1809 = vpop.f32.mrf.mxu0
        %1810 = vdwg.mxu0
        %v1811 = vadd.f32 %v1732, %v1808
        %v1812 = vld [vmem:[#allocation2 + $0x28] sm:$0x3f]
        %v1813 = vld [vmem:[%s3 + $0xa0] sm:$0xff]
        %v1814 = vld [vmem:[%s3 + $0xa8] sm:$0xff]
        %v1815 = vld [vmem:[%s3 + $0xb0] sm:$0xff]
        %v1816 = vld [vmem:[%s3 + $0xb8] sm:$0xff]
        %v1818 = vsel %vm673, %v1812, 0
        %1820 = vmatprep.subr.mxu0 0.0
        %1821 = vmatpush1.msra.mxu0 0.0
        %1822 = vmatprep.subr.mxu0 0.0
        %1823 = vmatpush1.msra.mxu0 0.0
        %1824 = vmatprep.subr.mxu0 0.0
        %1825 = vmatpush1.msra.mxu0 0.0
        %1826 = vmatprep.subr.mxu0 0.0
        %1827 = vmatpush1.msra.mxu0 0.0
        %1828 = vmatprep.subr.mxu0 0.0
        %1829 = vmatpush1.msra.mxu0 0.0
        %1830 = vmatprep.subr.mxu0 0.0
        %1831 = vmatpush1.msra.mxu0 0.0
        %1832 = vmatprep.subr.mxu0 0.0
        %1833 = vmatpush1.msra.mxu0 0.0
        %1834 = vmatprep.subr.mxu0 0.0
        %1835 = vmatpush1.msra.mxu0 0.0
        %1836 = vmatprep.subr.mxu0 0.0
        %1837 = vmatpush1.msra.mxu0 0.0
        %1838 = vmatprep.subr.mxu0 0.0
        %1839 = vmatpush1.msra.mxu0 0.0
        %1840 = vmatprep.subr.mxu0 0.0
        %1841 = vmatpush1.msra.mxu0 0.0
        %1842 = vmatprep.subr.mxu0 0.0
        %1843 = vmatpush1.msra.mxu0 0.0
        %1844 = vmatprep.subr.mxu0 0.0
        %1845 = vmatpush1.msra.mxu0 %v1816
        %1846 = vmatprep.subr.mxu0 0.0
        %1847 = vmatpush1.msra.mxu0 %v1815
        %1848 = vmatprep.subr.mxu0 0.0
        %1849 = vmatpush1.msra.mxu0 %v1814
        %1850 = vmatprep.subr.mxu0 0.0
        %1851 = vmatpush1.msra.mxu0 %v1813
        %1852 = vmatprep.subr.mxu0 0.0
        %1853 = vmatpush2.msra.mxu0 0.0
        %1854 = vmatprep.subr.mxu0 0.0
        %1855 = vmatpush2.msra.mxu0 0.0
        %1856 = vmatprep.subr.mxu0 0.0
        %1857 = vmatpush2.msra.mxu0 0.0
        %1858 = vmatprep.subr.mxu0 0.0
        %1859 = vmatpush2.msra.mxu0 0.0
        %1860 = vmatprep.subr.mxu0 0.0
        %1861 = vmatpush2.msra.mxu0 0.0
        %1862 = vmatprep.subr.mxu0 0.0
        %1863 = vmatpush2.msra.mxu0 0.0
        %1864 = vmatprep.subr.mxu0 0.0
        %1865 = vmatpush2.msra.mxu0 0.0
        %1866 = vmatprep.subr.mxu0 0.0
        %1867 = vmatpush2.msra.mxu0 0.0
        %1868 = vmatprep.subr.mxu0 0.0
        %1869 = vmatpush2.msra.mxu0 0.0
        %1870 = vmatprep.subr.mxu0 0.0
        %1871 = vmatpush2.msra.mxu0 0.0
        %1872 = vmatprep.subr.mxu0 0.0
        %1873 = vmatpush2.msra.mxu0 0.0
        %1874 = vmatprep.subr.mxu0 0.0
        %1875 = vmatpush2.msra.mxu0 0.0
        %1876 = vmatprep.subr.mxu0 0.0
        %1877 = vmatpush2.msra.mxu0 0.0
        %1878 = vmatprep.subr.mxu0 0.0
        %1879 = vmatpush2.msra.mxu0 0.0
        %1880 = vmatprep.subr.mxu0 0.0
        %1881 = vmatpush2.msra.mxu0 0.0
        %1882 = vmatprep.subr.mxu0 0.0
        %1883 = vmatpush2.msra.mxu0 0.0
        %1884 = vmatprep.mubr.f32.mxu0 0.0
        %1885 = vmatmul.mubr.f32.gmra.mxu0 %v1818
        %v1886 = vpop.f32.mrf.mxu0
        %v1887 = vadd.f32 0.0, %v1886
        %v1888 = vpop.f32.mrf.mxu0
        %1889 = vdwg.mxu0
        %v1890 = vadd.f32 %v1811, %v1887
        %v1891 = vld [vmem:[#allocation2 + $0x34] sm:$0x3f]
        %v1892 = vld [vmem:[%s3 + $0xc0] sm:$0xff]
        %v1893 = vld [vmem:[%s3 + $0xc8] sm:$0xff]
        %v1894 = vld [vmem:[%s3 + $0xd0] sm:$0xff]
        %v1895 = vld [vmem:[%s3 + $0xd8] sm:$0xff]
        %v1897 = vsel %vm673, %v1891, 0
        %1899 = vmatprep.subr.mxu0 0.0
        %1900 = vmatpush1.msra.mxu0 0.0
        %1901 = vmatprep.subr.mxu0 0.0
        %1902 = vmatpush1.msra.mxu0 0.0
        %1903 = vmatprep.subr.mxu0 0.0
        %1904 = vmatpush1.msra.mxu0 0.0
        %1905 = vmatprep.subr.mxu0 0.0
        %1906 = vmatpush1.msra.mxu0 0.0
        %1907 = vmatprep.subr.mxu0 0.0
        %1908 = vmatpush1.msra.mxu0 0.0
        %1909 = vmatprep.subr.mxu0 0.0
        %1910 = vmatpush1.msra.mxu0 0.0
        %1911 = vmatprep.subr.mxu0 0.0
        %1912 = vmatpush1.msra.mxu0 0.0
        %1913 = vmatprep.subr.mxu0 0.0
        %1914 = vmatpush1.msra.mxu0 0.0
        %1915 = vmatprep.subr.mxu0 0.0
        %1916 = vmatpush1.msra.mxu0 0.0
        %1917 = vmatprep.subr.mxu0 0.0
        %1918 = vmatpush1.msra.mxu0 0.0
        %1919 = vmatprep.subr.mxu0 0.0
        %1920 = vmatpush1.msra.mxu0 0.0
        %1921 = vmatprep.subr.mxu0 0.0
        %1922 = vmatpush1.msra.mxu0 0.0
        %1923 = vmatprep.subr.mxu0 0.0
        %1924 = vmatpush1.msra.mxu0 %v1895
        %1925 = vmatprep.subr.mxu0 0.0
        %1926 = vmatpush1.msra.mxu0 %v1894
        %1927 = vmatprep.subr.mxu0 0.0
        %1928 = vmatpush1.msra.mxu0 %v1893
        %1929 = vmatprep.subr.mxu0 0.0
        %1930 = vmatpush1.msra.mxu0 %v1892
        %1931 = vmatprep.subr.mxu0 0.0
        %1932 = vmatpush2.msra.mxu0 0.0
        %1933 = vmatprep.subr.mxu0 0.0
        %1934 = vmatpush2.msra.mxu0 0.0
        %1935 = vmatprep.subr.mxu0 0.0
        %1936 = vmatpush2.msra.mxu0 0.0
        %1937 = vmatprep.subr.mxu0 0.0
        %1938 = vmatpush2.msra.mxu0 0.0
        %1939 = vmatprep.subr.mxu0 0.0
        %1940 = vmatpush2.msra.mxu0 0.0
        %1941 = vmatprep.subr.mxu0 0.0
        %1942 = vmatpush2.msra.mxu0 0.0
        %1943 = vmatprep.subr.mxu0 0.0
        %1944 = vmatpush2.msra.mxu0 0.0
        %1945 = vmatprep.subr.mxu0 0.0
        %1946 = vmatpush2.msra.mxu0 0.0
        %1947 = vmatprep.subr.mxu0 0.0
        %1948 = vmatpush2.msra.mxu0 0.0
        %1949 = vmatprep.subr.mxu0 0.0
        %1950 = vmatpush2.msra.mxu0 0.0
        %1951 = vmatprep.subr.mxu0 0.0
        %1952 = vmatpush2.msra.mxu0 0.0
        %1953 = vmatprep.subr.mxu0 0.0
        %1954 = vmatpush2.msra.mxu0 0.0
        %1955 = vmatprep.subr.mxu0 0.0
        %1956 = vmatpush2.msra.mxu0 0.0
        %1957 = vmatprep.subr.mxu0 0.0
        %1958 = vmatpush2.msra.mxu0 0.0
        %1959 = vmatprep.subr.mxu0 0.0
        %1960 = vmatpush2.msra.mxu0 0.0
        %1961 = vmatprep.subr.mxu0 0.0
        %1962 = vmatpush2.msra.mxu0 0.0
        %1963 = vmatprep.mubr.f32.mxu0 0.0
        %1964 = vmatmul.mubr.f32.gmra.mxu0 %v1897
        %v1965 = vpop.f32.mrf.mxu0
        %v1966 = vadd.f32 0.0, %v1965
        %v1967 = vpop.f32.mrf.mxu0
        %1968 = vdwg.mxu0
        %v1969 = vadd.f32 %v1890, %v1966
        %v1970 = vld [vmem:[#allocation2 + $0x3b] sm:$0x3f]
        %v1971 = vld [vmem:[%s3 + $0xe0] sm:$0xff]
        %v1972 = vld [vmem:[%s3 + $0xe8] sm:$0xff]
        %v1973 = vld [vmem:[%s3 + $0xf0] sm:$0xff]
        %v1974 = vld [vmem:[%s3 + $0xf8] sm:$0xff]
        %v1976 = vsel %vm673, %v1970, 0
        %1978 = vmatprep.subr.mxu0 0.0
        %1979 = vmatpush1.msra.mxu0 0.0
        %1980 = vmatprep.subr.mxu0 0.0
        %1981 = vmatpush1.msra.mxu0 0.0
        %1982 = vmatprep.subr.mxu0 0.0
        %1983 = vmatpush1.msra.mxu0 0.0
        %1984 = vmatprep.subr.mxu0 0.0
        %1985 = vmatpush1.msra.mxu0 0.0
        %1986 = vmatprep.subr.mxu0 0.0
        %1987 = vmatpush1.msra.mxu0 0.0
        %1988 = vmatprep.subr.mxu0 0.0
        %1989 = vmatpush1.msra.mxu0 0.0
        %1990 = vmatprep.subr.mxu0 0.0
        %1991 = vmatpush1.msra.mxu0 0.0
        %1992 = vmatprep.subr.mxu0 0.0
        %1993 = vmatpush1.msra.mxu0 0.0
        %1994 = vmatprep.subr.mxu0 0.0
        %1995 = vmatpush1.msra.mxu0 0.0
        %1996 = vmatprep.subr.mxu0 0.0
        %1997 = vmatpush1.msra.mxu0 0.0
        %1998 = vmatprep.subr.mxu0 0.0
        %1999 = vmatpush1.msra.mxu0 0.0
        %2000 = vmatprep.subr.mxu0 0.0
        %2001 = vmatpush1.msra.mxu0 0.0
        %2002 = vmatprep.subr.mxu0 0.0
        %2003 = vmatpush1.msra.mxu0 %v1974
        %2004 = vmatprep.subr.mxu0 0.0
        %2005 = vmatpush1.msra.mxu0 %v1973
        %2006 = vmatprep.subr.mxu0 0.0
        %2007 = vmatpush1.msra.mxu0 %v1972
        %2008 = vmatprep.subr.mxu0 0.0
        %2009 = vmatpush1.msra.mxu0 %v1971
        %2010 = vmatprep.subr.mxu0 0.0
        %2011 = vmatpush2.msra.mxu0 0.0
        %2012 = vmatprep.subr.mxu0 0.0
        %2013 = vmatpush2.msra.mxu0 0.0
        %2014 = vmatprep.subr.mxu0 0.0
        %2015 = vmatpush2.msra.mxu0 0.0
        %2016 = vmatprep.subr.mxu0 0.0
        %2017 = vmatpush2.msra.mxu0 0.0
        %2018 = vmatprep.subr.mxu0 0.0
        %2019 = vmatpush2.msra.mxu0 0.0
        %2020 = vmatprep.subr.mxu0 0.0
        %2021 = vmatpush2.msra.mxu0 0.0
        %2022 = vmatprep.subr.mxu0 0.0
        %2023 = vmatpush2.msra.mxu0 0.0
        %2024 = vmatprep.subr.mxu0 0.0
        %2025 = vmatpush2.msra.mxu0 0.0
        %2026 = vmatprep.subr.mxu0 0.0
        %2027 = vmatpush2.msra.mxu0 0.0
        %2028 = vmatprep.subr.mxu0 0.0
        %2029 = vmatpush2.msra.mxu0 0.0
        %2030 = vmatprep.subr.mxu0 0.0
        %2031 = vmatpush2.msra.mxu0 0.0
        %2032 = vmatprep.subr.mxu0 0.0
        %2033 = vmatpush2.msra.mxu0 0.0
        %2034 = vmatprep.subr.mxu0 0.0
        %2035 = vmatpush2.msra.mxu0 0.0
        %2036 = vmatprep.subr.mxu0 0.0
        %2037 = vmatpush2.msra.mxu0 0.0
        %2038 = vmatprep.subr.mxu0 0.0
        %2039 = vmatpush2.msra.mxu0 0.0
        %2040 = vmatprep.subr.mxu0 0.0
        %2041 = vmatpush2.msra.mxu0 0.0
        %2042 = vmatprep.mubr.f32.mxu0 0.0
        %2043 = vmatmul.mubr.f32.gmra.mxu0 %v1976
        %v2044 = vpop.f32.mrf.mxu0
        %v2045 = vadd.f32 0.0, %v2044
        %v2046 = vpop.f32.mrf.mxu0
        %2047 = vdwg.mxu0
        %v2048 = vadd.f32 %v1969, %v2045
        %v2049 = vld [vmem:[#allocation2 + $0x35] sm:$0x3f]
        %v2050 = vld [vmem:[%s3 + $0x100] sm:$0xff]
        %v2051 = vld [vmem:[%s3 + $0x108] sm:$0xff]
        %v2052 = vld [vmem:[%s3 + $0x110] sm:$0xff]
        %v2053 = vld [vmem:[%s3 + $0x118] sm:$0xff]
        %v2055 = vsel %vm673, %v2049, 0
        %2057 = vmatprep.subr.mxu0 0.0
        %2058 = vmatpush1.msra.mxu0 0.0
        %2059 = vmatprep.subr.mxu0 0.0
        %2060 = vmatpush1.msra.mxu0 0.0
        %2061 = vmatprep.subr.mxu0 0.0
        %2062 = vmatpush1.msra.mxu0 0.0
        %2063 = vmatprep.subr.mxu0 0.0
        %2064 = vmatpush1.msra.mxu0 0.0
        %2065 = vmatprep.subr.mxu0 0.0
        %2066 = vmatpush1.msra.mxu0 0.0
        %2067 = vmatprep.subr.mxu0 0.0
        %2068 = vmatpush1.msra.mxu0 0.0
        %2069 = vmatprep.subr.mxu0 0.0
        %2070 = vmatpush1.msra.mxu0 0.0
        %2071 = vmatprep.subr.mxu0 0.0
        %2072 = vmatpush1.msra.mxu0 0.0
        %2073 = vmatprep.subr.mxu0 0.0
        %2074 = vmatpush1.msra.mxu0 0.0
        %2075 = vmatprep.subr.mxu0 0.0
        %2076 = vmatpush1.msra.mxu0 0.0
        %2077 = vmatprep.subr.mxu0 0.0
        %2078 = vmatpush1.msra.mxu0 0.0
        %2079 = vmatprep.subr.mxu0 0.0
        %2080 = vmatpush1.msra.mxu0 0.0
        %2081 = vmatprep.subr.mxu0 0.0
        %2082 = vmatpush1.msra.mxu0 %v2053
        %2083 = vmatprep.subr.mxu0 0.0
        %2084 = vmatpush1.msra.mxu0 %v2052
        %2085 = vmatprep.subr.mxu0 0.0
        %2086 = vmatpush1.msra.mxu0 %v2051
        %2087 = vmatprep.subr.mxu0 0.0
        %2088 = vmatpush1.msra.mxu0 %v2050
        %2089 = vmatprep.subr.mxu0 0.0
        %2090 = vmatpush2.msra.mxu0 0.0
        %2091 = vmatprep.subr.mxu0 0.0
        %2092 = vmatpush2.msra.mxu0 0.0
        %2093 = vmatprep.subr.mxu0 0.0
        %2094 = vmatpush2.msra.mxu0 0.0
        %2095 = vmatprep.subr.mxu0 0.0
        %2096 = vmatpush2.msra.mxu0 0.0
        %2097 = vmatprep.subr.mxu0 0.0
        %2098 = vmatpush2.msra.mxu0 0.0
        %2099 = vmatprep.subr.mxu0 0.0
        %2100 = vmatpush2.msra.mxu0 0.0
        %2101 = vmatprep.subr.mxu0 0.0
        %2102 = vmatpush2.msra.mxu0 0.0
        %2103 = vmatprep.subr.mxu0 0.0
        %2104 = vmatpush2.msra.mxu0 0.0
        %2105 = vmatprep.subr.mxu0 0.0
        %2106 = vmatpush2.msra.mxu0 0.0
        %2107 = vmatprep.subr.mxu0 0.0
        %2108 = vmatpush2.msra.mxu0 0.0
        %2109 = vmatprep.subr.mxu0 0.0
        %2110 = vmatpush2.msra.mxu0 0.0
        %2111 = vmatprep.subr.mxu0 0.0
        %2112 = vmatpush2.msra.mxu0 0.0
        %2113 = vmatprep.subr.mxu0 0.0
        %2114 = vmatpush2.msra.mxu0 0.0
        %2115 = vmatprep.subr.mxu0 0.0
        %2116 = vmatpush2.msra.mxu0 0.0
        %2117 = vmatprep.subr.mxu0 0.0
        %2118 = vmatpush2.msra.mxu0 0.0
        %2119 = vmatprep.subr.mxu0 0.0
        %2120 = vmatpush2.msra.mxu0 0.0
        %2121 = vmatprep.mubr.f32.mxu0 0.0
        %2122 = vmatmul.mubr.f32.gmra.mxu0 %v2055
        %v2123 = vpop.f32.mrf.mxu0
        %v2124 = vadd.f32 0.0, %v2123
        %v2125 = vpop.f32.mrf.mxu0
        %2126 = vdwg.mxu0
        %v2127 = vadd.f32 %v2048, %v2124
        %v2128 = vld [vmem:[%s4] sm:$0x1]
        %v2130 = vlaneseq
        %v2131 = vshrl.u32 %v2130, 7
        %v2132 = vsub.s32 0, %v2131
        %v2133 = vrot.slane %v2128, %v2132
        %v2135 = vadd.f32 %v2127, %v2133
        %vm2136 = vcmp.gt.f32.partialorder %v2135, 0.0
        %v2137 = vmul.f32 %v2135, 0.01
        %v2138 = vsel %vm2136, %v2135, %v2137
        %2139 = vst.msk [vmem:[#allocation3 + $0x6] sm:$0x3f] %vm1417, %v2138
        %v2140 = vld [vmem:[#allocation2 + $0x34] sm:$0x3f]
        %v2141 = vld [vmem:[%s3] sm:$0xff]
        %v2142 = vld [vmem:[%s3 + $0x8] sm:$0xff]
        %v2143 = vld [vmem:[%s3 + $0x10] sm:$0xff]
        %v2144 = vld [vmem:[%s3 + $0x18] sm:$0xff]
        %v2145 = vld [vmem:[#allocation2 + $0x3b] sm:$0x3f]
        %v2146 = vld [vmem:[%s3 + $0x20] sm:$0xff]
        %v2147 = vld [vmem:[%s3 + $0x28] sm:$0xff]
        %v2148 = vld [vmem:[%s3 + $0x30] sm:$0xff]
        %v2149 = vld [vmem:[%s3 + $0x38] sm:$0xff]
        %v2151 = vsel %vm673, %v2145, 0
        %2153 = vmatprep.subr.mxu0 0.0
        %2154 = vmatpush1.msra.mxu0 0.0
        %2155 = vmatprep.subr.mxu0 0.0
        %2156 = vmatpush1.msra.mxu0 0.0
        %2157 = vmatprep.subr.mxu0 0.0
        %2158 = vmatpush1.msra.mxu0 0.0
        %2159 = vmatprep.subr.mxu0 0.0
        %2160 = vmatpush1.msra.mxu0 0.0
        %2161 = vmatprep.subr.mxu0 0.0
        %2162 = vmatpush1.msra.mxu0 0.0
        %2163 = vmatprep.subr.mxu0 0.0
        %2164 = vmatpush1.msra.mxu0 0.0
        %2165 = vmatprep.subr.mxu0 0.0
        %2166 = vmatpush1.msra.mxu0 0.0
        %2167 = vmatprep.subr.mxu0 0.0
        %2168 = vmatpush1.msra.mxu0 0.0
        %2169 = vmatprep.subr.mxu0 0.0
        %2170 = vmatpush1.msra.mxu0 0.0
        %2171 = vmatprep.subr.mxu0 0.0
        %2172 = vmatpush1.msra.mxu0 0.0
        %2173 = vmatprep.subr.mxu0 0.0
        %2174 = vmatpush1.msra.mxu0 0.0
        %2175 = vmatprep.subr.mxu0 0.0
        %2176 = vmatpush1.msra.mxu0 0.0
        %2177 = vmatprep.subr.mxu0 0.0
        %2178 = vmatpush1.msra.mxu0 %v2149
        %2179 = vmatprep.subr.mxu0 0.0
        %2180 = vmatpush1.msra.mxu0 %v2148
        %2181 = vmatprep.subr.mxu0 0.0
        %2182 = vmatpush1.msra.mxu0 %v2147
        %2183 = vmatprep.subr.mxu0 0.0
        %2184 = vmatpush1.msra.mxu0 %v2146
        %2185 = vmatprep.subr.mxu0 0.0
        %2186 = vmatpush2.msra.mxu0 0.0
        %2187 = vmatprep.subr.mxu0 0.0
        %2188 = vmatpush2.msra.mxu0 0.0
        %2189 = vmatprep.subr.mxu0 0.0
        %2190 = vmatpush2.msra.mxu0 0.0
        %2191 = vmatprep.subr.mxu0 0.0
        %2192 = vmatpush2.msra.mxu0 0.0
        %2193 = vmatprep.subr.mxu0 0.0
        %2194 = vmatpush2.msra.mxu0 0.0
        %2195 = vmatprep.subr.mxu0 0.0
        %2196 = vmatpush2.msra.mxu0 0.0
        %2197 = vmatprep.subr.mxu0 0.0
        %2198 = vmatpush2.msra.mxu0 0.0
        %2199 = vmatprep.subr.mxu0 0.0
        %2200 = vmatpush2.msra.mxu0 0.0
        %2201 = vmatprep.subr.mxu0 0.0
        %2202 = vmatpush2.msra.mxu0 0.0
        %2203 = vmatprep.subr.mxu0 0.0
        %2204 = vmatpush2.msra.mxu0 0.0
        %2205 = vmatprep.subr.mxu0 0.0
        %2206 = vmatpush2.msra.mxu0 0.0
        %2207 = vmatprep.subr.mxu0 0.0
        %2208 = vmatpush2.msra.mxu0 0.0
        %2209 = vmatprep.subr.mxu0 0.0
        %2210 = vmatpush2.msra.mxu0 0.0
        %2211 = vmatprep.subr.mxu0 0.0
        %2212 = vmatpush2.msra.mxu0 0.0
        %2213 = vmatprep.subr.mxu0 0.0
        %2214 = vmatpush2.msra.mxu0 0.0
        %2215 = vmatprep.subr.mxu0 0.0
        %2216 = vmatpush2.msra.mxu0 0.0
        %2217 = vmatprep.mubr.f32.mxu0 0.0
        %2218 = vmatmul.mubr.f32.gmra.mxu0 %v2151
        %v2219 = vpop.f32.mrf.mxu0
        %v2220 = vadd.f32 0.0, %v2219
        %v2221 = vpop.f32.mrf.mxu0
        %2222 = vdwg.mxu0
        %v2224 = vsel %vm673, %v2140, 0
        %2226 = vmatprep.subr.mxu0 0.0
        %2227 = vmatpush1.msra.mxu0 0.0
        %2228 = vmatprep.subr.mxu0 0.0
        %2229 = vmatpush1.msra.mxu0 0.0
        %2230 = vmatprep.subr.mxu0 0.0
        %2231 = vmatpush1.msra.mxu0 0.0
        %2232 = vmatprep.subr.mxu0 0.0
        %2233 = vmatpush1.msra.mxu0 0.0
        %2234 = vmatprep.subr.mxu0 0.0
        %2235 = vmatpush1.msra.mxu0 0.0
        %2236 = vmatprep.subr.mxu0 0.0
        %2237 = vmatpush1.msra.mxu0 0.0
        %2238 = vmatprep.subr.mxu0 0.0
        %2239 = vmatpush1.msra.mxu0 0.0
        %2240 = vmatprep.subr.mxu0 0.0
        %2241 = vmatpush1.msra.mxu0 0.0
        %2242 = vmatprep.subr.mxu0 0.0
        %2243 = vmatpush1.msra.mxu0 0.0
        %2244 = vmatprep.subr.mxu0 0.0
        %2245 = vmatpush1.msra.mxu0 0.0
        %2246 = vmatprep.subr.mxu0 0.0
        %2247 = vmatpush1.msra.mxu0 0.0
        %2248 = vmatprep.subr.mxu0 0.0
        %2249 = vmatpush1.msra.mxu0 0.0
        %2250 = vmatprep.subr.mxu0 0.0
        %2251 = vmatpush1.msra.mxu0 %v2144
        %2252 = vmatprep.subr.mxu0 0.0
        %2253 = vmatpush1.msra.mxu0 %v2143
        %2254 = vmatprep.subr.mxu0 0.0
        %2255 = vmatpush1.msra.mxu0 %v2142
        %2256 = vmatprep.subr.mxu0 0.0
        %2257 = vmatpush1.msra.mxu0 %v2141
        %2258 = vmatprep.subr.mxu0 0.0
        %2259 = vmatpush2.msra.mxu0 0.0
        %2260 = vmatprep.subr.mxu0 0.0
        %2261 = vmatpush2.msra.mxu0 0.0
        %2262 = vmatprep.subr.mxu0 0.0
        %2263 = vmatpush2.msra.mxu0 0.0
        %2264 = vmatprep.subr.mxu0 0.0
        %2265 = vmatpush2.msra.mxu0 0.0
        %2266 = vmatprep.subr.mxu0 0.0
        %2267 = vmatpush2.msra.mxu0 0.0
        %2268 = vmatprep.subr.mxu0 0.0
        %2269 = vmatpush2.msra.mxu0 0.0
        %2270 = vmatprep.subr.mxu0 0.0
        %2271 = vmatpush2.msra.mxu0 0.0
        %2272 = vmatprep.subr.mxu0 0.0
        %2273 = vmatpush2.msra.mxu0 0.0
        %2274 = vmatprep.subr.mxu0 0.0
        %2275 = vmatpush2.msra.mxu0 0.0
        %2276 = vmatprep.subr.mxu0 0.0
        %2277 = vmatpush2.msra.mxu0 0.0
        %2278 = vmatprep.subr.mxu0 0.0
        %2279 = vmatpush2.msra.mxu0 0.0
        %2280 = vmatprep.subr.mxu0 0.0
        %2281 = vmatpush2.msra.mxu0 0.0
        %2282 = vmatprep.subr.mxu0 0.0
        %2283 = vmatpush2.msra.mxu0 0.0
        %2284 = vmatprep.subr.mxu0 0.0
        %2285 = vmatpush2.msra.mxu0 0.0
        %2286 = vmatprep.subr.mxu0 0.0
        %2287 = vmatpush2.msra.mxu0 0.0
        %2288 = vmatprep.subr.mxu0 0.0
        %2289 = vmatpush2.msra.mxu0 0.0
        %2290 = vmatprep.mubr.f32.mxu0 0.0
        %2291 = vmatmul.mubr.f32.gmra.mxu0 %v2224
        %v2292 = vpop.f32.mrf.mxu0
        %v2293 = vadd.f32 %v2220, %v2292
        %v2294 = vpop.f32.mrf.mxu0
        %2295 = vdwg.mxu0
        %v2296 = vld [vmem:[#allocation2 + $0x35] sm:$0x3f]
        %v2297 = vld [vmem:[%s3 + $0x40] sm:$0xff]
        %v2298 = vld [vmem:[%s3 + $0x48] sm:$0xff]
        %v2299 = vld [vmem:[%s3 + $0x50] sm:$0xff]
        %v2300 = vld [vmem:[%s3 + $0x58] sm:$0xff]
        %v2302 = vsel %vm673, %v2296, 0
        %2304 = vmatprep.subr.mxu0 0.0
        %2305 = vmatpush1.msra.mxu0 0.0
        %2306 = vmatprep.subr.mxu0 0.0
        %2307 = vmatpush1.msra.mxu0 0.0
        %2308 = vmatprep.subr.mxu0 0.0
        %2309 = vmatpush1.msra.mxu0 0.0
        %2310 = vmatprep.subr.mxu0 0.0
        %2311 = vmatpush1.msra.mxu0 0.0
        %2312 = vmatprep.subr.mxu0 0.0
        %2313 = vmatpush1.msra.mxu0 0.0
        %2314 = vmatprep.subr.mxu0 0.0
        %2315 = vmatpush1.msra.mxu0 0.0
        %2316 = vmatprep.subr.mxu0 0.0
        %2317 = vmatpush1.msra.mxu0 0.0
        %2318 = vmatprep.subr.mxu0 0.0
        %2319 = vmatpush1.msra.mxu0 0.0
        %2320 = vmatprep.subr.mxu0 0.0
        %2321 = vmatpush1.msra.mxu0 0.0
        %2322 = vmatprep.subr.mxu0 0.0
        %2323 = vmatpush1.msra.mxu0 0.0
        %2324 = vmatprep.subr.mxu0 0.0
        %2325 = vmatpush1.msra.mxu0 0.0
        %2326 = vmatprep.subr.mxu0 0.0
        %2327 = vmatpush1.msra.mxu0 0.0
        %2328 = vmatprep.subr.mxu0 0.0
        %2329 = vmatpush1.msra.mxu0 %v2300
        %2330 = vmatprep.subr.mxu0 0.0
        %2331 = vmatpush1.msra.mxu0 %v2299
        %2332 = vmatprep.subr.mxu0 0.0
        %2333 = vmatpush1.msra.mxu0 %v2298
        %2334 = vmatprep.subr.mxu0 0.0
        %2335 = vmatpush1.msra.mxu0 %v2297
        %2336 = vmatprep.subr.mxu0 0.0
        %2337 = vmatpush2.msra.mxu0 0.0
        %2338 = vmatprep.subr.mxu0 0.0
        %2339 = vmatpush2.msra.mxu0 0.0
        %2340 = vmatprep.subr.mxu0 0.0
        %2341 = vmatpush2.msra.mxu0 0.0
        %2342 = vmatprep.subr.mxu0 0.0
        %2343 = vmatpush2.msra.mxu0 0.0
        %2344 = vmatprep.subr.mxu0 0.0
        %2345 = vmatpush2.msra.mxu0 0.0
        %2346 = vmatprep.subr.mxu0 0.0
        %2347 = vmatpush2.msra.mxu0 0.0
        %2348 = vmatprep.subr.mxu0 0.0
        %2349 = vmatpush2.msra.mxu0 0.0
        %2350 = vmatprep.subr.mxu0 0.0
        %2351 = vmatpush2.msra.mxu0 0.0
        %2352 = vmatprep.subr.mxu0 0.0
        %2353 = vmatpush2.msra.mxu0 0.0
        %2354 = vmatprep.subr.mxu0 0.0
        %2355 = vmatpush2.msra.mxu0 0.0
        %2356 = vmatprep.subr.mxu0 0.0
        %2357 = vmatpush2.msra.mxu0 0.0
        %2358 = vmatprep.subr.mxu0 0.0
        %2359 = vmatpush2.msra.mxu0 0.0
        %2360 = vmatprep.subr.mxu0 0.0
        %2361 = vmatpush2.msra.mxu0 0.0
        %2362 = vmatprep.subr.mxu0 0.0
        %2363 = vmatpush2.msra.mxu0 0.0
        %2364 = vmatprep.subr.mxu0 0.0
        %2365 = vmatpush2.msra.mxu0 0.0
        %2366 = vmatprep.subr.mxu0 0.0
        %2367 = vmatpush2.msra.mxu0 0.0
        %2368 = vmatprep.mubr.f32.mxu0 0.0
        %2369 = vmatmul.mubr.f32.gmra.mxu0 %v2302
        %v2370 = vpop.f32.mrf.mxu0
        %v2371 = vadd.f32 0.0, %v2370
        %v2372 = vpop.f32.mrf.mxu0
        %2373 = vdwg.mxu0
        %v2374 = vadd.f32 %v2293, %v2371
        %v2375 = vld [vmem:[#allocation2 + $0x41] sm:$0x3f]
        %v2376 = vld [vmem:[%s3 + $0x60] sm:$0xff]
        %v2377 = vld [vmem:[%s3 + $0x68] sm:$0xff]
        %v2378 = vld [vmem:[%s3 + $0x70] sm:$0xff]
        %v2379 = vld [vmem:[%s3 + $0x78] sm:$0xff]
        %v2381 = vsel %vm673, %v2375, 0
        %2383 = vmatprep.subr.mxu0 0.0
        %2384 = vmatpush1.msra.mxu0 0.0
        %2385 = vmatprep.subr.mxu0 0.0
        %2386 = vmatpush1.msra.mxu0 0.0
        %2387 = vmatprep.subr.mxu0 0.0
        %2388 = vmatpush1.msra.mxu0 0.0
        %2389 = vmatprep.subr.mxu0 0.0
        %2390 = vmatpush1.msra.mxu0 0.0
        %2391 = vmatprep.subr.mxu0 0.0
        %2392 = vmatpush1.msra.mxu0 0.0
        %2393 = vmatprep.subr.mxu0 0.0
        %2394 = vmatpush1.msra.mxu0 0.0
        %2395 = vmatprep.subr.mxu0 0.0
        %2396 = vmatpush1.msra.mxu0 0.0
        %2397 = vmatprep.subr.mxu0 0.0
        %2398 = vmatpush1.msra.mxu0 0.0
        %2399 = vmatprep.subr.mxu0 0.0
        %2400 = vmatpush1.msra.mxu0 0.0
        %2401 = vmatprep.subr.mxu0 0.0
        %2402 = vmatpush1.msra.mxu0 0.0
        %2403 = vmatprep.subr.mxu0 0.0
        %2404 = vmatpush1.msra.mxu0 0.0
        %2405 = vmatprep.subr.mxu0 0.0
        %2406 = vmatpush1.msra.mxu0 0.0
        %2407 = vmatprep.subr.mxu0 0.0
        %2408 = vmatpush1.msra.mxu0 %v2379
        %2409 = vmatprep.subr.mxu0 0.0
        %2410 = vmatpush1.msra.mxu0 %v2378
        %2411 = vmatprep.subr.mxu0 0.0
        %2412 = vmatpush1.msra.mxu0 %v2377
        %2413 = vmatprep.subr.mxu0 0.0
        %2414 = vmatpush1.msra.mxu0 %v2376
        %2415 = vmatprep.subr.mxu0 0.0
        %2416 = vmatpush2.msra.mxu0 0.0
        %2417 = vmatprep.subr.mxu0 0.0
        %2418 = vmatpush2.msra.mxu0 0.0
        %2419 = vmatprep.subr.mxu0 0.0
        %2420 = vmatpush2.msra.mxu0 0.0
        %2421 = vmatprep.subr.mxu0 0.0
        %2422 = vmatpush2.msra.mxu0 0.0
        %2423 = vmatprep.subr.mxu0 0.0
        %2424 = vmatpush2.msra.mxu0 0.0
        %2425 = vmatprep.subr.mxu0 0.0
        %2426 = vmatpush2.msra.mxu0 0.0
        %2427 = vmatprep.subr.mxu0 0.0
        %2428 = vmatpush2.msra.mxu0 0.0
        %2429 = vmatprep.subr.mxu0 0.0
        %2430 = vmatpush2.msra.mxu0 0.0
        %2431 = vmatprep.subr.mxu0 0.0
        %2432 = vmatpush2.msra.mxu0 0.0
        %2433 = vmatprep.subr.mxu0 0.0
        %2434 = vmatpush2.msra.mxu0 0.0
        %2435 = vmatprep.subr.mxu0 0.0
        %2436 = vmatpush2.msra.mxu0 0.0
        %2437 = vmatprep.subr.mxu0 0.0
        %2438 = vmatpush2.msra.mxu0 0.0
        %2439 = vmatprep.subr.mxu0 0.0
        %2440 = vmatpush2.msra.mxu0 0.0
        %2441 = vmatprep.subr.mxu0 0.0
        %2442 = vmatpush2.msra.mxu0 0.0
        %2443 = vmatprep.subr.mxu0 0.0
        %2444 = vmatpush2.msra.mxu0 0.0
        %2445 = vmatprep.subr.mxu0 0.0
        %2446 = vmatpush2.msra.mxu0 0.0
        %2447 = vmatprep.mubr.f32.mxu0 0.0
        %2448 = vmatmul.mubr.f32.gmra.mxu0 %v2381
        %v2449 = vpop.f32.mrf.mxu0
        %v2450 = vadd.f32 0.0, %v2449
        %v2451 = vpop.f32.mrf.mxu0
        %2452 = vdwg.mxu0
        %v2453 = vadd.f32 %v2374, %v2450
        %v2454 = vld [vmem:[#allocation2 + $0x48] sm:$0x3f]
        %v2455 = vld [vmem:[%s3 + $0x80] sm:$0xff]
        %v2456 = vld [vmem:[%s3 + $0x88] sm:$0xff]
        %v2457 = vld [vmem:[%s3 + $0x90] sm:$0xff]
        %v2458 = vld [vmem:[%s3 + $0x98] sm:$0xff]
        %v2460 = vsel %vm673, %v2454, 0
        %2462 = vmatprep.subr.mxu0 0.0
        %2463 = vmatpush1.msra.mxu0 0.0
        %2464 = vmatprep.subr.mxu0 0.0
        %2465 = vmatpush1.msra.mxu0 0.0
        %2466 = vmatprep.subr.mxu0 0.0
        %2467 = vmatpush1.msra.mxu0 0.0
        %2468 = vmatprep.subr.mxu0 0.0
        %2469 = vmatpush1.msra.mxu0 0.0
        %2470 = vmatprep.subr.mxu0 0.0
        %2471 = vmatpush1.msra.mxu0 0.0
        %2472 = vmatprep.subr.mxu0 0.0
        %2473 = vmatpush1.msra.mxu0 0.0
        %2474 = vmatprep.subr.mxu0 0.0
        %2475 = vmatpush1.msra.mxu0 0.0
        %2476 = vmatprep.subr.mxu0 0.0
        %2477 = vmatpush1.msra.mxu0 0.0
        %2478 = vmatprep.subr.mxu0 0.0
        %2479 = vmatpush1.msra.mxu0 0.0
        %2480 = vmatprep.subr.mxu0 0.0
        %2481 = vmatpush1.msra.mxu0 0.0
        %2482 = vmatprep.subr.mxu0 0.0
        %2483 = vmatpush1.msra.mxu0 0.0
        %2484 = vmatprep.subr.mxu0 0.0
        %2485 = vmatpush1.msra.mxu0 0.0
        %2486 = vmatprep.subr.mxu0 0.0
        %2487 = vmatpush1.msra.mxu0 %v2458
        %2488 = vmatprep.subr.mxu0 0.0
        %2489 = vmatpush1.msra.mxu0 %v2457
        %2490 = vmatprep.subr.mxu0 0.0
        %2491 = vmatpush1.msra.mxu0 %v2456
        %2492 = vmatprep.subr.mxu0 0.0
        %2493 = vmatpush1.msra.mxu0 %v2455
        %2494 = vmatprep.subr.mxu0 0.0
        %2495 = vmatpush2.msra.mxu0 0.0
        %2496 = vmatprep.subr.mxu0 0.0
        %2497 = vmatpush2.msra.mxu0 0.0
        %2498 = vmatprep.subr.mxu0 0.0
        %2499 = vmatpush2.msra.mxu0 0.0
        %2500 = vmatprep.subr.mxu0 0.0
        %2501 = vmatpush2.msra.mxu0 0.0
        %2502 = vmatprep.subr.mxu0 0.0
        %2503 = vmatpush2.msra.mxu0 0.0
        %2504 = vmatprep.subr.mxu0 0.0
        %2505 = vmatpush2.msra.mxu0 0.0
        %2506 = vmatprep.subr.mxu0 0.0
        %2507 = vmatpush2.msra.mxu0 0.0
        %2508 = vmatprep.subr.mxu0 0.0
        %2509 = vmatpush2.msra.mxu0 0.0
        %2510 = vmatprep.subr.mxu0 0.0
        %2511 = vmatpush2.msra.mxu0 0.0
        %2512 = vmatprep.subr.mxu0 0.0
        %2513 = vmatpush2.msra.mxu0 0.0
        %2514 = vmatprep.subr.mxu0 0.0
        %2515 = vmatpush2.msra.mxu0 0.0
        %2516 = vmatprep.subr.mxu0 0.0
        %2517 = vmatpush2.msra.mxu0 0.0
        %2518 = vmatprep.subr.mxu0 0.0
        %2519 = vmatpush2.msra.mxu0 0.0
        %2520 = vmatprep.subr.mxu0 0.0
        %2521 = vmatpush2.msra.mxu0 0.0
        %2522 = vmatprep.subr.mxu0 0.0
        %2523 = vmatpush2.msra.mxu0 0.0
        %2524 = vmatprep.subr.mxu0 0.0
        %2525 = vmatpush2.msra.mxu0 0.0
        %2526 = vmatprep.mubr.f32.mxu0 0.0
        %2527 = vmatmul.mubr.f32.gmra.mxu0 %v2460
        %v2528 = vpop.f32.mrf.mxu0
        %v2529 = vadd.f32 0.0, %v2528
        %v2530 = vpop.f32.mrf.mxu0
        %2531 = vdwg.mxu0
        %v2532 = vadd.f32 %v2453, %v2529
        %v2533 = vld [vmem:[#allocation2 + $0x42] sm:$0x3f]
        %v2534 = vld [vmem:[%s3 + $0xa0] sm:$0xff]
        %v2535 = vld [vmem:[%s3 + $0xa8] sm:$0xff]
        %v2536 = vld [vmem:[%s3 + $0xb0] sm:$0xff]
        %v2537 = vld [vmem:[%s3 + $0xb8] sm:$0xff]
        %v2539 = vsel %vm673, %v2533, 0
        %2541 = vmatprep.subr.mxu0 0.0
        %2542 = vmatpush1.msra.mxu0 0.0
        %2543 = vmatprep.subr.mxu0 0.0
        %2544 = vmatpush1.msra.mxu0 0.0
        %2545 = vmatprep.subr.mxu0 0.0
        %2546 = vmatpush1.msra.mxu0 0.0
        %2547 = vmatprep.subr.mxu0 0.0
        %2548 = vmatpush1.msra.mxu0 0.0
        %2549 = vmatprep.subr.mxu0 0.0
        %2550 = vmatpush1.msra.mxu0 0.0
        %2551 = vmatprep.subr.mxu0 0.0
        %2552 = vmatpush1.msra.mxu0 0.0
        %2553 = vmatprep.subr.mxu0 0.0
        %2554 = vmatpush1.msra.mxu0 0.0
        %2555 = vmatprep.subr.mxu0 0.0
        %2556 = vmatpush1.msra.mxu0 0.0
        %2557 = vmatprep.subr.mxu0 0.0
        %2558 = vmatpush1.msra.mxu0 0.0
        %2559 = vmatprep.subr.mxu0 0.0
        %2560 = vmatpush1.msra.mxu0 0.0
        %2561 = vmatprep.subr.mxu0 0.0
        %2562 = vmatpush1.msra.mxu0 0.0
        %2563 = vmatprep.subr.mxu0 0.0
        %2564 = vmatpush1.msra.mxu0 0.0
        %2565 = vmatprep.subr.mxu0 0.0
        %2566 = vmatpush1.msra.mxu0 %v2537
        %2567 = vmatprep.subr.mxu0 0.0
        %2568 = vmatpush1.msra.mxu0 %v2536
        %2569 = vmatprep.subr.mxu0 0.0
        %2570 = vmatpush1.msra.mxu0 %v2535
        %2571 = vmatprep.subr.mxu0 0.0
        %2572 = vmatpush1.msra.mxu0 %v2534
        %2573 = vmatprep.subr.mxu0 0.0
        %2574 = vmatpush2.msra.mxu0 0.0
        %2575 = vmatprep.subr.mxu0 0.0
        %2576 = vmatpush2.msra.mxu0 0.0
        %2577 = vmatprep.subr.mxu0 0.0
        %2578 = vmatpush2.msra.mxu0 0.0
        %2579 = vmatprep.subr.mxu0 0.0
        %2580 = vmatpush2.msra.mxu0 0.0
        %2581 = vmatprep.subr.mxu0 0.0
        %2582 = vmatpush2.msra.mxu0 0.0
        %2583 = vmatprep.subr.mxu0 0.0
        %2584 = vmatpush2.msra.mxu0 0.0
        %2585 = vmatprep.subr.mxu0 0.0
        %2586 = vmatpush2.msra.mxu0 0.0
        %2587 = vmatprep.subr.mxu0 0.0
        %2588 = vmatpush2.msra.mxu0 0.0
        %2589 = vmatprep.subr.mxu0 0.0
        %2590 = vmatpush2.msra.mxu0 0.0
        %2591 = vmatprep.subr.mxu0 0.0
        %2592 = vmatpush2.msra.mxu0 0.0
        %2593 = vmatprep.subr.mxu0 0.0
        %2594 = vmatpush2.msra.mxu0 0.0
        %2595 = vmatprep.subr.mxu0 0.0
        %2596 = vmatpush2.msra.mxu0 0.0
        %2597 = vmatprep.subr.mxu0 0.0
        %2598 = vmatpush2.msra.mxu0 0.0
        %2599 = vmatprep.subr.mxu0 0.0
        %2600 = vmatpush2.msra.mxu0 0.0
        %2601 = vmatprep.subr.mxu0 0.0
        %2602 = vmatpush2.msra.mxu0 0.0
        %2603 = vmatprep.subr.mxu0 0.0
        %2604 = vmatpush2.msra.mxu0 0.0
        %2605 = vmatprep.mubr.f32.mxu0 0.0
        %2606 = vmatmul.mubr.f32.gmra.mxu0 %v2539
        %v2607 = vpop.f32.mrf.mxu0
        %v2608 = vadd.f32 0.0, %v2607
        %v2609 = vpop.f32.mrf.mxu0
        %2610 = vdwg.mxu0
        %v2611 = vadd.f32 %v2532, %v2608
        %v2612 = vld [vmem:[#allocation2 + $0x4e] sm:$0x3f]
        %v2613 = vld [vmem:[%s3 + $0xc0] sm:$0xff]
        %v2614 = vld [vmem:[%s3 + $0xc8] sm:$0xff]
        %v2615 = vld [vmem:[%s3 + $0xd0] sm:$0xff]
        %v2616 = vld [vmem:[%s3 + $0xd8] sm:$0xff]
        %v2618 = vsel %vm673, %v2612, 0
        %2620 = vmatprep.subr.mxu0 0.0
        %2621 = vmatpush1.msra.mxu0 0.0
        %2622 = vmatprep.subr.mxu0 0.0
        %2623 = vmatpush1.msra.mxu0 0.0
        %2624 = vmatprep.subr.mxu0 0.0
        %2625 = vmatpush1.msra.mxu0 0.0
        %2626 = vmatprep.subr.mxu0 0.0
        %2627 = vmatpush1.msra.mxu0 0.0
        %2628 = vmatprep.subr.mxu0 0.0
        %2629 = vmatpush1.msra.mxu0 0.0
        %2630 = vmatprep.subr.mxu0 0.0
        %2631 = vmatpush1.msra.mxu0 0.0
        %2632 = vmatprep.subr.mxu0 0.0
        %2633 = vmatpush1.msra.mxu0 0.0
        %2634 = vmatprep.subr.mxu0 0.0
        %2635 = vmatpush1.msra.mxu0 0.0
        %2636 = vmatprep.subr.mxu0 0.0
        %2637 = vmatpush1.msra.mxu0 0.0
        %2638 = vmatprep.subr.mxu0 0.0
        %2639 = vmatpush1.msra.mxu0 0.0
        %2640 = vmatprep.subr.mxu0 0.0
        %2641 = vmatpush1.msra.mxu0 0.0
        %2642 = vmatprep.subr.mxu0 0.0
        %2643 = vmatpush1.msra.mxu0 0.0
        %2644 = vmatprep.subr.mxu0 0.0
        %2645 = vmatpush1.msra.mxu0 %v2616
        %2646 = vmatprep.subr.mxu0 0.0
        %2647 = vmatpush1.msra.mxu0 %v2615
        %2648 = vmatprep.subr.mxu0 0.0
        %2649 = vmatpush1.msra.mxu0 %v2614
        %2650 = vmatprep.subr.mxu0 0.0
        %2651 = vmatpush1.msra.mxu0 %v2613
        %2652 = vmatprep.subr.mxu0 0.0
        %2653 = vmatpush2.msra.mxu0 0.0
        %2654 = vmatprep.subr.mxu0 0.0
        %2655 = vmatpush2.msra.mxu0 0.0
        %2656 = vmatprep.subr.mxu0 0.0
        %2657 = vmatpush2.msra.mxu0 0.0
        %2658 = vmatprep.subr.mxu0 0.0
        %2659 = vmatpush2.msra.mxu0 0.0
        %2660 = vmatprep.subr.mxu0 0.0
        %2661 = vmatpush2.msra.mxu0 0.0
        %2662 = vmatprep.subr.mxu0 0.0
        %2663 = vmatpush2.msra.mxu0 0.0
        %2664 = vmatprep.subr.mxu0 0.0
        %2665 = vmatpush2.msra.mxu0 0.0
        %2666 = vmatprep.subr.mxu0 0.0
        %2667 = vmatpush2.msra.mxu0 0.0
        %2668 = vmatprep.subr.mxu0 0.0
        %2669 = vmatpush2.msra.mxu0 0.0
        %2670 = vmatprep.subr.mxu0 0.0
        %2671 = vmatpush2.msra.mxu0 0.0
        %2672 = vmatprep.subr.mxu0 0.0
        %2673 = vmatpush2.msra.mxu0 0.0
        %2674 = vmatprep.subr.mxu0 0.0
        %2675 = vmatpush2.msra.mxu0 0.0
        %2676 = vmatprep.subr.mxu0 0.0
        %2677 = vmatpush2.msra.mxu0 0.0
        %2678 = vmatprep.subr.mxu0 0.0
        %2679 = vmatpush2.msra.mxu0 0.0
        %2680 = vmatprep.subr.mxu0 0.0
        %2681 = vmatpush2.msra.mxu0 0.0
        %2682 = vmatprep.subr.mxu0 0.0
        %2683 = vmatpush2.msra.mxu0 0.0
        %2684 = vmatprep.mubr.f32.mxu0 0.0
        %2685 = vmatmul.mubr.f32.gmra.mxu0 %v2618
        %v2686 = vpop.f32.mrf.mxu0
        %v2687 = vadd.f32 0.0, %v2686
        %v2688 = vpop.f32.mrf.mxu0
        %2689 = vdwg.mxu0
        %v2690 = vadd.f32 %v2611, %v2687
        %v2691 = vld [vmem:[#allocation2 + $0x55] sm:$0x3f]
        %v2692 = vld [vmem:[%s3 + $0xe0] sm:$0xff]
        %v2693 = vld [vmem:[%s3 + $0xe8] sm:$0xff]
        %v2694 = vld [vmem:[%s3 + $0xf0] sm:$0xff]
        %v2695 = vld [vmem:[%s3 + $0xf8] sm:$0xff]
        %v2697 = vsel %vm673, %v2691, 0
        %2699 = vmatprep.subr.mxu0 0.0
        %2700 = vmatpush1.msra.mxu0 0.0
        %2701 = vmatprep.subr.mxu0 0.0
        %2702 = vmatpush1.msra.mxu0 0.0
        %2703 = vmatprep.subr.mxu0 0.0
        %2704 = vmatpush1.msra.mxu0 0.0
        %2705 = vmatprep.subr.mxu0 0.0
        %2706 = vmatpush1.msra.mxu0 0.0
        %2707 = vmatprep.subr.mxu0 0.0
        %2708 = vmatpush1.msra.mxu0 0.0
        %2709 = vmatprep.subr.mxu0 0.0
        %2710 = vmatpush1.msra.mxu0 0.0
        %2711 = vmatprep.subr.mxu0 0.0
        %2712 = vmatpush1.msra.mxu0 0.0
        %2713 = vmatprep.subr.mxu0 0.0
        %2714 = vmatpush1.msra.mxu0 0.0
        %2715 = vmatprep.subr.mxu0 0.0
        %2716 = vmatpush1.msra.mxu0 0.0
        %2717 = vmatprep.subr.mxu0 0.0
        %2718 = vmatpush1.msra.mxu0 0.0
        %2719 = vmatprep.subr.mxu0 0.0
        %2720 = vmatpush1.msra.mxu0 0.0
        %2721 = vmatprep.subr.mxu0 0.0
        %2722 = vmatpush1.msra.mxu0 0.0
        %2723 = vmatprep.subr.mxu0 0.0
        %2724 = vmatpush1.msra.mxu0 %v2695
        %2725 = vmatprep.subr.mxu0 0.0
        %2726 = vmatpush1.msra.mxu0 %v2694
        %2727 = vmatprep.subr.mxu0 0.0
        %2728 = vmatpush1.msra.mxu0 %v2693
        %2729 = vmatprep.subr.mxu0 0.0
        %2730 = vmatpush1.msra.mxu0 %v2692
        %2731 = vmatprep.subr.mxu0 0.0
        %2732 = vmatpush2.msra.mxu0 0.0
        %2733 = vmatprep.subr.mxu0 0.0
        %2734 = vmatpush2.msra.mxu0 0.0
        %2735 = vmatprep.subr.mxu0 0.0
        %2736 = vmatpush2.msra.mxu0 0.0
        %2737 = vmatprep.subr.mxu0 0.0
        %2738 = vmatpush2.msra.mxu0 0.0
        %2739 = vmatprep.subr.mxu0 0.0
        %2740 = vmatpush2.msra.mxu0 0.0
        %2741 = vmatprep.subr.mxu0 0.0
        %2742 = vmatpush2.msra.mxu0 0.0
        %2743 = vmatprep.subr.mxu0 0.0
        %2744 = vmatpush2.msra.mxu0 0.0
        %2745 = vmatprep.subr.mxu0 0.0
        %2746 = vmatpush2.msra.mxu0 0.0
        %2747 = vmatprep.subr.mxu0 0.0
        %2748 = vmatpush2.msra.mxu0 0.0
        %2749 = vmatprep.subr.mxu0 0.0
        %2750 = vmatpush2.msra.mxu0 0.0
        %2751 = vmatprep.subr.mxu0 0.0
        %2752 = vmatpush2.msra.mxu0 0.0
        %2753 = vmatprep.subr.mxu0 0.0
        %2754 = vmatpush2.msra.mxu0 0.0
        %2755 = vmatprep.subr.mxu0 0.0
        %2756 = vmatpush2.msra.mxu0 0.0
        %2757 = vmatprep.subr.mxu0 0.0
        %2758 = vmatpush2.msra.mxu0 0.0
        %2759 = vmatprep.subr.mxu0 0.0
        %2760 = vmatpush2.msra.mxu0 0.0
        %2761 = vmatprep.subr.mxu0 0.0
        %2762 = vmatpush2.msra.mxu0 0.0
        %2763 = vmatprep.mubr.f32.mxu0 0.0
        %2764 = vmatmul.mubr.f32.gmra.mxu0 %v2697
        %v2765 = vpop.f32.mrf.mxu0
        %v2766 = vadd.f32 0.0, %v2765
        %v2767 = vpop.f32.mrf.mxu0
        %2768 = vdwg.mxu0
        %v2769 = vadd.f32 %v2690, %v2766
        %v2770 = vld [vmem:[#allocation2 + $0x4f] sm:$0x3f]
        %v2771 = vld [vmem:[%s3 + $0x100] sm:$0xff]
        %v2772 = vld [vmem:[%s3 + $0x108] sm:$0xff]
        %v2773 = vld [vmem:[%s3 + $0x110] sm:$0xff]
        %v2774 = vld [vmem:[%s3 + $0x118] sm:$0xff]
        %v2776 = vsel %vm673, %v2770, 0
        %2778 = vmatprep.subr.mxu0 0.0
        %2779 = vmatpush1.msra.mxu0 0.0
        %2780 = vmatprep.subr.mxu0 0.0
        %2781 = vmatpush1.msra.mxu0 0.0
        %2782 = vmatprep.subr.mxu0 0.0
        %2783 = vmatpush1.msra.mxu0 0.0
        %2784 = vmatprep.subr.mxu0 0.0
        %2785 = vmatpush1.msra.mxu0 0.0
        %2786 = vmatprep.subr.mxu0 0.0
        %2787 = vmatpush1.msra.mxu0 0.0
        %2788 = vmatprep.subr.mxu0 0.0
        %2789 = vmatpush1.msra.mxu0 0.0
        %2790 = vmatprep.subr.mxu0 0.0
        %2791 = vmatpush1.msra.mxu0 0.0
        %2792 = vmatprep.subr.mxu0 0.0
        %2793 = vmatpush1.msra.mxu0 0.0
        %2794 = vmatprep.subr.mxu0 0.0
        %2795 = vmatpush1.msra.mxu0 0.0
        %2796 = vmatprep.subr.mxu0 0.0
        %2797 = vmatpush1.msra.mxu0 0.0
        %2798 = vmatprep.subr.mxu0 0.0
        %2799 = vmatpush1.msra.mxu0 0.0
        %2800 = vmatprep.subr.mxu0 0.0
        %2801 = vmatpush1.msra.mxu0 0.0
        %2802 = vmatprep.subr.mxu0 0.0
        %2803 = vmatpush1.msra.mxu0 %v2774
        %2804 = vmatprep.subr.mxu0 0.0
        %2805 = vmatpush1.msra.mxu0 %v2773
        %2806 = vmatprep.subr.mxu0 0.0
        %2807 = vmatpush1.msra.mxu0 %v2772
        %2808 = vmatprep.subr.mxu0 0.0
        %2809 = vmatpush1.msra.mxu0 %v2771
        %2810 = vmatprep.subr.mxu0 0.0
        %2811 = vmatpush2.msra.mxu0 0.0
        %2812 = vmatprep.subr.mxu0 0.0
        %2813 = vmatpush2.msra.mxu0 0.0
        %2814 = vmatprep.subr.mxu0 0.0
        %2815 = vmatpush2.msra.mxu0 0.0
        %2816 = vmatprep.subr.mxu0 0.0
        %2817 = vmatpush2.msra.mxu0 0.0
        %2818 = vmatprep.subr.mxu0 0.0
        %2819 = vmatpush2.msra.mxu0 0.0
        %2820 = vmatprep.subr.mxu0 0.0
        %2821 = vmatpush2.msra.mxu0 0.0
        %2822 = vmatprep.subr.mxu0 0.0
        %2823 = vmatpush2.msra.mxu0 0.0
        %2824 = vmatprep.subr.mxu0 0.0
        %2825 = vmatpush2.msra.mxu0 0.0
        %2826 = vmatprep.subr.mxu0 0.0
        %2827 = vmatpush2.msra.mxu0 0.0
        %2828 = vmatprep.subr.mxu0 0.0
        %2829 = vmatpush2.msra.mxu0 0.0
        %2830 = vmatprep.subr.mxu0 0.0
        %2831 = vmatpush2.msra.mxu0 0.0
        %2832 = vmatprep.subr.mxu0 0.0
        %2833 = vmatpush2.msra.mxu0 0.0
        %2834 = vmatprep.subr.mxu0 0.0
        %2835 = vmatpush2.msra.mxu0 0.0
        %2836 = vmatprep.subr.mxu0 0.0
        %2837 = vmatpush2.msra.mxu0 0.0
        %2838 = vmatprep.subr.mxu0 0.0
        %2839 = vmatpush2.msra.mxu0 0.0
        %2840 = vmatprep.subr.mxu0 0.0
        %2841 = vmatpush2.msra.mxu0 0.0
        %2842 = vmatprep.mubr.f32.mxu0 0.0
        %2843 = vmatmul.mubr.f32.gmra.mxu0 %v2776
        %v2844 = vpop.f32.mrf.mxu0
        %v2845 = vadd.f32 0.0, %v2844
        %v2846 = vpop.f32.mrf.mxu0
        %2847 = vdwg.mxu0
        %v2848 = vadd.f32 %v2769, %v2845
        %v2849 = vld [vmem:[%s4] sm:$0x1]
        %v2851 = vlaneseq
        %v2852 = vshrl.u32 %v2851, 7
        %v2853 = vsub.s32 0, %v2852
        %v2854 = vrot.slane %v2849, %v2853
        %v2856 = vadd.f32 %v2848, %v2854
        %vm2857 = vcmp.gt.f32.partialorder %v2856, 0.0
        %v2858 = vmul.f32 %v2856, 0.01
        %v2859 = vsel %vm2857, %v2856, %v2858
        %2860 = vst.msk [vmem:[#allocation3 + $0xc] sm:$0x3f] %vm1417, %v2859
        %v2861 = vld [vmem:[#allocation2 + $0x4e] sm:$0x3f]
        %v2862 = vld [vmem:[%s3] sm:$0xff]
        %v2863 = vld [vmem:[%s3 + $0x8] sm:$0xff]
        %v2864 = vld [vmem:[%s3 + $0x10] sm:$0xff]
        %v2865 = vld [vmem:[%s3 + $0x18] sm:$0xff]
        %v2866 = vld [vmem:[#allocation2 + $0x55] sm:$0x3f]
        %v2867 = vld [vmem:[%s3 + $0x20] sm:$0xff]
        %v2868 = vld [vmem:[%s3 + $0x28] sm:$0xff]
        %v2869 = vld [vmem:[%s3 + $0x30] sm:$0xff]
        %v2870 = vld [vmem:[%s3 + $0x38] sm:$0xff]
        %v2872 = vsel %vm673, %v2866, 0
        %2874 = vmatprep.subr.mxu0 0.0
        %2875 = vmatpush1.msra.mxu0 0.0
        %2876 = vmatprep.subr.mxu0 0.0
        %2877 = vmatpush1.msra.mxu0 0.0
        %2878 = vmatprep.subr.mxu0 0.0
        %2879 = vmatpush1.msra.mxu0 0.0
        %2880 = vmatprep.subr.mxu0 0.0
        %2881 = vmatpush1.msra.mxu0 0.0
        %2882 = vmatprep.subr.mxu0 0.0
        %2883 = vmatpush1.msra.mxu0 0.0
        %2884 = vmatprep.subr.mxu0 0.0
        %2885 = vmatpush1.msra.mxu0 0.0
        %2886 = vmatprep.subr.mxu0 0.0
        %2887 = vmatpush1.msra.mxu0 0.0
        %2888 = vmatprep.subr.mxu0 0.0
        %2889 = vmatpush1.msra.mxu0 0.0
        %2890 = vmatprep.subr.mxu0 0.0
        %2891 = vmatpush1.msra.mxu0 0.0
        %2892 = vmatprep.subr.mxu0 0.0
        %2893 = vmatpush1.msra.mxu0 0.0
        %2894 = vmatprep.subr.mxu0 0.0
        %2895 = vmatpush1.msra.mxu0 0.0
        %2896 = vmatprep.subr.mxu0 0.0
        %2897 = vmatpush1.msra.mxu0 0.0
        %2898 = vmatprep.subr.mxu0 0.0
        %2899 = vmatpush1.msra.mxu0 %v2870
        %2900 = vmatprep.subr.mxu0 0.0
        %2901 = vmatpush1.msra.mxu0 %v2869
        %2902 = vmatprep.subr.mxu0 0.0
        %2903 = vmatpush1.msra.mxu0 %v2868
        %2904 = vmatprep.subr.mxu0 0.0
        %2905 = vmatpush1.msra.mxu0 %v2867
        %2906 = vmatprep.subr.mxu0 0.0
        %2907 = vmatpush2.msra.mxu0 0.0
        %2908 = vmatprep.subr.mxu0 0.0
        %2909 = vmatpush2.msra.mxu0 0.0
        %2910 = vmatprep.subr.mxu0 0.0
        %2911 = vmatpush2.msra.mxu0 0.0
        %2912 = vmatprep.subr.mxu0 0.0
        %2913 = vmatpush2.msra.mxu0 0.0
        %2914 = vmatprep.subr.mxu0 0.0
        %2915 = vmatpush2.msra.mxu0 0.0
        %2916 = vmatprep.subr.mxu0 0.0
        %2917 = vmatpush2.msra.mxu0 0.0
        %2918 = vmatprep.subr.mxu0 0.0
        %2919 = vmatpush2.msra.mxu0 0.0
        %2920 = vmatprep.subr.mxu0 0.0
        %2921 = vmatpush2.msra.mxu0 0.0
        %2922 = vmatprep.subr.mxu0 0.0
        %2923 = vmatpush2.msra.mxu0 0.0
        %2924 = vmatprep.subr.mxu0 0.0
        %2925 = vmatpush2.msra.mxu0 0.0
        %2926 = vmatprep.subr.mxu0 0.0
        %2927 = vmatpush2.msra.mxu0 0.0
        %2928 = vmatprep.subr.mxu0 0.0
        %2929 = vmatpush2.msra.mxu0 0.0
        %2930 = vmatprep.subr.mxu0 0.0
        %2931 = vmatpush2.msra.mxu0 0.0
        %2932 = vmatprep.subr.mxu0 0.0
        %2933 = vmatpush2.msra.mxu0 0.0
        %2934 = vmatprep.subr.mxu0 0.0
        %2935 = vmatpush2.msra.mxu0 0.0
        %2936 = vmatprep.subr.mxu0 0.0
        %2937 = vmatpush2.msra.mxu0 0.0
        %2938 = vmatprep.mubr.f32.mxu0 0.0
        %2939 = vmatmul.mubr.f32.gmra.mxu0 %v2872
        %v2940 = vpop.f32.mrf.mxu0
        %v2941 = vadd.f32 0.0, %v2940
        %v2942 = vpop.f32.mrf.mxu0
        %2943 = vdwg.mxu0
        %v2945 = vsel %vm673, %v2861, 0
        %2947 = vmatprep.subr.mxu0 0.0
        %2948 = vmatpush1.msra.mxu0 0.0
        %2949 = vmatprep.subr.mxu0 0.0
        %2950 = vmatpush1.msra.mxu0 0.0
        %2951 = vmatprep.subr.mxu0 0.0
        %2952 = vmatpush1.msra.mxu0 0.0
        %2953 = vmatprep.subr.mxu0 0.0
        %2954 = vmatpush1.msra.mxu0 0.0
        %2955 = vmatprep.subr.mxu0 0.0
        %2956 = vmatpush1.msra.mxu0 0.0
        %2957 = vmatprep.subr.mxu0 0.0
        %2958 = vmatpush1.msra.mxu0 0.0
        %2959 = vmatprep.subr.mxu0 0.0
        %2960 = vmatpush1.msra.mxu0 0.0
        %2961 = vmatprep.subr.mxu0 0.0
        %2962 = vmatpush1.msra.mxu0 0.0
        %2963 = vmatprep.subr.mxu0 0.0
        %2964 = vmatpush1.msra.mxu0 0.0
        %2965 = vmatprep.subr.mxu0 0.0
        %2966 = vmatpush1.msra.mxu0 0.0
        %2967 = vmatprep.subr.mxu0 0.0
        %2968 = vmatpush1.msra.mxu0 0.0
        %2969 = vmatprep.subr.mxu0 0.0
        %2970 = vmatpush1.msra.mxu0 0.0
        %2971 = vmatprep.subr.mxu0 0.0
        %2972 = vmatpush1.msra.mxu0 %v2865
        %2973 = vmatprep.subr.mxu0 0.0
        %2974 = vmatpush1.msra.mxu0 %v2864
        %2975 = vmatprep.subr.mxu0 0.0
        %2976 = vmatpush1.msra.mxu0 %v2863
        %2977 = vmatprep.subr.mxu0 0.0
        %2978 = vmatpush1.msra.mxu0 %v2862
        %2979 = vmatprep.subr.mxu0 0.0
        %2980 = vmatpush2.msra.mxu0 0.0
        %2981 = vmatprep.subr.mxu0 0.0
        %2982 = vmatpush2.msra.mxu0 0.0
        %2983 = vmatprep.subr.mxu0 0.0
        %2984 = vmatpush2.msra.mxu0 0.0
        %2985 = vmatprep.subr.mxu0 0.0
        %2986 = vmatpush2.msra.mxu0 0.0
        %2987 = vmatprep.subr.mxu0 0.0
        %2988 = vmatpush2.msra.mxu0 0.0
        %2989 = vmatprep.subr.mxu0 0.0
        %2990 = vmatpush2.msra.mxu0 0.0
        %2991 = vmatprep.subr.mxu0 0.0
        %2992 = vmatpush2.msra.mxu0 0.0
        %2993 = vmatprep.subr.mxu0 0.0
        %2994 = vmatpush2.msra.mxu0 0.0
        %2995 = vmatprep.subr.mxu0 0.0
        %2996 = vmatpush2.msra.mxu0 0.0
        %2997 = vmatprep.subr.mxu0 0.0
        %2998 = vmatpush2.msra.mxu0 0.0
        %2999 = vmatprep.subr.mxu0 0.0
        %3000 = vmatpush2.msra.mxu0 0.0
        %3001 = vmatprep.subr.mxu0 0.0
        %3002 = vmatpush2.msra.mxu0 0.0
        %3003 = vmatprep.subr.mxu0 0.0
        %3004 = vmatpush2.msra.mxu0 0.0
        %3005 = vmatprep.subr.mxu0 0.0
        %3006 = vmatpush2.msra.mxu0 0.0
        %3007 = vmatprep.subr.mxu0 0.0
        %3008 = vmatpush2.msra.mxu0 0.0
        %3009 = vmatprep.subr.mxu0 0.0
        %3010 = vmatpush2.msra.mxu0 0.0
        %3011 = vmatprep.mubr.f32.mxu0 0.0
        %3012 = vmatmul.mubr.f32.gmra.mxu0 %v2945
        %v3013 = vpop.f32.mrf.mxu0
        %v3014 = vadd.f32 %v2941, %v3013
        %v3015 = vpop.f32.mrf.mxu0
        %3016 = vdwg.mxu0
        %v3017 = vld [vmem:[#allocation2 + $0x4f] sm:$0x3f]
        %v3018 = vld [vmem:[%s3 + $0x40] sm:$0xff]
        %v3019 = vld [vmem:[%s3 + $0x48] sm:$0xff]
        %v3020 = vld [vmem:[%s3 + $0x50] sm:$0xff]
        %v3021 = vld [vmem:[%s3 + $0x58] sm:$0xff]
        %v3023 = vsel %vm673, %v3017, 0
        %3025 = vmatprep.subr.mxu0 0.0
        %3026 = vmatpush1.msra.mxu0 0.0
        %3027 = vmatprep.subr.mxu0 0.0
        %3028 = vmatpush1.msra.mxu0 0.0
        %3029 = vmatprep.subr.mxu0 0.0
        %3030 = vmatpush1.msra.mxu0 0.0
        %3031 = vmatprep.subr.mxu0 0.0
        %3032 = vmatpush1.msra.mxu0 0.0
        %3033 = vmatprep.subr.mxu0 0.0
        %3034 = vmatpush1.msra.mxu0 0.0
        %3035 = vmatprep.subr.mxu0 0.0
        %3036 = vmatpush1.msra.mxu0 0.0
        %3037 = vmatprep.subr.mxu0 0.0
        %3038 = vmatpush1.msra.mxu0 0.0
        %3039 = vmatprep.subr.mxu0 0.0
        %3040 = vmatpush1.msra.mxu0 0.0
        %3041 = vmatprep.subr.mxu0 0.0
        %3042 = vmatpush1.msra.mxu0 0.0
        %3043 = vmatprep.subr.mxu0 0.0
        %3044 = vmatpush1.msra.mxu0 0.0
        %3045 = vmatprep.subr.mxu0 0.0
        %3046 = vmatpush1.msra.mxu0 0.0
        %3047 = vmatprep.subr.mxu0 0.0
        %3048 = vmatpush1.msra.mxu0 0.0
        %3049 = vmatprep.subr.mxu0 0.0
        %3050 = vmatpush1.msra.mxu0 %v3021
        %3051 = vmatprep.subr.mxu0 0.0
        %3052 = vmatpush1.msra.mxu0 %v3020
        %3053 = vmatprep.subr.mxu0 0.0
        %3054 = vmatpush1.msra.mxu0 %v3019
        %3055 = vmatprep.subr.mxu0 0.0
        %3056 = vmatpush1.msra.mxu0 %v3018
        %3057 = vmatprep.subr.mxu0 0.0
        %3058 = vmatpush2.msra.mxu0 0.0
        %3059 = vmatprep.subr.mxu0 0.0
        %3060 = vmatpush2.msra.mxu0 0.0
        %3061 = vmatprep.subr.mxu0 0.0
        %3062 = vmatpush2.msra.mxu0 0.0
        %3063 = vmatprep.subr.mxu0 0.0
        %3064 = vmatpush2.msra.mxu0 0.0
        %3065 = vmatprep.subr.mxu0 0.0
        %3066 = vmatpush2.msra.mxu0 0.0
        %3067 = vmatprep.subr.mxu0 0.0
        %3068 = vmatpush2.msra.mxu0 0.0
        %3069 = vmatprep.subr.mxu0 0.0
        %3070 = vmatpush2.msra.mxu0 0.0
        %3071 = vmatprep.subr.mxu0 0.0
        %3072 = vmatpush2.msra.mxu0 0.0
        %3073 = vmatprep.subr.mxu0 0.0
        %3074 = vmatpush2.msra.mxu0 0.0
        %3075 = vmatprep.subr.mxu0 0.0
        %3076 = vmatpush2.msra.mxu0 0.0
        %3077 = vmatprep.subr.mxu0 0.0
        %3078 = vmatpush2.msra.mxu0 0.0
        %3079 = vmatprep.subr.mxu0 0.0
        %3080 = vmatpush2.msra.mxu0 0.0
        %3081 = vmatprep.subr.mxu0 0.0
        %3082 = vmatpush2.msra.mxu0 0.0
        %3083 = vmatprep.subr.mxu0 0.0
        %3084 = vmatpush2.msra.mxu0 0.0
        %3085 = vmatprep.subr.mxu0 0.0
        %3086 = vmatpush2.msra.mxu0 0.0
        %3087 = vmatprep.subr.mxu0 0.0
        %3088 = vmatpush2.msra.mxu0 0.0
        %3089 = vmatprep.mubr.f32.mxu0 0.0
        %3090 = vmatmul.mubr.f32.gmra.mxu0 %v3023
        %v3091 = vpop.f32.mrf.mxu0
        %v3092 = vadd.f32 0.0, %v3091
        %v3093 = vpop.f32.mrf.mxu0
        %3094 = vdwg.mxu0
        %v3095 = vadd.f32 %v3014, %v3092
        %v3096 = vld [vmem:[#allocation2 + $0x5b] sm:$0x3f]
        %v3097 = vld [vmem:[%s3 + $0x60] sm:$0xff]
        %v3098 = vld [vmem:[%s3 + $0x68] sm:$0xff]
        %v3099 = vld [vmem:[%s3 + $0x70] sm:$0xff]
        %v3100 = vld [vmem:[%s3 + $0x78] sm:$0xff]
        %v3102 = vsel %vm673, %v3096, 0
        %3104 = vmatprep.subr.mxu0 0.0
        %3105 = vmatpush1.msra.mxu0 0.0
        %3106 = vmatprep.subr.mxu0 0.0
        %3107 = vmatpush1.msra.mxu0 0.0
        %3108 = vmatprep.subr.mxu0 0.0
        %3109 = vmatpush1.msra.mxu0 0.0
        %3110 = vmatprep.subr.mxu0 0.0
        %3111 = vmatpush1.msra.mxu0 0.0
        %3112 = vmatprep.subr.mxu0 0.0
        %3113 = vmatpush1.msra.mxu0 0.0
        %3114 = vmatprep.subr.mxu0 0.0
        %3115 = vmatpush1.msra.mxu0 0.0
        %3116 = vmatprep.subr.mxu0 0.0
        %3117 = vmatpush1.msra.mxu0 0.0
        %3118 = vmatprep.subr.mxu0 0.0
        %3119 = vmatpush1.msra.mxu0 0.0
        %3120 = vmatprep.subr.mxu0 0.0
        %3121 = vmatpush1.msra.mxu0 0.0
        %3122 = vmatprep.subr.mxu0 0.0
        %3123 = vmatpush1.msra.mxu0 0.0
        %3124 = vmatprep.subr.mxu0 0.0
        %3125 = vmatpush1.msra.mxu0 0.0
        %3126 = vmatprep.subr.mxu0 0.0
        %3127 = vmatpush1.msra.mxu0 0.0
        %3128 = vmatprep.subr.mxu0 0.0
        %3129 = vmatpush1.msra.mxu0 %v3100
        %3130 = vmatprep.subr.mxu0 0.0
        %3131 = vmatpush1.msra.mxu0 %v3099
        %3132 = vmatprep.subr.mxu0 0.0
        %3133 = vmatpush1.msra.mxu0 %v3098
        %3134 = vmatprep.subr.mxu0 0.0
        %3135 = vmatpush1.msra.mxu0 %v3097
        %3136 = vmatprep.subr.mxu0 0.0
        %3137 = vmatpush2.msra.mxu0 0.0
        %3138 = vmatprep.subr.mxu0 0.0
        %3139 = vmatpush2.msra.mxu0 0.0
        %3140 = vmatprep.subr.mxu0 0.0
        %3141 = vmatpush2.msra.mxu0 0.0
        %3142 = vmatprep.subr.mxu0 0.0
        %3143 = vmatpush2.msra.mxu0 0.0
        %3144 = vmatprep.subr.mxu0 0.0
        %3145 = vmatpush2.msra.mxu0 0.0
        %3146 = vmatprep.subr.mxu0 0.0
        %3147 = vmatpush2.msra.mxu0 0.0
        %3148 = vmatprep.subr.mxu0 0.0
        %3149 = vmatpush2.msra.mxu0 0.0
        %3150 = vmatprep.subr.mxu0 0.0
        %3151 = vmatpush2.msra.mxu0 0.0
        %3152 = vmatprep.subr.mxu0 0.0
        %3153 = vmatpush2.msra.mxu0 0.0
        %3154 = vmatprep.subr.mxu0 0.0
        %3155 = vmatpush2.msra.mxu0 0.0
        %3156 = vmatprep.subr.mxu0 0.0
        %3157 = vmatpush2.msra.mxu0 0.0
        %3158 = vmatprep.subr.mxu0 0.0
        %3159 = vmatpush2.msra.mxu0 0.0
        %3160 = vmatprep.subr.mxu0 0.0
        %3161 = vmatpush2.msra.mxu0 0.0
        %3162 = vmatprep.subr.mxu0 0.0
        %3163 = vmatpush2.msra.mxu0 0.0
        %3164 = vmatprep.subr.mxu0 0.0
        %3165 = vmatpush2.msra.mxu0 0.0
        %3166 = vmatprep.subr.mxu0 0.0
        %3167 = vmatpush2.msra.mxu0 0.0
        %3168 = vmatprep.mubr.f32.mxu0 0.0
        %3169 = vmatmul.mubr.f32.gmra.mxu0 %v3102
        %v3170 = vpop.f32.mrf.mxu0
        %v3171 = vadd.f32 0.0, %v3170
        %v3172 = vpop.f32.mrf.mxu0
        %3173 = vdwg.mxu0
        %v3174 = vadd.f32 %v3095, %v3171
        %v3175 = vld [vmem:[#allocation2 + $0x62] sm:$0x3f]
        %v3176 = vld [vmem:[%s3 + $0x80] sm:$0xff]
        %v3177 = vld [vmem:[%s3 + $0x88] sm:$0xff]
        %v3178 = vld [vmem:[%s3 + $0x90] sm:$0xff]
        %v3179 = vld [vmem:[%s3 + $0x98] sm:$0xff]
        %v3181 = vsel %vm673, %v3175, 0
        %3183 = vmatprep.subr.mxu0 0.0
        %3184 = vmatpush1.msra.mxu0 0.0
        %3185 = vmatprep.subr.mxu0 0.0
        %3186 = vmatpush1.msra.mxu0 0.0
        %3187 = vmatprep.subr.mxu0 0.0
        %3188 = vmatpush1.msra.mxu0 0.0
        %3189 = vmatprep.subr.mxu0 0.0
        %3190 = vmatpush1.msra.mxu0 0.0
        %3191 = vmatprep.subr.mxu0 0.0
        %3192 = vmatpush1.msra.mxu0 0.0
        %3193 = vmatprep.subr.mxu0 0.0
        %3194 = vmatpush1.msra.mxu0 0.0
        %3195 = vmatprep.subr.mxu0 0.0
        %3196 = vmatpush1.msra.mxu0 0.0
        %3197 = vmatprep.subr.mxu0 0.0
        %3198 = vmatpush1.msra.mxu0 0.0
        %3199 = vmatprep.subr.mxu0 0.0
        %3200 = vmatpush1.msra.mxu0 0.0
        %3201 = vmatprep.subr.mxu0 0.0
        %3202 = vmatpush1.msra.mxu0 0.0
        %3203 = vmatprep.subr.mxu0 0.0
        %3204 = vmatpush1.msra.mxu0 0.0
        %3205 = vmatprep.subr.mxu0 0.0
        %3206 = vmatpush1.msra.mxu0 0.0
        %3207 = vmatprep.subr.mxu0 0.0
        %3208 = vmatpush1.msra.mxu0 %v3179
        %3209 = vmatprep.subr.mxu0 0.0
        %3210 = vmatpush1.msra.mxu0 %v3178
        %3211 = vmatprep.subr.mxu0 0.0
        %3212 = vmatpush1.msra.mxu0 %v3177
        %3213 = vmatprep.subr.mxu0 0.0
        %3214 = vmatpush1.msra.mxu0 %v3176
        %3215 = vmatprep.subr.mxu0 0.0
        %3216 = vmatpush2.msra.mxu0 0.0
        %3217 = vmatprep.subr.mxu0 0.0
        %3218 = vmatpush2.msra.mxu0 0.0
        %3219 = vmatprep.subr.mxu0 0.0
        %3220 = vmatpush2.msra.mxu0 0.0
        %3221 = vmatprep.subr.mxu0 0.0
        %3222 = vmatpush2.msra.mxu0 0.0
        %3223 = vmatprep.subr.mxu0 0.0
        %3224 = vmatpush2.msra.mxu0 0.0
        %3225 = vmatprep.subr.mxu0 0.0
        %3226 = vmatpush2.msra.mxu0 0.0
        %3227 = vmatprep.subr.mxu0 0.0
        %3228 = vmatpush2.msra.mxu0 0.0
        %3229 = vmatprep.subr.mxu0 0.0
        %3230 = vmatpush2.msra.mxu0 0.0
        %3231 = vmatprep.subr.mxu0 0.0
        %3232 = vmatpush2.msra.mxu0 0.0
        %3233 = vmatprep.subr.mxu0 0.0
        %3234 = vmatpush2.msra.mxu0 0.0
        %3235 = vmatprep.subr.mxu0 0.0
        %3236 = vmatpush2.msra.mxu0 0.0
        %3237 = vmatprep.subr.mxu0 0.0
        %3238 = vmatpush2.msra.mxu0 0.0
        %3239 = vmatprep.subr.mxu0 0.0
        %3240 = vmatpush2.msra.mxu0 0.0
        %3241 = vmatprep.subr.mxu0 0.0
        %3242 = vmatpush2.msra.mxu0 0.0
        %3243 = vmatprep.subr.mxu0 0.0
        %3244 = vmatpush2.msra.mxu0 0.0
        %3245 = vmatprep.subr.mxu0 0.0
        %3246 = vmatpush2.msra.mxu0 0.0
        %3247 = vmatprep.mubr.f32.mxu0 0.0
        %3248 = vmatmul.mubr.f32.gmra.mxu0 %v3181
        %v3249 = vpop.f32.mrf.mxu0
        %v3250 = vadd.f32 0.0, %v3249
        %v3251 = vpop.f32.mrf.mxu0
        %3252 = vdwg.mxu0
        %v3253 = vadd.f32 %v3174, %v3250
        %v3254 = vld [vmem:[#allocation2 + $0x5c] sm:$0x3f]
        %v3255 = vld [vmem:[%s3 + $0xa0] sm:$0xff]
        %v3256 = vld [vmem:[%s3 + $0xa8] sm:$0xff]
        %v3257 = vld [vmem:[%s3 + $0xb0] sm:$0xff]
        %v3258 = vld [vmem:[%s3 + $0xb8] sm:$0xff]
        %v3260 = vsel %vm673, %v3254, 0
        %3262 = vmatprep.subr.mxu0 0.0
        %3263 = vmatpush1.msra.mxu0 0.0
        %3264 = vmatprep.subr.mxu0 0.0
        %3265 = vmatpush1.msra.mxu0 0.0
        %3266 = vmatprep.subr.mxu0 0.0
        %3267 = vmatpush1.msra.mxu0 0.0
        %3268 = vmatprep.subr.mxu0 0.0
        %3269 = vmatpush1.msra.mxu0 0.0
        %3270 = vmatprep.subr.mxu0 0.0
        %3271 = vmatpush1.msra.mxu0 0.0
        %3272 = vmatprep.subr.mxu0 0.0
        %3273 = vmatpush1.msra.mxu0 0.0
        %3274 = vmatprep.subr.mxu0 0.0
        %3275 = vmatpush1.msra.mxu0 0.0
        %3276 = vmatprep.subr.mxu0 0.0
        %3277 = vmatpush1.msra.mxu0 0.0
        %3278 = vmatprep.subr.mxu0 0.0
        %3279 = vmatpush1.msra.mxu0 0.0
        %3280 = vmatprep.subr.mxu0 0.0
        %3281 = vmatpush1.msra.mxu0 0.0
        %3282 = vmatprep.subr.mxu0 0.0
        %3283 = vmatpush1.msra.mxu0 0.0
        %3284 = vmatprep.subr.mxu0 0.0
        %3285 = vmatpush1.msra.mxu0 0.0
        %3286 = vmatprep.subr.mxu0 0.0
        %3287 = vmatpush1.msra.mxu0 %v3258
        %3288 = vmatprep.subr.mxu0 0.0
        %3289 = vmatpush1.msra.mxu0 %v3257
        %3290 = vmatprep.subr.mxu0 0.0
        %3291 = vmatpush1.msra.mxu0 %v3256
        %3292 = vmatprep.subr.mxu0 0.0
        %3293 = vmatpush1.msra.mxu0 %v3255
        %3294 = vmatprep.subr.mxu0 0.0
        %3295 = vmatpush2.msra.mxu0 0.0
        %3296 = vmatprep.subr.mxu0 0.0
        %3297 = vmatpush2.msra.mxu0 0.0
        %3298 = vmatprep.subr.mxu0 0.0
        %3299 = vmatpush2.msra.mxu0 0.0
        %3300 = vmatprep.subr.mxu0 0.0
        %3301 = vmatpush2.msra.mxu0 0.0
        %3302 = vmatprep.subr.mxu0 0.0
        %3303 = vmatpush2.msra.mxu0 0.0
        %3304 = vmatprep.subr.mxu0 0.0
        %3305 = vmatpush2.msra.mxu0 0.0
        %3306 = vmatprep.subr.mxu0 0.0
        %3307 = vmatpush2.msra.mxu0 0.0
        %3308 = vmatprep.subr.mxu0 0.0
        %3309 = vmatpush2.msra.mxu0 0.0
        %3310 = vmatprep.subr.mxu0 0.0
        %3311 = vmatpush2.msra.mxu0 0.0
        %3312 = vmatprep.subr.mxu0 0.0
        %3313 = vmatpush2.msra.mxu0 0.0
        %3314 = vmatprep.subr.mxu0 0.0
        %3315 = vmatpush2.msra.mxu0 0.0
        %3316 = vmatprep.subr.mxu0 0.0
        %3317 = vmatpush2.msra.mxu0 0.0
        %3318 = vmatprep.subr.mxu0 0.0
        %3319 = vmatpush2.msra.mxu0 0.0
        %3320 = vmatprep.subr.mxu0 0.0
        %3321 = vmatpush2.msra.mxu0 0.0
        %3322 = vmatprep.subr.mxu0 0.0
        %3323 = vmatpush2.msra.mxu0 0.0
        %3324 = vmatprep.subr.mxu0 0.0
        %3325 = vmatpush2.msra.mxu0 0.0
        %3326 = vmatprep.mubr.f32.mxu0 0.0
        %3327 = vmatmul.mubr.f32.gmra.mxu0 %v3260
        %v3328 = vpop.f32.mrf.mxu0
        %v3329 = vadd.f32 0.0, %v3328
        %v3330 = vpop.f32.mrf.mxu0
        %3331 = vdwg.mxu0
        %v3332 = vadd.f32 %v3253, %v3329
        %v3333 = vld [vmem:[#allocation2 + $0x68] sm:$0x3f]
        %v3334 = vld [vmem:[%s3 + $0xc0] sm:$0xff]
        %v3335 = vld [vmem:[%s3 + $0xc8] sm:$0xff]
        %v3336 = vld [vmem:[%s3 + $0xd0] sm:$0xff]
        %v3337 = vld [vmem:[%s3 + $0xd8] sm:$0xff]
        %v3339 = vsel %vm673, %v3333, 0
        %3341 = vmatprep.subr.mxu0 0.0
        %3342 = vmatpush1.msra.mxu0 0.0
        %3343 = vmatprep.subr.mxu0 0.0
        %3344 = vmatpush1.msra.mxu0 0.0
        %3345 = vmatprep.subr.mxu0 0.0
        %3346 = vmatpush1.msra.mxu0 0.0
        %3347 = vmatprep.subr.mxu0 0.0
        %3348 = vmatpush1.msra.mxu0 0.0
        %3349 = vmatprep.subr.mxu0 0.0
        %3350 = vmatpush1.msra.mxu0 0.0
        %3351 = vmatprep.subr.mxu0 0.0
        %3352 = vmatpush1.msra.mxu0 0.0
        %3353 = vmatprep.subr.mxu0 0.0
        %3354 = vmatpush1.msra.mxu0 0.0
        %3355 = vmatprep.subr.mxu0 0.0
        %3356 = vmatpush1.msra.mxu0 0.0
        %3357 = vmatprep.subr.mxu0 0.0
        %3358 = vmatpush1.msra.mxu0 0.0
        %3359 = vmatprep.subr.mxu0 0.0
        %3360 = vmatpush1.msra.mxu0 0.0
        %3361 = vmatprep.subr.mxu0 0.0
        %3362 = vmatpush1.msra.mxu0 0.0
        %3363 = vmatprep.subr.mxu0 0.0
        %3364 = vmatpush1.msra.mxu0 0.0
        %3365 = vmatprep.subr.mxu0 0.0
        %3366 = vmatpush1.msra.mxu0 %v3337
        %3367 = vmatprep.subr.mxu0 0.0
        %3368 = vmatpush1.msra.mxu0 %v3336
        %3369 = vmatprep.subr.mxu0 0.0
        %3370 = vmatpush1.msra.mxu0 %v3335
        %3371 = vmatprep.subr.mxu0 0.0
        %3372 = vmatpush1.msra.mxu0 %v3334
        %3373 = vmatprep.subr.mxu0 0.0
        %3374 = vmatpush2.msra.mxu0 0.0
        %3375 = vmatprep.subr.mxu0 0.0
        %3376 = vmatpush2.msra.mxu0 0.0
        %3377 = vmatprep.subr.mxu0 0.0
        %3378 = vmatpush2.msra.mxu0 0.0
        %3379 = vmatprep.subr.mxu0 0.0
        %3380 = vmatpush2.msra.mxu0 0.0
        %3381 = vmatprep.subr.mxu0 0.0
        %3382 = vmatpush2.msra.mxu0 0.0
        %3383 = vmatprep.subr.mxu0 0.0
        %3384 = vmatpush2.msra.mxu0 0.0
        %3385 = vmatprep.subr.mxu0 0.0
        %3386 = vmatpush2.msra.mxu0 0.0
        %3387 = vmatprep.subr.mxu0 0.0
        %3388 = vmatpush2.msra.mxu0 0.0
        %3389 = vmatprep.subr.mxu0 0.0
        %3390 = vmatpush2.msra.mxu0 0.0
        %3391 = vmatprep.subr.mxu0 0.0
        %3392 = vmatpush2.msra.mxu0 0.0
        %3393 = vmatprep.subr.mxu0 0.0
        %3394 = vmatpush2.msra.mxu0 0.0
        %3395 = vmatprep.subr.mxu0 0.0
        %3396 = vmatpush2.msra.mxu0 0.0
        %3397 = vmatprep.subr.mxu0 0.0
        %3398 = vmatpush2.msra.mxu0 0.0
        %3399 = vmatprep.subr.mxu0 0.0
        %3400 = vmatpush2.msra.mxu0 0.0
        %3401 = vmatprep.subr.mxu0 0.0
        %3402 = vmatpush2.msra.mxu0 0.0
        %3403 = vmatprep.subr.mxu0 0.0
        %3404 = vmatpush2.msra.mxu0 0.0
        %3405 = vmatprep.mubr.f32.mxu0 0.0
        %3406 = vmatmul.mubr.f32.gmra.mxu0 %v3339
        %v3407 = vpop.f32.mrf.mxu0
        %v3408 = vadd.f32 0.0, %v3407
        %v3409 = vpop.f32.mrf.mxu0
        %3410 = vdwg.mxu0
        %v3411 = vadd.f32 %v3332, %v3408
        %v3412 = vld [vmem:[#allocation2 + $0x6f] sm:$0x3f]
        %v3413 = vld [vmem:[%s3 + $0xe0] sm:$0xff]
        %v3414 = vld [vmem:[%s3 + $0xe8] sm:$0xff]
        %v3415 = vld [vmem:[%s3 + $0xf0] sm:$0xff]
        %v3416 = vld [vmem:[%s3 + $0xf8] sm:$0xff]
        %v3418 = vsel %vm673, %v3412, 0
        %3420 = vmatprep.subr.mxu0 0.0
        %3421 = vmatpush1.msra.mxu0 0.0
        %3422 = vmatprep.subr.mxu0 0.0
        %3423 = vmatpush1.msra.mxu0 0.0
        %3424 = vmatprep.subr.mxu0 0.0
        %3425 = vmatpush1.msra.mxu0 0.0
        %3426 = vmatprep.subr.mxu0 0.0
        %3427 = vmatpush1.msra.mxu0 0.0
        %3428 = vmatprep.subr.mxu0 0.0
        %3429 = vmatpush1.msra.mxu0 0.0
        %3430 = vmatprep.subr.mxu0 0.0
        %3431 = vmatpush1.msra.mxu0 0.0
        %3432 = vmatprep.subr.mxu0 0.0
        %3433 = vmatpush1.msra.mxu0 0.0
        %3434 = vmatprep.subr.mxu0 0.0
        %3435 = vmatpush1.msra.mxu0 0.0
        %3436 = vmatprep.subr.mxu0 0.0
        %3437 = vmatpush1.msra.mxu0 0.0
        %3438 = vmatprep.subr.mxu0 0.0
        %3439 = vmatpush1.msra.mxu0 0.0
        %3440 = vmatprep.subr.mxu0 0.0
        %3441 = vmatpush1.msra.mxu0 0.0
        %3442 = vmatprep.subr.mxu0 0.0
        %3443 = vmatpush1.msra.mxu0 0.0
        %3444 = vmatprep.subr.mxu0 0.0
        %3445 = vmatpush1.msra.mxu0 %v3416
        %3446 = vmatprep.subr.mxu0 0.0
        %3447 = vmatpush1.msra.mxu0 %v3415
        %3448 = vmatprep.subr.mxu0 0.0
        %3449 = vmatpush1.msra.mxu0 %v3414
        %3450 = vmatprep.subr.mxu0 0.0
        %3451 = vmatpush1.msra.mxu0 %v3413
        %3452 = vmatprep.subr.mxu0 0.0
        %3453 = vmatpush2.msra.mxu0 0.0
        %3454 = vmatprep.subr.mxu0 0.0
        %3455 = vmatpush2.msra.mxu0 0.0
        %3456 = vmatprep.subr.mxu0 0.0
        %3457 = vmatpush2.msra.mxu0 0.0
        %3458 = vmatprep.subr.mxu0 0.0
        %3459 = vmatpush2.msra.mxu0 0.0
        %3460 = vmatprep.subr.mxu0 0.0
        %3461 = vmatpush2.msra.mxu0 0.0
        %3462 = vmatprep.subr.mxu0 0.0
        %3463 = vmatpush2.msra.mxu0 0.0
        %3464 = vmatprep.subr.mxu0 0.0
        %3465 = vmatpush2.msra.mxu0 0.0
        %3466 = vmatprep.subr.mxu0 0.0
        %3467 = vmatpush2.msra.mxu0 0.0
        %3468 = vmatprep.subr.mxu0 0.0
        %3469 = vmatpush2.msra.mxu0 0.0
        %3470 = vmatprep.subr.mxu0 0.0
        %3471 = vmatpush2.msra.mxu0 0.0
        %3472 = vmatprep.subr.mxu0 0.0
        %3473 = vmatpush2.msra.mxu0 0.0
        %3474 = vmatprep.subr.mxu0 0.0
        %3475 = vmatpush2.msra.mxu0 0.0
        %3476 = vmatprep.subr.mxu0 0.0
        %3477 = vmatpush2.msra.mxu0 0.0
        %3478 = vmatprep.subr.mxu0 0.0
        %3479 = vmatpush2.msra.mxu0 0.0
        %3480 = vmatprep.subr.mxu0 0.0
        %3481 = vmatpush2.msra.mxu0 0.0
        %3482 = vmatprep.subr.mxu0 0.0
        %3483 = vmatpush2.msra.mxu0 0.0
        %3484 = vmatprep.mubr.f32.mxu0 0.0
        %3485 = vmatmul.mubr.f32.gmra.mxu0 %v3418
        %v3486 = vpop.f32.mrf.mxu0
        %v3487 = vadd.f32 0.0, %v3486
        %v3488 = vpop.f32.mrf.mxu0
        %3489 = vdwg.mxu0
        %v3490 = vadd.f32 %v3411, %v3487
        %v3491 = vld [vmem:[#allocation2 + $0x69] sm:$0x3f]
        %v3492 = vld [vmem:[%s3 + $0x100] sm:$0xff]
        %v3493 = vld [vmem:[%s3 + $0x108] sm:$0xff]
        %v3494 = vld [vmem:[%s3 + $0x110] sm:$0xff]
        %v3495 = vld [vmem:[%s3 + $0x118] sm:$0xff]
        %v3497 = vsel %vm673, %v3491, 0
        %3499 = vmatprep.subr.mxu0 0.0
        %3500 = vmatpush1.msra.mxu0 0.0
        %3501 = vmatprep.subr.mxu0 0.0
        %3502 = vmatpush1.msra.mxu0 0.0
        %3503 = vmatprep.subr.mxu0 0.0
        %3504 = vmatpush1.msra.mxu0 0.0
        %3505 = vmatprep.subr.mxu0 0.0
        %3506 = vmatpush1.msra.mxu0 0.0
        %3507 = vmatprep.subr.mxu0 0.0
        %3508 = vmatpush1.msra.mxu0 0.0
        %3509 = vmatprep.subr.mxu0 0.0
        %3510 = vmatpush1.msra.mxu0 0.0
        %3511 = vmatprep.subr.mxu0 0.0
        %3512 = vmatpush1.msra.mxu0 0.0
        %3513 = vmatprep.subr.mxu0 0.0
        %3514 = vmatpush1.msra.mxu0 0.0
        %3515 = vmatprep.subr.mxu0 0.0
        %3516 = vmatpush1.msra.mxu0 0.0
        %3517 = vmatprep.subr.mxu0 0.0
        %3518 = vmatpush1.msra.mxu0 0.0
        %3519 = vmatprep.subr.mxu0 0.0
        %3520 = vmatpush1.msra.mxu0 0.0
        %3521 = vmatprep.subr.mxu0 0.0
        %3522 = vmatpush1.msra.mxu0 0.0
        %3523 = vmatprep.subr.mxu0 0.0
        %3524 = vmatpush1.msra.mxu0 %v3495
        %3525 = vmatprep.subr.mxu0 0.0
        %3526 = vmatpush1.msra.mxu0 %v3494
        %3527 = vmatprep.subr.mxu0 0.0
        %3528 = vmatpush1.msra.mxu0 %v3493
        %3529 = vmatprep.subr.mxu0 0.0
        %3530 = vmatpush1.msra.mxu0 %v3492
        %3531 = vmatprep.subr.mxu0 0.0
        %3532 = vmatpush2.msra.mxu0 0.0
        %3533 = vmatprep.subr.mxu0 0.0
        %3534 = vmatpush2.msra.mxu0 0.0
        %3535 = vmatprep.subr.mxu0 0.0
        %3536 = vmatpush2.msra.mxu0 0.0
        %3537 = vmatprep.subr.mxu0 0.0
        %3538 = vmatpush2.msra.mxu0 0.0
        %3539 = vmatprep.subr.mxu0 0.0
        %3540 = vmatpush2.msra.mxu0 0.0
        %3541 = vmatprep.subr.mxu0 0.0
        %3542 = vmatpush2.msra.mxu0 0.0
        %3543 = vmatprep.subr.mxu0 0.0
        %3544 = vmatpush2.msra.mxu0 0.0
        %3545 = vmatprep.subr.mxu0 0.0
        %3546 = vmatpush2.msra.mxu0 0.0
        %3547 = vmatprep.subr.mxu0 0.0
        %3548 = vmatpush2.msra.mxu0 0.0
        %3549 = vmatprep.subr.mxu0 0.0
        %3550 = vmatpush2.msra.mxu0 0.0
        %3551 = vmatprep.subr.mxu0 0.0
        %3552 = vmatpush2.msra.mxu0 0.0
        %3553 = vmatprep.subr.mxu0 0.0
        %3554 = vmatpush2.msra.mxu0 0.0
        %3555 = vmatprep.subr.mxu0 0.0
        %3556 = vmatpush2.msra.mxu0 0.0
        %3557 = vmatprep.subr.mxu0 0.0
        %3558 = vmatpush2.msra.mxu0 0.0
        %3559 = vmatprep.subr.mxu0 0.0
        %3560 = vmatpush2.msra.mxu0 0.0
        %3561 = vmatprep.subr.mxu0 0.0
        %3562 = vmatpush2.msra.mxu0 0.0
        %3563 = vmatprep.mubr.f32.mxu0 0.0
        %3564 = vmatmul.mubr.f32.gmra.mxu0 %v3497
        %v3565 = vpop.f32.mrf.mxu0
        %v3566 = vadd.f32 0.0, %v3565
        %v3567 = vpop.f32.mrf.mxu0
        %3568 = vdwg.mxu0
        %v3569 = vadd.f32 %v3490, %v3566
        %v3570 = vld [vmem:[%s4] sm:$0x1]
        %v3572 = vlaneseq
        %v3573 = vshrl.u32 %v3572, 7
        %v3574 = vsub.s32 0, %v3573
        %v3575 = vrot.slane %v3570, %v3574
        %v3577 = vadd.f32 %v3569, %v3575
        %vm3578 = vcmp.gt.f32.partialorder %v3577, 0.0
        %v3579 = vmul.f32 %v3577, 0.01
        %v3580 = vsel %vm3578, %v3577, %v3579
        %3581 = vst.msk [vmem:[#allocation3 + $0x12] sm:$0x3f] %vm1417, %v3580
        %v3582 = vld [vmem:[#allocation2 + $0x68] sm:$0x3f]
        %v3583 = vld [vmem:[%s3] sm:$0xff]
        %v3584 = vld [vmem:[%s3 + $0x8] sm:$0xff]
        %v3585 = vld [vmem:[%s3 + $0x10] sm:$0xff]
        %v3586 = vld [vmem:[%s3 + $0x18] sm:$0xff]
        %v3587 = vld [vmem:[#allocation2 + $0x6f] sm:$0x3f]
        %v3588 = vld [vmem:[%s3 + $0x20] sm:$0xff]
        %v3589 = vld [vmem:[%s3 + $0x28] sm:$0xff]
        %v3590 = vld [vmem:[%s3 + $0x30] sm:$0xff]
        %v3591 = vld [vmem:[%s3 + $0x38] sm:$0xff]
        %v3593 = vsel %vm673, %v3587, 0
        %3595 = vmatprep.subr.mxu0 0.0
        %3596 = vmatpush1.msra.mxu0 0.0
        %3597 = vmatprep.subr.mxu0 0.0
        %3598 = vmatpush1.msra.mxu0 0.0
        %3599 = vmatprep.subr.mxu0 0.0
        %3600 = vmatpush1.msra.mxu0 0.0
        %3601 = vmatprep.subr.mxu0 0.0
        %3602 = vmatpush1.msra.mxu0 0.0
        %3603 = vmatprep.subr.mxu0 0.0
        %3604 = vmatpush1.msra.mxu0 0.0
        %3605 = vmatprep.subr.mxu0 0.0
        %3606 = vmatpush1.msra.mxu0 0.0
        %3607 = vmatprep.subr.mxu0 0.0
        %3608 = vmatpush1.msra.mxu0 0.0
        %3609 = vmatprep.subr.mxu0 0.0
        %3610 = vmatpush1.msra.mxu0 0.0
        %3611 = vmatprep.subr.mxu0 0.0
        %3612 = vmatpush1.msra.mxu0 0.0
        %3613 = vmatprep.subr.mxu0 0.0
        %3614 = vmatpush1.msra.mxu0 0.0
        %3615 = vmatprep.subr.mxu0 0.0
        %3616 = vmatpush1.msra.mxu0 0.0
        %3617 = vmatprep.subr.mxu0 0.0
        %3618 = vmatpush1.msra.mxu0 0.0
        %3619 = vmatprep.subr.mxu0 0.0
        %3620 = vmatpush1.msra.mxu0 %v3591
        %3621 = vmatprep.subr.mxu0 0.0
        %3622 = vmatpush1.msra.mxu0 %v3590
        %3623 = vmatprep.subr.mxu0 0.0
        %3624 = vmatpush1.msra.mxu0 %v3589
        %3625 = vmatprep.subr.mxu0 0.0
        %3626 = vmatpush1.msra.mxu0 %v3588
        %3627 = vmatprep.subr.mxu0 0.0
        %3628 = vmatpush2.msra.mxu0 0.0
        %3629 = vmatprep.subr.mxu0 0.0
        %3630 = vmatpush2.msra.mxu0 0.0
        %3631 = vmatprep.subr.mxu0 0.0
        %3632 = vmatpush2.msra.mxu0 0.0
        %3633 = vmatprep.subr.mxu0 0.0
        %3634 = vmatpush2.msra.mxu0 0.0
        %3635 = vmatprep.subr.mxu0 0.0
        %3636 = vmatpush2.msra.mxu0 0.0
        %3637 = vmatprep.subr.mxu0 0.0
        %3638 = vmatpush2.msra.mxu0 0.0
        %3639 = vmatprep.subr.mxu0 0.0
        %3640 = vmatpush2.msra.mxu0 0.0
        %3641 = vmatprep.subr.mxu0 0.0
        %3642 = vmatpush2.msra.mxu0 0.0
        %3643 = vmatprep.subr.mxu0 0.0
        %3644 = vmatpush2.msra.mxu0 0.0
        %3645 = vmatprep.subr.mxu0 0.0
        %3646 = vmatpush2.msra.mxu0 0.0
        %3647 = vmatprep.subr.mxu0 0.0
        %3648 = vmatpush2.msra.mxu0 0.0
        %3649 = vmatprep.subr.mxu0 0.0
        %3650 = vmatpush2.msra.mxu0 0.0
        %3651 = vmatprep.subr.mxu0 0.0
        %3652 = vmatpush2.msra.mxu0 0.0
        %3653 = vmatprep.subr.mxu0 0.0
        %3654 = vmatpush2.msra.mxu0 0.0
        %3655 = vmatprep.subr.mxu0 0.0
        %3656 = vmatpush2.msra.mxu0 0.0
        %3657 = vmatprep.subr.mxu0 0.0
        %3658 = vmatpush2.msra.mxu0 0.0
        %3659 = vmatprep.mubr.f32.mxu0 0.0
        %3660 = vmatmul.mubr.f32.gmra.mxu0 %v3593
        %v3661 = vpop.f32.mrf.mxu0
        %v3662 = vadd.f32 0.0, %v3661
        %v3663 = vpop.f32.mrf.mxu0
        %3664 = vdwg.mxu0
        %v3666 = vsel %vm673, %v3582, 0
        %3668 = vmatprep.subr.mxu0 0.0
        %3669 = vmatpush1.msra.mxu0 0.0
        %3670 = vmatprep.subr.mxu0 0.0
        %3671 = vmatpush1.msra.mxu0 0.0
        %3672 = vmatprep.subr.mxu0 0.0
        %3673 = vmatpush1.msra.mxu0 0.0
        %3674 = vmatprep.subr.mxu0 0.0
        %3675 = vmatpush1.msra.mxu0 0.0
        %3676 = vmatprep.subr.mxu0 0.0
        %3677 = vmatpush1.msra.mxu0 0.0
        %3678 = vmatprep.subr.mxu0 0.0
        %3679 = vmatpush1.msra.mxu0 0.0
        %3680 = vmatprep.subr.mxu0 0.0
        %3681 = vmatpush1.msra.mxu0 0.0
        %3682 = vmatprep.subr.mxu0 0.0
        %3683 = vmatpush1.msra.mxu0 0.0
        %3684 = vmatprep.subr.mxu0 0.0
        %3685 = vmatpush1.msra.mxu0 0.0
        %3686 = vmatprep.subr.mxu0 0.0
        %3687 = vmatpush1.msra.mxu0 0.0
        %3688 = vmatprep.subr.mxu0 0.0
        %3689 = vmatpush1.msra.mxu0 0.0
        %3690 = vmatprep.subr.mxu0 0.0
        %3691 = vmatpush1.msra.mxu0 0.0
        %3692 = vmatprep.subr.mxu0 0.0
        %3693 = vmatpush1.msra.mxu0 %v3586
        %3694 = vmatprep.subr.mxu0 0.0
        %3695 = vmatpush1.msra.mxu0 %v3585
        %3696 = vmatprep.subr.mxu0 0.0
        %3697 = vmatpush1.msra.mxu0 %v3584
        %3698 = vmatprep.subr.mxu0 0.0
        %3699 = vmatpush1.msra.mxu0 %v3583
        %3700 = vmatprep.subr.mxu0 0.0
        %3701 = vmatpush2.msra.mxu0 0.0
        %3702 = vmatprep.subr.mxu0 0.0
        %3703 = vmatpush2.msra.mxu0 0.0
        %3704 = vmatprep.subr.mxu0 0.0
        %3705 = vmatpush2.msra.mxu0 0.0
        %3706 = vmatprep.subr.mxu0 0.0
        %3707 = vmatpush2.msra.mxu0 0.0
        %3708 = vmatprep.subr.mxu0 0.0
        %3709 = vmatpush2.msra.mxu0 0.0
        %3710 = vmatprep.subr.mxu0 0.0
        %3711 = vmatpush2.msra.mxu0 0.0
        %3712 = vmatprep.subr.mxu0 0.0
        %3713 = vmatpush2.msra.mxu0 0.0
        %3714 = vmatprep.subr.mxu0 0.0
        %3715 = vmatpush2.msra.mxu0 0.0
        %3716 = vmatprep.subr.mxu0 0.0
        %3717 = vmatpush2.msra.mxu0 0.0
        %3718 = vmatprep.subr.mxu0 0.0
        %3719 = vmatpush2.msra.mxu0 0.0
        %3720 = vmatprep.subr.mxu0 0.0
        %3721 = vmatpush2.msra.mxu0 0.0
        %3722 = vmatprep.subr.mxu0 0.0
        %3723 = vmatpush2.msra.mxu0 0.0
        %3724 = vmatprep.subr.mxu0 0.0
        %3725 = vmatpush2.msra.mxu0 0.0
        %3726 = vmatprep.subr.mxu0 0.0
        %3727 = vmatpush2.msra.mxu0 0.0
        %3728 = vmatprep.subr.mxu0 0.0
        %3729 = vmatpush2.msra.mxu0 0.0
        %3730 = vmatprep.subr.mxu0 0.0
        %3731 = vmatpush2.msra.mxu0 0.0
        %3732 = vmatprep.mubr.f32.mxu0 0.0
        %3733 = vmatmul.mubr.f32.gmra.mxu0 %v3666
        %v3734 = vpop.f32.mrf.mxu0
        %v3735 = vadd.f32 %v3662, %v3734
        %v3736 = vpop.f32.mrf.mxu0
        %3737 = vdwg.mxu0
        %v3738 = vld [vmem:[#allocation2 + $0x69] sm:$0x3f]
        %v3739 = vld [vmem:[%s3 + $0x40] sm:$0xff]
        %v3740 = vld [vmem:[%s3 + $0x48] sm:$0xff]
        %v3741 = vld [vmem:[%s3 + $0x50] sm:$0xff]
        %v3742 = vld [vmem:[%s3 + $0x58] sm:$0xff]
        %v3744 = vsel %vm673, %v3738, 0
        %3746 = vmatprep.subr.mxu0 0.0
        %3747 = vmatpush1.msra.mxu0 0.0
        %3748 = vmatprep.subr.mxu0 0.0
        %3749 = vmatpush1.msra.mxu0 0.0
        %3750 = vmatprep.subr.mxu0 0.0
        %3751 = vmatpush1.msra.mxu0 0.0
        %3752 = vmatprep.subr.mxu0 0.0
        %3753 = vmatpush1.msra.mxu0 0.0
        %3754 = vmatprep.subr.mxu0 0.0
        %3755 = vmatpush1.msra.mxu0 0.0
        %3756 = vmatprep.subr.mxu0 0.0
        %3757 = vmatpush1.msra.mxu0 0.0
        %3758 = vmatprep.subr.mxu0 0.0
        %3759 = vmatpush1.msra.mxu0 0.0
        %3760 = vmatprep.subr.mxu0 0.0
        %3761 = vmatpush1.msra.mxu0 0.0
        %3762 = vmatprep.subr.mxu0 0.0
        %3763 = vmatpush1.msra.mxu0 0.0
        %3764 = vmatprep.subr.mxu0 0.0
        %3765 = vmatpush1.msra.mxu0 0.0
        %3766 = vmatprep.subr.mxu0 0.0
        %3767 = vmatpush1.msra.mxu0 0.0
        %3768 = vmatprep.subr.mxu0 0.0
        %3769 = vmatpush1.msra.mxu0 0.0
        %3770 = vmatprep.subr.mxu0 0.0
        %3771 = vmatpush1.msra.mxu0 %v3742
        %3772 = vmatprep.subr.mxu0 0.0
        %3773 = vmatpush1.msra.mxu0 %v3741
        %3774 = vmatprep.subr.mxu0 0.0
        %3775 = vmatpush1.msra.mxu0 %v3740
        %3776 = vmatprep.subr.mxu0 0.0
        %3777 = vmatpush1.msra.mxu0 %v3739
        %3778 = vmatprep.subr.mxu0 0.0
        %3779 = vmatpush2.msra.mxu0 0.0
        %3780 = vmatprep.subr.mxu0 0.0
        %3781 = vmatpush2.msra.mxu0 0.0
        %3782 = vmatprep.subr.mxu0 0.0
        %3783 = vmatpush2.msra.mxu0 0.0
        %3784 = vmatprep.subr.mxu0 0.0
        %3785 = vmatpush2.msra.mxu0 0.0
        %3786 = vmatprep.subr.mxu0 0.0
        %3787 = vmatpush2.msra.mxu0 0.0
        %3788 = vmatprep.subr.mxu0 0.0
        %3789 = vmatpush2.msra.mxu0 0.0
        %3790 = vmatprep.subr.mxu0 0.0
        %3791 = vmatpush2.msra.mxu0 0.0
        %3792 = vmatprep.subr.mxu0 0.0
        %3793 = vmatpush2.msra.mxu0 0.0
        %3794 = vmatprep.subr.mxu0 0.0
        %3795 = vmatpush2.msra.mxu0 0.0
        %3796 = vmatprep.subr.mxu0 0.0
        %3797 = vmatpush2.msra.mxu0 0.0
        %3798 = vmatprep.subr.mxu0 0.0
        %3799 = vmatpush2.msra.mxu0 0.0
        %3800 = vmatprep.subr.mxu0 0.0
        %3801 = vmatpush2.msra.mxu0 0.0
        %3802 = vmatprep.subr.mxu0 0.0
        %3803 = vmatpush2.msra.mxu0 0.0
        %3804 = vmatprep.subr.mxu0 0.0
        %3805 = vmatpush2.msra.mxu0 0.0
        %3806 = vmatprep.subr.mxu0 0.0
        %3807 = vmatpush2.msra.mxu0 0.0
        %3808 = vmatprep.subr.mxu0 0.0
        %3809 = vmatpush2.msra.mxu0 0.0
        %3810 = vmatprep.mubr.f32.mxu0 0.0
        %3811 = vmatmul.mubr.f32.gmra.mxu0 %v3744
        %v3812 = vpop.f32.mrf.mxu0
        %v3813 = vadd.f32 0.0, %v3812
        %v3814 = vpop.f32.mrf.mxu0
        %3815 = vdwg.mxu0
        %v3816 = vadd.f32 %v3735, %v3813
        %v3817 = vld [vmem:[#allocation2 + $0x75] sm:$0x3f]
        %v3818 = vld [vmem:[%s3 + $0x60] sm:$0xff]
        %v3819 = vld [vmem:[%s3 + $0x68] sm:$0xff]
        %v3820 = vld [vmem:[%s3 + $0x70] sm:$0xff]
        %v3821 = vld [vmem:[%s3 + $0x78] sm:$0xff]
        %v3823 = vsel %vm673, %v3817, 0
        %3825 = vmatprep.subr.mxu0 0.0
        %3826 = vmatpush1.msra.mxu0 0.0
        %3827 = vmatprep.subr.mxu0 0.0
        %3828 = vmatpush1.msra.mxu0 0.0
        %3829 = vmatprep.subr.mxu0 0.0
        %3830 = vmatpush1.msra.mxu0 0.0
        %3831 = vmatprep.subr.mxu0 0.0
        %3832 = vmatpush1.msra.mxu0 0.0
        %3833 = vmatprep.subr.mxu0 0.0
        %3834 = vmatpush1.msra.mxu0 0.0
        %3835 = vmatprep.subr.mxu0 0.0
        %3836 = vmatpush1.msra.mxu0 0.0
        %3837 = vmatprep.subr.mxu0 0.0
        %3838 = vmatpush1.msra.mxu0 0.0
        %3839 = vmatprep.subr.mxu0 0.0
        %3840 = vmatpush1.msra.mxu0 0.0
        %3841 = vmatprep.subr.mxu0 0.0
        %3842 = vmatpush1.msra.mxu0 0.0
        %3843 = vmatprep.subr.mxu0 0.0
        %3844 = vmatpush1.msra.mxu0 0.0
        %3845 = vmatprep.subr.mxu0 0.0
        %3846 = vmatpush1.msra.mxu0 0.0
        %3847 = vmatprep.subr.mxu0 0.0
        %3848 = vmatpush1.msra.mxu0 0.0
        %3849 = vmatprep.subr.mxu0 0.0
        %3850 = vmatpush1.msra.mxu0 %v3821
        %3851 = vmatprep.subr.mxu0 0.0
        %3852 = vmatpush1.msra.mxu0 %v3820
        %3853 = vmatprep.subr.mxu0 0.0
        %3854 = vmatpush1.msra.mxu0 %v3819
        %3855 = vmatprep.subr.mxu0 0.0
        %3856 = vmatpush1.msra.mxu0 %v3818
        %3857 = vmatprep.subr.mxu0 0.0
        %3858 = vmatpush2.msra.mxu0 0.0
        %3859 = vmatprep.subr.mxu0 0.0
        %3860 = vmatpush2.msra.mxu0 0.0
        %3861 = vmatprep.subr.mxu0 0.0
        %3862 = vmatpush2.msra.mxu0 0.0
        %3863 = vmatprep.subr.mxu0 0.0
        %3864 = vmatpush2.msra.mxu0 0.0
        %3865 = vmatprep.subr.mxu0 0.0
        %3866 = vmatpush2.msra.mxu0 0.0
        %3867 = vmatprep.subr.mxu0 0.0
        %3868 = vmatpush2.msra.mxu0 0.0
        %3869 = vmatprep.subr.mxu0 0.0
        %3870 = vmatpush2.msra.mxu0 0.0
        %3871 = vmatprep.subr.mxu0 0.0
        %3872 = vmatpush2.msra.mxu0 0.0
        %3873 = vmatprep.subr.mxu0 0.0
        %3874 = vmatpush2.msra.mxu0 0.0
        %3875 = vmatprep.subr.mxu0 0.0
        %3876 = vmatpush2.msra.mxu0 0.0
        %3877 = vmatprep.subr.mxu0 0.0
        %3878 = vmatpush2.msra.mxu0 0.0
        %3879 = vmatprep.subr.mxu0 0.0
        %3880 = vmatpush2.msra.mxu0 0.0
        %3881 = vmatprep.subr.mxu0 0.0
        %3882 = vmatpush2.msra.mxu0 0.0
        %3883 = vmatprep.subr.mxu0 0.0
        %3884 = vmatpush2.msra.mxu0 0.0
        %3885 = vmatprep.subr.mxu0 0.0
        %3886 = vmatpush2.msra.mxu0 0.0
        %3887 = vmatprep.subr.mxu0 0.0
        %3888 = vmatpush2.msra.mxu0 0.0
        %3889 = vmatprep.mubr.f32.mxu0 0.0
        %3890 = vmatmul.mubr.f32.gmra.mxu0 %v3823
        %v3891 = vpop.f32.mrf.mxu0
        %v3892 = vadd.f32 0.0, %v3891
        %v3893 = vpop.f32.mrf.mxu0
        %3894 = vdwg.mxu0
        %v3895 = vadd.f32 %v3816, %v3892
        %v3896 = vld [vmem:[#allocation2 + $0x7c] sm:$0x3f]
        %v3897 = vld [vmem:[%s3 + $0x80] sm:$0xff]
        %v3898 = vld [vmem:[%s3 + $0x88] sm:$0xff]
        %v3899 = vld [vmem:[%s3 + $0x90] sm:$0xff]
        %v3900 = vld [vmem:[%s3 + $0x98] sm:$0xff]
        %v3902 = vsel %vm673, %v3896, 0
        %3904 = vmatprep.subr.mxu0 0.0
        %3905 = vmatpush1.msra.mxu0 0.0
        %3906 = vmatprep.subr.mxu0 0.0
        %3907 = vmatpush1.msra.mxu0 0.0
        %3908 = vmatprep.subr.mxu0 0.0
        %3909 = vmatpush1.msra.mxu0 0.0
        %3910 = vmatprep.subr.mxu0 0.0
        %3911 = vmatpush1.msra.mxu0 0.0
        %3912 = vmatprep.subr.mxu0 0.0
        %3913 = vmatpush1.msra.mxu0 0.0
        %3914 = vmatprep.subr.mxu0 0.0
        %3915 = vmatpush1.msra.mxu0 0.0
        %3916 = vmatprep.subr.mxu0 0.0
        %3917 = vmatpush1.msra.mxu0 0.0
        %3918 = vmatprep.subr.mxu0 0.0
        %3919 = vmatpush1.msra.mxu0 0.0
        %3920 = vmatprep.subr.mxu0 0.0
        %3921 = vmatpush1.msra.mxu0 0.0
        %3922 = vmatprep.subr.mxu0 0.0
        %3923 = vmatpush1.msra.mxu0 0.0
        %3924 = vmatprep.subr.mxu0 0.0
        %3925 = vmatpush1.msra.mxu0 0.0
        %3926 = vmatprep.subr.mxu0 0.0
        %3927 = vmatpush1.msra.mxu0 0.0
        %3928 = vmatprep.subr.mxu0 0.0
        %3929 = vmatpush1.msra.mxu0 %v3900
        %3930 = vmatprep.subr.mxu0 0.0
        %3931 = vmatpush1.msra.mxu0 %v3899
        %3932 = vmatprep.subr.mxu0 0.0
        %3933 = vmatpush1.msra.mxu0 %v3898
        %3934 = vmatprep.subr.mxu0 0.0
        %3935 = vmatpush1.msra.mxu0 %v3897
        %3936 = vmatprep.subr.mxu0 0.0
        %3937 = vmatpush2.msra.mxu0 0.0
        %3938 = vmatprep.subr.mxu0 0.0
        %3939 = vmatpush2.msra.mxu0 0.0
        %3940 = vmatprep.subr.mxu0 0.0
        %3941 = vmatpush2.msra.mxu0 0.0
        %3942 = vmatprep.subr.mxu0 0.0
        %3943 = vmatpush2.msra.mxu0 0.0
        %3944 = vmatprep.subr.mxu0 0.0
        %3945 = vmatpush2.msra.mxu0 0.0
        %3946 = vmatprep.subr.mxu0 0.0
        %3947 = vmatpush2.msra.mxu0 0.0
        %3948 = vmatprep.subr.mxu0 0.0
        %3949 = vmatpush2.msra.mxu0 0.0
        %3950 = vmatprep.subr.mxu0 0.0
        %3951 = vmatpush2.msra.mxu0 0.0
        %3952 = vmatprep.subr.mxu0 0.0
        %3953 = vmatpush2.msra.mxu0 0.0
        %3954 = vmatprep.subr.mxu0 0.0
        %3955 = vmatpush2.msra.mxu0 0.0
        %3956 = vmatprep.subr.mxu0 0.0
        %3957 = vmatpush2.msra.mxu0 0.0
        %3958 = vmatprep.subr.mxu0 0.0
        %3959 = vmatpush2.msra.mxu0 0.0
        %3960 = vmatprep.subr.mxu0 0.0
        %3961 = vmatpush2.msra.mxu0 0.0
        %3962 = vmatprep.subr.mxu0 0.0
        %3963 = vmatpush2.msra.mxu0 0.0
        %3964 = vmatprep.subr.mxu0 0.0
        %3965 = vmatpush2.msra.mxu0 0.0
        %3966 = vmatprep.subr.mxu0 0.0
        %3967 = vmatpush2.msra.mxu0 0.0
        %3968 = vmatprep.mubr.f32.mxu0 0.0
        %3969 = vmatmul.mubr.f32.gmra.mxu0 %v3902
        %v3970 = vpop.f32.mrf.mxu0
        %v3971 = vadd.f32 0.0, %v3970
        %v3972 = vpop.f32.mrf.mxu0
        %3973 = vdwg.mxu0
        %v3974 = vadd.f32 %v3895, %v3971
        %v3975 = vld [vmem:[#allocation2 + $0x76] sm:$0x3f]
        %v3976 = vld [vmem:[%s3 + $0xa0] sm:$0xff]
        %v3977 = vld [vmem:[%s3 + $0xa8] sm:$0xff]
        %v3978 = vld [vmem:[%s3 + $0xb0] sm:$0xff]
        %v3979 = vld [vmem:[%s3 + $0xb8] sm:$0xff]
        %v3981 = vsel %vm673, %v3975, 0
        %3983 = vmatprep.subr.mxu0 0.0
        %3984 = vmatpush1.msra.mxu0 0.0
        %3985 = vmatprep.subr.mxu0 0.0
        %3986 = vmatpush1.msra.mxu0 0.0
        %3987 = vmatprep.subr.mxu0 0.0
        %3988 = vmatpush1.msra.mxu0 0.0
        %3989 = vmatprep.subr.mxu0 0.0
        %3990 = vmatpush1.msra.mxu0 0.0
        %3991 = vmatprep.subr.mxu0 0.0
        %3992 = vmatpush1.msra.mxu0 0.0
        %3993 = vmatprep.subr.mxu0 0.0
        %3994 = vmatpush1.msra.mxu0 0.0
        %3995 = vmatprep.subr.mxu0 0.0
        %3996 = vmatpush1.msra.mxu0 0.0
        %3997 = vmatprep.subr.mxu0 0.0
        %3998 = vmatpush1.msra.mxu0 0.0
        %3999 = vmatprep.subr.mxu0 0.0
        %4000 = vmatpush1.msra.mxu0 0.0
        %4001 = vmatprep.subr.mxu0 0.0
        %4002 = vmatpush1.msra.mxu0 0.0
        %4003 = vmatprep.subr.mxu0 0.0
        %4004 = vmatpush1.msra.mxu0 0.0
        %4005 = vmatprep.subr.mxu0 0.0
        %4006 = vmatpush1.msra.mxu0 0.0
        %4007 = vmatprep.subr.mxu0 0.0
        %4008 = vmatpush1.msra.mxu0 %v3979
        %4009 = vmatprep.subr.mxu0 0.0
        %4010 = vmatpush1.msra.mxu0 %v3978
        %4011 = vmatprep.subr.mxu0 0.0
        %4012 = vmatpush1.msra.mxu0 %v3977
        %4013 = vmatprep.subr.mxu0 0.0
        %4014 = vmatpush1.msra.mxu0 %v3976
        %4015 = vmatprep.subr.mxu0 0.0
        %4016 = vmatpush2.msra.mxu0 0.0
        %4017 = vmatprep.subr.mxu0 0.0
        %4018 = vmatpush2.msra.mxu0 0.0
        %4019 = vmatprep.subr.mxu0 0.0
        %4020 = vmatpush2.msra.mxu0 0.0
        %4021 = vmatprep.subr.mxu0 0.0
        %4022 = vmatpush2.msra.mxu0 0.0
        %4023 = vmatprep.subr.mxu0 0.0
        %4024 = vmatpush2.msra.mxu0 0.0
        %4025 = vmatprep.subr.mxu0 0.0
        %4026 = vmatpush2.msra.mxu0 0.0
        %4027 = vmatprep.subr.mxu0 0.0
        %4028 = vmatpush2.msra.mxu0 0.0
        %4029 = vmatprep.subr.mxu0 0.0
        %4030 = vmatpush2.msra.mxu0 0.0
        %4031 = vmatprep.subr.mxu0 0.0
        %4032 = vmatpush2.msra.mxu0 0.0
        %4033 = vmatprep.subr.mxu0 0.0
        %4034 = vmatpush2.msra.mxu0 0.0
        %4035 = vmatprep.subr.mxu0 0.0
        %4036 = vmatpush2.msra.mxu0 0.0
        %4037 = vmatprep.subr.mxu0 0.0
        %4038 = vmatpush2.msra.mxu0 0.0
        %4039 = vmatprep.subr.mxu0 0.0
        %4040 = vmatpush2.msra.mxu0 0.0
        %4041 = vmatprep.subr.mxu0 0.0
        %4042 = vmatpush2.msra.mxu0 0.0
        %4043 = vmatprep.subr.mxu0 0.0
        %4044 = vmatpush2.msra.mxu0 0.0
        %4045 = vmatprep.subr.mxu0 0.0
        %4046 = vmatpush2.msra.mxu0 0.0
        %4047 = vmatprep.mubr.f32.mxu0 0.0
        %4048 = vmatmul.mubr.f32.gmra.mxu0 %v3981
        %v4049 = vpop.f32.mrf.mxu0
        %v4050 = vadd.f32 0.0, %v4049
        %v4051 = vpop.f32.mrf.mxu0
        %4052 = vdwg.mxu0
        %v4053 = vadd.f32 %v3974, %v4050
        %v4054 = vld [vmem:[#allocation2 + $0x82] sm:$0x3f]
        %v4055 = vld [vmem:[%s3 + $0xc0] sm:$0xff]
        %v4056 = vld [vmem:[%s3 + $0xc8] sm:$0xff]
        %v4057 = vld [vmem:[%s3 + $0xd0] sm:$0xff]
        %v4058 = vld [vmem:[%s3 + $0xd8] sm:$0xff]
        %v4060 = vsel %vm673, %v4054, 0
        %4062 = vmatprep.subr.mxu0 0.0
        %4063 = vmatpush1.msra.mxu0 0.0
        %4064 = vmatprep.subr.mxu0 0.0
        %4065 = vmatpush1.msra.mxu0 0.0
        %4066 = vmatprep.subr.mxu0 0.0
        %4067 = vmatpush1.msra.mxu0 0.0
        %4068 = vmatprep.subr.mxu0 0.0
        %4069 = vmatpush1.msra.mxu0 0.0
        %4070 = vmatprep.subr.mxu0 0.0
        %4071 = vmatpush1.msra.mxu0 0.0
        %4072 = vmatprep.subr.mxu0 0.0
        %4073 = vmatpush1.msra.mxu0 0.0
        %4074 = vmatprep.subr.mxu0 0.0
        %4075 = vmatpush1.msra.mxu0 0.0
        %4076 = vmatprep.subr.mxu0 0.0
        %4077 = vmatpush1.msra.mxu0 0.0
        %4078 = vmatprep.subr.mxu0 0.0
        %4079 = vmatpush1.msra.mxu0 0.0
        %4080 = vmatprep.subr.mxu0 0.0
        %4081 = vmatpush1.msra.mxu0 0.0
        %4082 = vmatprep.subr.mxu0 0.0
        %4083 = vmatpush1.msra.mxu0 0.0
        %4084 = vmatprep.subr.mxu0 0.0
        %4085 = vmatpush1.msra.mxu0 0.0
        %4086 = vmatprep.subr.mxu0 0.0
        %4087 = vmatpush1.msra.mxu0 %v4058
        %4088 = vmatprep.subr.mxu0 0.0
        %4089 = vmatpush1.msra.mxu0 %v4057
        %4090 = vmatprep.subr.mxu0 0.0
        %4091 = vmatpush1.msra.mxu0 %v4056
        %4092 = vmatprep.subr.mxu0 0.0
        %4093 = vmatpush1.msra.mxu0 %v4055
        %4094 = vmatprep.subr.mxu0 0.0
        %4095 = vmatpush2.msra.mxu0 0.0
        %4096 = vmatprep.subr.mxu0 0.0
        %4097 = vmatpush2.msra.mxu0 0.0
        %4098 = vmatprep.subr.mxu0 0.0
        %4099 = vmatpush2.msra.mxu0 0.0
        %4100 = vmatprep.subr.mxu0 0.0
        %4101 = vmatpush2.msra.mxu0 0.0
        %4102 = vmatprep.subr.mxu0 0.0
        %4103 = vmatpush2.msra.mxu0 0.0
        %4104 = vmatprep.subr.mxu0 0.0
        %4105 = vmatpush2.msra.mxu0 0.0
        %4106 = vmatprep.subr.mxu0 0.0
        %4107 = vmatpush2.msra.mxu0 0.0
        %4108 = vmatprep.subr.mxu0 0.0
        %4109 = vmatpush2.msra.mxu0 0.0
        %4110 = vmatprep.subr.mxu0 0.0
        %4111 = vmatpush2.msra.mxu0 0.0
        %4112 = vmatprep.subr.mxu0 0.0
        %4113 = vmatpush2.msra.mxu0 0.0
        %4114 = vmatprep.subr.mxu0 0.0
        %4115 = vmatpush2.msra.mxu0 0.0
        %4116 = vmatprep.subr.mxu0 0.0
        %4117 = vmatpush2.msra.mxu0 0.0
        %4118 = vmatprep.subr.mxu0 0.0
        %4119 = vmatpush2.msra.mxu0 0.0
        %4120 = vmatprep.subr.mxu0 0.0
        %4121 = vmatpush2.msra.mxu0 0.0
        %4122 = vmatprep.subr.mxu0 0.0
        %4123 = vmatpush2.msra.mxu0 0.0
        %4124 = vmatprep.subr.mxu0 0.0
        %4125 = vmatpush2.msra.mxu0 0.0
        %4126 = vmatprep.mubr.f32.mxu0 0.0
        %4127 = vmatmul.mubr.f32.gmra.mxu0 %v4060
        %v4128 = vpop.f32.mrf.mxu0
        %v4129 = vadd.f32 0.0, %v4128
        %v4130 = vpop.f32.mrf.mxu0
        %4131 = vdwg.mxu0
        %v4132 = vadd.f32 %v4053, %v4129
        %v4133 = vld [vmem:[#allocation2 + $0x89] sm:$0x3f]
        %v4134 = vld [vmem:[%s3 + $0xe0] sm:$0xff]
        %v4135 = vld [vmem:[%s3 + $0xe8] sm:$0xff]
        %v4136 = vld [vmem:[%s3 + $0xf0] sm:$0xff]
        %v4137 = vld [vmem:[%s3 + $0xf8] sm:$0xff]
        %v4139 = vsel %vm673, %v4133, 0
        %4141 = vmatprep.subr.mxu0 0.0
        %4142 = vmatpush1.msra.mxu0 0.0
        %4143 = vmatprep.subr.mxu0 0.0
        %4144 = vmatpush1.msra.mxu0 0.0
        %4145 = vmatprep.subr.mxu0 0.0
        %4146 = vmatpush1.msra.mxu0 0.0
        %4147 = vmatprep.subr.mxu0 0.0
        %4148 = vmatpush1.msra.mxu0 0.0
        %4149 = vmatprep.subr.mxu0 0.0
        %4150 = vmatpush1.msra.mxu0 0.0
        %4151 = vmatprep.subr.mxu0 0.0
        %4152 = vmatpush1.msra.mxu0 0.0
        %4153 = vmatprep.subr.mxu0 0.0
        %4154 = vmatpush1.msra.mxu0 0.0
        %4155 = vmatprep.subr.mxu0 0.0
        %4156 = vmatpush1.msra.mxu0 0.0
        %4157 = vmatprep.subr.mxu0 0.0
        %4158 = vmatpush1.msra.mxu0 0.0
        %4159 = vmatprep.subr.mxu0 0.0
        %4160 = vmatpush1.msra.mxu0 0.0
        %4161 = vmatprep.subr.mxu0 0.0
        %4162 = vmatpush1.msra.mxu0 0.0
        %4163 = vmatprep.subr.mxu0 0.0
        %4164 = vmatpush1.msra.mxu0 0.0
        %4165 = vmatprep.subr.mxu0 0.0
        %4166 = vmatpush1.msra.mxu0 %v4137
        %4167 = vmatprep.subr.mxu0 0.0
        %4168 = vmatpush1.msra.mxu0 %v4136
        %4169 = vmatprep.subr.mxu0 0.0
        %4170 = vmatpush1.msra.mxu0 %v4135
        %4171 = vmatprep.subr.mxu0 0.0
        %4172 = vmatpush1.msra.mxu0 %v4134
        %4173 = vmatprep.subr.mxu0 0.0
        %4174 = vmatpush2.msra.mxu0 0.0
        %4175 = vmatprep.subr.mxu0 0.0
        %4176 = vmatpush2.msra.mxu0 0.0
        %4177 = vmatprep.subr.mxu0 0.0
        %4178 = vmatpush2.msra.mxu0 0.0
        %4179 = vmatprep.subr.mxu0 0.0
        %4180 = vmatpush2.msra.mxu0 0.0
        %4181 = vmatprep.subr.mxu0 0.0
        %4182 = vmatpush2.msra.mxu0 0.0
        %4183 = vmatprep.subr.mxu0 0.0
        %4184 = vmatpush2.msra.mxu0 0.0
        %4185 = vmatprep.subr.mxu0 0.0
        %4186 = vmatpush2.msra.mxu0 0.0
        %4187 = vmatprep.subr.mxu0 0.0
        %4188 = vmatpush2.msra.mxu0 0.0
        %4189 = vmatprep.subr.mxu0 0.0
        %4190 = vmatpush2.msra.mxu0 0.0
        %4191 = vmatprep.subr.mxu0 0.0
        %4192 = vmatpush2.msra.mxu0 0.0
        %4193 = vmatprep.subr.mxu0 0.0
        %4194 = vmatpush2.msra.mxu0 0.0
        %4195 = vmatprep.subr.mxu0 0.0
        %4196 = vmatpush2.msra.mxu0 0.0
        %4197 = vmatprep.subr.mxu0 0.0
        %4198 = vmatpush2.msra.mxu0 0.0
        %4199 = vmatprep.subr.mxu0 0.0
        %4200 = vmatpush2.msra.mxu0 0.0
        %4201 = vmatprep.subr.mxu0 0.0
        %4202 = vmatpush2.msra.mxu0 0.0
        %4203 = vmatprep.subr.mxu0 0.0
        %4204 = vmatpush2.msra.mxu0 0.0
        %4205 = vmatprep.mubr.f32.mxu0 0.0
        %4206 = vmatmul.mubr.f32.gmra.mxu0 %v4139
        %v4207 = vpop.f32.mrf.mxu0
        %v4208 = vadd.f32 0.0, %v4207
        %v4209 = vpop.f32.mrf.mxu0
        %4210 = vdwg.mxu0
        %v4211 = vadd.f32 %v4132, %v4208
        %v4212 = vld [vmem:[#allocation2 + $0x83] sm:$0x3f]
        %v4213 = vld [vmem:[%s3 + $0x100] sm:$0xff]
        %v4214 = vld [vmem:[%s3 + $0x108] sm:$0xff]
        %v4215 = vld [vmem:[%s3 + $0x110] sm:$0xff]
        %v4216 = vld [vmem:[%s3 + $0x118] sm:$0xff]
        %v4218 = vsel %vm673, %v4212, 0
        %4220 = vmatprep.subr.mxu0 0.0
        %4221 = vmatpush1.msra.mxu0 0.0
        %4222 = vmatprep.subr.mxu0 0.0
        %4223 = vmatpush1.msra.mxu0 0.0
        %4224 = vmatprep.subr.mxu0 0.0
        %4225 = vmatpush1.msra.mxu0 0.0
        %4226 = vmatprep.subr.mxu0 0.0
        %4227 = vmatpush1.msra.mxu0 0.0
        %4228 = vmatprep.subr.mxu0 0.0
        %4229 = vmatpush1.msra.mxu0 0.0
        %4230 = vmatprep.subr.mxu0 0.0
        %4231 = vmatpush1.msra.mxu0 0.0
        %4232 = vmatprep.subr.mxu0 0.0
        %4233 = vmatpush1.msra.mxu0 0.0
        %4234 = vmatprep.subr.mxu0 0.0
        %4235 = vmatpush1.msra.mxu0 0.0
        %4236 = vmatprep.subr.mxu0 0.0
        %4237 = vmatpush1.msra.mxu0 0.0
        %4238 = vmatprep.subr.mxu0 0.0
        %4239 = vmatpush1.msra.mxu0 0.0
        %4240 = vmatprep.subr.mxu0 0.0
        %4241 = vmatpush1.msra.mxu0 0.0
        %4242 = vmatprep.subr.mxu0 0.0
        %4243 = vmatpush1.msra.mxu0 0.0
        %4244 = vmatprep.subr.mxu0 0.0
        %4245 = vmatpush1.msra.mxu0 %v4216
        %4246 = vmatprep.subr.mxu0 0.0
        %4247 = vmatpush1.msra.mxu0 %v4215
        %4248 = vmatprep.subr.mxu0 0.0
        %4249 = vmatpush1.msra.mxu0 %v4214
        %4250 = vmatprep.subr.mxu0 0.0
        %4251 = vmatpush1.msra.mxu0 %v4213
        %4252 = vmatprep.subr.mxu0 0.0
        %4253 = vmatpush2.msra.mxu0 0.0
        %4254 = vmatprep.subr.mxu0 0.0
        %4255 = vmatpush2.msra.mxu0 0.0
        %4256 = vmatprep.subr.mxu0 0.0
        %4257 = vmatpush2.msra.mxu0 0.0
        %4258 = vmatprep.subr.mxu0 0.0
        %4259 = vmatpush2.msra.mxu0 0.0
        %4260 = vmatprep.subr.mxu0 0.0
        %4261 = vmatpush2.msra.mxu0 0.0
        %4262 = vmatprep.subr.mxu0 0.0
        %4263 = vmatpush2.msra.mxu0 0.0
        %4264 = vmatprep.subr.mxu0 0.0
        %4265 = vmatpush2.msra.mxu0 0.0
        %4266 = vmatprep.subr.mxu0 0.0
        %4267 = vmatpush2.msra.mxu0 0.0
        %4268 = vmatprep.subr.mxu0 0.0
        %4269 = vmatpush2.msra.mxu0 0.0
        %4270 = vmatprep.subr.mxu0 0.0
        %4271 = vmatpush2.msra.mxu0 0.0
        %4272 = vmatprep.subr.mxu0 0.0
        %4273 = vmatpush2.msra.mxu0 0.0
        %4274 = vmatprep.subr.mxu0 0.0
        %4275 = vmatpush2.msra.mxu0 0.0
        %4276 = vmatprep.subr.mxu0 0.0
        %4277 = vmatpush2.msra.mxu0 0.0
        %4278 = vmatprep.subr.mxu0 0.0
        %4279 = vmatpush2.msra.mxu0 0.0
        %4280 = vmatprep.subr.mxu0 0.0
        %4281 = vmatpush2.msra.mxu0 0.0
        %4282 = vmatprep.subr.mxu0 0.0
        %4283 = vmatpush2.msra.mxu0 0.0
        %4284 = vmatprep.mubr.f32.mxu0 0.0
        %4285 = vmatmul.mubr.f32.gmra.mxu0 %v4218
        %v4286 = vpop.f32.mrf.mxu0
        %v4287 = vadd.f32 0.0, %v4286
        %v4288 = vpop.f32.mrf.mxu0
        %4289 = vdwg.mxu0
        %v4290 = vadd.f32 %v4211, %v4287
        %v4291 = vld [vmem:[%s4] sm:$0x1]
        %v4293 = vlaneseq
        %v4294 = vshrl.u32 %v4293, 7
        %v4295 = vsub.s32 0, %v4294
        %v4296 = vrot.slane %v4291, %v4295
        %v4298 = vadd.f32 %v4290, %v4296
        %vm4299 = vcmp.gt.f32.partialorder %v4298, 0.0
        %v4300 = vmul.f32 %v4298, 0.01
        %v4301 = vsel %vm4299, %v4298, %v4300
        %4302 = vst.msk [vmem:[#allocation3 + $0x18] sm:$0x3f] %vm1417, %v4301
        %v4303 = vld [vmem:[#allocation2 + $0x82] sm:$0x3f]
        %v4304 = vld [vmem:[%s3] sm:$0xff]
        %v4305 = vld [vmem:[%s3 + $0x8] sm:$0xff]
        %v4306 = vld [vmem:[%s3 + $0x10] sm:$0xff]
        %v4307 = vld [vmem:[%s3 + $0x18] sm:$0xff]
        %v4308 = vld [vmem:[#allocation2 + $0x89] sm:$0x3f]
        %v4309 = vld [vmem:[%s3 + $0x20] sm:$0xff]
        %v4310 = vld [vmem:[%s3 + $0x28] sm:$0xff]
        %v4311 = vld [vmem:[%s3 + $0x30] sm:$0xff]
        %v4312 = vld [vmem:[%s3 + $0x38] sm:$0xff]
        %v4314 = vsel %vm673, %v4308, 0
        %4316 = vmatprep.subr.mxu0 0.0
        %4317 = vmatpush1.msra.mxu0 0.0
        %4318 = vmatprep.subr.mxu0 0.0
        %4319 = vmatpush1.msra.mxu0 0.0
        %4320 = vmatprep.subr.mxu0 0.0
        %4321 = vmatpush1.msra.mxu0 0.0
        %4322 = vmatprep.subr.mxu0 0.0
        %4323 = vmatpush1.msra.mxu0 0.0
        %4324 = vmatprep.subr.mxu0 0.0
        %4325 = vmatpush1.msra.mxu0 0.0
        %4326 = vmatprep.subr.mxu0 0.0
        %4327 = vmatpush1.msra.mxu0 0.0
        %4328 = vmatprep.subr.mxu0 0.0
        %4329 = vmatpush1.msra.mxu0 0.0
        %4330 = vmatprep.subr.mxu0 0.0
        %4331 = vmatpush1.msra.mxu0 0.0
        %4332 = vmatprep.subr.mxu0 0.0
        %4333 = vmatpush1.msra.mxu0 0.0
        %4334 = vmatprep.subr.mxu0 0.0
        %4335 = vmatpush1.msra.mxu0 0.0
        %4336 = vmatprep.subr.mxu0 0.0
        %4337 = vmatpush1.msra.mxu0 0.0
        %4338 = vmatprep.subr.mxu0 0.0
        %4339 = vmatpush1.msra.mxu0 0.0
        %4340 = vmatprep.subr.mxu0 0.0
        %4341 = vmatpush1.msra.mxu0 %v4312
        %4342 = vmatprep.subr.mxu0 0.0
        %4343 = vmatpush1.msra.mxu0 %v4311
        %4344 = vmatprep.subr.mxu0 0.0
        %4345 = vmatpush1.msra.mxu0 %v4310
        %4346 = vmatprep.subr.mxu0 0.0
        %4347 = vmatpush1.msra.mxu0 %v4309
        %4348 = vmatprep.subr.mxu0 0.0
        %4349 = vmatpush2.msra.mxu0 0.0
        %4350 = vmatprep.subr.mxu0 0.0
        %4351 = vmatpush2.msra.mxu0 0.0
        %4352 = vmatprep.subr.mxu0 0.0
        %4353 = vmatpush2.msra.mxu0 0.0
        %4354 = vmatprep.subr.mxu0 0.0
        %4355 = vmatpush2.msra.mxu0 0.0
        %4356 = vmatprep.subr.mxu0 0.0
        %4357 = vmatpush2.msra.mxu0 0.0
        %4358 = vmatprep.subr.mxu0 0.0
        %4359 = vmatpush2.msra.mxu0 0.0
        %4360 = vmatprep.subr.mxu0 0.0
        %4361 = vmatpush2.msra.mxu0 0.0
        %4362 = vmatprep.subr.mxu0 0.0
        %4363 = vmatpush2.msra.mxu0 0.0
        %4364 = vmatprep.subr.mxu0 0.0
        %4365 = vmatpush2.msra.mxu0 0.0
        %4366 = vmatprep.subr.mxu0 0.0
        %4367 = vmatpush2.msra.mxu0 0.0
        %4368 = vmatprep.subr.mxu0 0.0
        %4369 = vmatpush2.msra.mxu0 0.0
        %4370 = vmatprep.subr.mxu0 0.0
        %4371 = vmatpush2.msra.mxu0 0.0
        %4372 = vmatprep.subr.mxu0 0.0
        %4373 = vmatpush2.msra.mxu0 0.0
        %4374 = vmatprep.subr.mxu0 0.0
        %4375 = vmatpush2.msra.mxu0 0.0
        %4376 = vmatprep.subr.mxu0 0.0
        %4377 = vmatpush2.msra.mxu0 0.0
        %4378 = vmatprep.subr.mxu0 0.0
        %4379 = vmatpush2.msra.mxu0 0.0
        %4380 = vmatprep.mubr.f32.mxu0 0.0
        %4381 = vmatmul.mubr.f32.gmra.mxu0 %v4314
        %v4382 = vpop.f32.mrf.mxu0
        %v4383 = vadd.f32 0.0, %v4382
        %v4384 = vpop.f32.mrf.mxu0
        %4385 = vdwg.mxu0
        %v4387 = vsel %vm673, %v4303, 0
        %4389 = vmatprep.subr.mxu0 0.0
        %4390 = vmatpush1.msra.mxu0 0.0
        %4391 = vmatprep.subr.mxu0 0.0
        %4392 = vmatpush1.msra.mxu0 0.0
        %4393 = vmatprep.subr.mxu0 0.0
        %4394 = vmatpush1.msra.mxu0 0.0
        %4395 = vmatprep.subr.mxu0 0.0
        %4396 = vmatpush1.msra.mxu0 0.0
        %4397 = vmatprep.subr.mxu0 0.0
        %4398 = vmatpush1.msra.mxu0 0.0
        %4399 = vmatprep.subr.mxu0 0.0
        %4400 = vmatpush1.msra.mxu0 0.0
        %4401 = vmatprep.subr.mxu0 0.0
        %4402 = vmatpush1.msra.mxu0 0.0
        %4403 = vmatprep.subr.mxu0 0.0
        %4404 = vmatpush1.msra.mxu0 0.0
        %4405 = vmatprep.subr.mxu0 0.0
        %4406 = vmatpush1.msra.mxu0 0.0
        %4407 = vmatprep.subr.mxu0 0.0
        %4408 = vmatpush1.msra.mxu0 0.0
        %4409 = vmatprep.subr.mxu0 0.0
        %4410 = vmatpush1.msra.mxu0 0.0
        %4411 = vmatprep.subr.mxu0 0.0
        %4412 = vmatpush1.msra.mxu0 0.0
        %4413 = vmatprep.subr.mxu0 0.0
        %4414 = vmatpush1.msra.mxu0 %v4307
        %4415 = vmatprep.subr.mxu0 0.0
        %4416 = vmatpush1.msra.mxu0 %v4306
        %4417 = vmatprep.subr.mxu0 0.0
        %4418 = vmatpush1.msra.mxu0 %v4305
        %4419 = vmatprep.subr.mxu0 0.0
        %4420 = vmatpush1.msra.mxu0 %v4304
        %4421 = vmatprep.subr.mxu0 0.0
        %4422 = vmatpush2.msra.mxu0 0.0
        %4423 = vmatprep.subr.mxu0 0.0
        %4424 = vmatpush2.msra.mxu0 0.0
        %4425 = vmatprep.subr.mxu0 0.0
        %4426 = vmatpush2.msra.mxu0 0.0
        %4427 = vmatprep.subr.mxu0 0.0
        %4428 = vmatpush2.msra.mxu0 0.0
        %4429 = vmatprep.subr.mxu0 0.0
        %4430 = vmatpush2.msra.mxu0 0.0
        %4431 = vmatprep.subr.mxu0 0.0
        %4432 = vmatpush2.msra.mxu0 0.0
        %4433 = vmatprep.subr.mxu0 0.0
        %4434 = vmatpush2.msra.mxu0 0.0
        %4435 = vmatprep.subr.mxu0 0.0
        %4436 = vmatpush2.msra.mxu0 0.0
        %4437 = vmatprep.subr.mxu0 0.0
        %4438 = vmatpush2.msra.mxu0 0.0
        %4439 = vmatprep.subr.mxu0 0.0
        %4440 = vmatpush2.msra.mxu0 0.0
        %4441 = vmatprep.subr.mxu0 0.0
        %4442 = vmatpush2.msra.mxu0 0.0
        %4443 = vmatprep.subr.mxu0 0.0
        %4444 = vmatpush2.msra.mxu0 0.0
        %4445 = vmatprep.subr.mxu0 0.0
        %4446 = vmatpush2.msra.mxu0 0.0
        %4447 = vmatprep.subr.mxu0 0.0
        %4448 = vmatpush2.msra.mxu0 0.0
        %4449 = vmatprep.subr.mxu0 0.0
        %4450 = vmatpush2.msra.mxu0 0.0
        %4451 = vmatprep.subr.mxu0 0.0
        %4452 = vmatpush2.msra.mxu0 0.0
        %4453 = vmatprep.mubr.f32.mxu0 0.0
        %4454 = vmatmul.mubr.f32.gmra.mxu0 %v4387
        %v4455 = vpop.f32.mrf.mxu0
        %v4456 = vadd.f32 %v4383, %v4455
        %v4457 = vpop.f32.mrf.mxu0
        %4458 = vdwg.mxu0
        %v4459 = vld [vmem:[#allocation2 + $0x83] sm:$0x3f]
        %v4460 = vld [vmem:[%s3 + $0x40] sm:$0xff]
        %v4461 = vld [vmem:[%s3 + $0x48] sm:$0xff]
        %v4462 = vld [vmem:[%s3 + $0x50] sm:$0xff]
        %v4463 = vld [vmem:[%s3 + $0x58] sm:$0xff]
        %v4465 = vsel %vm673, %v4459, 0
        %4467 = vmatprep.subr.mxu0 0.0
        %4468 = vmatpush1.msra.mxu0 0.0
        %4469 = vmatprep.subr.mxu0 0.0
        %4470 = vmatpush1.msra.mxu0 0.0
        %4471 = vmatprep.subr.mxu0 0.0
        %4472 = vmatpush1.msra.mxu0 0.0
        %4473 = vmatprep.subr.mxu0 0.0
        %4474 = vmatpush1.msra.mxu0 0.0
        %4475 = vmatprep.subr.mxu0 0.0
        %4476 = vmatpush1.msra.mxu0 0.0
        %4477 = vmatprep.subr.mxu0 0.0
        %4478 = vmatpush1.msra.mxu0 0.0
        %4479 = vmatprep.subr.mxu0 0.0
        %4480 = vmatpush1.msra.mxu0 0.0
        %4481 = vmatprep.subr.mxu0 0.0
        %4482 = vmatpush1.msra.mxu0 0.0
        %4483 = vmatprep.subr.mxu0 0.0
        %4484 = vmatpush1.msra.mxu0 0.0
        %4485 = vmatprep.subr.mxu0 0.0
        %4486 = vmatpush1.msra.mxu0 0.0
        %4487 = vmatprep.subr.mxu0 0.0
        %4488 = vmatpush1.msra.mxu0 0.0
        %4489 = vmatprep.subr.mxu0 0.0
        %4490 = vmatpush1.msra.mxu0 0.0
        %4491 = vmatprep.subr.mxu0 0.0
        %4492 = vmatpush1.msra.mxu0 %v4463
        %4493 = vmatprep.subr.mxu0 0.0
        %4494 = vmatpush1.msra.mxu0 %v4462
        %4495 = vmatprep.subr.mxu0 0.0
        %4496 = vmatpush1.msra.mxu0 %v4461
        %4497 = vmatprep.subr.mxu0 0.0
        %4498 = vmatpush1.msra.mxu0 %v4460
        %4499 = vmatprep.subr.mxu0 0.0
        %4500 = vmatpush2.msra.mxu0 0.0
        %4501 = vmatprep.subr.mxu0 0.0
        %4502 = vmatpush2.msra.mxu0 0.0
        %4503 = vmatprep.subr.mxu0 0.0
        %4504 = vmatpush2.msra.mxu0 0.0
        %4505 = vmatprep.subr.mxu0 0.0
        %4506 = vmatpush2.msra.mxu0 0.0
        %4507 = vmatprep.subr.mxu0 0.0
        %4508 = vmatpush2.msra.mxu0 0.0
        %4509 = vmatprep.subr.mxu0 0.0
        %4510 = vmatpush2.msra.mxu0 0.0
        %4511 = vmatprep.subr.mxu0 0.0
        %4512 = vmatpush2.msra.mxu0 0.0
        %4513 = vmatprep.subr.mxu0 0.0
        %4514 = vmatpush2.msra.mxu0 0.0
        %4515 = vmatprep.subr.mxu0 0.0
        %4516 = vmatpush2.msra.mxu0 0.0
        %4517 = vmatprep.subr.mxu0 0.0
        %4518 = vmatpush2.msra.mxu0 0.0
        %4519 = vmatprep.subr.mxu0 0.0
        %4520 = vmatpush2.msra.mxu0 0.0
        %4521 = vmatprep.subr.mxu0 0.0
        %4522 = vmatpush2.msra.mxu0 0.0
        %4523 = vmatprep.subr.mxu0 0.0
        %4524 = vmatpush2.msra.mxu0 0.0
        %4525 = vmatprep.subr.mxu0 0.0
        %4526 = vmatpush2.msra.mxu0 0.0
        %4527 = vmatprep.subr.mxu0 0.0
        %4528 = vmatpush2.msra.mxu0 0.0
        %4529 = vmatprep.subr.mxu0 0.0
        %4530 = vmatpush2.msra.mxu0 0.0
        %4531 = vmatprep.mubr.f32.mxu0 0.0
        %4532 = vmatmul.mubr.f32.gmra.mxu0 %v4465
        %v4533 = vpop.f32.mrf.mxu0
        %v4534 = vadd.f32 0.0, %v4533
        %v4535 = vpop.f32.mrf.mxu0
        %4536 = vdwg.mxu0
        %v4537 = vadd.f32 %v4456, %v4534
        %v4538 = vld [vmem:[#allocation2 + $0x8f] sm:$0x3f]
        %v4539 = vld [vmem:[%s3 + $0x60] sm:$0xff]
        %v4540 = vld [vmem:[%s3 + $0x68] sm:$0xff]
        %v4541 = vld [vmem:[%s3 + $0x70] sm:$0xff]
        %v4542 = vld [vmem:[%s3 + $0x78] sm:$0xff]
        %v4544 = vsel %vm673, %v4538, 0
        %4546 = vmatprep.subr.mxu0 0.0
        %4547 = vmatpush1.msra.mxu0 0.0
        %4548 = vmatprep.subr.mxu0 0.0
        %4549 = vmatpush1.msra.mxu0 0.0
        %4550 = vmatprep.subr.mxu0 0.0
        %4551 = vmatpush1.msra.mxu0 0.0
        %4552 = vmatprep.subr.mxu0 0.0
        %4553 = vmatpush1.msra.mxu0 0.0
        %4554 = vmatprep.subr.mxu0 0.0
        %4555 = vmatpush1.msra.mxu0 0.0
        %4556 = vmatprep.subr.mxu0 0.0
        %4557 = vmatpush1.msra.mxu0 0.0
        %4558 = vmatprep.subr.mxu0 0.0
        %4559 = vmatpush1.msra.mxu0 0.0
        %4560 = vmatprep.subr.mxu0 0.0
        %4561 = vmatpush1.msra.mxu0 0.0
        %4562 = vmatprep.subr.mxu0 0.0
        %4563 = vmatpush1.msra.mxu0 0.0
        %4564 = vmatprep.subr.mxu0 0.0
        %4565 = vmatpush1.msra.mxu0 0.0
        %4566 = vmatprep.subr.mxu0 0.0
        %4567 = vmatpush1.msra.mxu0 0.0
        %4568 = vmatprep.subr.mxu0 0.0
        %4569 = vmatpush1.msra.mxu0 0.0
        %4570 = vmatprep.subr.mxu0 0.0
        %4571 = vmatpush1.msra.mxu0 %v4542
        %4572 = vmatprep.subr.mxu0 0.0
        %4573 = vmatpush1.msra.mxu0 %v4541
        %4574 = vmatprep.subr.mxu0 0.0
        %4575 = vmatpush1.msra.mxu0 %v4540
        %4576 = vmatprep.subr.mxu0 0.0
        %4577 = vmatpush1.msra.mxu0 %v4539
        %4578 = vmatprep.subr.mxu0 0.0
        %4579 = vmatpush2.msra.mxu0 0.0
        %4580 = vmatprep.subr.mxu0 0.0
        %4581 = vmatpush2.msra.mxu0 0.0
        %4582 = vmatprep.subr.mxu0 0.0
        %4583 = vmatpush2.msra.mxu0 0.0
        %4584 = vmatprep.subr.mxu0 0.0
        %4585 = vmatpush2.msra.mxu0 0.0
        %4586 = vmatprep.subr.mxu0 0.0
        %4587 = vmatpush2.msra.mxu0 0.0
        %4588 = vmatprep.subr.mxu0 0.0
        %4589 = vmatpush2.msra.mxu0 0.0
        %4590 = vmatprep.subr.mxu0 0.0
        %4591 = vmatpush2.msra.mxu0 0.0
        %4592 = vmatprep.subr.mxu0 0.0
        %4593 = vmatpush2.msra.mxu0 0.0
        %4594 = vmatprep.subr.mxu0 0.0
        %4595 = vmatpush2.msra.mxu0 0.0
        %4596 = vmatprep.subr.mxu0 0.0
        %4597 = vmatpush2.msra.mxu0 0.0
        %4598 = vmatprep.subr.mxu0 0.0
        %4599 = vmatpush2.msra.mxu0 0.0
        %4600 = vmatprep.subr.mxu0 0.0
        %4601 = vmatpush2.msra.mxu0 0.0
        %4602 = vmatprep.subr.mxu0 0.0
        %4603 = vmatpush2.msra.mxu0 0.0
        %4604 = vmatprep.subr.mxu0 0.0
        %4605 = vmatpush2.msra.mxu0 0.0
        %4606 = vmatprep.subr.mxu0 0.0
        %4607 = vmatpush2.msra.mxu0 0.0
        %4608 = vmatprep.subr.mxu0 0.0
        %4609 = vmatpush2.msra.mxu0 0.0
        %4610 = vmatprep.mubr.f32.mxu0 0.0
        %4611 = vmatmul.mubr.f32.gmra.mxu0 %v4544
        %v4612 = vpop.f32.mrf.mxu0
        %v4613 = vadd.f32 0.0, %v4612
        %v4614 = vpop.f32.mrf.mxu0
        %4615 = vdwg.mxu0
        %v4616 = vadd.f32 %v4537, %v4613
        %v4617 = vld [vmem:[#allocation2 + $0x96] sm:$0x3f]
        %v4618 = vld [vmem:[%s3 + $0x80] sm:$0xff]
        %v4619 = vld [vmem:[%s3 + $0x88] sm:$0xff]
        %v4620 = vld [vmem:[%s3 + $0x90] sm:$0xff]
        %v4621 = vld [vmem:[%s3 + $0x98] sm:$0xff]
        %v4623 = vsel %vm673, %v4617, 0
        %4625 = vmatprep.subr.mxu0 0.0
        %4626 = vmatpush1.msra.mxu0 0.0
        %4627 = vmatprep.subr.mxu0 0.0
        %4628 = vmatpush1.msra.mxu0 0.0
        %4629 = vmatprep.subr.mxu0 0.0
        %4630 = vmatpush1.msra.mxu0 0.0
        %4631 = vmatprep.subr.mxu0 0.0
        %4632 = vmatpush1.msra.mxu0 0.0
        %4633 = vmatprep.subr.mxu0 0.0
        %4634 = vmatpush1.msra.mxu0 0.0
        %4635 = vmatprep.subr.mxu0 0.0
        %4636 = vmatpush1.msra.mxu0 0.0
        %4637 = vmatprep.subr.mxu0 0.0
        %4638 = vmatpush1.msra.mxu0 0.0
        %4639 = vmatprep.subr.mxu0 0.0
        %4640 = vmatpush1.msra.mxu0 0.0
        %4641 = vmatprep.subr.mxu0 0.0
        %4642 = vmatpush1.msra.mxu0 0.0
        %4643 = vmatprep.subr.mxu0 0.0
        %4644 = vmatpush1.msra.mxu0 0.0
        %4645 = vmatprep.subr.mxu0 0.0
        %4646 = vmatpush1.msra.mxu0 0.0
        %4647 = vmatprep.subr.mxu0 0.0
        %4648 = vmatpush1.msra.mxu0 0.0
        %4649 = vmatprep.subr.mxu0 0.0
        %4650 = vmatpush1.msra.mxu0 %v4621
        %4651 = vmatprep.subr.mxu0 0.0
        %4652 = vmatpush1.msra.mxu0 %v4620
        %4653 = vmatprep.subr.mxu0 0.0
        %4654 = vmatpush1.msra.mxu0 %v4619
        %4655 = vmatprep.subr.mxu0 0.0
        %4656 = vmatpush1.msra.mxu0 %v4618
        %4657 = vmatprep.subr.mxu0 0.0
        %4658 = vmatpush2.msra.mxu0 0.0
        %4659 = vmatprep.subr.mxu0 0.0
        %4660 = vmatpush2.msra.mxu0 0.0
        %4661 = vmatprep.subr.mxu0 0.0
        %4662 = vmatpush2.msra.mxu0 0.0
        %4663 = vmatprep.subr.mxu0 0.0
        %4664 = vmatpush2.msra.mxu0 0.0
        %4665 = vmatprep.subr.mxu0 0.0
        %4666 = vmatpush2.msra.mxu0 0.0
        %4667 = vmatprep.subr.mxu0 0.0
        %4668 = vmatpush2.msra.mxu0 0.0
        %4669 = vmatprep.subr.mxu0 0.0
        %4670 = vmatpush2.msra.mxu0 0.0
        %4671 = vmatprep.subr.mxu0 0.0
        %4672 = vmatpush2.msra.mxu0 0.0
        %4673 = vmatprep.subr.mxu0 0.0
        %4674 = vmatpush2.msra.mxu0 0.0
        %4675 = vmatprep.subr.mxu0 0.0
        %4676 = vmatpush2.msra.mxu0 0.0
        %4677 = vmatprep.subr.mxu0 0.0
        %4678 = vmatpush2.msra.mxu0 0.0
        %4679 = vmatprep.subr.mxu0 0.0
        %4680 = vmatpush2.msra.mxu0 0.0
        %4681 = vmatprep.subr.mxu0 0.0
        %4682 = vmatpush2.msra.mxu0 0.0
        %4683 = vmatprep.subr.mxu0 0.0
        %4684 = vmatpush2.msra.mxu0 0.0
        %4685 = vmatprep.subr.mxu0 0.0
        %4686 = vmatpush2.msra.mxu0 0.0
        %4687 = vmatprep.subr.mxu0 0.0
        %4688 = vmatpush2.msra.mxu0 0.0
        %4689 = vmatprep.mubr.f32.mxu0 0.0
        %4690 = vmatmul.mubr.f32.gmra.mxu0 %v4623
        %v4691 = vpop.f32.mrf.mxu0
        %v4692 = vadd.f32 0.0, %v4691
        %v4693 = vpop.f32.mrf.mxu0
        %4694 = vdwg.mxu0
        %v4695 = vadd.f32 %v4616, %v4692
        %v4696 = vld [vmem:[#allocation2 + $0x90] sm:$0x3f]
        %v4697 = vld [vmem:[%s3 + $0xa0] sm:$0xff]
        %v4698 = vld [vmem:[%s3 + $0xa8] sm:$0xff]
        %v4699 = vld [vmem:[%s3 + $0xb0] sm:$0xff]
        %v4700 = vld [vmem:[%s3 + $0xb8] sm:$0xff]
        %v4702 = vsel %vm673, %v4696, 0
        %4704 = vmatprep.subr.mxu0 0.0
        %4705 = vmatpush1.msra.mxu0 0.0
        %4706 = vmatprep.subr.mxu0 0.0
        %4707 = vmatpush1.msra.mxu0 0.0
        %4708 = vmatprep.subr.mxu0 0.0
        %4709 = vmatpush1.msra.mxu0 0.0
        %4710 = vmatprep.subr.mxu0 0.0
        %4711 = vmatpush1.msra.mxu0 0.0
        %4712 = vmatprep.subr.mxu0 0.0
        %4713 = vmatpush1.msra.mxu0 0.0
        %4714 = vmatprep.subr.mxu0 0.0
        %4715 = vmatpush1.msra.mxu0 0.0
        %4716 = vmatprep.subr.mxu0 0.0
        %4717 = vmatpush1.msra.mxu0 0.0
        %4718 = vmatprep.subr.mxu0 0.0
        %4719 = vmatpush1.msra.mxu0 0.0
        %4720 = vmatprep.subr.mxu0 0.0
        %4721 = vmatpush1.msra.mxu0 0.0
        %4722 = vmatprep.subr.mxu0 0.0
        %4723 = vmatpush1.msra.mxu0 0.0
        %4724 = vmatprep.subr.mxu0 0.0
        %4725 = vmatpush1.msra.mxu0 0.0
        %4726 = vmatprep.subr.mxu0 0.0
        %4727 = vmatpush1.msra.mxu0 0.0
        %4728 = vmatprep.subr.mxu0 0.0
        %4729 = vmatpush1.msra.mxu0 %v4700
        %4730 = vmatprep.subr.mxu0 0.0
        %4731 = vmatpush1.msra.mxu0 %v4699
        %4732 = vmatprep.subr.mxu0 0.0
        %4733 = vmatpush1.msra.mxu0 %v4698
        %4734 = vmatprep.subr.mxu0 0.0
        %4735 = vmatpush1.msra.mxu0 %v4697
        %4736 = vmatprep.subr.mxu0 0.0
        %4737 = vmatpush2.msra.mxu0 0.0
        %4738 = vmatprep.subr.mxu0 0.0
        %4739 = vmatpush2.msra.mxu0 0.0
        %4740 = vmatprep.subr.mxu0 0.0
        %4741 = vmatpush2.msra.mxu0 0.0
        %4742 = vmatprep.subr.mxu0 0.0
        %4743 = vmatpush2.msra.mxu0 0.0
        %4744 = vmatprep.subr.mxu0 0.0
        %4745 = vmatpush2.msra.mxu0 0.0
        %4746 = vmatprep.subr.mxu0 0.0
        %4747 = vmatpush2.msra.mxu0 0.0
        %4748 = vmatprep.subr.mxu0 0.0
        %4749 = vmatpush2.msra.mxu0 0.0
        %4750 = vmatprep.subr.mxu0 0.0
        %4751 = vmatpush2.msra.mxu0 0.0
        %4752 = vmatprep.subr.mxu0 0.0
        %4753 = vmatpush2.msra.mxu0 0.0
        %4754 = vmatprep.subr.mxu0 0.0
        %4755 = vmatpush2.msra.mxu0 0.0
        %4756 = vmatprep.subr.mxu0 0.0
        %4757 = vmatpush2.msra.mxu0 0.0
        %4758 = vmatprep.subr.mxu0 0.0
        %4759 = vmatpush2.msra.mxu0 0.0
        %4760 = vmatprep.subr.mxu0 0.0
        %4761 = vmatpush2.msra.mxu0 0.0
        %4762 = vmatprep.subr.mxu0 0.0
        %4763 = vmatpush2.msra.mxu0 0.0
        %4764 = vmatprep.subr.mxu0 0.0
        %4765 = vmatpush2.msra.mxu0 0.0
        %4766 = vmatprep.subr.mxu0 0.0
        %4767 = vmatpush2.msra.mxu0 0.0
        %4768 = vmatprep.mubr.f32.mxu0 0.0
        %4769 = vmatmul.mubr.f32.gmra.mxu0 %v4702
        %v4770 = vpop.f32.mrf.mxu0
        %v4771 = vadd.f32 0.0, %v4770
        %v4772 = vpop.f32.mrf.mxu0
        %4773 = vdwg.mxu0
        %v4774 = vadd.f32 %v4695, %v4771
        %v4775 = vld [vmem:[#allocation2 + $0x9c] sm:$0x3f]
        %v4776 = vld [vmem:[%s3 + $0xc0] sm:$0xff]
        %v4777 = vld [vmem:[%s3 + $0xc8] sm:$0xff]
        %v4778 = vld [vmem:[%s3 + $0xd0] sm:$0xff]
        %v4779 = vld [vmem:[%s3 + $0xd8] sm:$0xff]
        %v4781 = vsel %vm673, %v4775, 0
        %4783 = vmatprep.subr.mxu0 0.0
        %4784 = vmatpush1.msra.mxu0 0.0
        %4785 = vmatprep.subr.mxu0 0.0
        %4786 = vmatpush1.msra.mxu0 0.0
        %4787 = vmatprep.subr.mxu0 0.0
        %4788 = vmatpush1.msra.mxu0 0.0
        %4789 = vmatprep.subr.mxu0 0.0
        %4790 = vmatpush1.msra.mxu0 0.0
        %4791 = vmatprep.subr.mxu0 0.0
        %4792 = vmatpush1.msra.mxu0 0.0
        %4793 = vmatprep.subr.mxu0 0.0
        %4794 = vmatpush1.msra.mxu0 0.0
        %4795 = vmatprep.subr.mxu0 0.0
        %4796 = vmatpush1.msra.mxu0 0.0
        %4797 = vmatprep.subr.mxu0 0.0
        %4798 = vmatpush1.msra.mxu0 0.0
        %4799 = vmatprep.subr.mxu0 0.0
        %4800 = vmatpush1.msra.mxu0 0.0
        %4801 = vmatprep.subr.mxu0 0.0
        %4802 = vmatpush1.msra.mxu0 0.0
        %4803 = vmatprep.subr.mxu0 0.0
        %4804 = vmatpush1.msra.mxu0 0.0
        %4805 = vmatprep.subr.mxu0 0.0
        %4806 = vmatpush1.msra.mxu0 0.0
        %4807 = vmatprep.subr.mxu0 0.0
        %4808 = vmatpush1.msra.mxu0 %v4779
        %4809 = vmatprep.subr.mxu0 0.0
        %4810 = vmatpush1.msra.mxu0 %v4778
        %4811 = vmatprep.subr.mxu0 0.0
        %4812 = vmatpush1.msra.mxu0 %v4777
        %4813 = vmatprep.subr.mxu0 0.0
        %4814 = vmatpush1.msra.mxu0 %v4776
        %4815 = vmatprep.subr.mxu0 0.0
        %4816 = vmatpush2.msra.mxu0 0.0
        %4817 = vmatprep.subr.mxu0 0.0
        %4818 = vmatpush2.msra.mxu0 0.0
        %4819 = vmatprep.subr.mxu0 0.0
        %4820 = vmatpush2.msra.mxu0 0.0
        %4821 = vmatprep.subr.mxu0 0.0
        %4822 = vmatpush2.msra.mxu0 0.0
        %4823 = vmatprep.subr.mxu0 0.0
        %4824 = vmatpush2.msra.mxu0 0.0
        %4825 = vmatprep.subr.mxu0 0.0
        %4826 = vmatpush2.msra.mxu0 0.0
        %4827 = vmatprep.subr.mxu0 0.0
        %4828 = vmatpush2.msra.mxu0 0.0
        %4829 = vmatprep.subr.mxu0 0.0
        %4830 = vmatpush2.msra.mxu0 0.0
        %4831 = vmatprep.subr.mxu0 0.0
        %4832 = vmatpush2.msra.mxu0 0.0
        %4833 = vmatprep.subr.mxu0 0.0
        %4834 = vmatpush2.msra.mxu0 0.0
        %4835 = vmatprep.subr.mxu0 0.0
        %4836 = vmatpush2.msra.mxu0 0.0
        %4837 = vmatprep.subr.mxu0 0.0
        %4838 = vmatpush2.msra.mxu0 0.0
        %4839 = vmatprep.subr.mxu0 0.0
        %4840 = vmatpush2.msra.mxu0 0.0
        %4841 = vmatprep.subr.mxu0 0.0
        %4842 = vmatpush2.msra.mxu0 0.0
        %4843 = vmatprep.subr.mxu0 0.0
        %4844 = vmatpush2.msra.mxu0 0.0
        %4845 = vmatprep.subr.mxu0 0.0
        %4846 = vmatpush2.msra.mxu0 0.0
        %4847 = vmatprep.mubr.f32.mxu0 0.0
        %4848 = vmatmul.mubr.f32.gmra.mxu0 %v4781
        %v4849 = vpop.f32.mrf.mxu0
        %v4850 = vadd.f32 0.0, %v4849
        %v4851 = vpop.f32.mrf.mxu0
        %4852 = vdwg.mxu0
        %v4853 = vadd.f32 %v4774, %v4850
        %v4854 = vld [vmem:[#allocation2 + $0xa3] sm:$0x3f]
        %v4855 = vld [vmem:[%s3 + $0xe0] sm:$0xff]
        %v4856 = vld [vmem:[%s3 + $0xe8] sm:$0xff]
        %v4857 = vld [vmem:[%s3 + $0xf0] sm:$0xff]
        %v4858 = vld [vmem:[%s3 + $0xf8] sm:$0xff]
        %v4860 = vsel %vm673, %v4854, 0
        %4862 = vmatprep.subr.mxu0 0.0
        %4863 = vmatpush1.msra.mxu0 0.0
        %4864 = vmatprep.subr.mxu0 0.0
        %4865 = vmatpush1.msra.mxu0 0.0
        %4866 = vmatprep.subr.mxu0 0.0
        %4867 = vmatpush1.msra.mxu0 0.0
        %4868 = vmatprep.subr.mxu0 0.0
        %4869 = vmatpush1.msra.mxu0 0.0
        %4870 = vmatprep.subr.mxu0 0.0
        %4871 = vmatpush1.msra.mxu0 0.0
        %4872 = vmatprep.subr.mxu0 0.0
        %4873 = vmatpush1.msra.mxu0 0.0
        %4874 = vmatprep.subr.mxu0 0.0
        %4875 = vmatpush1.msra.mxu0 0.0
        %4876 = vmatprep.subr.mxu0 0.0
        %4877 = vmatpush1.msra.mxu0 0.0
        %4878 = vmatprep.subr.mxu0 0.0
        %4879 = vmatpush1.msra.mxu0 0.0
        %4880 = vmatprep.subr.mxu0 0.0
        %4881 = vmatpush1.msra.mxu0 0.0
        %4882 = vmatprep.subr.mxu0 0.0
        %4883 = vmatpush1.msra.mxu0 0.0
        %4884 = vmatprep.subr.mxu0 0.0
        %4885 = vmatpush1.msra.mxu0 0.0
        %4886 = vmatprep.subr.mxu0 0.0
        %4887 = vmatpush1.msra.mxu0 %v4858
        %4888 = vmatprep.subr.mxu0 0.0
        %4889 = vmatpush1.msra.mxu0 %v4857
        %4890 = vmatprep.subr.mxu0 0.0
        %4891 = vmatpush1.msra.mxu0 %v4856
        %4892 = vmatprep.subr.mxu0 0.0
        %4893 = vmatpush1.msra.mxu0 %v4855
        %4894 = vmatprep.subr.mxu0 0.0
        %4895 = vmatpush2.msra.mxu0 0.0
        %4896 = vmatprep.subr.mxu0 0.0
        %4897 = vmatpush2.msra.mxu0 0.0
        %4898 = vmatprep.subr.mxu0 0.0
        %4899 = vmatpush2.msra.mxu0 0.0
        %4900 = vmatprep.subr.mxu0 0.0
        %4901 = vmatpush2.msra.mxu0 0.0
        %4902 = vmatprep.subr.mxu0 0.0
        %4903 = vmatpush2.msra.mxu0 0.0
        %4904 = vmatprep.subr.mxu0 0.0
        %4905 = vmatpush2.msra.mxu0 0.0
        %4906 = vmatprep.subr.mxu0 0.0
        %4907 = vmatpush2.msra.mxu0 0.0
        %4908 = vmatprep.subr.mxu0 0.0
        %4909 = vmatpush2.msra.mxu0 0.0
        %4910 = vmatprep.subr.mxu0 0.0
        %4911 = vmatpush2.msra.mxu0 0.0
        %4912 = vmatprep.subr.mxu0 0.0
        %4913 = vmatpush2.msra.mxu0 0.0
        %4914 = vmatprep.subr.mxu0 0.0
        %4915 = vmatpush2.msra.mxu0 0.0
        %4916 = vmatprep.subr.mxu0 0.0
        %4917 = vmatpush2.msra.mxu0 0.0
        %4918 = vmatprep.subr.mxu0 0.0
        %4919 = vmatpush2.msra.mxu0 0.0
        %4920 = vmatprep.subr.mxu0 0.0
        %4921 = vmatpush2.msra.mxu0 0.0
        %4922 = vmatprep.subr.mxu0 0.0
        %4923 = vmatpush2.msra.mxu0 0.0
        %4924 = vmatprep.subr.mxu0 0.0
        %4925 = vmatpush2.msra.mxu0 0.0
        %4926 = vmatprep.mubr.f32.mxu0 0.0
        %4927 = vmatmul.mubr.f32.gmra.mxu0 %v4860
        %v4928 = vpop.f32.mrf.mxu0
        %v4929 = vadd.f32 0.0, %v4928
        %v4930 = vpop.f32.mrf.mxu0
        %4931 = vdwg.mxu0
        %v4932 = vadd.f32 %v4853, %v4929
        %v4933 = vld [vmem:[#allocation2 + $0x9d] sm:$0x3f]
        %v4934 = vld [vmem:[%s3 + $0x100] sm:$0xff]
        %v4935 = vld [vmem:[%s3 + $0x108] sm:$0xff]
        %v4936 = vld [vmem:[%s3 + $0x110] sm:$0xff]
        %v4937 = vld [vmem:[%s3 + $0x118] sm:$0xff]
        %v4939 = vsel %vm673, %v4933, 0
        %4941 = vmatprep.subr.mxu0 0.0
        %4942 = vmatpush1.msra.mxu0 0.0
        %4943 = vmatprep.subr.mxu0 0.0
        %4944 = vmatpush1.msra.mxu0 0.0
        %4945 = vmatprep.subr.mxu0 0.0
        %4946 = vmatpush1.msra.mxu0 0.0
        %4947 = vmatprep.subr.mxu0 0.0
        %4948 = vmatpush1.msra.mxu0 0.0
        %4949 = vmatprep.subr.mxu0 0.0
        %4950 = vmatpush1.msra.mxu0 0.0
        %4951 = vmatprep.subr.mxu0 0.0
        %4952 = vmatpush1.msra.mxu0 0.0
        %4953 = vmatprep.subr.mxu0 0.0
        %4954 = vmatpush1.msra.mxu0 0.0
        %4955 = vmatprep.subr.mxu0 0.0
        %4956 = vmatpush1.msra.mxu0 0.0
        %4957 = vmatprep.subr.mxu0 0.0
        %4958 = vmatpush1.msra.mxu0 0.0
        %4959 = vmatprep.subr.mxu0 0.0
        %4960 = vmatpush1.msra.mxu0 0.0
        %4961 = vmatprep.subr.mxu0 0.0
        %4962 = vmatpush1.msra.mxu0 0.0
        %4963 = vmatprep.subr.mxu0 0.0
        %4964 = vmatpush1.msra.mxu0 0.0
        %4965 = vmatprep.subr.mxu0 0.0
        %4966 = vmatpush1.msra.mxu0 %v4937
        %4967 = vmatprep.subr.mxu0 0.0
        %4968 = vmatpush1.msra.mxu0 %v4936
        %4969 = vmatprep.subr.mxu0 0.0
        %4970 = vmatpush1.msra.mxu0 %v4935
        %4971 = vmatprep.subr.mxu0 0.0
        %4972 = vmatpush1.msra.mxu0 %v4934
        %4973 = vmatprep.subr.mxu0 0.0
        %4974 = vmatpush2.msra.mxu0 0.0
        %4975 = vmatprep.subr.mxu0 0.0
        %4976 = vmatpush2.msra.mxu0 0.0
        %4977 = vmatprep.subr.mxu0 0.0
        %4978 = vmatpush2.msra.mxu0 0.0
        %4979 = vmatprep.subr.mxu0 0.0
        %4980 = vmatpush2.msra.mxu0 0.0
        %4981 = vmatprep.subr.mxu0 0.0
        %4982 = vmatpush2.msra.mxu0 0.0
        %4983 = vmatprep.subr.mxu0 0.0
        %4984 = vmatpush2.msra.mxu0 0.0
        %4985 = vmatprep.subr.mxu0 0.0
        %4986 = vmatpush2.msra.mxu0 0.0
        %4987 = vmatprep.subr.mxu0 0.0
        %4988 = vmatpush2.msra.mxu0 0.0
        %4989 = vmatprep.subr.mxu0 0.0
        %4990 = vmatpush2.msra.mxu0 0.0
        %4991 = vmatprep.subr.mxu0 0.0
        %4992 = vmatpush2.msra.mxu0 0.0
        %4993 = vmatprep.subr.mxu0 0.0
        %4994 = vmatpush2.msra.mxu0 0.0
        %4995 = vmatprep.subr.mxu0 0.0
        %4996 = vmatpush2.msra.mxu0 0.0
        %4997 = vmatprep.subr.mxu0 0.0
        %4998 = vmatpush2.msra.mxu0 0.0
        %4999 = vmatprep.subr.mxu0 0.0
        %5000 = vmatpush2.msra.mxu0 0.0
        %5001 = vmatprep.subr.mxu0 0.0
        %5002 = vmatpush2.msra.mxu0 0.0
        %5003 = vmatprep.subr.mxu0 0.0
        %5004 = vmatpush2.msra.mxu0 0.0
        %5005 = vmatprep.mubr.f32.mxu0 0.0
        %5006 = vmatmul.mubr.f32.gmra.mxu0 %v4939
        %v5007 = vpop.f32.mrf.mxu0
        %v5008 = vadd.f32 0.0, %v5007
        %v5009 = vpop.f32.mrf.mxu0
        %5010 = vdwg.mxu0
        %v5011 = vadd.f32 %v4932, %v5008
        %v5012 = vld [vmem:[%s4] sm:$0x1]
        %v5014 = vlaneseq
        %v5015 = vshrl.u32 %v5014, 7
        %v5016 = vsub.s32 0, %v5015
        %v5017 = vrot.slane %v5012, %v5016
        %v5019 = vadd.f32 %v5011, %v5017
        %vm5020 = vcmp.gt.f32.partialorder %v5019, 0.0
        %v5021 = vmul.f32 %v5019, 0.01
        %v5022 = vsel %vm5020, %v5019, %v5021
        %5023 = vst.msk [vmem:[#allocation3 + $0x1e] sm:$0x3f] %vm1417, %v5022
        %v5024 = vld [vmem:[#allocation3] sm:$0xf]
        %v5025 = vld [vmem:[%s5] sm:$0xff]
        %v5026 = vld [vmem:[%s5 + $0x8] sm:$0xff]
        %v5027 = vld [vmem:[%s5 + $0x10] sm:$0xff]
        %v5028 = vld [vmem:[%s5 + $0x18] sm:$0xff]
        %v5029 = vld [vmem:[%s5 + $0x20] sm:$0xff]
        %v5030 = vld [vmem:[%s5 + $0x28] sm:$0xff]
        %v5031 = vld [vmem:[%s5 + $0x30] sm:$0xff]
        %v5032 = vld [vmem:[%s5 + $0x38] sm:$0xff]
        %v5033 = vld [vmem:[#allocation3 + $0x1] sm:$0xf]
        %v5034 = vld [vmem:[%s5 + $0x40] sm:$0xff]
        %v5035 = vld [vmem:[%s5 + $0x48] sm:$0xff]
        %v5036 = vld [vmem:[%s5 + $0x50] sm:$0xff]
        %v5037 = vld [vmem:[%s5 + $0x58] sm:$0xff]
        %v5038 = vld [vmem:[%s5 + $0x60] sm:$0xff]
        %v5039 = vld [vmem:[%s5 + $0x68] sm:$0xff]
        %v5040 = vld [vmem:[%s5 + $0x70] sm:$0xff]
        %v5041 = vld [vmem:[%s5 + $0x78] sm:$0xff]
        %vm5042 = vcmask 523264
        %v5044 = vsel %vm5042, %v5033, 0
        %5046 = vmatprep.subr.mxu0 0.0
        %5047 = vmatpush1.msra.mxu0 0.0
        %5048 = vmatprep.subr.mxu0 0.0
        %5049 = vmatpush1.msra.mxu0 0.0
        %5050 = vmatprep.subr.mxu0 0.0
        %5051 = vmatpush1.msra.mxu0 0.0
        %5052 = vmatprep.subr.mxu0 0.0
        %5053 = vmatpush1.msra.mxu0 0.0
        %5054 = vmatprep.subr.mxu0 0.0
        %5055 = vmatpush1.msra.mxu0 0.0
        %5056 = vmatprep.subr.mxu0 0.0
        %5057 = vmatpush1.msra.mxu0 0.0
        %5058 = vmatprep.subr.mxu0 0.0
        %5059 = vmatpush1.msra.mxu0 0.0
        %5060 = vmatprep.subr.mxu0 0.0
        %5061 = vmatpush1.msra.mxu0 0.0
        %5062 = vmatprep.subr.mxu0 0.0
        %5063 = vmatpush1.msra.mxu0 %v5041
        %5064 = vmatprep.subr.mxu0 0.0
        %5065 = vmatpush1.msra.mxu0 %v5040
        %5066 = vmatprep.subr.mxu0 0.0
        %5067 = vmatpush1.msra.mxu0 %v5039
        %5068 = vmatprep.subr.mxu0 0.0
        %5069 = vmatpush1.msra.mxu0 %v5038
        %5070 = vmatprep.subr.mxu0 0.0
        %5071 = vmatpush1.msra.mxu0 %v5037
        %5072 = vmatprep.subr.mxu0 0.0
        %5073 = vmatpush1.msra.mxu0 %v5036
        %5074 = vmatprep.subr.mxu0 0.0
        %5075 = vmatpush1.msra.mxu0 %v5035
        %5076 = vmatprep.subr.mxu0 0.0
        %5077 = vmatpush1.msra.mxu0 %v5034
        %5078 = vmatprep.subr.mxu0 0.0
        %5079 = vmatpush2.msra.mxu0 0.0
        %5080 = vmatprep.subr.mxu0 0.0
        %5081 = vmatpush2.msra.mxu0 0.0
        %5082 = vmatprep.subr.mxu0 0.0
        %5083 = vmatpush2.msra.mxu0 0.0
        %5084 = vmatprep.subr.mxu0 0.0
        %5085 = vmatpush2.msra.mxu0 0.0
        %5086 = vmatprep.subr.mxu0 0.0
        %5087 = vmatpush2.msra.mxu0 0.0
        %5088 = vmatprep.subr.mxu0 0.0
        %5089 = vmatpush2.msra.mxu0 0.0
        %5090 = vmatprep.subr.mxu0 0.0
        %5091 = vmatpush2.msra.mxu0 0.0
        %5092 = vmatprep.subr.mxu0 0.0
        %5093 = vmatpush2.msra.mxu0 0.0
        %5094 = vmatprep.subr.mxu0 0.0
        %5095 = vmatpush2.msra.mxu0 0.0
        %5096 = vmatprep.subr.mxu0 0.0
        %5097 = vmatpush2.msra.mxu0 0.0
        %5098 = vmatprep.subr.mxu0 0.0
        %5099 = vmatpush2.msra.mxu0 0.0
        %5100 = vmatprep.subr.mxu0 0.0
        %5101 = vmatpush2.msra.mxu0 0.0
        %5102 = vmatprep.subr.mxu0 0.0
        %5103 = vmatpush2.msra.mxu0 0.0
        %5104 = vmatprep.subr.mxu0 0.0
        %5105 = vmatpush2.msra.mxu0 0.0
        %5106 = vmatprep.subr.mxu0 0.0
        %5107 = vmatpush2.msra.mxu0 0.0
        %5108 = vmatprep.subr.mxu0 0.0
        %5109 = vmatpush2.msra.mxu0 0.0
        %5110 = vmatprep.mubr.f32.mxu0 0.0
        %5111 = vmatmul.mubr.f32.gmra.mxu0 %v5044
        %v5112 = vpop.f32.mrf.mxu0
        %v5113 = vadd.f32 0.0, %v5112
        %v5114 = vpop.f32.mrf.mxu0
        %5115 = vdwg.mxu0
        %v5117 = vsel %vm5042, %v5024, 0
        %5119 = vmatprep.subr.mxu0 0.0
        %5120 = vmatpush1.msra.mxu0 0.0
        %5121 = vmatprep.subr.mxu0 0.0
        %5122 = vmatpush1.msra.mxu0 0.0
        %5123 = vmatprep.subr.mxu0 0.0
        %5124 = vmatpush1.msra.mxu0 0.0
        %5125 = vmatprep.subr.mxu0 0.0
        %5126 = vmatpush1.msra.mxu0 0.0
        %5127 = vmatprep.subr.mxu0 0.0
        %5128 = vmatpush1.msra.mxu0 0.0
        %5129 = vmatprep.subr.mxu0 0.0
        %5130 = vmatpush1.msra.mxu0 0.0
        %5131 = vmatprep.subr.mxu0 0.0
        %5132 = vmatpush1.msra.mxu0 0.0
        %5133 = vmatprep.subr.mxu0 0.0
        %5134 = vmatpush1.msra.mxu0 0.0
        %5135 = vmatprep.subr.mxu0 0.0
        %5136 = vmatpush1.msra.mxu0 %v5032
        %5137 = vmatprep.subr.mxu0 0.0
        %5138 = vmatpush1.msra.mxu0 %v5031
        %5139 = vmatprep.subr.mxu0 0.0
        %5140 = vmatpush1.msra.mxu0 %v5030
        %5141 = vmatprep.subr.mxu0 0.0
        %5142 = vmatpush1.msra.mxu0 %v5029
        %5143 = vmatprep.subr.mxu0 0.0
        %5144 = vmatpush1.msra.mxu0 %v5028
        %5145 = vmatprep.subr.mxu0 0.0
        %5146 = vmatpush1.msra.mxu0 %v5027
        %5147 = vmatprep.subr.mxu0 0.0
        %5148 = vmatpush1.msra.mxu0 %v5026
        %5149 = vmatprep.subr.mxu0 0.0
        %5150 = vmatpush1.msra.mxu0 %v5025
        %5151 = vmatprep.subr.mxu0 0.0
        %5152 = vmatpush2.msra.mxu0 0.0
        %5153 = vmatprep.subr.mxu0 0.0
        %5154 = vmatpush2.msra.mxu0 0.0
        %5155 = vmatprep.subr.mxu0 0.0
        %5156 = vmatpush2.msra.mxu0 0.0
        %5157 = vmatprep.subr.mxu0 0.0
        %5158 = vmatpush2.msra.mxu0 0.0
        %5159 = vmatprep.subr.mxu0 0.0
        %5160 = vmatpush2.msra.mxu0 0.0
        %5161 = vmatprep.subr.mxu0 0.0
        %5162 = vmatpush2.msra.mxu0 0.0
        %5163 = vmatprep.subr.mxu0 0.0
        %5164 = vmatpush2.msra.mxu0 0.0
        %5165 = vmatprep.subr.mxu0 0.0
        %5166 = vmatpush2.msra.mxu0 0.0
        %5167 = vmatprep.subr.mxu0 0.0
        %5168 = vmatpush2.msra.mxu0 0.0
        %5169 = vmatprep.subr.mxu0 0.0
        %5170 = vmatpush2.msra.mxu0 0.0
        %5171 = vmatprep.subr.mxu0 0.0
        %5172 = vmatpush2.msra.mxu0 0.0
        %5173 = vmatprep.subr.mxu0 0.0
        %5174 = vmatpush2.msra.mxu0 0.0
        %5175 = vmatprep.subr.mxu0 0.0
        %5176 = vmatpush2.msra.mxu0 0.0
        %5177 = vmatprep.subr.mxu0 0.0
        %5178 = vmatpush2.msra.mxu0 0.0
        %5179 = vmatprep.subr.mxu0 0.0
        %5180 = vmatpush2.msra.mxu0 0.0
        %5181 = vmatprep.subr.mxu0 0.0
        %5182 = vmatpush2.msra.mxu0 0.0
        %5183 = vmatprep.mubr.f32.mxu0 0.0
        %5184 = vmatmul.mubr.f32.gmra.mxu0 %v5117
        %v5185 = vpop.f32.mrf.mxu0
        %v5186 = vadd.f32 %v5113, %v5185
        %v5187 = vpop.f32.mrf.mxu0
        %5188 = vdwg.mxu0
        %v5189 = vld [vmem:[#allocation3 + $0x2] sm:$0xf]
        %v5190 = vld [vmem:[%s5 + $0x80] sm:$0xff]
        %v5191 = vld [vmem:[%s5 + $0x88] sm:$0xff]
        %v5192 = vld [vmem:[%s5 + $0x90] sm:$0xff]
        %v5193 = vld [vmem:[%s5 + $0x98] sm:$0xff]
        %v5194 = vld [vmem:[%s5 + $0xa0] sm:$0xff]
        %v5195 = vld [vmem:[%s5 + $0xa8] sm:$0xff]
        %v5196 = vld [vmem:[%s5 + $0xb0] sm:$0xff]
        %v5197 = vld [vmem:[%s5 + $0xb8] sm:$0xff]
        %v5199 = vsel %vm5042, %v5189, 0
        %5201 = vmatprep.subr.mxu0 0.0
        %5202 = vmatpush1.msra.mxu0 0.0
        %5203 = vmatprep.subr.mxu0 0.0
        %5204 = vmatpush1.msra.mxu0 0.0
        %5205 = vmatprep.subr.mxu0 0.0
        %5206 = vmatpush1.msra.mxu0 0.0
        %5207 = vmatprep.subr.mxu0 0.0
        %5208 = vmatpush1.msra.mxu0 0.0
        %5209 = vmatprep.subr.mxu0 0.0
        %5210 = vmatpush1.msra.mxu0 0.0
        %5211 = vmatprep.subr.mxu0 0.0
        %5212 = vmatpush1.msra.mxu0 0.0
        %5213 = vmatprep.subr.mxu0 0.0
        %5214 = vmatpush1.msra.mxu0 0.0
        %5215 = vmatprep.subr.mxu0 0.0
        %5216 = vmatpush1.msra.mxu0 0.0
        %5217 = vmatprep.subr.mxu0 0.0
        %5218 = vmatpush1.msra.mxu0 %v5197
        %5219 = vmatprep.subr.mxu0 0.0
        %5220 = vmatpush1.msra.mxu0 %v5196
        %5221 = vmatprep.subr.mxu0 0.0
        %5222 = vmatpush1.msra.mxu0 %v5195
        %5223 = vmatprep.subr.mxu0 0.0
        %5224 = vmatpush1.msra.mxu0 %v5194
        %5225 = vmatprep.subr.mxu0 0.0
        %5226 = vmatpush1.msra.mxu0 %v5193
        %5227 = vmatprep.subr.mxu0 0.0
        %5228 = vmatpush1.msra.mxu0 %v5192
        %5229 = vmatprep.subr.mxu0 0.0
        %5230 = vmatpush1.msra.mxu0 %v5191
        %5231 = vmatprep.subr.mxu0 0.0
        %5232 = vmatpush1.msra.mxu0 %v5190
        %5233 = vmatprep.subr.mxu0 0.0
        %5234 = vmatpush2.msra.mxu0 0.0
        %5235 = vmatprep.subr.mxu0 0.0
        %5236 = vmatpush2.msra.mxu0 0.0
        %5237 = vmatprep.subr.mxu0 0.0
        %5238 = vmatpush2.msra.mxu0 0.0
        %5239 = vmatprep.subr.mxu0 0.0
        %5240 = vmatpush2.msra.mxu0 0.0
        %5241 = vmatprep.subr.mxu0 0.0
        %5242 = vmatpush2.msra.mxu0 0.0
        %5243 = vmatprep.subr.mxu0 0.0
        %5244 = vmatpush2.msra.mxu0 0.0
        %5245 = vmatprep.subr.mxu0 0.0
        %5246 = vmatpush2.msra.mxu0 0.0
        %5247 = vmatprep.subr.mxu0 0.0
        %5248 = vmatpush2.msra.mxu0 0.0
        %5249 = vmatprep.subr.mxu0 0.0
        %5250 = vmatpush2.msra.mxu0 0.0
        %5251 = vmatprep.subr.mxu0 0.0
        %5252 = vmatpush2.msra.mxu0 0.0
        %5253 = vmatprep.subr.mxu0 0.0
        %5254 = vmatpush2.msra.mxu0 0.0
        %5255 = vmatprep.subr.mxu0 0.0
        %5256 = vmatpush2.msra.mxu0 0.0
        %5257 = vmatprep.subr.mxu0 0.0
        %5258 = vmatpush2.msra.mxu0 0.0
        %5259 = vmatprep.subr.mxu0 0.0
        %5260 = vmatpush2.msra.mxu0 0.0
        %5261 = vmatprep.subr.mxu0 0.0
        %5262 = vmatpush2.msra.mxu0 0.0
        %5263 = vmatprep.subr.mxu0 0.0
        %5264 = vmatpush2.msra.mxu0 0.0
        %5265 = vmatprep.mubr.f32.mxu0 0.0
        %5266 = vmatmul.mubr.f32.gmra.mxu0 %v5199
        %v5267 = vpop.f32.mrf.mxu0
        %v5268 = vadd.f32 0.0, %v5267
        %v5269 = vpop.f32.mrf.mxu0
        %5270 = vdwg.mxu0
        %v5271 = vadd.f32 %v5186, %v5268
        %v5272 = vld [vmem:[#allocation3 + $0x6] sm:$0xf]
        %v5273 = vld [vmem:[%s5 + $0xc0] sm:$0xff]
        %v5274 = vld [vmem:[%s5 + $0xc8] sm:$0xff]
        %v5275 = vld [vmem:[%s5 + $0xd0] sm:$0xff]
        %v5276 = vld [vmem:[%s5 + $0xd8] sm:$0xff]
        %v5277 = vld [vmem:[%s5 + $0xe0] sm:$0xff]
        %v5278 = vld [vmem:[%s5 + $0xe8] sm:$0xff]
        %v5279 = vld [vmem:[%s5 + $0xf0] sm:$0xff]
        %v5280 = vld [vmem:[%s5 + $0xf8] sm:$0xff]
        %v5282 = vsel %vm5042, %v5272, 0
        %5284 = vmatprep.subr.mxu0 0.0
        %5285 = vmatpush1.msra.mxu0 0.0
        %5286 = vmatprep.subr.mxu0 0.0
        %5287 = vmatpush1.msra.mxu0 0.0
        %5288 = vmatprep.subr.mxu0 0.0
        %5289 = vmatpush1.msra.mxu0 0.0
        %5290 = vmatprep.subr.mxu0 0.0
        %5291 = vmatpush1.msra.mxu0 0.0
        %5292 = vmatprep.subr.mxu0 0.0
        %5293 = vmatpush1.msra.mxu0 0.0
        %5294 = vmatprep.subr.mxu0 0.0
        %5295 = vmatpush1.msra.mxu0 0.0
        %5296 = vmatprep.subr.mxu0 0.0
        %5297 = vmatpush1.msra.mxu0 0.0
        %5298 = vmatprep.subr.mxu0 0.0
        %5299 = vmatpush1.msra.mxu0 0.0
        %5300 = vmatprep.subr.mxu0 0.0
        %5301 = vmatpush1.msra.mxu0 %v5280
        %5302 = vmatprep.subr.mxu0 0.0
        %5303 = vmatpush1.msra.mxu0 %v5279
        %5304 = vmatprep.subr.mxu0 0.0
        %5305 = vmatpush1.msra.mxu0 %v5278
        %5306 = vmatprep.subr.mxu0 0.0
        %5307 = vmatpush1.msra.mxu0 %v5277
        %5308 = vmatprep.subr.mxu0 0.0
        %5309 = vmatpush1.msra.mxu0 %v5276
        %5310 = vmatprep.subr.mxu0 0.0
        %5311 = vmatpush1.msra.mxu0 %v5275
        %5312 = vmatprep.subr.mxu0 0.0
        %5313 = vmatpush1.msra.mxu0 %v5274
        %5314 = vmatprep.subr.mxu0 0.0
        %5315 = vmatpush1.msra.mxu0 %v5273
        %5316 = vmatprep.subr.mxu0 0.0
        %5317 = vmatpush2.msra.mxu0 0.0
        %5318 = vmatprep.subr.mxu0 0.0
        %5319 = vmatpush2.msra.mxu0 0.0
        %5320 = vmatprep.subr.mxu0 0.0
        %5321 = vmatpush2.msra.mxu0 0.0
        %5322 = vmatprep.subr.mxu0 0.0
        %5323 = vmatpush2.msra.mxu0 0.0
        %5324 = vmatprep.subr.mxu0 0.0
        %5325 = vmatpush2.msra.mxu0 0.0
        %5326 = vmatprep.subr.mxu0 0.0
        %5327 = vmatpush2.msra.mxu0 0.0
        %5328 = vmatprep.subr.mxu0 0.0
        %5329 = vmatpush2.msra.mxu0 0.0
        %5330 = vmatprep.subr.mxu0 0.0
        %5331 = vmatpush2.msra.mxu0 0.0
        %5332 = vmatprep.subr.mxu0 0.0
        %5333 = vmatpush2.msra.mxu0 0.0
        %5334 = vmatprep.subr.mxu0 0.0
        %5335 = vmatpush2.msra.mxu0 0.0
        %5336 = vmatprep.subr.mxu0 0.0
        %5337 = vmatpush2.msra.mxu0 0.0
        %5338 = vmatprep.subr.mxu0 0.0
        %5339 = vmatpush2.msra.mxu0 0.0
        %5340 = vmatprep.subr.mxu0 0.0
        %5341 = vmatpush2.msra.mxu0 0.0
        %5342 = vmatprep.subr.mxu0 0.0
        %5343 = vmatpush2.msra.mxu0 0.0
        %5344 = vmatprep.subr.mxu0 0.0
        %5345 = vmatpush2.msra.mxu0 0.0
        %5346 = vmatprep.subr.mxu0 0.0
        %5347 = vmatpush2.msra.mxu0 0.0
        %5348 = vmatprep.mubr.f32.mxu0 0.0
        %5349 = vmatmul.mubr.f32.gmra.mxu0 %v5282
        %v5350 = vpop.f32.mrf.mxu0
        %v5351 = vadd.f32 0.0, %v5350
        %v5352 = vpop.f32.mrf.mxu0
        %5353 = vdwg.mxu0
        %v5354 = vadd.f32 %v5271, %v5351
        %v5355 = vld [vmem:[#allocation3 + $0x7] sm:$0xf]
        %v5356 = vld [vmem:[%s5 + $0x100] sm:$0xff]
        %v5357 = vld [vmem:[%s5 + $0x108] sm:$0xff]
        %v5358 = vld [vmem:[%s5 + $0x110] sm:$0xff]
        %v5359 = vld [vmem:[%s5 + $0x118] sm:$0xff]
        %v5360 = vld [vmem:[%s5 + $0x120] sm:$0xff]
        %v5361 = vld [vmem:[%s5 + $0x128] sm:$0xff]
        %v5362 = vld [vmem:[%s5 + $0x130] sm:$0xff]
        %v5363 = vld [vmem:[%s5 + $0x138] sm:$0xff]
        %v5365 = vsel %vm5042, %v5355, 0
        %5367 = vmatprep.subr.mxu0 0.0
        %5368 = vmatpush1.msra.mxu0 0.0
        %5369 = vmatprep.subr.mxu0 0.0
        %5370 = vmatpush1.msra.mxu0 0.0
        %5371 = vmatprep.subr.mxu0 0.0
        %5372 = vmatpush1.msra.mxu0 0.0
        %5373 = vmatprep.subr.mxu0 0.0
        %5374 = vmatpush1.msra.mxu0 0.0
        %5375 = vmatprep.subr.mxu0 0.0
        %5376 = vmatpush1.msra.mxu0 0.0
        %5377 = vmatprep.subr.mxu0 0.0
        %5378 = vmatpush1.msra.mxu0 0.0
        %5379 = vmatprep.subr.mxu0 0.0
        %5380 = vmatpush1.msra.mxu0 0.0
        %5381 = vmatprep.subr.mxu0 0.0
        %5382 = vmatpush1.msra.mxu0 0.0
        %5383 = vmatprep.subr.mxu0 0.0
        %5384 = vmatpush1.msra.mxu0 %v5363
        %5385 = vmatprep.subr.mxu0 0.0
        %5386 = vmatpush1.msra.mxu0 %v5362
        %5387 = vmatprep.subr.mxu0 0.0
        %5388 = vmatpush1.msra.mxu0 %v5361
        %5389 = vmatprep.subr.mxu0 0.0
        %5390 = vmatpush1.msra.mxu0 %v5360
        %5391 = vmatprep.subr.mxu0 0.0
        %5392 = vmatpush1.msra.mxu0 %v5359
        %5393 = vmatprep.subr.mxu0 0.0
        %5394 = vmatpush1.msra.mxu0 %v5358
        %5395 = vmatprep.subr.mxu0 0.0
        %5396 = vmatpush1.msra.mxu0 %v5357
        %5397 = vmatprep.subr.mxu0 0.0
        %5398 = vmatpush1.msra.mxu0 %v5356
        %5399 = vmatprep.subr.mxu0 0.0
        %5400 = vmatpush2.msra.mxu0 0.0
        %5401 = vmatprep.subr.mxu0 0.0
        %5402 = vmatpush2.msra.mxu0 0.0
        %5403 = vmatprep.subr.mxu0 0.0
        %5404 = vmatpush2.msra.mxu0 0.0
        %5405 = vmatprep.subr.mxu0 0.0
        %5406 = vmatpush2.msra.mxu0 0.0
        %5407 = vmatprep.subr.mxu0 0.0
        %5408 = vmatpush2.msra.mxu0 0.0
        %5409 = vmatprep.subr.mxu0 0.0
        %5410 = vmatpush2.msra.mxu0 0.0
        %5411 = vmatprep.subr.mxu0 0.0
        %5412 = vmatpush2.msra.mxu0 0.0
        %5413 = vmatprep.subr.mxu0 0.0
        %5414 = vmatpush2.msra.mxu0 0.0
        %5415 = vmatprep.subr.mxu0 0.0
        %5416 = vmatpush2.msra.mxu0 0.0
        %5417 = vmatprep.subr.mxu0 0.0
        %5418 = vmatpush2.msra.mxu0 0.0
        %5419 = vmatprep.subr.mxu0 0.0
        %5420 = vmatpush2.msra.mxu0 0.0
        %5421 = vmatprep.subr.mxu0 0.0
        %5422 = vmatpush2.msra.mxu0 0.0
        %5423 = vmatprep.subr.mxu0 0.0
        %5424 = vmatpush2.msra.mxu0 0.0
        %5425 = vmatprep.subr.mxu0 0.0
        %5426 = vmatpush2.msra.mxu0 0.0
        %5427 = vmatprep.subr.mxu0 0.0
        %5428 = vmatpush2.msra.mxu0 0.0
        %5429 = vmatprep.subr.mxu0 0.0
        %5430 = vmatpush2.msra.mxu0 0.0
        %5431 = vmatprep.mubr.f32.mxu0 0.0
        %5432 = vmatmul.mubr.f32.gmra.mxu0 %v5365
        %v5433 = vpop.f32.mrf.mxu0
        %v5434 = vadd.f32 0.0, %v5433
        %v5435 = vpop.f32.mrf.mxu0
        %5436 = vdwg.mxu0
        %v5437 = vadd.f32 %v5354, %v5434
        %v5438 = vld [vmem:[#allocation3 + $0x8] sm:$0xf]
        %v5439 = vld [vmem:[%s5 + $0x140] sm:$0xff]
        %v5440 = vld [vmem:[%s5 + $0x148] sm:$0xff]
        %v5441 = vld [vmem:[%s5 + $0x150] sm:$0xff]
        %v5442 = vld [vmem:[%s5 + $0x158] sm:$0xff]
        %v5443 = vld [vmem:[%s5 + $0x160] sm:$0xff]
        %v5444 = vld [vmem:[%s5 + $0x168] sm:$0xff]
        %v5445 = vld [vmem:[%s5 + $0x170] sm:$0xff]
        %v5446 = vld [vmem:[%s5 + $0x178] sm:$0xff]
        %v5448 = vsel %vm5042, %v5438, 0
        %5450 = vmatprep.subr.mxu0 0.0
        %5451 = vmatpush1.msra.mxu0 0.0
        %5452 = vmatprep.subr.mxu0 0.0
        %5453 = vmatpush1.msra.mxu0 0.0
        %5454 = vmatprep.subr.mxu0 0.0
        %5455 = vmatpush1.msra.mxu0 0.0
        %5456 = vmatprep.subr.mxu0 0.0
        %5457 = vmatpush1.msra.mxu0 0.0
        %5458 = vmatprep.subr.mxu0 0.0
        %5459 = vmatpush1.msra.mxu0 0.0
        %5460 = vmatprep.subr.mxu0 0.0
        %5461 = vmatpush1.msra.mxu0 0.0
        %5462 = vmatprep.subr.mxu0 0.0
        %5463 = vmatpush1.msra.mxu0 0.0
        %5464 = vmatprep.subr.mxu0 0.0
        %5465 = vmatpush1.msra.mxu0 0.0
        %5466 = vmatprep.subr.mxu0 0.0
        %5467 = vmatpush1.msra.mxu0 %v5446
        %5468 = vmatprep.subr.mxu0 0.0
        %5469 = vmatpush1.msra.mxu0 %v5445
        %5470 = vmatprep.subr.mxu0 0.0
        %5471 = vmatpush1.msra.mxu0 %v5444
        %5472 = vmatprep.subr.mxu0 0.0
        %5473 = vmatpush1.msra.mxu0 %v5443
        %5474 = vmatprep.subr.mxu0 0.0
        %5475 = vmatpush1.msra.mxu0 %v5442
        %5476 = vmatprep.subr.mxu0 0.0
        %5477 = vmatpush1.msra.mxu0 %v5441
        %5478 = vmatprep.subr.mxu0 0.0
        %5479 = vmatpush1.msra.mxu0 %v5440
        %5480 = vmatprep.subr.mxu0 0.0
        %5481 = vmatpush1.msra.mxu0 %v5439
        %5482 = vmatprep.subr.mxu0 0.0
        %5483 = vmatpush2.msra.mxu0 0.0
        %5484 = vmatprep.subr.mxu0 0.0
        %5485 = vmatpush2.msra.mxu0 0.0
        %5486 = vmatprep.subr.mxu0 0.0
        %5487 = vmatpush2.msra.mxu0 0.0
        %5488 = vmatprep.subr.mxu0 0.0
        %5489 = vmatpush2.msra.mxu0 0.0
        %5490 = vmatprep.subr.mxu0 0.0
        %5491 = vmatpush2.msra.mxu0 0.0
        %5492 = vmatprep.subr.mxu0 0.0
        %5493 = vmatpush2.msra.mxu0 0.0
        %5494 = vmatprep.subr.mxu0 0.0
        %5495 = vmatpush2.msra.mxu0 0.0
        %5496 = vmatprep.subr.mxu0 0.0
        %5497 = vmatpush2.msra.mxu0 0.0
        %5498 = vmatprep.subr.mxu0 0.0
        %5499 = vmatpush2.msra.mxu0 0.0
        %5500 = vmatprep.subr.mxu0 0.0
        %5501 = vmatpush2.msra.mxu0 0.0
        %5502 = vmatprep.subr.mxu0 0.0
        %5503 = vmatpush2.msra.mxu0 0.0
        %5504 = vmatprep.subr.mxu0 0.0
        %5505 = vmatpush2.msra.mxu0 0.0
        %5506 = vmatprep.subr.mxu0 0.0
        %5507 = vmatpush2.msra.mxu0 0.0
        %5508 = vmatprep.subr.mxu0 0.0
        %5509 = vmatpush2.msra.mxu0 0.0
        %5510 = vmatprep.subr.mxu0 0.0
        %5511 = vmatpush2.msra.mxu0 0.0
        %5512 = vmatprep.subr.mxu0 0.0
        %5513 = vmatpush2.msra.mxu0 0.0
        %5514 = vmatprep.mubr.f32.mxu0 0.0
        %5515 = vmatmul.mubr.f32.gmra.mxu0 %v5448
        %v5516 = vpop.f32.mrf.mxu0
        %v5517 = vadd.f32 0.0, %v5516
        %v5518 = vpop.f32.mrf.mxu0
        %5519 = vdwg.mxu0
        %v5520 = vadd.f32 %v5437, %v5517
        %v5521 = vld [vmem:[#allocation3 + $0xc] sm:$0xf]
        %v5522 = vld [vmem:[%s5 + $0x180] sm:$0xff]
        %v5523 = vld [vmem:[%s5 + $0x188] sm:$0xff]
        %v5524 = vld [vmem:[%s5 + $0x190] sm:$0xff]
        %v5525 = vld [vmem:[%s5 + $0x198] sm:$0xff]
        %v5526 = vld [vmem:[%s5 + $0x1a0] sm:$0xff]
        %v5527 = vld [vmem:[%s5 + $0x1a8] sm:$0xff]
        %v5528 = vld [vmem:[%s5 + $0x1b0] sm:$0xff]
        %v5529 = vld [vmem:[%s5 + $0x1b8] sm:$0xff]
        %v5531 = vsel %vm5042, %v5521, 0
        %5533 = vmatprep.subr.mxu0 0.0
        %5534 = vmatpush1.msra.mxu0 0.0
        %5535 = vmatprep.subr.mxu0 0.0
        %5536 = vmatpush1.msra.mxu0 0.0
        %5537 = vmatprep.subr.mxu0 0.0
        %5538 = vmatpush1.msra.mxu0 0.0
        %5539 = vmatprep.subr.mxu0 0.0
        %5540 = vmatpush1.msra.mxu0 0.0
        %5541 = vmatprep.subr.mxu0 0.0
        %5542 = vmatpush1.msra.mxu0 0.0
        %5543 = vmatprep.subr.mxu0 0.0
        %5544 = vmatpush1.msra.mxu0 0.0
        %5545 = vmatprep.subr.mxu0 0.0
        %5546 = vmatpush1.msra.mxu0 0.0
        %5547 = vmatprep.subr.mxu0 0.0
        %5548 = vmatpush1.msra.mxu0 0.0
        %5549 = vmatprep.subr.mxu0 0.0
        %5550 = vmatpush1.msra.mxu0 %v5529
        %5551 = vmatprep.subr.mxu0 0.0
        %5552 = vmatpush1.msra.mxu0 %v5528
        %5553 = vmatprep.subr.mxu0 0.0
        %5554 = vmatpush1.msra.mxu0 %v5527
        %5555 = vmatprep.subr.mxu0 0.0
        %5556 = vmatpush1.msra.mxu0 %v5526
        %5557 = vmatprep.subr.mxu0 0.0
        %5558 = vmatpush1.msra.mxu0 %v5525
        %5559 = vmatprep.subr.mxu0 0.0
        %5560 = vmatpush1.msra.mxu0 %v5524
        %5561 = vmatprep.subr.mxu0 0.0
        %5562 = vmatpush1.msra.mxu0 %v5523
        %5563 = vmatprep.subr.mxu0 0.0
        %5564 = vmatpush1.msra.mxu0 %v5522
        %5565 = vmatprep.subr.mxu0 0.0
        %5566 = vmatpush2.msra.mxu0 0.0
        %5567 = vmatprep.subr.mxu0 0.0
        %5568 = vmatpush2.msra.mxu0 0.0
        %5569 = vmatprep.subr.mxu0 0.0
        %5570 = vmatpush2.msra.mxu0 0.0
        %5571 = vmatprep.subr.mxu0 0.0
        %5572 = vmatpush2.msra.mxu0 0.0
        %5573 = vmatprep.subr.mxu0 0.0
        %5574 = vmatpush2.msra.mxu0 0.0
        %5575 = vmatprep.subr.mxu0 0.0
        %5576 = vmatpush2.msra.mxu0 0.0
        %5577 = vmatprep.subr.mxu0 0.0
        %5578 = vmatpush2.msra.mxu0 0.0
        %5579 = vmatprep.subr.mxu0 0.0
        %5580 = vmatpush2.msra.mxu0 0.0
        %5581 = vmatprep.subr.mxu0 0.0
        %5582 = vmatpush2.msra.mxu0 0.0
        %5583 = vmatprep.subr.mxu0 0.0
        %5584 = vmatpush2.msra.mxu0 0.0
        %5585 = vmatprep.subr.mxu0 0.0
        %5586 = vmatpush2.msra.mxu0 0.0
        %5587 = vmatprep.subr.mxu0 0.0
        %5588 = vmatpush2.msra.mxu0 0.0
        %5589 = vmatprep.subr.mxu0 0.0
        %5590 = vmatpush2.msra.mxu0 0.0
        %5591 = vmatprep.subr.mxu0 0.0
        %5592 = vmatpush2.msra.mxu0 0.0
        %5593 = vmatprep.subr.mxu0 0.0
        %5594 = vmatpush2.msra.mxu0 0.0
        %5595 = vmatprep.subr.mxu0 0.0
        %5596 = vmatpush2.msra.mxu0 0.0
        %5597 = vmatprep.mubr.f32.mxu0 0.0
        %5598 = vmatmul.mubr.f32.gmra.mxu0 %v5531
        %v5599 = vpop.f32.mrf.mxu0
        %v5600 = vadd.f32 0.0, %v5599
        %v5601 = vpop.f32.mrf.mxu0
        %5602 = vdwg.mxu0
        %v5603 = vadd.f32 %v5520, %v5600
        %v5604 = vld [vmem:[#allocation3 + $0xd] sm:$0xf]
        %v5605 = vld [vmem:[%s5 + $0x1c0] sm:$0xff]
        %v5606 = vld [vmem:[%s5 + $0x1c8] sm:$0xff]
        %v5607 = vld [vmem:[%s5 + $0x1d0] sm:$0xff]
        %v5608 = vld [vmem:[%s5 + $0x1d8] sm:$0xff]
        %v5609 = vld [vmem:[%s5 + $0x1e0] sm:$0xff]
        %v5610 = vld [vmem:[%s5 + $0x1e8] sm:$0xff]
        %v5611 = vld [vmem:[%s5 + $0x1f0] sm:$0xff]
        %v5612 = vld [vmem:[%s5 + $0x1f8] sm:$0xff]
        %v5614 = vsel %vm5042, %v5604, 0
        %5616 = vmatprep.subr.mxu0 0.0
        %5617 = vmatpush1.msra.mxu0 0.0
        %5618 = vmatprep.subr.mxu0 0.0
        %5619 = vmatpush1.msra.mxu0 0.0
        %5620 = vmatprep.subr.mxu0 0.0
        %5621 = vmatpush1.msra.mxu0 0.0
        %5622 = vmatprep.subr.mxu0 0.0
        %5623 = vmatpush1.msra.mxu0 0.0
        %5624 = vmatprep.subr.mxu0 0.0
        %5625 = vmatpush1.msra.mxu0 0.0
        %5626 = vmatprep.subr.mxu0 0.0
        %5627 = vmatpush1.msra.mxu0 0.0
        %5628 = vmatprep.subr.mxu0 0.0
        %5629 = vmatpush1.msra.mxu0 0.0
        %5630 = vmatprep.subr.mxu0 0.0
        %5631 = vmatpush1.msra.mxu0 0.0
        %5632 = vmatprep.subr.mxu0 0.0
        %5633 = vmatpush1.msra.mxu0 %v5612
        %5634 = vmatprep.subr.mxu0 0.0
        %5635 = vmatpush1.msra.mxu0 %v5611
        %5636 = vmatprep.subr.mxu0 0.0
        %5637 = vmatpush1.msra.mxu0 %v5610
        %5638 = vmatprep.subr.mxu0 0.0
        %5639 = vmatpush1.msra.mxu0 %v5609
        %5640 = vmatprep.subr.mxu0 0.0
        %5641 = vmatpush1.msra.mxu0 %v5608
        %5642 = vmatprep.subr.mxu0 0.0
        %5643 = vmatpush1.msra.mxu0 %v5607
        %5644 = vmatprep.subr.mxu0 0.0
        %5645 = vmatpush1.msra.mxu0 %v5606
        %5646 = vmatprep.subr.mxu0 0.0
        %5647 = vmatpush1.msra.mxu0 %v5605
        %5648 = vmatprep.subr.mxu0 0.0
        %5649 = vmatpush2.msra.mxu0 0.0
        %5650 = vmatprep.subr.mxu0 0.0
        %5651 = vmatpush2.msra.mxu0 0.0
        %5652 = vmatprep.subr.mxu0 0.0
        %5653 = vmatpush2.msra.mxu0 0.0
        %5654 = vmatprep.subr.mxu0 0.0
        %5655 = vmatpush2.msra.mxu0 0.0
        %5656 = vmatprep.subr.mxu0 0.0
        %5657 = vmatpush2.msra.mxu0 0.0
        %5658 = vmatprep.subr.mxu0 0.0
        %5659 = vmatpush2.msra.mxu0 0.0
        %5660 = vmatprep.subr.mxu0 0.0
        %5661 = vmatpush2.msra.mxu0 0.0
        %5662 = vmatprep.subr.mxu0 0.0
        %5663 = vmatpush2.msra.mxu0 0.0
        %5664 = vmatprep.subr.mxu0 0.0
        %5665 = vmatpush2.msra.mxu0 0.0
        %5666 = vmatprep.subr.mxu0 0.0
        %5667 = vmatpush2.msra.mxu0 0.0
        %5668 = vmatprep.subr.mxu0 0.0
        %5669 = vmatpush2.msra.mxu0 0.0
        %5670 = vmatprep.subr.mxu0 0.0
        %5671 = vmatpush2.msra.mxu0 0.0
        %5672 = vmatprep.subr.mxu0 0.0
        %5673 = vmatpush2.msra.mxu0 0.0
        %5674 = vmatprep.subr.mxu0 0.0
        %5675 = vmatpush2.msra.mxu0 0.0
        %5676 = vmatprep.subr.mxu0 0.0
        %5677 = vmatpush2.msra.mxu0 0.0
        %5678 = vmatprep.subr.mxu0 0.0
        %5679 = vmatpush2.msra.mxu0 0.0
        %5680 = vmatprep.mubr.f32.mxu0 0.0
        %5681 = vmatmul.mubr.f32.gmra.mxu0 %v5614
        %v5682 = vpop.f32.mrf.mxu0
        %v5683 = vadd.f32 0.0, %v5682
        %v5684 = vpop.f32.mrf.mxu0
        %5685 = vdwg.mxu0
        %v5686 = vadd.f32 %v5603, %v5683
        %v5687 = vld [vmem:[#allocation3 + $0xe] sm:$0xf]
        %v5688 = vld [vmem:[%s5 + $0x200] sm:$0xff]
        %v5689 = vld [vmem:[%s5 + $0x208] sm:$0xff]
        %v5690 = vld [vmem:[%s5 + $0x210] sm:$0xff]
        %v5691 = vld [vmem:[%s5 + $0x218] sm:$0xff]
        %v5692 = vld [vmem:[%s5 + $0x220] sm:$0xff]
        %v5693 = vld [vmem:[%s5 + $0x228] sm:$0xff]
        %v5694 = vld [vmem:[%s5 + $0x230] sm:$0xff]
        %v5695 = vld [vmem:[%s5 + $0x238] sm:$0xff]
        %v5697 = vsel %vm5042, %v5687, 0
        %5699 = vmatprep.subr.mxu0 0.0
        %5700 = vmatpush1.msra.mxu0 0.0
        %5701 = vmatprep.subr.mxu0 0.0
        %5702 = vmatpush1.msra.mxu0 0.0
        %5703 = vmatprep.subr.mxu0 0.0
        %5704 = vmatpush1.msra.mxu0 0.0
        %5705 = vmatprep.subr.mxu0 0.0
        %5706 = vmatpush1.msra.mxu0 0.0
        %5707 = vmatprep.subr.mxu0 0.0
        %5708 = vmatpush1.msra.mxu0 0.0
        %5709 = vmatprep.subr.mxu0 0.0
        %5710 = vmatpush1.msra.mxu0 0.0
        %5711 = vmatprep.subr.mxu0 0.0
        %5712 = vmatpush1.msra.mxu0 0.0
        %5713 = vmatprep.subr.mxu0 0.0
        %5714 = vmatpush1.msra.mxu0 0.0
        %5715 = vmatprep.subr.mxu0 0.0
        %5716 = vmatpush1.msra.mxu0 %v5695
        %5717 = vmatprep.subr.mxu0 0.0
        %5718 = vmatpush1.msra.mxu0 %v5694
        %5719 = vmatprep.subr.mxu0 0.0
        %5720 = vmatpush1.msra.mxu0 %v5693
        %5721 = vmatprep.subr.mxu0 0.0
        %5722 = vmatpush1.msra.mxu0 %v5692
        %5723 = vmatprep.subr.mxu0 0.0
        %5724 = vmatpush1.msra.mxu0 %v5691
        %5725 = vmatprep.subr.mxu0 0.0
        %5726 = vmatpush1.msra.mxu0 %v5690
        %5727 = vmatprep.subr.mxu0 0.0
        %5728 = vmatpush1.msra.mxu0 %v5689
        %5729 = vmatprep.subr.mxu0 0.0
        %5730 = vmatpush1.msra.mxu0 %v5688
        %5731 = vmatprep.subr.mxu0 0.0
        %5732 = vmatpush2.msra.mxu0 0.0
        %5733 = vmatprep.subr.mxu0 0.0
        %5734 = vmatpush2.msra.mxu0 0.0
        %5735 = vmatprep.subr.mxu0 0.0
        %5736 = vmatpush2.msra.mxu0 0.0
        %5737 = vmatprep.subr.mxu0 0.0
        %5738 = vmatpush2.msra.mxu0 0.0
        %5739 = vmatprep.subr.mxu0 0.0
        %5740 = vmatpush2.msra.mxu0 0.0
        %5741 = vmatprep.subr.mxu0 0.0
        %5742 = vmatpush2.msra.mxu0 0.0
        %5743 = vmatprep.subr.mxu0 0.0
        %5744 = vmatpush2.msra.mxu0 0.0
        %5745 = vmatprep.subr.mxu0 0.0
        %5746 = vmatpush2.msra.mxu0 0.0
        %5747 = vmatprep.subr.mxu0 0.0
        %5748 = vmatpush2.msra.mxu0 0.0
        %5749 = vmatprep.subr.mxu0 0.0
        %5750 = vmatpush2.msra.mxu0 0.0
        %5751 = vmatprep.subr.mxu0 0.0
        %5752 = vmatpush2.msra.mxu0 0.0
        %5753 = vmatprep.subr.mxu0 0.0
        %5754 = vmatpush2.msra.mxu0 0.0
        %5755 = vmatprep.subr.mxu0 0.0
        %5756 = vmatpush2.msra.mxu0 0.0
        %5757 = vmatprep.subr.mxu0 0.0
        %5758 = vmatpush2.msra.mxu0 0.0
        %5759 = vmatprep.subr.mxu0 0.0
        %5760 = vmatpush2.msra.mxu0 0.0
        %5761 = vmatprep.subr.mxu0 0.0
        %5762 = vmatpush2.msra.mxu0 0.0
        %5763 = vmatprep.mubr.f32.mxu0 0.0
        %5764 = vmatmul.mubr.f32.gmra.mxu0 %v5697
        %v5765 = vpop.f32.mrf.mxu0
        %v5766 = vadd.f32 0.0, %v5765
        %v5767 = vpop.f32.mrf.mxu0
        %5768 = vdwg.mxu0
        %v5769 = vadd.f32 %v5686, %v5766
        %v5770 = vld [vmem:[%s6] sm:$0x1]
        %v5772 = vlaneseq
        %v5773 = vshrl.u32 %v5772, 7
        %v5774 = vsub.s32 0, %v5773
        %v5775 = vrot.slane %v5770, %v5774
        %v5777 = vadd.f32 %v5769, %v5775
        %vm5778 = vcmp.gt.f32.partialorder %v5777, 0.0
        %v5779 = vmul.f32 %v5777, 0.01
        %v5780 = vsel %vm5778, %v5777, %v5779
        %5781 = vst [vmem:[#allocation4] sm:$0xf] %v5780
        %v5782 = vld [vmem:[#allocation3 + $0x6] sm:$0xf]
        %v5783 = vld [vmem:[%s5] sm:$0xff]
        %v5784 = vld [vmem:[%s5 + $0x8] sm:$0xff]
        %v5785 = vld [vmem:[%s5 + $0x10] sm:$0xff]
        %v5786 = vld [vmem:[%s5 + $0x18] sm:$0xff]
        %v5787 = vld [vmem:[%s5 + $0x20] sm:$0xff]
        %v5788 = vld [vmem:[%s5 + $0x28] sm:$0xff]
        %v5789 = vld [vmem:[%s5 + $0x30] sm:$0xff]
        %v5790 = vld [vmem:[%s5 + $0x38] sm:$0xff]
        %v5791 = vld [vmem:[#allocation3 + $0x7] sm:$0xf]
        %v5792 = vld [vmem:[%s5 + $0x40] sm:$0xff]
        %v5793 = vld [vmem:[%s5 + $0x48] sm:$0xff]
        %v5794 = vld [vmem:[%s5 + $0x50] sm:$0xff]
        %v5795 = vld [vmem:[%s5 + $0x58] sm:$0xff]
        %v5796 = vld [vmem:[%s5 + $0x60] sm:$0xff]
        %v5797 = vld [vmem:[%s5 + $0x68] sm:$0xff]
        %v5798 = vld [vmem:[%s5 + $0x70] sm:$0xff]
        %v5799 = vld [vmem:[%s5 + $0x78] sm:$0xff]
        %v5801 = vsel %vm5042, %v5791, 0
        %5803 = vmatprep.subr.mxu0 0.0
        %5804 = vmatpush1.msra.mxu0 0.0
        %5805 = vmatprep.subr.mxu0 0.0
        %5806 = vmatpush1.msra.mxu0 0.0
        %5807 = vmatprep.subr.mxu0 0.0
        %5808 = vmatpush1.msra.mxu0 0.0
        %5809 = vmatprep.subr.mxu0 0.0
        %5810 = vmatpush1.msra.mxu0 0.0
        %5811 = vmatprep.subr.mxu0 0.0
        %5812 = vmatpush1.msra.mxu0 0.0
        %5813 = vmatprep.subr.mxu0 0.0
        %5814 = vmatpush1.msra.mxu0 0.0
        %5815 = vmatprep.subr.mxu0 0.0
        %5816 = vmatpush1.msra.mxu0 0.0
        %5817 = vmatprep.subr.mxu0 0.0
        %5818 = vmatpush1.msra.mxu0 0.0
        %5819 = vmatprep.subr.mxu0 0.0
        %5820 = vmatpush1.msra.mxu0 %v5799
        %5821 = vmatprep.subr.mxu0 0.0
        %5822 = vmatpush1.msra.mxu0 %v5798
        %5823 = vmatprep.subr.mxu0 0.0
        %5824 = vmatpush1.msra.mxu0 %v5797
        %5825 = vmatprep.subr.mxu0 0.0
        %5826 = vmatpush1.msra.mxu0 %v5796
        %5827 = vmatprep.subr.mxu0 0.0
        %5828 = vmatpush1.msra.mxu0 %v5795
        %5829 = vmatprep.subr.mxu0 0.0
        %5830 = vmatpush1.msra.mxu0 %v5794
        %5831 = vmatprep.subr.mxu0 0.0
        %5832 = vmatpush1.msra.mxu0 %v5793
        %5833 = vmatprep.subr.mxu0 0.0
        %5834 = vmatpush1.msra.mxu0 %v5792
        %5835 = vmatprep.subr.mxu0 0.0
        %5836 = vmatpush2.msra.mxu0 0.0
        %5837 = vmatprep.subr.mxu0 0.0
        %5838 = vmatpush2.msra.mxu0 0.0
        %5839 = vmatprep.subr.mxu0 0.0
        %5840 = vmatpush2.msra.mxu0 0.0
        %5841 = vmatprep.subr.mxu0 0.0
        %5842 = vmatpush2.msra.mxu0 0.0
        %5843 = vmatprep.subr.mxu0 0.0
        %5844 = vmatpush2.msra.mxu0 0.0
        %5845 = vmatprep.subr.mxu0 0.0
        %5846 = vmatpush2.msra.mxu0 0.0
        %5847 = vmatprep.subr.mxu0 0.0
        %5848 = vmatpush2.msra.mxu0 0.0
        %5849 = vmatprep.subr.mxu0 0.0
        %5850 = vmatpush2.msra.mxu0 0.0
        %5851 = vmatprep.subr.mxu0 0.0
        %5852 = vmatpush2.msra.mxu0 0.0
        %5853 = vmatprep.subr.mxu0 0.0
        %5854 = vmatpush2.msra.mxu0 0.0
        %5855 = vmatprep.subr.mxu0 0.0
        %5856 = vmatpush2.msra.mxu0 0.0
        %5857 = vmatprep.subr.mxu0 0.0
        %5858 = vmatpush2.msra.mxu0 0.0
        %5859 = vmatprep.subr.mxu0 0.0
        %5860 = vmatpush2.msra.mxu0 0.0
        %5861 = vmatprep.subr.mxu0 0.0
        %5862 = vmatpush2.msra.mxu0 0.0
        %5863 = vmatprep.subr.mxu0 0.0
        %5864 = vmatpush2.msra.mxu0 0.0
        %5865 = vmatprep.subr.mxu0 0.0
        %5866 = vmatpush2.msra.mxu0 0.0
        %5867 = vmatprep.mubr.f32.mxu0 0.0
        %5868 = vmatmul.mubr.f32.gmra.mxu0 %v5801
        %v5869 = vpop.f32.mrf.mxu0
        %v5870 = vadd.f32 0.0, %v5869
        %v5871 = vpop.f32.mrf.mxu0
        %5872 = vdwg.mxu0
        %v5874 = vsel %vm5042, %v5782, 0
        %5876 = vmatprep.subr.mxu0 0.0
        %5877 = vmatpush1.msra.mxu0 0.0
        %5878 = vmatprep.subr.mxu0 0.0
        %5879 = vmatpush1.msra.mxu0 0.0
        %5880 = vmatprep.subr.mxu0 0.0
        %5881 = vmatpush1.msra.mxu0 0.0
        %5882 = vmatprep.subr.mxu0 0.0
        %5883 = vmatpush1.msra.mxu0 0.0
        %5884 = vmatprep.subr.mxu0 0.0
        %5885 = vmatpush1.msra.mxu0 0.0
        %5886 = vmatprep.subr.mxu0 0.0
        %5887 = vmatpush1.msra.mxu0 0.0
        %5888 = vmatprep.subr.mxu0 0.0
        %5889 = vmatpush1.msra.mxu0 0.0
        %5890 = vmatprep.subr.mxu0 0.0
        %5891 = vmatpush1.msra.mxu0 0.0
        %5892 = vmatprep.subr.mxu0 0.0
        %5893 = vmatpush1.msra.mxu0 %v5790
        %5894 = vmatprep.subr.mxu0 0.0
        %5895 = vmatpush1.msra.mxu0 %v5789
        %5896 = vmatprep.subr.mxu0 0.0
        %5897 = vmatpush1.msra.mxu0 %v5788
        %5898 = vmatprep.subr.mxu0 0.0
        %5899 = vmatpush1.msra.mxu0 %v5787
        %5900 = vmatprep.subr.mxu0 0.0
        %5901 = vmatpush1.msra.mxu0 %v5786
        %5902 = vmatprep.subr.mxu0 0.0
        %5903 = vmatpush1.msra.mxu0 %v5785
        %5904 = vmatprep.subr.mxu0 0.0
        %5905 = vmatpush1.msra.mxu0 %v5784
        %5906 = vmatprep.subr.mxu0 0.0
        %5907 = vmatpush1.msra.mxu0 %v5783
        %5908 = vmatprep.subr.mxu0 0.0
        %5909 = vmatpush2.msra.mxu0 0.0
        %5910 = vmatprep.subr.mxu0 0.0
        %5911 = vmatpush2.msra.mxu0 0.0
        %5912 = vmatprep.subr.mxu0 0.0
        %5913 = vmatpush2.msra.mxu0 0.0
        %5914 = vmatprep.subr.mxu0 0.0
        %5915 = vmatpush2.msra.mxu0 0.0
        %5916 = vmatprep.subr.mxu0 0.0
        %5917 = vmatpush2.msra.mxu0 0.0
        %5918 = vmatprep.subr.mxu0 0.0
        %5919 = vmatpush2.msra.mxu0 0.0
        %5920 = vmatprep.subr.mxu0 0.0
        %5921 = vmatpush2.msra.mxu0 0.0
        %5922 = vmatprep.subr.mxu0 0.0
        %5923 = vmatpush2.msra.mxu0 0.0
        %5924 = vmatprep.subr.mxu0 0.0
        %5925 = vmatpush2.msra.mxu0 0.0
        %5926 = vmatprep.subr.mxu0 0.0
        %5927 = vmatpush2.msra.mxu0 0.0
        %5928 = vmatprep.subr.mxu0 0.0
        %5929 = vmatpush2.msra.mxu0 0.0
        %5930 = vmatprep.subr.mxu0 0.0
        %5931 = vmatpush2.msra.mxu0 0.0
        %5932 = vmatprep.subr.mxu0 0.0
        %5933 = vmatpush2.msra.mxu0 0.0
        %5934 = vmatprep.subr.mxu0 0.0
        %5935 = vmatpush2.msra.mxu0 0.0
        %5936 = vmatprep.subr.mxu0 0.0
        %5937 = vmatpush2.msra.mxu0 0.0
        %5938 = vmatprep.subr.mxu0 0.0
        %5939 = vmatpush2.msra.mxu0 0.0
        %5940 = vmatprep.mubr.f32.mxu0 0.0
        %5941 = vmatmul.mubr.f32.gmra.mxu0 %v5874
        %v5942 = vpop.f32.mrf.mxu0
        %v5943 = vadd.f32 %v5870, %v5942
        %v5944 = vpop.f32.mrf.mxu0
        %5945 = vdwg.mxu0
        %v5946 = vld [vmem:[#allocation3 + $0x8] sm:$0xf]
        %v5947 = vld [vmem:[%s5 + $0x80] sm:$0xff]
        %v5948 = vld [vmem:[%s5 + $0x88] sm:$0xff]
        %v5949 = vld [vmem:[%s5 + $0x90] sm:$0xff]
        %v5950 = vld [vmem:[%s5 + $0x98] sm:$0xff]
        %v5951 = vld [vmem:[%s5 + $0xa0] sm:$0xff]
        %v5952 = vld [vmem:[%s5 + $0xa8] sm:$0xff]
        %v5953 = vld [vmem:[%s5 + $0xb0] sm:$0xff]
        %v5954 = vld [vmem:[%s5 + $0xb8] sm:$0xff]
        %v5956 = vsel %vm5042, %v5946, 0
        %5958 = vmatprep.subr.mxu0 0.0
        %5959 = vmatpush1.msra.mxu0 0.0
        %5960 = vmatprep.subr.mxu0 0.0
        %5961 = vmatpush1.msra.mxu0 0.0
        %5962 = vmatprep.subr.mxu0 0.0
        %5963 = vmatpush1.msra.mxu0 0.0
        %5964 = vmatprep.subr.mxu0 0.0
        %5965 = vmatpush1.msra.mxu0 0.0
        %5966 = vmatprep.subr.mxu0 0.0
        %5967 = vmatpush1.msra.mxu0 0.0
        %5968 = vmatprep.subr.mxu0 0.0
        %5969 = vmatpush1.msra.mxu0 0.0
        %5970 = vmatprep.subr.mxu0 0.0
        %5971 = vmatpush1.msra.mxu0 0.0
        %5972 = vmatprep.subr.mxu0 0.0
        %5973 = vmatpush1.msra.mxu0 0.0
        %5974 = vmatprep.subr.mxu0 0.0
        %5975 = vmatpush1.msra.mxu0 %v5954
        %5976 = vmatprep.subr.mxu0 0.0
        %5977 = vmatpush1.msra.mxu0 %v5953
        %5978 = vmatprep.subr.mxu0 0.0
        %5979 = vmatpush1.msra.mxu0 %v5952
        %5980 = vmatprep.subr.mxu0 0.0
        %5981 = vmatpush1.msra.mxu0 %v5951
        %5982 = vmatprep.subr.mxu0 0.0
        %5983 = vmatpush1.msra.mxu0 %v5950
        %5984 = vmatprep.subr.mxu0 0.0
        %5985 = vmatpush1.msra.mxu0 %v5949
        %5986 = vmatprep.subr.mxu0 0.0
        %5987 = vmatpush1.msra.mxu0 %v5948
        %5988 = vmatprep.subr.mxu0 0.0
        %5989 = vmatpush1.msra.mxu0 %v5947
        %5990 = vmatprep.subr.mxu0 0.0
        %5991 = vmatpush2.msra.mxu0 0.0
        %5992 = vmatprep.subr.mxu0 0.0
        %5993 = vmatpush2.msra.mxu0 0.0
        %5994 = vmatprep.subr.mxu0 0.0
        %5995 = vmatpush2.msra.mxu0 0.0
        %5996 = vmatprep.subr.mxu0 0.0
        %5997 = vmatpush2.msra.mxu0 0.0
        %5998 = vmatprep.subr.mxu0 0.0
        %5999 = vmatpush2.msra.mxu0 0.0
        %6000 = vmatprep.subr.mxu0 0.0
        %6001 = vmatpush2.msra.mxu0 0.0
        %6002 = vmatprep.subr.mxu0 0.0
        %6003 = vmatpush2.msra.mxu0 0.0
        %6004 = vmatprep.subr.mxu0 0.0
        %6005 = vmatpush2.msra.mxu0 0.0
        %6006 = vmatprep.subr.mxu0 0.0
        %6007 = vmatpush2.msra.mxu0 0.0
        %6008 = vmatprep.subr.mxu0 0.0
        %6009 = vmatpush2.msra.mxu0 0.0
        %6010 = vmatprep.subr.mxu0 0.0
        %6011 = vmatpush2.msra.mxu0 0.0
        %6012 = vmatprep.subr.mxu0 0.0
        %6013 = vmatpush2.msra.mxu0 0.0
        %6014 = vmatprep.subr.mxu0 0.0
        %6015 = vmatpush2.msra.mxu0 0.0
        %6016 = vmatprep.subr.mxu0 0.0
        %6017 = vmatpush2.msra.mxu0 0.0
        %6018 = vmatprep.subr.mxu0 0.0
        %6019 = vmatpush2.msra.mxu0 0.0
        %6020 = vmatprep.subr.mxu0 0.0
        %6021 = vmatpush2.msra.mxu0 0.0
        %6022 = vmatprep.mubr.f32.mxu0 0.0
        %6023 = vmatmul.mubr.f32.gmra.mxu0 %v5956
        %v6024 = vpop.f32.mrf.mxu0
        %v6025 = vadd.f32 0.0, %v6024
        %v6026 = vpop.f32.mrf.mxu0
        %6027 = vdwg.mxu0
        %v6028 = vadd.f32 %v5943, %v6025
        %v6029 = vld [vmem:[#allocation3 + $0xc] sm:$0xf]
        %v6030 = vld [vmem:[%s5 + $0xc0] sm:$0xff]
        %v6031 = vld [vmem:[%s5 + $0xc8] sm:$0xff]
        %v6032 = vld [vmem:[%s5 + $0xd0] sm:$0xff]
        %v6033 = vld [vmem:[%s5 + $0xd8] sm:$0xff]
        %v6034 = vld [vmem:[%s5 + $0xe0] sm:$0xff]
        %v6035 = vld [vmem:[%s5 + $0xe8] sm:$0xff]
        %v6036 = vld [vmem:[%s5 + $0xf0] sm:$0xff]
        %v6037 = vld [vmem:[%s5 + $0xf8] sm:$0xff]
        %v6039 = vsel %vm5042, %v6029, 0
        %6041 = vmatprep.subr.mxu0 0.0
        %6042 = vmatpush1.msra.mxu0 0.0
        %6043 = vmatprep.subr.mxu0 0.0
        %6044 = vmatpush1.msra.mxu0 0.0
        %6045 = vmatprep.subr.mxu0 0.0
        %6046 = vmatpush1.msra.mxu0 0.0
        %6047 = vmatprep.subr.mxu0 0.0
        %6048 = vmatpush1.msra.mxu0 0.0
        %6049 = vmatprep.subr.mxu0 0.0
        %6050 = vmatpush1.msra.mxu0 0.0
        %6051 = vmatprep.subr.mxu0 0.0
        %6052 = vmatpush1.msra.mxu0 0.0
        %6053 = vmatprep.subr.mxu0 0.0
        %6054 = vmatpush1.msra.mxu0 0.0
        %6055 = vmatprep.subr.mxu0 0.0
        %6056 = vmatpush1.msra.mxu0 0.0
        %6057 = vmatprep.subr.mxu0 0.0
        %6058 = vmatpush1.msra.mxu0 %v6037
        %6059 = vmatprep.subr.mxu0 0.0
        %6060 = vmatpush1.msra.mxu0 %v6036
        %6061 = vmatprep.subr.mxu0 0.0
        %6062 = vmatpush1.msra.mxu0 %v6035
        %6063 = vmatprep.subr.mxu0 0.0
        %6064 = vmatpush1.msra.mxu0 %v6034
        %6065 = vmatprep.subr.mxu0 0.0
        %6066 = vmatpush1.msra.mxu0 %v6033
        %6067 = vmatprep.subr.mxu0 0.0
        %6068 = vmatpush1.msra.mxu0 %v6032
        %6069 = vmatprep.subr.mxu0 0.0
        %6070 = vmatpush1.msra.mxu0 %v6031
        %6071 = vmatprep.subr.mxu0 0.0
        %6072 = vmatpush1.msra.mxu0 %v6030
        %6073 = vmatprep.subr.mxu0 0.0
        %6074 = vmatpush2.msra.mxu0 0.0
        %6075 = vmatprep.subr.mxu0 0.0
        %6076 = vmatpush2.msra.mxu0 0.0
        %6077 = vmatprep.subr.mxu0 0.0
        %6078 = vmatpush2.msra.mxu0 0.0
        %6079 = vmatprep.subr.mxu0 0.0
        %6080 = vmatpush2.msra.mxu0 0.0
        %6081 = vmatprep.subr.mxu0 0.0
        %6082 = vmatpush2.msra.mxu0 0.0
        %6083 = vmatprep.subr.mxu0 0.0
        %6084 = vmatpush2.msra.mxu0 0.0
        %6085 = vmatprep.subr.mxu0 0.0
        %6086 = vmatpush2.msra.mxu0 0.0
        %6087 = vmatprep.subr.mxu0 0.0
        %6088 = vmatpush2.msra.mxu0 0.0
        %6089 = vmatprep.subr.mxu0 0.0
        %6090 = vmatpush2.msra.mxu0 0.0
        %6091 = vmatprep.subr.mxu0 0.0
        %6092 = vmatpush2.msra.mxu0 0.0
        %6093 = vmatprep.subr.mxu0 0.0
        %6094 = vmatpush2.msra.mxu0 0.0
        %6095 = vmatprep.subr.mxu0 0.0
        %6096 = vmatpush2.msra.mxu0 0.0
        %6097 = vmatprep.subr.mxu0 0.0
        %6098 = vmatpush2.msra.mxu0 0.0
        %6099 = vmatprep.subr.mxu0 0.0
        %6100 = vmatpush2.msra.mxu0 0.0
        %6101 = vmatprep.subr.mxu0 0.0
        %6102 = vmatpush2.msra.mxu0 0.0
        %6103 = vmatprep.subr.mxu0 0.0
        %6104 = vmatpush2.msra.mxu0 0.0
        %6105 = vmatprep.mubr.f32.mxu0 0.0
        %6106 = vmatmul.mubr.f32.gmra.mxu0 %v6039
        %v6107 = vpop.f32.mrf.mxu0
        %v6108 = vadd.f32 0.0, %v6107
        %v6109 = vpop.f32.mrf.mxu0
        %6110 = vdwg.mxu0
        %v6111 = vadd.f32 %v6028, %v6108
        %v6112 = vld [vmem:[#allocation3 + $0xd] sm:$0xf]
        %v6113 = vld [vmem:[%s5 + $0x100] sm:$0xff]
        %v6114 = vld [vmem:[%s5 + $0x108] sm:$0xff]
        %v6115 = vld [vmem:[%s5 + $0x110] sm:$0xff]
        %v6116 = vld [vmem:[%s5 + $0x118] sm:$0xff]
        %v6117 = vld [vmem:[%s5 + $0x120] sm:$0xff]
        %v6118 = vld [vmem:[%s5 + $0x128] sm:$0xff]
        %v6119 = vld [vmem:[%s5 + $0x130] sm:$0xff]
        %v6120 = vld [vmem:[%s5 + $0x138] sm:$0xff]
        %v6122 = vsel %vm5042, %v6112, 0
        %6124 = vmatprep.subr.mxu0 0.0
        %6125 = vmatpush1.msra.mxu0 0.0
        %6126 = vmatprep.subr.mxu0 0.0
        %6127 = vmatpush1.msra.mxu0 0.0
        %6128 = vmatprep.subr.mxu0 0.0
        %6129 = vmatpush1.msra.mxu0 0.0
        %6130 = vmatprep.subr.mxu0 0.0
        %6131 = vmatpush1.msra.mxu0 0.0
        %6132 = vmatprep.subr.mxu0 0.0
        %6133 = vmatpush1.msra.mxu0 0.0
        %6134 = vmatprep.subr.mxu0 0.0
        %6135 = vmatpush1.msra.mxu0 0.0
        %6136 = vmatprep.subr.mxu0 0.0
        %6137 = vmatpush1.msra.mxu0 0.0
        %6138 = vmatprep.subr.mxu0 0.0
        %6139 = vmatpush1.msra.mxu0 0.0
        %6140 = vmatprep.subr.mxu0 0.0
        %6141 = vmatpush1.msra.mxu0 %v6120
        %6142 = vmatprep.subr.mxu0 0.0
        %6143 = vmatpush1.msra.mxu0 %v6119
        %6144 = vmatprep.subr.mxu0 0.0
        %6145 = vmatpush1.msra.mxu0 %v6118
        %6146 = vmatprep.subr.mxu0 0.0
        %6147 = vmatpush1.msra.mxu0 %v6117
        %6148 = vmatprep.subr.mxu0 0.0
        %6149 = vmatpush1.msra.mxu0 %v6116
        %6150 = vmatprep.subr.mxu0 0.0
        %6151 = vmatpush1.msra.mxu0 %v6115
        %6152 = vmatprep.subr.mxu0 0.0
        %6153 = vmatpush1.msra.mxu0 %v6114
        %6154 = vmatprep.subr.mxu0 0.0
        %6155 = vmatpush1.msra.mxu0 %v6113
        %6156 = vmatprep.subr.mxu0 0.0
        %6157 = vmatpush2.msra.mxu0 0.0
        %6158 = vmatprep.subr.mxu0 0.0
        %6159 = vmatpush2.msra.mxu0 0.0
        %6160 = vmatprep.subr.mxu0 0.0
        %6161 = vmatpush2.msra.mxu0 0.0
        %6162 = vmatprep.subr.mxu0 0.0
        %6163 = vmatpush2.msra.mxu0 0.0
        %6164 = vmatprep.subr.mxu0 0.0
        %6165 = vmatpush2.msra.mxu0 0.0
        %6166 = vmatprep.subr.mxu0 0.0
        %6167 = vmatpush2.msra.mxu0 0.0
        %6168 = vmatprep.subr.mxu0 0.0
        %6169 = vmatpush2.msra.mxu0 0.0
        %6170 = vmatprep.subr.mxu0 0.0
        %6171 = vmatpush2.msra.mxu0 0.0
        %6172 = vmatprep.subr.mxu0 0.0
        %6173 = vmatpush2.msra.mxu0 0.0
        %6174 = vmatprep.subr.mxu0 0.0
        %6175 = vmatpush2.msra.mxu0 0.0
        %6176 = vmatprep.subr.mxu0 0.0
        %6177 = vmatpush2.msra.mxu0 0.0
        %6178 = vmatprep.subr.mxu0 0.0
        %6179 = vmatpush2.msra.mxu0 0.0
        %6180 = vmatprep.subr.mxu0 0.0
        %6181 = vmatpush2.msra.mxu0 0.0
        %6182 = vmatprep.subr.mxu0 0.0
        %6183 = vmatpush2.msra.mxu0 0.0
        %6184 = vmatprep.subr.mxu0 0.0
        %6185 = vmatpush2.msra.mxu0 0.0
        %6186 = vmatprep.subr.mxu0 0.0
        %6187 = vmatpush2.msra.mxu0 0.0
        %6188 = vmatprep.mubr.f32.mxu0 0.0
        %6189 = vmatmul.mubr.f32.gmra.mxu0 %v6122
        %v6190 = vpop.f32.mrf.mxu0
        %v6191 = vadd.f32 0.0, %v6190
        %v6192 = vpop.f32.mrf.mxu0
        %6193 = vdwg.mxu0
        %v6194 = vadd.f32 %v6111, %v6191
        %v6195 = vld [vmem:[#allocation3 + $0xe] sm:$0xf]
        %v6196 = vld [vmem:[%s5 + $0x140] sm:$0xff]
        %v6197 = vld [vmem:[%s5 + $0x148] sm:$0xff]
        %v6198 = vld [vmem:[%s5 + $0x150] sm:$0xff]
        %v6199 = vld [vmem:[%s5 + $0x158] sm:$0xff]
        %v6200 = vld [vmem:[%s5 + $0x160] sm:$0xff]
        %v6201 = vld [vmem:[%s5 + $0x168] sm:$0xff]
        %v6202 = vld [vmem:[%s5 + $0x170] sm:$0xff]
        %v6203 = vld [vmem:[%s5 + $0x178] sm:$0xff]
        %v6205 = vsel %vm5042, %v6195, 0
        %6207 = vmatprep.subr.mxu0 0.0
        %6208 = vmatpush1.msra.mxu0 0.0
        %6209 = vmatprep.subr.mxu0 0.0
        %6210 = vmatpush1.msra.mxu0 0.0
        %6211 = vmatprep.subr.mxu0 0.0
        %6212 = vmatpush1.msra.mxu0 0.0
        %6213 = vmatprep.subr.mxu0 0.0
        %6214 = vmatpush1.msra.mxu0 0.0
        %6215 = vmatprep.subr.mxu0 0.0
        %6216 = vmatpush1.msra.mxu0 0.0
        %6217 = vmatprep.subr.mxu0 0.0
        %6218 = vmatpush1.msra.mxu0 0.0
        %6219 = vmatprep.subr.mxu0 0.0
        %6220 = vmatpush1.msra.mxu0 0.0
        %6221 = vmatprep.subr.mxu0 0.0
        %6222 = vmatpush1.msra.mxu0 0.0
        %6223 = vmatprep.subr.mxu0 0.0
        %6224 = vmatpush1.msra.mxu0 %v6203
        %6225 = vmatprep.subr.mxu0 0.0
        %6226 = vmatpush1.msra.mxu0 %v6202
        %6227 = vmatprep.subr.mxu0 0.0
        %6228 = vmatpush1.msra.mxu0 %v6201
        %6229 = vmatprep.subr.mxu0 0.0
        %6230 = vmatpush1.msra.mxu0 %v6200
        %6231 = vmatprep.subr.mxu0 0.0
        %6232 = vmatpush1.msra.mxu0 %v6199
        %6233 = vmatprep.subr.mxu0 0.0
        %6234 = vmatpush1.msra.mxu0 %v6198
        %6235 = vmatprep.subr.mxu0 0.0
        %6236 = vmatpush1.msra.mxu0 %v6197
        %6237 = vmatprep.subr.mxu0 0.0
        %6238 = vmatpush1.msra.mxu0 %v6196
        %6239 = vmatprep.subr.mxu0 0.0
        %6240 = vmatpush2.msra.mxu0 0.0
        %6241 = vmatprep.subr.mxu0 0.0
        %6242 = vmatpush2.msra.mxu0 0.0
        %6243 = vmatprep.subr.mxu0 0.0
        %6244 = vmatpush2.msra.mxu0 0.0
        %6245 = vmatprep.subr.mxu0 0.0
        %6246 = vmatpush2.msra.mxu0 0.0
        %6247 = vmatprep.subr.mxu0 0.0
        %6248 = vmatpush2.msra.mxu0 0.0
        %6249 = vmatprep.subr.mxu0 0.0
        %6250 = vmatpush2.msra.mxu0 0.0
        %6251 = vmatprep.subr.mxu0 0.0
        %6252 = vmatpush2.msra.mxu0 0.0
        %6253 = vmatprep.subr.mxu0 0.0
        %6254 = vmatpush2.msra.mxu0 0.0
        %6255 = vmatprep.subr.mxu0 0.0
        %6256 = vmatpush2.msra.mxu0 0.0
        %6257 = vmatprep.subr.mxu0 0.0
        %6258 = vmatpush2.msra.mxu0 0.0
        %6259 = vmatprep.subr.mxu0 0.0
        %6260 = vmatpush2.msra.mxu0 0.0
        %6261 = vmatprep.subr.mxu0 0.0
        %6262 = vmatpush2.msra.mxu0 0.0
        %6263 = vmatprep.subr.mxu0 0.0
        %6264 = vmatpush2.msra.mxu0 0.0
        %6265 = vmatprep.subr.mxu0 0.0
        %6266 = vmatpush2.msra.mxu0 0.0
        %6267 = vmatprep.subr.mxu0 0.0
        %6268 = vmatpush2.msra.mxu0 0.0
        %6269 = vmatprep.subr.mxu0 0.0
        %6270 = vmatpush2.msra.mxu0 0.0
        %6271 = vmatprep.mubr.f32.mxu0 0.0
        %6272 = vmatmul.mubr.f32.gmra.mxu0 %v6205
        %v6273 = vpop.f32.mrf.mxu0
        %v6274 = vadd.f32 0.0, %v6273
        %v6275 = vpop.f32.mrf.mxu0
        %6276 = vdwg.mxu0
        %v6277 = vadd.f32 %v6194, %v6274
        %v6278 = vld [vmem:[#allocation3 + $0x12] sm:$0xf]
        %v6279 = vld [vmem:[%s5 + $0x180] sm:$0xff]
        %v6280 = vld [vmem:[%s5 + $0x188] sm:$0xff]
        %v6281 = vld [vmem:[%s5 + $0x190] sm:$0xff]
        %v6282 = vld [vmem:[%s5 + $0x198] sm:$0xff]
        %v6283 = vld [vmem:[%s5 + $0x1a0] sm:$0xff]
        %v6284 = vld [vmem:[%s5 + $0x1a8] sm:$0xff]
        %v6285 = vld [vmem:[%s5 + $0x1b0] sm:$0xff]
        %v6286 = vld [vmem:[%s5 + $0x1b8] sm:$0xff]
        %v6288 = vsel %vm5042, %v6278, 0
        %6290 = vmatprep.subr.mxu0 0.0
        %6291 = vmatpush1.msra.mxu0 0.0
        %6292 = vmatprep.subr.mxu0 0.0
        %6293 = vmatpush1.msra.mxu0 0.0
        %6294 = vmatprep.subr.mxu0 0.0
        %6295 = vmatpush1.msra.mxu0 0.0
        %6296 = vmatprep.subr.mxu0 0.0
        %6297 = vmatpush1.msra.mxu0 0.0
        %6298 = vmatprep.subr.mxu0 0.0
        %6299 = vmatpush1.msra.mxu0 0.0
        %6300 = vmatprep.subr.mxu0 0.0
        %6301 = vmatpush1.msra.mxu0 0.0
        %6302 = vmatprep.subr.mxu0 0.0
        %6303 = vmatpush1.msra.mxu0 0.0
        %6304 = vmatprep.subr.mxu0 0.0
        %6305 = vmatpush1.msra.mxu0 0.0
        %6306 = vmatprep.subr.mxu0 0.0
        %6307 = vmatpush1.msra.mxu0 %v6286
        %6308 = vmatprep.subr.mxu0 0.0
        %6309 = vmatpush1.msra.mxu0 %v6285
        %6310 = vmatprep.subr.mxu0 0.0
        %6311 = vmatpush1.msra.mxu0 %v6284
        %6312 = vmatprep.subr.mxu0 0.0
        %6313 = vmatpush1.msra.mxu0 %v6283
        %6314 = vmatprep.subr.mxu0 0.0
        %6315 = vmatpush1.msra.mxu0 %v6282
        %6316 = vmatprep.subr.mxu0 0.0
        %6317 = vmatpush1.msra.mxu0 %v6281
        %6318 = vmatprep.subr.mxu0 0.0
        %6319 = vmatpush1.msra.mxu0 %v6280
        %6320 = vmatprep.subr.mxu0 0.0
        %6321 = vmatpush1.msra.mxu0 %v6279
        %6322 = vmatprep.subr.mxu0 0.0
        %6323 = vmatpush2.msra.mxu0 0.0
        %6324 = vmatprep.subr.mxu0 0.0
        %6325 = vmatpush2.msra.mxu0 0.0
        %6326 = vmatprep.subr.mxu0 0.0
        %6327 = vmatpush2.msra.mxu0 0.0
        %6328 = vmatprep.subr.mxu0 0.0
        %6329 = vmatpush2.msra.mxu0 0.0
        %6330 = vmatprep.subr.mxu0 0.0
        %6331 = vmatpush2.msra.mxu0 0.0
        %6332 = vmatprep.subr.mxu0 0.0
        %6333 = vmatpush2.msra.mxu0 0.0
        %6334 = vmatprep.subr.mxu0 0.0
        %6335 = vmatpush2.msra.mxu0 0.0
        %6336 = vmatprep.subr.mxu0 0.0
        %6337 = vmatpush2.msra.mxu0 0.0
        %6338 = vmatprep.subr.mxu0 0.0
        %6339 = vmatpush2.msra.mxu0 0.0
        %6340 = vmatprep.subr.mxu0 0.0
        %6341 = vmatpush2.msra.mxu0 0.0
        %6342 = vmatprep.subr.mxu0 0.0
        %6343 = vmatpush2.msra.mxu0 0.0
        %6344 = vmatprep.subr.mxu0 0.0
        %6345 = vmatpush2.msra.mxu0 0.0
        %6346 = vmatprep.subr.mxu0 0.0
        %6347 = vmatpush2.msra.mxu0 0.0
        %6348 = vmatprep.subr.mxu0 0.0
        %6349 = vmatpush2.msra.mxu0 0.0
        %6350 = vmatprep.subr.mxu0 0.0
        %6351 = vmatpush2.msra.mxu0 0.0
        %6352 = vmatprep.subr.mxu0 0.0
        %6353 = vmatpush2.msra.mxu0 0.0
        %6354 = vmatprep.mubr.f32.mxu0 0.0
        %6355 = vmatmul.mubr.f32.gmra.mxu0 %v6288
        %v6356 = vpop.f32.mrf.mxu0
        %v6357 = vadd.f32 0.0, %v6356
        %v6358 = vpop.f32.mrf.mxu0
        %6359 = vdwg.mxu0
        %v6360 = vadd.f32 %v6277, %v6357
        %v6361 = vld [vmem:[#allocation3 + $0x13] sm:$0xf]
        %v6362 = vld [vmem:[%s5 + $0x1c0] sm:$0xff]
        %v6363 = vld [vmem:[%s5 + $0x1c8] sm:$0xff]
        %v6364 = vld [vmem:[%s5 + $0x1d0] sm:$0xff]
        %v6365 = vld [vmem:[%s5 + $0x1d8] sm:$0xff]
        %v6366 = vld [vmem:[%s5 + $0x1e0] sm:$0xff]
        %v6367 = vld [vmem:[%s5 + $0x1e8] sm:$0xff]
        %v6368 = vld [vmem:[%s5 + $0x1f0] sm:$0xff]
        %v6369 = vld [vmem:[%s5 + $0x1f8] sm:$0xff]
        %v6371 = vsel %vm5042, %v6361, 0
        %6373 = vmatprep.subr.mxu0 0.0
        %6374 = vmatpush1.msra.mxu0 0.0
        %6375 = vmatprep.subr.mxu0 0.0
        %6376 = vmatpush1.msra.mxu0 0.0
        %6377 = vmatprep.subr.mxu0 0.0
        %6378 = vmatpush1.msra.mxu0 0.0
        %6379 = vmatprep.subr.mxu0 0.0
        %6380 = vmatpush1.msra.mxu0 0.0
        %6381 = vmatprep.subr.mxu0 0.0
        %6382 = vmatpush1.msra.mxu0 0.0
        %6383 = vmatprep.subr.mxu0 0.0
        %6384 = vmatpush1.msra.mxu0 0.0
        %6385 = vmatprep.subr.mxu0 0.0
        %6386 = vmatpush1.msra.mxu0 0.0
        %6387 = vmatprep.subr.mxu0 0.0
        %6388 = vmatpush1.msra.mxu0 0.0
        %6389 = vmatprep.subr.mxu0 0.0
        %6390 = vmatpush1.msra.mxu0 %v6369
        %6391 = vmatprep.subr.mxu0 0.0
        %6392 = vmatpush1.msra.mxu0 %v6368
        %6393 = vmatprep.subr.mxu0 0.0
        %6394 = vmatpush1.msra.mxu0 %v6367
        %6395 = vmatprep.subr.mxu0 0.0
        %6396 = vmatpush1.msra.mxu0 %v6366
        %6397 = vmatprep.subr.mxu0 0.0
        %6398 = vmatpush1.msra.mxu0 %v6365
        %6399 = vmatprep.subr.mxu0 0.0
        %6400 = vmatpush1.msra.mxu0 %v6364
        %6401 = vmatprep.subr.mxu0 0.0
        %6402 = vmatpush1.msra.mxu0 %v6363
        %6403 = vmatprep.subr.mxu0 0.0
        %6404 = vmatpush1.msra.mxu0 %v6362
        %6405 = vmatprep.subr.mxu0 0.0
        %6406 = vmatpush2.msra.mxu0 0.0
        %6407 = vmatprep.subr.mxu0 0.0
        %6408 = vmatpush2.msra.mxu0 0.0
        %6409 = vmatprep.subr.mxu0 0.0
        %6410 = vmatpush2.msra.mxu0 0.0
        %6411 = vmatprep.subr.mxu0 0.0
        %6412 = vmatpush2.msra.mxu0 0.0
        %6413 = vmatprep.subr.mxu0 0.0
        %6414 = vmatpush2.msra.mxu0 0.0
        %6415 = vmatprep.subr.mxu0 0.0
        %6416 = vmatpush2.msra.mxu0 0.0
        %6417 = vmatprep.subr.mxu0 0.0
        %6418 = vmatpush2.msra.mxu0 0.0
        %6419 = vmatprep.subr.mxu0 0.0
        %6420 = vmatpush2.msra.mxu0 0.0
        %6421 = vmatprep.subr.mxu0 0.0
        %6422 = vmatpush2.msra.mxu0 0.0
        %6423 = vmatprep.subr.mxu0 0.0
        %6424 = vmatpush2.msra.mxu0 0.0
        %6425 = vmatprep.subr.mxu0 0.0
        %6426 = vmatpush2.msra.mxu0 0.0
        %6427 = vmatprep.subr.mxu0 0.0
        %6428 = vmatpush2.msra.mxu0 0.0
        %6429 = vmatprep.subr.mxu0 0.0
        %6430 = vmatpush2.msra.mxu0 0.0
        %6431 = vmatprep.subr.mxu0 0.0
        %6432 = vmatpush2.msra.mxu0 0.0
        %6433 = vmatprep.subr.mxu0 0.0
        %6434 = vmatpush2.msra.mxu0 0.0
        %6435 = vmatprep.subr.mxu0 0.0
        %6436 = vmatpush2.msra.mxu0 0.0
        %6437 = vmatprep.mubr.f32.mxu0 0.0
        %6438 = vmatmul.mubr.f32.gmra.mxu0 %v6371
        %v6439 = vpop.f32.mrf.mxu0
        %v6440 = vadd.f32 0.0, %v6439
        %v6441 = vpop.f32.mrf.mxu0
        %6442 = vdwg.mxu0
        %v6443 = vadd.f32 %v6360, %v6440
        %v6444 = vld [vmem:[#allocation3 + $0x14] sm:$0xf]
        %v6445 = vld [vmem:[%s5 + $0x200] sm:$0xff]
        %v6446 = vld [vmem:[%s5 + $0x208] sm:$0xff]
        %v6447 = vld [vmem:[%s5 + $0x210] sm:$0xff]
        %v6448 = vld [vmem:[%s5 + $0x218] sm:$0xff]
        %v6449 = vld [vmem:[%s5 + $0x220] sm:$0xff]
        %v6450 = vld [vmem:[%s5 + $0x228] sm:$0xff]
        %v6451 = vld [vmem:[%s5 + $0x230] sm:$0xff]
        %v6452 = vld [vmem:[%s5 + $0x238] sm:$0xff]
        %v6454 = vsel %vm5042, %v6444, 0
        %6456 = vmatprep.subr.mxu0 0.0
        %6457 = vmatpush1.msra.mxu0 0.0
        %6458 = vmatprep.subr.mxu0 0.0
        %6459 = vmatpush1.msra.mxu0 0.0
        %6460 = vmatprep.subr.mxu0 0.0
        %6461 = vmatpush1.msra.mxu0 0.0
        %6462 = vmatprep.subr.mxu0 0.0
        %6463 = vmatpush1.msra.mxu0 0.0
        %6464 = vmatprep.subr.mxu0 0.0
        %6465 = vmatpush1.msra.mxu0 0.0
        %6466 = vmatprep.subr.mxu0 0.0
        %6467 = vmatpush1.msra.mxu0 0.0
        %6468 = vmatprep.subr.mxu0 0.0
        %6469 = vmatpush1.msra.mxu0 0.0
        %6470 = vmatprep.subr.mxu0 0.0
        %6471 = vmatpush1.msra.mxu0 0.0
        %6472 = vmatprep.subr.mxu0 0.0
        %6473 = vmatpush1.msra.mxu0 %v6452
        %6474 = vmatprep.subr.mxu0 0.0
        %6475 = vmatpush1.msra.mxu0 %v6451
        %6476 = vmatprep.subr.mxu0 0.0
        %6477 = vmatpush1.msra.mxu0 %v6450
        %6478 = vmatprep.subr.mxu0 0.0
        %6479 = vmatpush1.msra.mxu0 %v6449
        %6480 = vmatprep.subr.mxu0 0.0
        %6481 = vmatpush1.msra.mxu0 %v6448
        %6482 = vmatprep.subr.mxu0 0.0
        %6483 = vmatpush1.msra.mxu0 %v6447
        %6484 = vmatprep.subr.mxu0 0.0
        %6485 = vmatpush1.msra.mxu0 %v6446
        %6486 = vmatprep.subr.mxu0 0.0
        %6487 = vmatpush1.msra.mxu0 %v6445
        %6488 = vmatprep.subr.mxu0 0.0
        %6489 = vmatpush2.msra.mxu0 0.0
        %6490 = vmatprep.subr.mxu0 0.0
        %6491 = vmatpush2.msra.mxu0 0.0
        %6492 = vmatprep.subr.mxu0 0.0
        %6493 = vmatpush2.msra.mxu0 0.0
        %6494 = vmatprep.subr.mxu0 0.0
        %6495 = vmatpush2.msra.mxu0 0.0
        %6496 = vmatprep.subr.mxu0 0.0
        %6497 = vmatpush2.msra.mxu0 0.0
        %6498 = vmatprep.subr.mxu0 0.0
        %6499 = vmatpush2.msra.mxu0 0.0
        %6500 = vmatprep.subr.mxu0 0.0
        %6501 = vmatpush2.msra.mxu0 0.0
        %6502 = vmatprep.subr.mxu0 0.0
        %6503 = vmatpush2.msra.mxu0 0.0
        %6504 = vmatprep.subr.mxu0 0.0
        %6505 = vmatpush2.msra.mxu0 0.0
        %6506 = vmatprep.subr.mxu0 0.0
        %6507 = vmatpush2.msra.mxu0 0.0
        %6508 = vmatprep.subr.mxu0 0.0
        %6509 = vmatpush2.msra.mxu0 0.0
        %6510 = vmatprep.subr.mxu0 0.0
        %6511 = vmatpush2.msra.mxu0 0.0
        %6512 = vmatprep.subr.mxu0 0.0
        %6513 = vmatpush2.msra.mxu0 0.0
        %6514 = vmatprep.subr.mxu0 0.0
        %6515 = vmatpush2.msra.mxu0 0.0
        %6516 = vmatprep.subr.mxu0 0.0
        %6517 = vmatpush2.msra.mxu0 0.0
        %6518 = vmatprep.subr.mxu0 0.0
        %6519 = vmatpush2.msra.mxu0 0.0
        %6520 = vmatprep.mubr.f32.mxu0 0.0
        %6521 = vmatmul.mubr.f32.gmra.mxu0 %v6454
        %v6522 = vpop.f32.mrf.mxu0
        %v6523 = vadd.f32 0.0, %v6522
        %v6524 = vpop.f32.mrf.mxu0
        %6525 = vdwg.mxu0
        %v6526 = vadd.f32 %v6443, %v6523
        %v6527 = vld [vmem:[%s6] sm:$0x1]
        %v6529 = vlaneseq
        %v6530 = vshrl.u32 %v6529, 7
        %v6531 = vsub.s32 0, %v6530
        %v6532 = vrot.slane %v6527, %v6531
        %v6534 = vadd.f32 %v6526, %v6532
        %vm6535 = vcmp.gt.f32.partialorder %v6534, 0.0
        %v6536 = vmul.f32 %v6534, 0.01
        %v6537 = vsel %vm6535, %v6534, %v6536
        %6538 = vst [vmem:[#allocation4 + $0x4] sm:$0xf] %v6537
        %v6539 = vld [vmem:[#allocation3 + $0xc] sm:$0xf]
        %v6540 = vld [vmem:[%s5] sm:$0xff]
        %v6541 = vld [vmem:[%s5 + $0x8] sm:$0xff]
        %v6542 = vld [vmem:[%s5 + $0x10] sm:$0xff]
        %v6543 = vld [vmem:[%s5 + $0x18] sm:$0xff]
        %v6544 = vld [vmem:[%s5 + $0x20] sm:$0xff]
        %v6545 = vld [vmem:[%s5 + $0x28] sm:$0xff]
        %v6546 = vld [vmem:[%s5 + $0x30] sm:$0xff]
        %v6547 = vld [vmem:[%s5 + $0x38] sm:$0xff]
        %v6548 = vld [vmem:[#allocation3 + $0xd] sm:$0xf]
        %v6549 = vld [vmem:[%s5 + $0x40] sm:$0xff]
        %v6550 = vld [vmem:[%s5 + $0x48] sm:$0xff]
        %v6551 = vld [vmem:[%s5 + $0x50] sm:$0xff]
        %v6552 = vld [vmem:[%s5 + $0x58] sm:$0xff]
        %v6553 = vld [vmem:[%s5 + $0x60] sm:$0xff]
        %v6554 = vld [vmem:[%s5 + $0x68] sm:$0xff]
        %v6555 = vld [vmem:[%s5 + $0x70] sm:$0xff]
        %v6556 = vld [vmem:[%s5 + $0x78] sm:$0xff]
        %v6558 = vsel %vm5042, %v6548, 0
        %6560 = vmatprep.subr.mxu0 0.0
        %6561 = vmatpush1.msra.mxu0 0.0
        %6562 = vmatprep.subr.mxu0 0.0
        %6563 = vmatpush1.msra.mxu0 0.0
        %6564 = vmatprep.subr.mxu0 0.0
        %6565 = vmatpush1.msra.mxu0 0.0
        %6566 = vmatprep.subr.mxu0 0.0
        %6567 = vmatpush1.msra.mxu0 0.0
        %6568 = vmatprep.subr.mxu0 0.0
        %6569 = vmatpush1.msra.mxu0 0.0
        %6570 = vmatprep.subr.mxu0 0.0
        %6571 = vmatpush1.msra.mxu0 0.0
        %6572 = vmatprep.subr.mxu0 0.0
        %6573 = vmatpush1.msra.mxu0 0.0
        %6574 = vmatprep.subr.mxu0 0.0
        %6575 = vmatpush1.msra.mxu0 0.0
        %6576 = vmatprep.subr.mxu0 0.0
        %6577 = vmatpush1.msra.mxu0 %v6556
        %6578 = vmatprep.subr.mxu0 0.0
        %6579 = vmatpush1.msra.mxu0 %v6555
        %6580 = vmatprep.subr.mxu0 0.0
        %6581 = vmatpush1.msra.mxu0 %v6554
        %6582 = vmatprep.subr.mxu0 0.0
        %6583 = vmatpush1.msra.mxu0 %v6553
        %6584 = vmatprep.subr.mxu0 0.0
        %6585 = vmatpush1.msra.mxu0 %v6552
        %6586 = vmatprep.subr.mxu0 0.0
        %6587 = vmatpush1.msra.mxu0 %v6551
        %6588 = vmatprep.subr.mxu0 0.0
        %6589 = vmatpush1.msra.mxu0 %v6550
        %6590 = vmatprep.subr.mxu0 0.0
        %6591 = vmatpush1.msra.mxu0 %v6549
        %6592 = vmatprep.subr.mxu0 0.0
        %6593 = vmatpush2.msra.mxu0 0.0
        %6594 = vmatprep.subr.mxu0 0.0
        %6595 = vmatpush2.msra.mxu0 0.0
        %6596 = vmatprep.subr.mxu0 0.0
        %6597 = vmatpush2.msra.mxu0 0.0
        %6598 = vmatprep.subr.mxu0 0.0
        %6599 = vmatpush2.msra.mxu0 0.0
        %6600 = vmatprep.subr.mxu0 0.0
        %6601 = vmatpush2.msra.mxu0 0.0
        %6602 = vmatprep.subr.mxu0 0.0
        %6603 = vmatpush2.msra.mxu0 0.0
        %6604 = vmatprep.subr.mxu0 0.0
        %6605 = vmatpush2.msra.mxu0 0.0
        %6606 = vmatprep.subr.mxu0 0.0
        %6607 = vmatpush2.msra.mxu0 0.0
        %6608 = vmatprep.subr.mxu0 0.0
        %6609 = vmatpush2.msra.mxu0 0.0
        %6610 = vmatprep.subr.mxu0 0.0
        %6611 = vmatpush2.msra.mxu0 0.0
        %6612 = vmatprep.subr.mxu0 0.0
        %6613 = vmatpush2.msra.mxu0 0.0
        %6614 = vmatprep.subr.mxu0 0.0
        %6615 = vmatpush2.msra.mxu0 0.0
        %6616 = vmatprep.subr.mxu0 0.0
        %6617 = vmatpush2.msra.mxu0 0.0
        %6618 = vmatprep.subr.mxu0 0.0
        %6619 = vmatpush2.msra.mxu0 0.0
        %6620 = vmatprep.subr.mxu0 0.0
        %6621 = vmatpush2.msra.mxu0 0.0
        %6622 = vmatprep.subr.mxu0 0.0
        %6623 = vmatpush2.msra.mxu0 0.0
        %6624 = vmatprep.mubr.f32.mxu0 0.0
        %6625 = vmatmul.mubr.f32.gmra.mxu0 %v6558
        %v6626 = vpop.f32.mrf.mxu0
        %v6627 = vadd.f32 0.0, %v6626
        %v6628 = vpop.f32.mrf.mxu0
        %6629 = vdwg.mxu0
        %v6631 = vsel %vm5042, %v6539, 0
        %6633 = vmatprep.subr.mxu0 0.0
        %6634 = vmatpush1.msra.mxu0 0.0
        %6635 = vmatprep.subr.mxu0 0.0
        %6636 = vmatpush1.msra.mxu0 0.0
        %6637 = vmatprep.subr.mxu0 0.0
        %6638 = vmatpush1.msra.mxu0 0.0
        %6639 = vmatprep.subr.mxu0 0.0
        %6640 = vmatpush1.msra.mxu0 0.0
        %6641 = vmatprep.subr.mxu0 0.0
        %6642 = vmatpush1.msra.mxu0 0.0
        %6643 = vmatprep.subr.mxu0 0.0
        %6644 = vmatpush1.msra.mxu0 0.0
        %6645 = vmatprep.subr.mxu0 0.0
        %6646 = vmatpush1.msra.mxu0 0.0
        %6647 = vmatprep.subr.mxu0 0.0
        %6648 = vmatpush1.msra.mxu0 0.0
        %6649 = vmatprep.subr.mxu0 0.0
        %6650 = vmatpush1.msra.mxu0 %v6547
        %6651 = vmatprep.subr.mxu0 0.0
        %6652 = vmatpush1.msra.mxu0 %v6546
        %6653 = vmatprep.subr.mxu0 0.0
        %6654 = vmatpush1.msra.mxu0 %v6545
        %6655 = vmatprep.subr.mxu0 0.0
        %6656 = vmatpush1.msra.mxu0 %v6544
        %6657 = vmatprep.subr.mxu0 0.0
        %6658 = vmatpush1.msra.mxu0 %v6543
        %6659 = vmatprep.subr.mxu0 0.0
        %6660 = vmatpush1.msra.mxu0 %v6542
        %6661 = vmatprep.subr.mxu0 0.0
        %6662 = vmatpush1.msra.mxu0 %v6541
        %6663 = vmatprep.subr.mxu0 0.0
        %6664 = vmatpush1.msra.mxu0 %v6540
        %6665 = vmatprep.subr.mxu0 0.0
        %6666 = vmatpush2.msra.mxu0 0.0
        %6667 = vmatprep.subr.mxu0 0.0
        %6668 = vmatpush2.msra.mxu0 0.0
        %6669 = vmatprep.subr.mxu0 0.0
        %6670 = vmatpush2.msra.mxu0 0.0
        %6671 = vmatprep.subr.mxu0 0.0
        %6672 = vmatpush2.msra.mxu0 0.0
        %6673 = vmatprep.subr.mxu0 0.0
        %6674 = vmatpush2.msra.mxu0 0.0
        %6675 = vmatprep.subr.mxu0 0.0
        %6676 = vmatpush2.msra.mxu0 0.0
        %6677 = vmatprep.subr.mxu0 0.0
        %6678 = vmatpush2.msra.mxu0 0.0
        %6679 = vmatprep.subr.mxu0 0.0
        %6680 = vmatpush2.msra.mxu0 0.0
        %6681 = vmatprep.subr.mxu0 0.0
        %6682 = vmatpush2.msra.mxu0 0.0
        %6683 = vmatprep.subr.mxu0 0.0
        %6684 = vmatpush2.msra.mxu0 0.0
        %6685 = vmatprep.subr.mxu0 0.0
        %6686 = vmatpush2.msra.mxu0 0.0
        %6687 = vmatprep.subr.mxu0 0.0
        %6688 = vmatpush2.msra.mxu0 0.0
        %6689 = vmatprep.subr.mxu0 0.0
        %6690 = vmatpush2.msra.mxu0 0.0
        %6691 = vmatprep.subr.mxu0 0.0
        %6692 = vmatpush2.msra.mxu0 0.0
        %6693 = vmatprep.subr.mxu0 0.0
        %6694 = vmatpush2.msra.mxu0 0.0
        %6695 = vmatprep.subr.mxu0 0.0
        %6696 = vmatpush2.msra.mxu0 0.0
        %6697 = vmatprep.mubr.f32.mxu0 0.0
        %6698 = vmatmul.mubr.f32.gmra.mxu0 %v6631
        %v6699 = vpop.f32.mrf.mxu0
        %v6700 = vadd.f32 %v6627, %v6699
        %v6701 = vpop.f32.mrf.mxu0
        %6702 = vdwg.mxu0
        %v6703 = vld [vmem:[#allocation3 + $0xe] sm:$0xf]
        %v6704 = vld [vmem:[%s5 + $0x80] sm:$0xff]
        %v6705 = vld [vmem:[%s5 + $0x88] sm:$0xff]
        %v6706 = vld [vmem:[%s5 + $0x90] sm:$0xff]
        %v6707 = vld [vmem:[%s5 + $0x98] sm:$0xff]
        %v6708 = vld [vmem:[%s5 + $0xa0] sm:$0xff]
        %v6709 = vld [vmem:[%s5 + $0xa8] sm:$0xff]
        %v6710 = vld [vmem:[%s5 + $0xb0] sm:$0xff]
        %v6711 = vld [vmem:[%s5 + $0xb8] sm:$0xff]
        %v6713 = vsel %vm5042, %v6703, 0
        %6715 = vmatprep.subr.mxu0 0.0
        %6716 = vmatpush1.msra.mxu0 0.0
        %6717 = vmatprep.subr.mxu0 0.0
        %6718 = vmatpush1.msra.mxu0 0.0
        %6719 = vmatprep.subr.mxu0 0.0
        %6720 = vmatpush1.msra.mxu0 0.0
        %6721 = vmatprep.subr.mxu0 0.0
        %6722 = vmatpush1.msra.mxu0 0.0
        %6723 = vmatprep.subr.mxu0 0.0
        %6724 = vmatpush1.msra.mxu0 0.0
        %6725 = vmatprep.subr.mxu0 0.0
        %6726 = vmatpush1.msra.mxu0 0.0
        %6727 = vmatprep.subr.mxu0 0.0
        %6728 = vmatpush1.msra.mxu0 0.0
        %6729 = vmatprep.subr.mxu0 0.0
        %6730 = vmatpush1.msra.mxu0 0.0
        %6731 = vmatprep.subr.mxu0 0.0
        %6732 = vmatpush1.msra.mxu0 %v6711
        %6733 = vmatprep.subr.mxu0 0.0
        %6734 = vmatpush1.msra.mxu0 %v6710
        %6735 = vmatprep.subr.mxu0 0.0
        %6736 = vmatpush1.msra.mxu0 %v6709
        %6737 = vmatprep.subr.mxu0 0.0
        %6738 = vmatpush1.msra.mxu0 %v6708
        %6739 = vmatprep.subr.mxu0 0.0
        %6740 = vmatpush1.msra.mxu0 %v6707
        %6741 = vmatprep.subr.mxu0 0.0
        %6742 = vmatpush1.msra.mxu0 %v6706
        %6743 = vmatprep.subr.mxu0 0.0
        %6744 = vmatpush1.msra.mxu0 %v6705
        %6745 = vmatprep.subr.mxu0 0.0
        %6746 = vmatpush1.msra.mxu0 %v6704
        %6747 = vmatprep.subr.mxu0 0.0
        %6748 = vmatpush2.msra.mxu0 0.0
        %6749 = vmatprep.subr.mxu0 0.0
        %6750 = vmatpush2.msra.mxu0 0.0
        %6751 = vmatprep.subr.mxu0 0.0
        %6752 = vmatpush2.msra.mxu0 0.0
        %6753 = vmatprep.subr.mxu0 0.0
        %6754 = vmatpush2.msra.mxu0 0.0
        %6755 = vmatprep.subr.mxu0 0.0
        %6756 = vmatpush2.msra.mxu0 0.0
        %6757 = vmatprep.subr.mxu0 0.0
        %6758 = vmatpush2.msra.mxu0 0.0
        %6759 = vmatprep.subr.mxu0 0.0
        %6760 = vmatpush2.msra.mxu0 0.0
        %6761 = vmatprep.subr.mxu0 0.0
        %6762 = vmatpush2.msra.mxu0 0.0
        %6763 = vmatprep.subr.mxu0 0.0
        %6764 = vmatpush2.msra.mxu0 0.0
        %6765 = vmatprep.subr.mxu0 0.0
        %6766 = vmatpush2.msra.mxu0 0.0
        %6767 = vmatprep.subr.mxu0 0.0
        %6768 = vmatpush2.msra.mxu0 0.0
        %6769 = vmatprep.subr.mxu0 0.0
        %6770 = vmatpush2.msra.mxu0 0.0
        %6771 = vmatprep.subr.mxu0 0.0
        %6772 = vmatpush2.msra.mxu0 0.0
        %6773 = vmatprep.subr.mxu0 0.0
        %6774 = vmatpush2.msra.mxu0 0.0
        %6775 = vmatprep.subr.mxu0 0.0
        %6776 = vmatpush2.msra.mxu0 0.0
        %6777 = vmatprep.subr.mxu0 0.0
        %6778 = vmatpush2.msra.mxu0 0.0
        %6779 = vmatprep.mubr.f32.mxu0 0.0
        %6780 = vmatmul.mubr.f32.gmra.mxu0 %v6713
        %v6781 = vpop.f32.mrf.mxu0
        %v6782 = vadd.f32 0.0, %v6781
        %v6783 = vpop.f32.mrf.mxu0
        %6784 = vdwg.mxu0
        %v6785 = vadd.f32 %v6700, %v6782
        %v6786 = vld [vmem:[#allocation3 + $0x12] sm:$0xf]
        %v6787 = vld [vmem:[%s5 + $0xc0] sm:$0xff]
        %v6788 = vld [vmem:[%s5 + $0xc8] sm:$0xff]
        %v6789 = vld [vmem:[%s5 + $0xd0] sm:$0xff]
        %v6790 = vld [vmem:[%s5 + $0xd8] sm:$0xff]
        %v6791 = vld [vmem:[%s5 + $0xe0] sm:$0xff]
        %v6792 = vld [vmem:[%s5 + $0xe8] sm:$0xff]
        %v6793 = vld [vmem:[%s5 + $0xf0] sm:$0xff]
        %v6794 = vld [vmem:[%s5 + $0xf8] sm:$0xff]
        %v6796 = vsel %vm5042, %v6786, 0
        %6798 = vmatprep.subr.mxu0 0.0
        %6799 = vmatpush1.msra.mxu0 0.0
        %6800 = vmatprep.subr.mxu0 0.0
        %6801 = vmatpush1.msra.mxu0 0.0
        %6802 = vmatprep.subr.mxu0 0.0
        %6803 = vmatpush1.msra.mxu0 0.0
        %6804 = vmatprep.subr.mxu0 0.0
        %6805 = vmatpush1.msra.mxu0 0.0
        %6806 = vmatprep.subr.mxu0 0.0
        %6807 = vmatpush1.msra.mxu0 0.0
        %6808 = vmatprep.subr.mxu0 0.0
        %6809 = vmatpush1.msra.mxu0 0.0
        %6810 = vmatprep.subr.mxu0 0.0
        %6811 = vmatpush1.msra.mxu0 0.0
        %6812 = vmatprep.subr.mxu0 0.0
        %6813 = vmatpush1.msra.mxu0 0.0
        %6814 = vmatprep.subr.mxu0 0.0
        %6815 = vmatpush1.msra.mxu0 %v6794
        %6816 = vmatprep.subr.mxu0 0.0
        %6817 = vmatpush1.msra.mxu0 %v6793
        %6818 = vmatprep.subr.mxu0 0.0
        %6819 = vmatpush1.msra.mxu0 %v6792
        %6820 = vmatprep.subr.mxu0 0.0
        %6821 = vmatpush1.msra.mxu0 %v6791
        %6822 = vmatprep.subr.mxu0 0.0
        %6823 = vmatpush1.msra.mxu0 %v6790
        %6824 = vmatprep.subr.mxu0 0.0
        %6825 = vmatpush1.msra.mxu0 %v6789
        %6826 = vmatprep.subr.mxu0 0.0
        %6827 = vmatpush1.msra.mxu0 %v6788
        %6828 = vmatprep.subr.mxu0 0.0
        %6829 = vmatpush1.msra.mxu0 %v6787
        %6830 = vmatprep.subr.mxu0 0.0
        %6831 = vmatpush2.msra.mxu0 0.0
        %6832 = vmatprep.subr.mxu0 0.0
        %6833 = vmatpush2.msra.mxu0 0.0
        %6834 = vmatprep.subr.mxu0 0.0
        %6835 = vmatpush2.msra.mxu0 0.0
        %6836 = vmatprep.subr.mxu0 0.0
        %6837 = vmatpush2.msra.mxu0 0.0
        %6838 = vmatprep.subr.mxu0 0.0
        %6839 = vmatpush2.msra.mxu0 0.0
        %6840 = vmatprep.subr.mxu0 0.0
        %6841 = vmatpush2.msra.mxu0 0.0
        %6842 = vmatprep.subr.mxu0 0.0
        %6843 = vmatpush2.msra.mxu0 0.0
        %6844 = vmatprep.subr.mxu0 0.0
        %6845 = vmatpush2.msra.mxu0 0.0
        %6846 = vmatprep.subr.mxu0 0.0
        %6847 = vmatpush2.msra.mxu0 0.0
        %6848 = vmatprep.subr.mxu0 0.0
        %6849 = vmatpush2.msra.mxu0 0.0
        %6850 = vmatprep.subr.mxu0 0.0
        %6851 = vmatpush2.msra.mxu0 0.0
        %6852 = vmatprep.subr.mxu0 0.0
        %6853 = vmatpush2.msra.mxu0 0.0
        %6854 = vmatprep.subr.mxu0 0.0
        %6855 = vmatpush2.msra.mxu0 0.0
        %6856 = vmatprep.subr.mxu0 0.0
        %6857 = vmatpush2.msra.mxu0 0.0
        %6858 = vmatprep.subr.mxu0 0.0
        %6859 = vmatpush2.msra.mxu0 0.0
        %6860 = vmatprep.subr.mxu0 0.0
        %6861 = vmatpush2.msra.mxu0 0.0
        %6862 = vmatprep.mubr.f32.mxu0 0.0
        %6863 = vmatmul.mubr.f32.gmra.mxu0 %v6796
        %v6864 = vpop.f32.mrf.mxu0
        %v6865 = vadd.f32 0.0, %v6864
        %v6866 = vpop.f32.mrf.mxu0
        %6867 = vdwg.mxu0
        %v6868 = vadd.f32 %v6785, %v6865
        %v6869 = vld [vmem:[#allocation3 + $0x13] sm:$0xf]
        %v6870 = vld [vmem:[%s5 + $0x100] sm:$0xff]
        %v6871 = vld [vmem:[%s5 + $0x108] sm:$0xff]
        %v6872 = vld [vmem:[%s5 + $0x110] sm:$0xff]
        %v6873 = vld [vmem:[%s5 + $0x118] sm:$0xff]
        %v6874 = vld [vmem:[%s5 + $0x120] sm:$0xff]
        %v6875 = vld [vmem:[%s5 + $0x128] sm:$0xff]
        %v6876 = vld [vmem:[%s5 + $0x130] sm:$0xff]
        %v6877 = vld [vmem:[%s5 + $0x138] sm:$0xff]
        %v6879 = vsel %vm5042, %v6869, 0
        %6881 = vmatprep.subr.mxu0 0.0
        %6882 = vmatpush1.msra.mxu0 0.0
        %6883 = vmatprep.subr.mxu0 0.0
        %6884 = vmatpush1.msra.mxu0 0.0
        %6885 = vmatprep.subr.mxu0 0.0
        %6886 = vmatpush1.msra.mxu0 0.0
        %6887 = vmatprep.subr.mxu0 0.0
        %6888 = vmatpush1.msra.mxu0 0.0
        %6889 = vmatprep.subr.mxu0 0.0
        %6890 = vmatpush1.msra.mxu0 0.0
        %6891 = vmatprep.subr.mxu0 0.0
        %6892 = vmatpush1.msra.mxu0 0.0
        %6893 = vmatprep.subr.mxu0 0.0
        %6894 = vmatpush1.msra.mxu0 0.0
        %6895 = vmatprep.subr.mxu0 0.0
        %6896 = vmatpush1.msra.mxu0 0.0
        %6897 = vmatprep.subr.mxu0 0.0
        %6898 = vmatpush1.msra.mxu0 %v6877
        %6899 = vmatprep.subr.mxu0 0.0
        %6900 = vmatpush1.msra.mxu0 %v6876
        %6901 = vmatprep.subr.mxu0 0.0
        %6902 = vmatpush1.msra.mxu0 %v6875
        %6903 = vmatprep.subr.mxu0 0.0
        %6904 = vmatpush1.msra.mxu0 %v6874
        %6905 = vmatprep.subr.mxu0 0.0
        %6906 = vmatpush1.msra.mxu0 %v6873
        %6907 = vmatprep.subr.mxu0 0.0
        %6908 = vmatpush1.msra.mxu0 %v6872
        %6909 = vmatprep.subr.mxu0 0.0
        %6910 = vmatpush1.msra.mxu0 %v6871
        %6911 = vmatprep.subr.mxu0 0.0
        %6912 = vmatpush1.msra.mxu0 %v6870
        %6913 = vmatprep.subr.mxu0 0.0
        %6914 = vmatpush2.msra.mxu0 0.0
        %6915 = vmatprep.subr.mxu0 0.0
        %6916 = vmatpush2.msra.mxu0 0.0
        %6917 = vmatprep.subr.mxu0 0.0
        %6918 = vmatpush2.msra.mxu0 0.0
        %6919 = vmatprep.subr.mxu0 0.0
        %6920 = vmatpush2.msra.mxu0 0.0
        %6921 = vmatprep.subr.mxu0 0.0
        %6922 = vmatpush2.msra.mxu0 0.0
        %6923 = vmatprep.subr.mxu0 0.0
        %6924 = vmatpush2.msra.mxu0 0.0
        %6925 = vmatprep.subr.mxu0 0.0
        %6926 = vmatpush2.msra.mxu0 0.0
        %6927 = vmatprep.subr.mxu0 0.0
        %6928 = vmatpush2.msra.mxu0 0.0
        %6929 = vmatprep.subr.mxu0 0.0
        %6930 = vmatpush2.msra.mxu0 0.0
        %6931 = vmatprep.subr.mxu0 0.0
        %6932 = vmatpush2.msra.mxu0 0.0
        %6933 = vmatprep.subr.mxu0 0.0
        %6934 = vmatpush2.msra.mxu0 0.0
        %6935 = vmatprep.subr.mxu0 0.0
        %6936 = vmatpush2.msra.mxu0 0.0
        %6937 = vmatprep.subr.mxu0 0.0
        %6938 = vmatpush2.msra.mxu0 0.0
        %6939 = vmatprep.subr.mxu0 0.0
        %6940 = vmatpush2.msra.mxu0 0.0
        %6941 = vmatprep.subr.mxu0 0.0
        %6942 = vmatpush2.msra.mxu0 0.0
        %6943 = vmatprep.subr.mxu0 0.0
        %6944 = vmatpush2.msra.mxu0 0.0
        %6945 = vmatprep.mubr.f32.mxu0 0.0
        %6946 = vmatmul.mubr.f32.gmra.mxu0 %v6879
        %v6947 = vpop.f32.mrf.mxu0
        %v6948 = vadd.f32 0.0, %v6947
        %v6949 = vpop.f32.mrf.mxu0
        %6950 = vdwg.mxu0
        %v6951 = vadd.f32 %v6868, %v6948
        %v6952 = vld [vmem:[#allocation3 + $0x14] sm:$0xf]
        %v6953 = vld [vmem:[%s5 + $0x140] sm:$0xff]
        %v6954 = vld [vmem:[%s5 + $0x148] sm:$0xff]
        %v6955 = vld [vmem:[%s5 + $0x150] sm:$0xff]
        %v6956 = vld [vmem:[%s5 + $0x158] sm:$0xff]
        %v6957 = vld [vmem:[%s5 + $0x160] sm:$0xff]
        %v6958 = vld [vmem:[%s5 + $0x168] sm:$0xff]
        %v6959 = vld [vmem:[%s5 + $0x170] sm:$0xff]
        %v6960 = vld [vmem:[%s5 + $0x178] sm:$0xff]
        %v6962 = vsel %vm5042, %v6952, 0
        %6964 = vmatprep.subr.mxu0 0.0
        %6965 = vmatpush1.msra.mxu0 0.0
        %6966 = vmatprep.subr.mxu0 0.0
        %6967 = vmatpush1.msra.mxu0 0.0
        %6968 = vmatprep.subr.mxu0 0.0
        %6969 = vmatpush1.msra.mxu0 0.0
        %6970 = vmatprep.subr.mxu0 0.0
        %6971 = vmatpush1.msra.mxu0 0.0
        %6972 = vmatprep.subr.mxu0 0.0
        %6973 = vmatpush1.msra.mxu0 0.0
        %6974 = vmatprep.subr.mxu0 0.0
        %6975 = vmatpush1.msra.mxu0 0.0
        %6976 = vmatprep.subr.mxu0 0.0
        %6977 = vmatpush1.msra.mxu0 0.0
        %6978 = vmatprep.subr.mxu0 0.0
        %6979 = vmatpush1.msra.mxu0 0.0
        %6980 = vmatprep.subr.mxu0 0.0
        %6981 = vmatpush1.msra.mxu0 %v6960
        %6982 = vmatprep.subr.mxu0 0.0
        %6983 = vmatpush1.msra.mxu0 %v6959
        %6984 = vmatprep.subr.mxu0 0.0
        %6985 = vmatpush1.msra.mxu0 %v6958
        %6986 = vmatprep.subr.mxu0 0.0
        %6987 = vmatpush1.msra.mxu0 %v6957
        %6988 = vmatprep.subr.mxu0 0.0
        %6989 = vmatpush1.msra.mxu0 %v6956
        %6990 = vmatprep.subr.mxu0 0.0
        %6991 = vmatpush1.msra.mxu0 %v6955
        %6992 = vmatprep.subr.mxu0 0.0
        %6993 = vmatpush1.msra.mxu0 %v6954
        %6994 = vmatprep.subr.mxu0 0.0
        %6995 = vmatpush1.msra.mxu0 %v6953
        %6996 = vmatprep.subr.mxu0 0.0
        %6997 = vmatpush2.msra.mxu0 0.0
        %6998 = vmatprep.subr.mxu0 0.0
        %6999 = vmatpush2.msra.mxu0 0.0
        %7000 = vmatprep.subr.mxu0 0.0
        %7001 = vmatpush2.msra.mxu0 0.0
        %7002 = vmatprep.subr.mxu0 0.0
        %7003 = vmatpush2.msra.mxu0 0.0
        %7004 = vmatprep.subr.mxu0 0.0
        %7005 = vmatpush2.msra.mxu0 0.0
        %7006 = vmatprep.subr.mxu0 0.0
        %7007 = vmatpush2.msra.mxu0 0.0
        %7008 = vmatprep.subr.mxu0 0.0
        %7009 = vmatpush2.msra.mxu0 0.0
        %7010 = vmatprep.subr.mxu0 0.0
        %7011 = vmatpush2.msra.mxu0 0.0
        %7012 = vmatprep.subr.mxu0 0.0
        %7013 = vmatpush2.msra.mxu0 0.0
        %7014 = vmatprep.subr.mxu0 0.0
        %7015 = vmatpush2.msra.mxu0 0.0
        %7016 = vmatprep.subr.mxu0 0.0
        %7017 = vmatpush2.msra.mxu0 0.0
        %7018 = vmatprep.subr.mxu0 0.0
        %7019 = vmatpush2.msra.mxu0 0.0
        %7020 = vmatprep.subr.mxu0 0.0
        %7021 = vmatpush2.msra.mxu0 0.0
        %7022 = vmatprep.subr.mxu0 0.0
        %7023 = vmatpush2.msra.mxu0 0.0
        %7024 = vmatprep.subr.mxu0 0.0
        %7025 = vmatpush2.msra.mxu0 0.0
        %7026 = vmatprep.subr.mxu0 0.0
        %7027 = vmatpush2.msra.mxu0 0.0
        %7028 = vmatprep.mubr.f32.mxu0 0.0
        %7029 = vmatmul.mubr.f32.gmra.mxu0 %v6962
        %v7030 = vpop.f32.mrf.mxu0
        %v7031 = vadd.f32 0.0, %v7030
        %v7032 = vpop.f32.mrf.mxu0
        %7033 = vdwg.mxu0
        %v7034 = vadd.f32 %v6951, %v7031
        %v7035 = vld [vmem:[#allocation3 + $0x18] sm:$0xf]
        %v7036 = vld [vmem:[%s5 + $0x180] sm:$0xff]
        %v7037 = vld [vmem:[%s5 + $0x188] sm:$0xff]
        %v7038 = vld [vmem:[%s5 + $0x190] sm:$0xff]
        %v7039 = vld [vmem:[%s5 + $0x198] sm:$0xff]
        %v7040 = vld [vmem:[%s5 + $0x1a0] sm:$0xff]
        %v7041 = vld [vmem:[%s5 + $0x1a8] sm:$0xff]
        %v7042 = vld [vmem:[%s5 + $0x1b0] sm:$0xff]
        %v7043 = vld [vmem:[%s5 + $0x1b8] sm:$0xff]
        %v7045 = vsel %vm5042, %v7035, 0
        %7047 = vmatprep.subr.mxu0 0.0
        %7048 = vmatpush1.msra.mxu0 0.0
        %7049 = vmatprep.subr.mxu0 0.0
        %7050 = vmatpush1.msra.mxu0 0.0
        %7051 = vmatprep.subr.mxu0 0.0
        %7052 = vmatpush1.msra.mxu0 0.0
        %7053 = vmatprep.subr.mxu0 0.0
        %7054 = vmatpush1.msra.mxu0 0.0
        %7055 = vmatprep.subr.mxu0 0.0
        %7056 = vmatpush1.msra.mxu0 0.0
        %7057 = vmatprep.subr.mxu0 0.0
        %7058 = vmatpush1.msra.mxu0 0.0
        %7059 = vmatprep.subr.mxu0 0.0
        %7060 = vmatpush1.msra.mxu0 0.0
        %7061 = vmatprep.subr.mxu0 0.0
        %7062 = vmatpush1.msra.mxu0 0.0
        %7063 = vmatprep.subr.mxu0 0.0
        %7064 = vmatpush1.msra.mxu0 %v7043
        %7065 = vmatprep.subr.mxu0 0.0
        %7066 = vmatpush1.msra.mxu0 %v7042
        %7067 = vmatprep.subr.mxu0 0.0
        %7068 = vmatpush1.msra.mxu0 %v7041
        %7069 = vmatprep.subr.mxu0 0.0
        %7070 = vmatpush1.msra.mxu0 %v7040
        %7071 = vmatprep.subr.mxu0 0.0
        %7072 = vmatpush1.msra.mxu0 %v7039
        %7073 = vmatprep.subr.mxu0 0.0
        %7074 = vmatpush1.msra.mxu0 %v7038
        %7075 = vmatprep.subr.mxu0 0.0
        %7076 = vmatpush1.msra.mxu0 %v7037
        %7077 = vmatprep.subr.mxu0 0.0
        %7078 = vmatpush1.msra.mxu0 %v7036
        %7079 = vmatprep.subr.mxu0 0.0
        %7080 = vmatpush2.msra.mxu0 0.0
        %7081 = vmatprep.subr.mxu0 0.0
        %7082 = vmatpush2.msra.mxu0 0.0
        %7083 = vmatprep.subr.mxu0 0.0
        %7084 = vmatpush2.msra.mxu0 0.0
        %7085 = vmatprep.subr.mxu0 0.0
        %7086 = vmatpush2.msra.mxu0 0.0
        %7087 = vmatprep.subr.mxu0 0.0
        %7088 = vmatpush2.msra.mxu0 0.0
        %7089 = vmatprep.subr.mxu0 0.0
        %7090 = vmatpush2.msra.mxu0 0.0
        %7091 = vmatprep.subr.mxu0 0.0
        %7092 = vmatpush2.msra.mxu0 0.0
        %7093 = vmatprep.subr.mxu0 0.0
        %7094 = vmatpush2.msra.mxu0 0.0
        %7095 = vmatprep.subr.mxu0 0.0
        %7096 = vmatpush2.msra.mxu0 0.0
        %7097 = vmatprep.subr.mxu0 0.0
        %7098 = vmatpush2.msra.mxu0 0.0
        %7099 = vmatprep.subr.mxu0 0.0
        %7100 = vmatpush2.msra.mxu0 0.0
        %7101 = vmatprep.subr.mxu0 0.0
        %7102 = vmatpush2.msra.mxu0 0.0
        %7103 = vmatprep.subr.mxu0 0.0
        %7104 = vmatpush2.msra.mxu0 0.0
        %7105 = vmatprep.subr.mxu0 0.0
        %7106 = vmatpush2.msra.mxu0 0.0
        %7107 = vmatprep.subr.mxu0 0.0
        %7108 = vmatpush2.msra.mxu0 0.0
        %7109 = vmatprep.subr.mxu0 0.0
        %7110 = vmatpush2.msra.mxu0 0.0
        %7111 = vmatprep.mubr.f32.mxu0 0.0
        %7112 = vmatmul.mubr.f32.gmra.mxu0 %v7045
        %v7113 = vpop.f32.mrf.mxu0
        %v7114 = vadd.f32 0.0, %v7113
        %v7115 = vpop.f32.mrf.mxu0
        %7116 = vdwg.mxu0
        %v7117 = vadd.f32 %v7034, %v7114
        %v7118 = vld [vmem:[#allocation3 + $0x19] sm:$0xf]
        %v7119 = vld [vmem:[%s5 + $0x1c0] sm:$0xff]
        %v7120 = vld [vmem:[%s5 + $0x1c8] sm:$0xff]
        %v7121 = vld [vmem:[%s5 + $0x1d0] sm:$0xff]
        %v7122 = vld [vmem:[%s5 + $0x1d8] sm:$0xff]
        %v7123 = vld [vmem:[%s5 + $0x1e0] sm:$0xff]
        %v7124 = vld [vmem:[%s5 + $0x1e8] sm:$0xff]
        %v7125 = vld [vmem:[%s5 + $0x1f0] sm:$0xff]
        %v7126 = vld [vmem:[%s5 + $0x1f8] sm:$0xff]
        %v7128 = vsel %vm5042, %v7118, 0
        %7130 = vmatprep.subr.mxu0 0.0
        %7131 = vmatpush1.msra.mxu0 0.0
        %7132 = vmatprep.subr.mxu0 0.0
        %7133 = vmatpush1.msra.mxu0 0.0
        %7134 = vmatprep.subr.mxu0 0.0
        %7135 = vmatpush1.msra.mxu0 0.0
        %7136 = vmatprep.subr.mxu0 0.0
        %7137 = vmatpush1.msra.mxu0 0.0
        %7138 = vmatprep.subr.mxu0 0.0
        %7139 = vmatpush1.msra.mxu0 0.0
        %7140 = vmatprep.subr.mxu0 0.0
        %7141 = vmatpush1.msra.mxu0 0.0
        %7142 = vmatprep.subr.mxu0 0.0
        %7143 = vmatpush1.msra.mxu0 0.0
        %7144 = vmatprep.subr.mxu0 0.0
        %7145 = vmatpush1.msra.mxu0 0.0
        %7146 = vmatprep.subr.mxu0 0.0
        %7147 = vmatpush1.msra.mxu0 %v7126
        %7148 = vmatprep.subr.mxu0 0.0
        %7149 = vmatpush1.msra.mxu0 %v7125
        %7150 = vmatprep.subr.mxu0 0.0
        %7151 = vmatpush1.msra.mxu0 %v7124
        %7152 = vmatprep.subr.mxu0 0.0
        %7153 = vmatpush1.msra.mxu0 %v7123
        %7154 = vmatprep.subr.mxu0 0.0
        %7155 = vmatpush1.msra.mxu0 %v7122
        %7156 = vmatprep.subr.mxu0 0.0
        %7157 = vmatpush1.msra.mxu0 %v7121
        %7158 = vmatprep.subr.mxu0 0.0
        %7159 = vmatpush1.msra.mxu0 %v7120
        %7160 = vmatprep.subr.mxu0 0.0
        %7161 = vmatpush1.msra.mxu0 %v7119
        %7162 = vmatprep.subr.mxu0 0.0
        %7163 = vmatpush2.msra.mxu0 0.0
        %7164 = vmatprep.subr.mxu0 0.0
        %7165 = vmatpush2.msra.mxu0 0.0
        %7166 = vmatprep.subr.mxu0 0.0
        %7167 = vmatpush2.msra.mxu0 0.0
        %7168 = vmatprep.subr.mxu0 0.0
        %7169 = vmatpush2.msra.mxu0 0.0
        %7170 = vmatprep.subr.mxu0 0.0
        %7171 = vmatpush2.msra.mxu0 0.0
        %7172 = vmatprep.subr.mxu0 0.0
        %7173 = vmatpush2.msra.mxu0 0.0
        %7174 = vmatprep.subr.mxu0 0.0
        %7175 = vmatpush2.msra.mxu0 0.0
        %7176 = vmatprep.subr.mxu0 0.0
        %7177 = vmatpush2.msra.mxu0 0.0
        %7178 = vmatprep.subr.mxu0 0.0
        %7179 = vmatpush2.msra.mxu0 0.0
        %7180 = vmatprep.subr.mxu0 0.0
        %7181 = vmatpush2.msra.mxu0 0.0
        %7182 = vmatprep.subr.mxu0 0.0
        %7183 = vmatpush2.msra.mxu0 0.0
        %7184 = vmatprep.subr.mxu0 0.0
        %7185 = vmatpush2.msra.mxu0 0.0
        %7186 = vmatprep.subr.mxu0 0.0
        %7187 = vmatpush2.msra.mxu0 0.0
        %7188 = vmatprep.subr.mxu0 0.0
        %7189 = vmatpush2.msra.mxu0 0.0
        %7190 = vmatprep.subr.mxu0 0.0
        %7191 = vmatpush2.msra.mxu0 0.0
        %7192 = vmatprep.subr.mxu0 0.0
        %7193 = vmatpush2.msra.mxu0 0.0
        %7194 = vmatprep.mubr.f32.mxu0 0.0
        %7195 = vmatmul.mubr.f32.gmra.mxu0 %v7128
        %v7196 = vpop.f32.mrf.mxu0
        %v7197 = vadd.f32 0.0, %v7196
        %v7198 = vpop.f32.mrf.mxu0
        %7199 = vdwg.mxu0
        %v7200 = vadd.f32 %v7117, %v7197
        %v7201 = vld [vmem:[#allocation3 + $0x1a] sm:$0xf]
        %v7202 = vld [vmem:[%s5 + $0x200] sm:$0xff]
        %v7203 = vld [vmem:[%s5 + $0x208] sm:$0xff]
        %v7204 = vld [vmem:[%s5 + $0x210] sm:$0xff]
        %v7205 = vld [vmem:[%s5 + $0x218] sm:$0xff]
        %v7206 = vld [vmem:[%s5 + $0x220] sm:$0xff]
        %v7207 = vld [vmem:[%s5 + $0x228] sm:$0xff]
        %v7208 = vld [vmem:[%s5 + $0x230] sm:$0xff]
        %v7209 = vld [vmem:[%s5 + $0x238] sm:$0xff]
        %v7211 = vsel %vm5042, %v7201, 0
        %7213 = vmatprep.subr.mxu0 0.0
        %7214 = vmatpush1.msra.mxu0 0.0
        %7215 = vmatprep.subr.mxu0 0.0
        %7216 = vmatpush1.msra.mxu0 0.0
        %7217 = vmatprep.subr.mxu0 0.0
        %7218 = vmatpush1.msra.mxu0 0.0
        %7219 = vmatprep.subr.mxu0 0.0
        %7220 = vmatpush1.msra.mxu0 0.0
        %7221 = vmatprep.subr.mxu0 0.0
        %7222 = vmatpush1.msra.mxu0 0.0
        %7223 = vmatprep.subr.mxu0 0.0
        %7224 = vmatpush1.msra.mxu0 0.0
        %7225 = vmatprep.subr.mxu0 0.0
        %7226 = vmatpush1.msra.mxu0 0.0
        %7227 = vmatprep.subr.mxu0 0.0
        %7228 = vmatpush1.msra.mxu0 0.0
        %7229 = vmatprep.subr.mxu0 0.0
        %7230 = vmatpush1.msra.mxu0 %v7209
        %7231 = vmatprep.subr.mxu0 0.0
        %7232 = vmatpush1.msra.mxu0 %v7208
        %7233 = vmatprep.subr.mxu0 0.0
        %7234 = vmatpush1.msra.mxu0 %v7207
        %7235 = vmatprep.subr.mxu0 0.0
        %7236 = vmatpush1.msra.mxu0 %v7206
        %7237 = vmatprep.subr.mxu0 0.0
        %7238 = vmatpush1.msra.mxu0 %v7205
        %7239 = vmatprep.subr.mxu0 0.0
        %7240 = vmatpush1.msra.mxu0 %v7204
        %7241 = vmatprep.subr.mxu0 0.0
        %7242 = vmatpush1.msra.mxu0 %v7203
        %7243 = vmatprep.subr.mxu0 0.0
        %7244 = vmatpush1.msra.mxu0 %v7202
        %7245 = vmatprep.subr.mxu0 0.0
        %7246 = vmatpush2.msra.mxu0 0.0
        %7247 = vmatprep.subr.mxu0 0.0
        %7248 = vmatpush2.msra.mxu0 0.0
        %7249 = vmatprep.subr.mxu0 0.0
        %7250 = vmatpush2.msra.mxu0 0.0
        %7251 = vmatprep.subr.mxu0 0.0
        %7252 = vmatpush2.msra.mxu0 0.0
        %7253 = vmatprep.subr.mxu0 0.0
        %7254 = vmatpush2.msra.mxu0 0.0
        %7255 = vmatprep.subr.mxu0 0.0
        %7256 = vmatpush2.msra.mxu0 0.0
        %7257 = vmatprep.subr.mxu0 0.0
        %7258 = vmatpush2.msra.mxu0 0.0
        %7259 = vmatprep.subr.mxu0 0.0
        %7260 = vmatpush2.msra.mxu0 0.0
        %7261 = vmatprep.subr.mxu0 0.0
        %7262 = vmatpush2.msra.mxu0 0.0
        %7263 = vmatprep.subr.mxu0 0.0
        %7264 = vmatpush2.msra.mxu0 0.0
        %7265 = vmatprep.subr.mxu0 0.0
        %7266 = vmatpush2.msra.mxu0 0.0
        %7267 = vmatprep.subr.mxu0 0.0
        %7268 = vmatpush2.msra.mxu0 0.0
        %7269 = vmatprep.subr.mxu0 0.0
        %7270 = vmatpush2.msra.mxu0 0.0
        %7271 = vmatprep.subr.mxu0 0.0
        %7272 = vmatpush2.msra.mxu0 0.0
        %7273 = vmatprep.subr.mxu0 0.0
        %7274 = vmatpush2.msra.mxu0 0.0
        %7275 = vmatprep.subr.mxu0 0.0
        %7276 = vmatpush2.msra.mxu0 0.0
        %7277 = vmatprep.mubr.f32.mxu0 0.0
        %7278 = vmatmul.mubr.f32.gmra.mxu0 %v7211
        %v7279 = vpop.f32.mrf.mxu0
        %v7280 = vadd.f32 0.0, %v7279
        %v7281 = vpop.f32.mrf.mxu0
        %7282 = vdwg.mxu0
        %v7283 = vadd.f32 %v7200, %v7280
        %v7284 = vld [vmem:[%s6] sm:$0x1]
        %v7286 = vlaneseq
        %v7287 = vshrl.u32 %v7286, 7
        %v7288 = vsub.s32 0, %v7287
        %v7289 = vrot.slane %v7284, %v7288
        %v7291 = vadd.f32 %v7283, %v7289
        %vm7292 = vcmp.gt.f32.partialorder %v7291, 0.0
        %v7293 = vmul.f32 %v7291, 0.01
        %v7294 = vsel %vm7292, %v7291, %v7293
        %7295 = vst [vmem:[#allocation4 + $0x8] sm:$0xf] %v7294
        %v7296 = vld [vmem:[#allocation3 + $0x12] sm:$0xf]
        %v7297 = vld [vmem:[%s5] sm:$0xff]
        %v7298 = vld [vmem:[%s5 + $0x8] sm:$0xff]
        %v7299 = vld [vmem:[%s5 + $0x10] sm:$0xff]
        %v7300 = vld [vmem:[%s5 + $0x18] sm:$0xff]
        %v7301 = vld [vmem:[%s5 + $0x20] sm:$0xff]
        %v7302 = vld [vmem:[%s5 + $0x28] sm:$0xff]
        %v7303 = vld [vmem:[%s5 + $0x30] sm:$0xff]
        %v7304 = vld [vmem:[%s5 + $0x38] sm:$0xff]
        %v7305 = vld [vmem:[#allocation3 + $0x13] sm:$0xf]
        %v7306 = vld [vmem:[%s5 + $0x40] sm:$0xff]
        %v7307 = vld [vmem:[%s5 + $0x48] sm:$0xff]
        %v7308 = vld [vmem:[%s5 + $0x50] sm:$0xff]
        %v7309 = vld [vmem:[%s5 + $0x58] sm:$0xff]
        %v7310 = vld [vmem:[%s5 + $0x60] sm:$0xff]
        %v7311 = vld [vmem:[%s5 + $0x68] sm:$0xff]
        %v7312 = vld [vmem:[%s5 + $0x70] sm:$0xff]
        %v7313 = vld [vmem:[%s5 + $0x78] sm:$0xff]
        %v7315 = vsel %vm5042, %v7305, 0
        %7317 = vmatprep.subr.mxu0 0.0
        %7318 = vmatpush1.msra.mxu0 0.0
        %7319 = vmatprep.subr.mxu0 0.0
        %7320 = vmatpush1.msra.mxu0 0.0
        %7321 = vmatprep.subr.mxu0 0.0
        %7322 = vmatpush1.msra.mxu0 0.0
        %7323 = vmatprep.subr.mxu0 0.0
        %7324 = vmatpush1.msra.mxu0 0.0
        %7325 = vmatprep.subr.mxu0 0.0
        %7326 = vmatpush1.msra.mxu0 0.0
        %7327 = vmatprep.subr.mxu0 0.0
        %7328 = vmatpush1.msra.mxu0 0.0
        %7329 = vmatprep.subr.mxu0 0.0
        %7330 = vmatpush1.msra.mxu0 0.0
        %7331 = vmatprep.subr.mxu0 0.0
        %7332 = vmatpush1.msra.mxu0 0.0
        %7333 = vmatprep.subr.mxu0 0.0
        %7334 = vmatpush1.msra.mxu0 %v7313
        %7335 = vmatprep.subr.mxu0 0.0
        %7336 = vmatpush1.msra.mxu0 %v7312
        %7337 = vmatprep.subr.mxu0 0.0
        %7338 = vmatpush1.msra.mxu0 %v7311
        %7339 = vmatprep.subr.mxu0 0.0
        %7340 = vmatpush1.msra.mxu0 %v7310
        %7341 = vmatprep.subr.mxu0 0.0
        %7342 = vmatpush1.msra.mxu0 %v7309
        %7343 = vmatprep.subr.mxu0 0.0
        %7344 = vmatpush1.msra.mxu0 %v7308
        %7345 = vmatprep.subr.mxu0 0.0
        %7346 = vmatpush1.msra.mxu0 %v7307
        %7347 = vmatprep.subr.mxu0 0.0
        %7348 = vmatpush1.msra.mxu0 %v7306
        %7349 = vmatprep.subr.mxu0 0.0
        %7350 = vmatpush2.msra.mxu0 0.0
        %7351 = vmatprep.subr.mxu0 0.0
        %7352 = vmatpush2.msra.mxu0 0.0
        %7353 = vmatprep.subr.mxu0 0.0
        %7354 = vmatpush2.msra.mxu0 0.0
        %7355 = vmatprep.subr.mxu0 0.0
        %7356 = vmatpush2.msra.mxu0 0.0
        %7357 = vmatprep.subr.mxu0 0.0
        %7358 = vmatpush2.msra.mxu0 0.0
        %7359 = vmatprep.subr.mxu0 0.0
        %7360 = vmatpush2.msra.mxu0 0.0
        %7361 = vmatprep.subr.mxu0 0.0
        %7362 = vmatpush2.msra.mxu0 0.0
        %7363 = vmatprep.subr.mxu0 0.0
        %7364 = vmatpush2.msra.mxu0 0.0
        %7365 = vmatprep.subr.mxu0 0.0
        %7366 = vmatpush2.msra.mxu0 0.0
        %7367 = vmatprep.subr.mxu0 0.0
        %7368 = vmatpush2.msra.mxu0 0.0
        %7369 = vmatprep.subr.mxu0 0.0
        %7370 = vmatpush2.msra.mxu0 0.0
        %7371 = vmatprep.subr.mxu0 0.0
        %7372 = vmatpush2.msra.mxu0 0.0
        %7373 = vmatprep.subr.mxu0 0.0
        %7374 = vmatpush2.msra.mxu0 0.0
        %7375 = vmatprep.subr.mxu0 0.0
        %7376 = vmatpush2.msra.mxu0 0.0
        %7377 = vmatprep.subr.mxu0 0.0
        %7378 = vmatpush2.msra.mxu0 0.0
        %7379 = vmatprep.subr.mxu0 0.0
        %7380 = vmatpush2.msra.mxu0 0.0
        %7381 = vmatprep.mubr.f32.mxu0 0.0
        %7382 = vmatmul.mubr.f32.gmra.mxu0 %v7315
        %v7383 = vpop.f32.mrf.mxu0
        %v7384 = vadd.f32 0.0, %v7383
        %v7385 = vpop.f32.mrf.mxu0
        %7386 = vdwg.mxu0
        %v7388 = vsel %vm5042, %v7296, 0
        %7390 = vmatprep.subr.mxu0 0.0
        %7391 = vmatpush1.msra.mxu0 0.0
        %7392 = vmatprep.subr.mxu0 0.0
        %7393 = vmatpush1.msra.mxu0 0.0
        %7394 = vmatprep.subr.mxu0 0.0
        %7395 = vmatpush1.msra.mxu0 0.0
        %7396 = vmatprep.subr.mxu0 0.0
        %7397 = vmatpush1.msra.mxu0 0.0
        %7398 = vmatprep.subr.mxu0 0.0
        %7399 = vmatpush1.msra.mxu0 0.0
        %7400 = vmatprep.subr.mxu0 0.0
        %7401 = vmatpush1.msra.mxu0 0.0
        %7402 = vmatprep.subr.mxu0 0.0
        %7403 = vmatpush1.msra.mxu0 0.0
        %7404 = vmatprep.subr.mxu0 0.0
        %7405 = vmatpush1.msra.mxu0 0.0
        %7406 = vmatprep.subr.mxu0 0.0
        %7407 = vmatpush1.msra.mxu0 %v7304
        %7408 = vmatprep.subr.mxu0 0.0
        %7409 = vmatpush1.msra.mxu0 %v7303
        %7410 = vmatprep.subr.mxu0 0.0
        %7411 = vmatpush1.msra.mxu0 %v7302
        %7412 = vmatprep.subr.mxu0 0.0
        %7413 = vmatpush1.msra.mxu0 %v7301
        %7414 = vmatprep.subr.mxu0 0.0
        %7415 = vmatpush1.msra.mxu0 %v7300
        %7416 = vmatprep.subr.mxu0 0.0
        %7417 = vmatpush1.msra.mxu0 %v7299
        %7418 = vmatprep.subr.mxu0 0.0
        %7419 = vmatpush1.msra.mxu0 %v7298
        %7420 = vmatprep.subr.mxu0 0.0
        %7421 = vmatpush1.msra.mxu0 %v7297
        %7422 = vmatprep.subr.mxu0 0.0
        %7423 = vmatpush2.msra.mxu0 0.0
        %7424 = vmatprep.subr.mxu0 0.0
        %7425 = vmatpush2.msra.mxu0 0.0
        %7426 = vmatprep.subr.mxu0 0.0
        %7427 = vmatpush2.msra.mxu0 0.0
        %7428 = vmatprep.subr.mxu0 0.0
        %7429 = vmatpush2.msra.mxu0 0.0
        %7430 = vmatprep.subr.mxu0 0.0
        %7431 = vmatpush2.msra.mxu0 0.0
        %7432 = vmatprep.subr.mxu0 0.0
        %7433 = vmatpush2.msra.mxu0 0.0
        %7434 = vmatprep.subr.mxu0 0.0
        %7435 = vmatpush2.msra.mxu0 0.0
        %7436 = vmatprep.subr.mxu0 0.0
        %7437 = vmatpush2.msra.mxu0 0.0
        %7438 = vmatprep.subr.mxu0 0.0
        %7439 = vmatpush2.msra.mxu0 0.0
        %7440 = vmatprep.subr.mxu0 0.0
        %7441 = vmatpush2.msra.mxu0 0.0
        %7442 = vmatprep.subr.mxu0 0.0
        %7443 = vmatpush2.msra.mxu0 0.0
        %7444 = vmatprep.subr.mxu0 0.0
        %7445 = vmatpush2.msra.mxu0 0.0
        %7446 = vmatprep.subr.mxu0 0.0
        %7447 = vmatpush2.msra.mxu0 0.0
        %7448 = vmatprep.subr.mxu0 0.0
        %7449 = vmatpush2.msra.mxu0 0.0
        %7450 = vmatprep.subr.mxu0 0.0
        %7451 = vmatpush2.msra.mxu0 0.0
        %7452 = vmatprep.subr.mxu0 0.0
        %7453 = vmatpush2.msra.mxu0 0.0
        %7454 = vmatprep.mubr.f32.mxu0 0.0
        %7455 = vmatmul.mubr.f32.gmra.mxu0 %v7388
        %v7456 = vpop.f32.mrf.mxu0
        %v7457 = vadd.f32 %v7384, %v7456
        %v7458 = vpop.f32.mrf.mxu0
        %7459 = vdwg.mxu0
        %v7460 = vld [vmem:[#allocation3 + $0x14] sm:$0xf]
        %v7461 = vld [vmem:[%s5 + $0x80] sm:$0xff]
        %v7462 = vld [vmem:[%s5 + $0x88] sm:$0xff]
        %v7463 = vld [vmem:[%s5 + $0x90] sm:$0xff]
        %v7464 = vld [vmem:[%s5 + $0x98] sm:$0xff]
        %v7465 = vld [vmem:[%s5 + $0xa0] sm:$0xff]
        %v7466 = vld [vmem:[%s5 + $0xa8] sm:$0xff]
        %v7467 = vld [vmem:[%s5 + $0xb0] sm:$0xff]
        %v7468 = vld [vmem:[%s5 + $0xb8] sm:$0xff]
        %v7470 = vsel %vm5042, %v7460, 0
        %7472 = vmatprep.subr.mxu0 0.0
        %7473 = vmatpush1.msra.mxu0 0.0
        %7474 = vmatprep.subr.mxu0 0.0
        %7475 = vmatpush1.msra.mxu0 0.0
        %7476 = vmatprep.subr.mxu0 0.0
        %7477 = vmatpush1.msra.mxu0 0.0
        %7478 = vmatprep.subr.mxu0 0.0
        %7479 = vmatpush1.msra.mxu0 0.0
        %7480 = vmatprep.subr.mxu0 0.0
        %7481 = vmatpush1.msra.mxu0 0.0
        %7482 = vmatprep.subr.mxu0 0.0
        %7483 = vmatpush1.msra.mxu0 0.0
        %7484 = vmatprep.subr.mxu0 0.0
        %7485 = vmatpush1.msra.mxu0 0.0
        %7486 = vmatprep.subr.mxu0 0.0
        %7487 = vmatpush1.msra.mxu0 0.0
        %7488 = vmatprep.subr.mxu0 0.0
        %7489 = vmatpush1.msra.mxu0 %v7468
        %7490 = vmatprep.subr.mxu0 0.0
        %7491 = vmatpush1.msra.mxu0 %v7467
        %7492 = vmatprep.subr.mxu0 0.0
        %7493 = vmatpush1.msra.mxu0 %v7466
        %7494 = vmatprep.subr.mxu0 0.0
        %7495 = vmatpush1.msra.mxu0 %v7465
        %7496 = vmatprep.subr.mxu0 0.0
        %7497 = vmatpush1.msra.mxu0 %v7464
        %7498 = vmatprep.subr.mxu0 0.0
        %7499 = vmatpush1.msra.mxu0 %v7463
        %7500 = vmatprep.subr.mxu0 0.0
        %7501 = vmatpush1.msra.mxu0 %v7462
        %7502 = vmatprep.subr.mxu0 0.0
        %7503 = vmatpush1.msra.mxu0 %v7461
        %7504 = vmatprep.subr.mxu0 0.0
        %7505 = vmatpush2.msra.mxu0 0.0
        %7506 = vmatprep.subr.mxu0 0.0
        %7507 = vmatpush2.msra.mxu0 0.0
        %7508 = vmatprep.subr.mxu0 0.0
        %7509 = vmatpush2.msra.mxu0 0.0
        %7510 = vmatprep.subr.mxu0 0.0
        %7511 = vmatpush2.msra.mxu0 0.0
        %7512 = vmatprep.subr.mxu0 0.0
        %7513 = vmatpush2.msra.mxu0 0.0
        %7514 = vmatprep.subr.mxu0 0.0
        %7515 = vmatpush2.msra.mxu0 0.0
        %7516 = vmatprep.subr.mxu0 0.0
        %7517 = vmatpush2.msra.mxu0 0.0
        %7518 = vmatprep.subr.mxu0 0.0
        %7519 = vmatpush2.msra.mxu0 0.0
        %7520 = vmatprep.subr.mxu0 0.0
        %7521 = vmatpush2.msra.mxu0 0.0
        %7522 = vmatprep.subr.mxu0 0.0
        %7523 = vmatpush2.msra.mxu0 0.0
        %7524 = vmatprep.subr.mxu0 0.0
        %7525 = vmatpush2.msra.mxu0 0.0
        %7526 = vmatprep.subr.mxu0 0.0
        %7527 = vmatpush2.msra.mxu0 0.0
        %7528 = vmatprep.subr.mxu0 0.0
        %7529 = vmatpush2.msra.mxu0 0.0
        %7530 = vmatprep.subr.mxu0 0.0
        %7531 = vmatpush2.msra.mxu0 0.0
        %7532 = vmatprep.subr.mxu0 0.0
        %7533 = vmatpush2.msra.mxu0 0.0
        %7534 = vmatprep.subr.mxu0 0.0
        %7535 = vmatpush2.msra.mxu0 0.0
        %7536 = vmatprep.mubr.f32.mxu0 0.0
        %7537 = vmatmul.mubr.f32.gmra.mxu0 %v7470
        %v7538 = vpop.f32.mrf.mxu0
        %v7539 = vadd.f32 0.0, %v7538
        %v7540 = vpop.f32.mrf.mxu0
        %7541 = vdwg.mxu0
        %v7542 = vadd.f32 %v7457, %v7539
        %v7543 = vld [vmem:[#allocation3 + $0x18] sm:$0xf]
        %v7544 = vld [vmem:[%s5 + $0xc0] sm:$0xff]
        %v7545 = vld [vmem:[%s5 + $0xc8] sm:$0xff]
        %v7546 = vld [vmem:[%s5 + $0xd0] sm:$0xff]
        %v7547 = vld [vmem:[%s5 + $0xd8] sm:$0xff]
        %v7548 = vld [vmem:[%s5 + $0xe0] sm:$0xff]
        %v7549 = vld [vmem:[%s5 + $0xe8] sm:$0xff]
        %v7550 = vld [vmem:[%s5 + $0xf0] sm:$0xff]
        %v7551 = vld [vmem:[%s5 + $0xf8] sm:$0xff]
        %v7553 = vsel %vm5042, %v7543, 0
        %7555 = vmatprep.subr.mxu0 0.0
        %7556 = vmatpush1.msra.mxu0 0.0
        %7557 = vmatprep.subr.mxu0 0.0
        %7558 = vmatpush1.msra.mxu0 0.0
        %7559 = vmatprep.subr.mxu0 0.0
        %7560 = vmatpush1.msra.mxu0 0.0
        %7561 = vmatprep.subr.mxu0 0.0
        %7562 = vmatpush1.msra.mxu0 0.0
        %7563 = vmatprep.subr.mxu0 0.0
        %7564 = vmatpush1.msra.mxu0 0.0
        %7565 = vmatprep.subr.mxu0 0.0
        %7566 = vmatpush1.msra.mxu0 0.0
        %7567 = vmatprep.subr.mxu0 0.0
        %7568 = vmatpush1.msra.mxu0 0.0
        %7569 = vmatprep.subr.mxu0 0.0
        %7570 = vmatpush1.msra.mxu0 0.0
        %7571 = vmatprep.subr.mxu0 0.0
        %7572 = vmatpush1.msra.mxu0 %v7551
        %7573 = vmatprep.subr.mxu0 0.0
        %7574 = vmatpush1.msra.mxu0 %v7550
        %7575 = vmatprep.subr.mxu0 0.0
        %7576 = vmatpush1.msra.mxu0 %v7549
        %7577 = vmatprep.subr.mxu0 0.0
        %7578 = vmatpush1.msra.mxu0 %v7548
        %7579 = vmatprep.subr.mxu0 0.0
        %7580 = vmatpush1.msra.mxu0 %v7547
        %7581 = vmatprep.subr.mxu0 0.0
        %7582 = vmatpush1.msra.mxu0 %v7546
        %7583 = vmatprep.subr.mxu0 0.0
        %7584 = vmatpush1.msra.mxu0 %v7545
        %7585 = vmatprep.subr.mxu0 0.0
        %7586 = vmatpush1.msra.mxu0 %v7544
        %7587 = vmatprep.subr.mxu0 0.0
        %7588 = vmatpush2.msra.mxu0 0.0
        %7589 = vmatprep.subr.mxu0 0.0
        %7590 = vmatpush2.msra.mxu0 0.0
        %7591 = vmatprep.subr.mxu0 0.0
        %7592 = vmatpush2.msra.mxu0 0.0
        %7593 = vmatprep.subr.mxu0 0.0
        %7594 = vmatpush2.msra.mxu0 0.0
        %7595 = vmatprep.subr.mxu0 0.0
        %7596 = vmatpush2.msra.mxu0 0.0
        %7597 = vmatprep.subr.mxu0 0.0
        %7598 = vmatpush2.msra.mxu0 0.0
        %7599 = vmatprep.subr.mxu0 0.0
        %7600 = vmatpush2.msra.mxu0 0.0
        %7601 = vmatprep.subr.mxu0 0.0
        %7602 = vmatpush2.msra.mxu0 0.0
        %7603 = vmatprep.subr.mxu0 0.0
        %7604 = vmatpush2.msra.mxu0 0.0
        %7605 = vmatprep.subr.mxu0 0.0
        %7606 = vmatpush2.msra.mxu0 0.0
        %7607 = vmatprep.subr.mxu0 0.0
        %7608 = vmatpush2.msra.mxu0 0.0
        %7609 = vmatprep.subr.mxu0 0.0
        %7610 = vmatpush2.msra.mxu0 0.0
        %7611 = vmatprep.subr.mxu0 0.0
        %7612 = vmatpush2.msra.mxu0 0.0
        %7613 = vmatprep.subr.mxu0 0.0
        %7614 = vmatpush2.msra.mxu0 0.0
        %7615 = vmatprep.subr.mxu0 0.0
        %7616 = vmatpush2.msra.mxu0 0.0
        %7617 = vmatprep.subr.mxu0 0.0
        %7618 = vmatpush2.msra.mxu0 0.0
        %7619 = vmatprep.mubr.f32.mxu0 0.0
        %7620 = vmatmul.mubr.f32.gmra.mxu0 %v7553
        %v7621 = vpop.f32.mrf.mxu0
        %v7622 = vadd.f32 0.0, %v7621
        %v7623 = vpop.f32.mrf.mxu0
        %7624 = vdwg.mxu0
        %v7625 = vadd.f32 %v7542, %v7622
        %v7626 = vld [vmem:[#allocation3 + $0x19] sm:$0xf]
        %v7627 = vld [vmem:[%s5 + $0x100] sm:$0xff]
        %v7628 = vld [vmem:[%s5 + $0x108] sm:$0xff]
        %v7629 = vld [vmem:[%s5 + $0x110] sm:$0xff]
        %v7630 = vld [vmem:[%s5 + $0x118] sm:$0xff]
        %v7631 = vld [vmem:[%s5 + $0x120] sm:$0xff]
        %v7632 = vld [vmem:[%s5 + $0x128] sm:$0xff]
        %v7633 = vld [vmem:[%s5 + $0x130] sm:$0xff]
        %v7634 = vld [vmem:[%s5 + $0x138] sm:$0xff]
        %v7636 = vsel %vm5042, %v7626, 0
        %7638 = vmatprep.subr.mxu0 0.0
        %7639 = vmatpush1.msra.mxu0 0.0
        %7640 = vmatprep.subr.mxu0 0.0
        %7641 = vmatpush1.msra.mxu0 0.0
        %7642 = vmatprep.subr.mxu0 0.0
        %7643 = vmatpush1.msra.mxu0 0.0
        %7644 = vmatprep.subr.mxu0 0.0
        %7645 = vmatpush1.msra.mxu0 0.0
        %7646 = vmatprep.subr.mxu0 0.0
        %7647 = vmatpush1.msra.mxu0 0.0
        %7648 = vmatprep.subr.mxu0 0.0
        %7649 = vmatpush1.msra.mxu0 0.0
        %7650 = vmatprep.subr.mxu0 0.0
        %7651 = vmatpush1.msra.mxu0 0.0
        %7652 = vmatprep.subr.mxu0 0.0
        %7653 = vmatpush1.msra.mxu0 0.0
        %7654 = vmatprep.subr.mxu0 0.0
        %7655 = vmatpush1.msra.mxu0 %v7634
        %7656 = vmatprep.subr.mxu0 0.0
        %7657 = vmatpush1.msra.mxu0 %v7633
        %7658 = vmatprep.subr.mxu0 0.0
        %7659 = vmatpush1.msra.mxu0 %v7632
        %7660 = vmatprep.subr.mxu0 0.0
        %7661 = vmatpush1.msra.mxu0 %v7631
        %7662 = vmatprep.subr.mxu0 0.0
        %7663 = vmatpush1.msra.mxu0 %v7630
        %7664 = vmatprep.subr.mxu0 0.0
        %7665 = vmatpush1.msra.mxu0 %v7629
        %7666 = vmatprep.subr.mxu0 0.0
        %7667 = vmatpush1.msra.mxu0 %v7628
        %7668 = vmatprep.subr.mxu0 0.0
        %7669 = vmatpush1.msra.mxu0 %v7627
        %7670 = vmatprep.subr.mxu0 0.0
        %7671 = vmatpush2.msra.mxu0 0.0
        %7672 = vmatprep.subr.mxu0 0.0
        %7673 = vmatpush2.msra.mxu0 0.0
        %7674 = vmatprep.subr.mxu0 0.0
        %7675 = vmatpush2.msra.mxu0 0.0
        %7676 = vmatprep.subr.mxu0 0.0
        %7677 = vmatpush2.msra.mxu0 0.0
        %7678 = vmatprep.subr.mxu0 0.0
        %7679 = vmatpush2.msra.mxu0 0.0
        %7680 = vmatprep.subr.mxu0 0.0
        %7681 = vmatpush2.msra.mxu0 0.0
        %7682 = vmatprep.subr.mxu0 0.0
        %7683 = vmatpush2.msra.mxu0 0.0
        %7684 = vmatprep.subr.mxu0 0.0
        %7685 = vmatpush2.msra.mxu0 0.0
        %7686 = vmatprep.subr.mxu0 0.0
        %7687 = vmatpush2.msra.mxu0 0.0
        %7688 = vmatprep.subr.mxu0 0.0
        %7689 = vmatpush2.msra.mxu0 0.0
        %7690 = vmatprep.subr.mxu0 0.0
        %7691 = vmatpush2.msra.mxu0 0.0
        %7692 = vmatprep.subr.mxu0 0.0
        %7693 = vmatpush2.msra.mxu0 0.0
        %7694 = vmatprep.subr.mxu0 0.0
        %7695 = vmatpush2.msra.mxu0 0.0
        %7696 = vmatprep.subr.mxu0 0.0
        %7697 = vmatpush2.msra.mxu0 0.0
        %7698 = vmatprep.subr.mxu0 0.0
        %7699 = vmatpush2.msra.mxu0 0.0
        %7700 = vmatprep.subr.mxu0 0.0
        %7701 = vmatpush2.msra.mxu0 0.0
        %7702 = vmatprep.mubr.f32.mxu0 0.0
        %7703 = vmatmul.mubr.f32.gmra.mxu0 %v7636
        %v7704 = vpop.f32.mrf.mxu0
        %v7705 = vadd.f32 0.0, %v7704
        %v7706 = vpop.f32.mrf.mxu0
        %7707 = vdwg.mxu0
        %v7708 = vadd.f32 %v7625, %v7705
        %v7709 = vld [vmem:[#allocation3 + $0x1a] sm:$0xf]
        %v7710 = vld [vmem:[%s5 + $0x140] sm:$0xff]
        %v7711 = vld [vmem:[%s5 + $0x148] sm:$0xff]
        %v7712 = vld [vmem:[%s5 + $0x150] sm:$0xff]
        %v7713 = vld [vmem:[%s5 + $0x158] sm:$0xff]
        %v7714 = vld [vmem:[%s5 + $0x160] sm:$0xff]
        %v7715 = vld [vmem:[%s5 + $0x168] sm:$0xff]
        %v7716 = vld [vmem:[%s5 + $0x170] sm:$0xff]
        %v7717 = vld [vmem:[%s5 + $0x178] sm:$0xff]
        %v7719 = vsel %vm5042, %v7709, 0
        %7721 = vmatprep.subr.mxu0 0.0
        %7722 = vmatpush1.msra.mxu0 0.0
        %7723 = vmatprep.subr.mxu0 0.0
        %7724 = vmatpush1.msra.mxu0 0.0
        %7725 = vmatprep.subr.mxu0 0.0
        %7726 = vmatpush1.msra.mxu0 0.0
        %7727 = vmatprep.subr.mxu0 0.0
        %7728 = vmatpush1.msra.mxu0 0.0
        %7729 = vmatprep.subr.mxu0 0.0
        %7730 = vmatpush1.msra.mxu0 0.0
        %7731 = vmatprep.subr.mxu0 0.0
        %7732 = vmatpush1.msra.mxu0 0.0
        %7733 = vmatprep.subr.mxu0 0.0
        %7734 = vmatpush1.msra.mxu0 0.0
        %7735 = vmatprep.subr.mxu0 0.0
        %7736 = vmatpush1.msra.mxu0 0.0
        %7737 = vmatprep.subr.mxu0 0.0
        %7738 = vmatpush1.msra.mxu0 %v7717
        %7739 = vmatprep.subr.mxu0 0.0
        %7740 = vmatpush1.msra.mxu0 %v7716
        %7741 = vmatprep.subr.mxu0 0.0
        %7742 = vmatpush1.msra.mxu0 %v7715
        %7743 = vmatprep.subr.mxu0 0.0
        %7744 = vmatpush1.msra.mxu0 %v7714
        %7745 = vmatprep.subr.mxu0 0.0
        %7746 = vmatpush1.msra.mxu0 %v7713
        %7747 = vmatprep.subr.mxu0 0.0
        %7748 = vmatpush1.msra.mxu0 %v7712
        %7749 = vmatprep.subr.mxu0 0.0
        %7750 = vmatpush1.msra.mxu0 %v7711
        %7751 = vmatprep.subr.mxu0 0.0
        %7752 = vmatpush1.msra.mxu0 %v7710
        %7753 = vmatprep.subr.mxu0 0.0
        %7754 = vmatpush2.msra.mxu0 0.0
        %7755 = vmatprep.subr.mxu0 0.0
        %7756 = vmatpush2.msra.mxu0 0.0
        %7757 = vmatprep.subr.mxu0 0.0
        %7758 = vmatpush2.msra.mxu0 0.0
        %7759 = vmatprep.subr.mxu0 0.0
        %7760 = vmatpush2.msra.mxu0 0.0
        %7761 = vmatprep.subr.mxu0 0.0
        %7762 = vmatpush2.msra.mxu0 0.0
        %7763 = vmatprep.subr.mxu0 0.0
        %7764 = vmatpush2.msra.mxu0 0.0
        %7765 = vmatprep.subr.mxu0 0.0
        %7766 = vmatpush2.msra.mxu0 0.0
        %7767 = vmatprep.subr.mxu0 0.0
        %7768 = vmatpush2.msra.mxu0 0.0
        %7769 = vmatprep.subr.mxu0 0.0
        %7770 = vmatpush2.msra.mxu0 0.0
        %7771 = vmatprep.subr.mxu0 0.0
        %7772 = vmatpush2.msra.mxu0 0.0
        %7773 = vmatprep.subr.mxu0 0.0
        %7774 = vmatpush2.msra.mxu0 0.0
        %7775 = vmatprep.subr.mxu0 0.0
        %7776 = vmatpush2.msra.mxu0 0.0
        %7777 = vmatprep.subr.mxu0 0.0
        %7778 = vmatpush2.msra.mxu0 0.0
        %7779 = vmatprep.subr.mxu0 0.0
        %7780 = vmatpush2.msra.mxu0 0.0
        %7781 = vmatprep.subr.mxu0 0.0
        %7782 = vmatpush2.msra.mxu0 0.0
        %7783 = vmatprep.subr.mxu0 0.0
        %7784 = vmatpush2.msra.mxu0 0.0
        %7785 = vmatprep.mubr.f32.mxu0 0.0
        %7786 = vmatmul.mubr.f32.gmra.mxu0 %v7719
        %v7787 = vpop.f32.mrf.mxu0
        %v7788 = vadd.f32 0.0, %v7787
        %v7789 = vpop.f32.mrf.mxu0
        %7790 = vdwg.mxu0
        %v7791 = vadd.f32 %v7708, %v7788
        %v7792 = vld [vmem:[#allocation3 + $0x1e] sm:$0xf]
        %v7793 = vld [vmem:[%s5 + $0x180] sm:$0xff]
        %v7794 = vld [vmem:[%s5 + $0x188] sm:$0xff]
        %v7795 = vld [vmem:[%s5 + $0x190] sm:$0xff]
        %v7796 = vld [vmem:[%s5 + $0x198] sm:$0xff]
        %v7797 = vld [vmem:[%s5 + $0x1a0] sm:$0xff]
        %v7798 = vld [vmem:[%s5 + $0x1a8] sm:$0xff]
        %v7799 = vld [vmem:[%s5 + $0x1b0] sm:$0xff]
        %v7800 = vld [vmem:[%s5 + $0x1b8] sm:$0xff]
        %v7802 = vsel %vm5042, %v7792, 0
        %7804 = vmatprep.subr.mxu0 0.0
        %7805 = vmatpush1.msra.mxu0 0.0
        %7806 = vmatprep.subr.mxu0 0.0
        %7807 = vmatpush1.msra.mxu0 0.0
        %7808 = vmatprep.subr.mxu0 0.0
        %7809 = vmatpush1.msra.mxu0 0.0
        %7810 = vmatprep.subr.mxu0 0.0
        %7811 = vmatpush1.msra.mxu0 0.0
        %7812 = vmatprep.subr.mxu0 0.0
        %7813 = vmatpush1.msra.mxu0 0.0
        %7814 = vmatprep.subr.mxu0 0.0
        %7815 = vmatpush1.msra.mxu0 0.0
        %7816 = vmatprep.subr.mxu0 0.0
        %7817 = vmatpush1.msra.mxu0 0.0
        %7818 = vmatprep.subr.mxu0 0.0
        %7819 = vmatpush1.msra.mxu0 0.0
        %7820 = vmatprep.subr.mxu0 0.0
        %7821 = vmatpush1.msra.mxu0 %v7800
        %7822 = vmatprep.subr.mxu0 0.0
        %7823 = vmatpush1.msra.mxu0 %v7799
        %7824 = vmatprep.subr.mxu0 0.0
        %7825 = vmatpush1.msra.mxu0 %v7798
        %7826 = vmatprep.subr.mxu0 0.0
        %7827 = vmatpush1.msra.mxu0 %v7797
        %7828 = vmatprep.subr.mxu0 0.0
        %7829 = vmatpush1.msra.mxu0 %v7796
        %7830 = vmatprep.subr.mxu0 0.0
        %7831 = vmatpush1.msra.mxu0 %v7795
        %7832 = vmatprep.subr.mxu0 0.0
        %7833 = vmatpush1.msra.mxu0 %v7794
        %7834 = vmatprep.subr.mxu0 0.0
        %7835 = vmatpush1.msra.mxu0 %v7793
        %7836 = vmatprep.subr.mxu0 0.0
        %7837 = vmatpush2.msra.mxu0 0.0
        %7838 = vmatprep.subr.mxu0 0.0
        %7839 = vmatpush2.msra.mxu0 0.0
        %7840 = vmatprep.subr.mxu0 0.0
        %7841 = vmatpush2.msra.mxu0 0.0
        %7842 = vmatprep.subr.mxu0 0.0
        %7843 = vmatpush2.msra.mxu0 0.0
        %7844 = vmatprep.subr.mxu0 0.0
        %7845 = vmatpush2.msra.mxu0 0.0
        %7846 = vmatprep.subr.mxu0 0.0
        %7847 = vmatpush2.msra.mxu0 0.0
        %7848 = vmatprep.subr.mxu0 0.0
        %7849 = vmatpush2.msra.mxu0 0.0
        %7850 = vmatprep.subr.mxu0 0.0
        %7851 = vmatpush2.msra.mxu0 0.0
        %7852 = vmatprep.subr.mxu0 0.0
        %7853 = vmatpush2.msra.mxu0 0.0
        %7854 = vmatprep.subr.mxu0 0.0
        %7855 = vmatpush2.msra.mxu0 0.0
        %7856 = vmatprep.subr.mxu0 0.0
        %7857 = vmatpush2.msra.mxu0 0.0
        %7858 = vmatprep.subr.mxu0 0.0
        %7859 = vmatpush2.msra.mxu0 0.0
        %7860 = vmatprep.subr.mxu0 0.0
        %7861 = vmatpush2.msra.mxu0 0.0
        %7862 = vmatprep.subr.mxu0 0.0
        %7863 = vmatpush2.msra.mxu0 0.0
        %7864 = vmatprep.subr.mxu0 0.0
        %7865 = vmatpush2.msra.mxu0 0.0
        %7866 = vmatprep.subr.mxu0 0.0
        %7867 = vmatpush2.msra.mxu0 0.0
        %7868 = vmatprep.mubr.f32.mxu0 0.0
        %7869 = vmatmul.mubr.f32.gmra.mxu0 %v7802
        %v7870 = vpop.f32.mrf.mxu0
        %v7871 = vadd.f32 0.0, %v7870
        %v7872 = vpop.f32.mrf.mxu0
        %7873 = vdwg.mxu0
        %v7874 = vadd.f32 %v7791, %v7871
        %v7875 = vld [vmem:[#allocation3 + $0x1f] sm:$0xf]
        %v7876 = vld [vmem:[%s5 + $0x1c0] sm:$0xff]
        %v7877 = vld [vmem:[%s5 + $0x1c8] sm:$0xff]
        %v7878 = vld [vmem:[%s5 + $0x1d0] sm:$0xff]
        %v7879 = vld [vmem:[%s5 + $0x1d8] sm:$0xff]
        %v7880 = vld [vmem:[%s5 + $0x1e0] sm:$0xff]
        %v7881 = vld [vmem:[%s5 + $0x1e8] sm:$0xff]
        %v7882 = vld [vmem:[%s5 + $0x1f0] sm:$0xff]
        %v7883 = vld [vmem:[%s5 + $0x1f8] sm:$0xff]
        %v7885 = vsel %vm5042, %v7875, 0
        %7887 = vmatprep.subr.mxu0 0.0
        %7888 = vmatpush1.msra.mxu0 0.0
        %7889 = vmatprep.subr.mxu0 0.0
        %7890 = vmatpush1.msra.mxu0 0.0
        %7891 = vmatprep.subr.mxu0 0.0
        %7892 = vmatpush1.msra.mxu0 0.0
        %7893 = vmatprep.subr.mxu0 0.0
        %7894 = vmatpush1.msra.mxu0 0.0
        %7895 = vmatprep.subr.mxu0 0.0
        %7896 = vmatpush1.msra.mxu0 0.0
        %7897 = vmatprep.subr.mxu0 0.0
        %7898 = vmatpush1.msra.mxu0 0.0
        %7899 = vmatprep.subr.mxu0 0.0
        %7900 = vmatpush1.msra.mxu0 0.0
        %7901 = vmatprep.subr.mxu0 0.0
        %7902 = vmatpush1.msra.mxu0 0.0
        %7903 = vmatprep.subr.mxu0 0.0
        %7904 = vmatpush1.msra.mxu0 %v7883
        %7905 = vmatprep.subr.mxu0 0.0
        %7906 = vmatpush1.msra.mxu0 %v7882
        %7907 = vmatprep.subr.mxu0 0.0
        %7908 = vmatpush1.msra.mxu0 %v7881
        %7909 = vmatprep.subr.mxu0 0.0
        %7910 = vmatpush1.msra.mxu0 %v7880
        %7911 = vmatprep.subr.mxu0 0.0
        %7912 = vmatpush1.msra.mxu0 %v7879
        %7913 = vmatprep.subr.mxu0 0.0
        %7914 = vmatpush1.msra.mxu0 %v7878
        %7915 = vmatprep.subr.mxu0 0.0
        %7916 = vmatpush1.msra.mxu0 %v7877
        %7917 = vmatprep.subr.mxu0 0.0
        %7918 = vmatpush1.msra.mxu0 %v7876
        %7919 = vmatprep.subr.mxu0 0.0
        %7920 = vmatpush2.msra.mxu0 0.0
        %7921 = vmatprep.subr.mxu0 0.0
        %7922 = vmatpush2.msra.mxu0 0.0
        %7923 = vmatprep.subr.mxu0 0.0
        %7924 = vmatpush2.msra.mxu0 0.0
        %7925 = vmatprep.subr.mxu0 0.0
        %7926 = vmatpush2.msra.mxu0 0.0
        %7927 = vmatprep.subr.mxu0 0.0
        %7928 = vmatpush2.msra.mxu0 0.0
        %7929 = vmatprep.subr.mxu0 0.0
        %7930 = vmatpush2.msra.mxu0 0.0
        %7931 = vmatprep.subr.mxu0 0.0
        %7932 = vmatpush2.msra.mxu0 0.0
        %7933 = vmatprep.subr.mxu0 0.0
        %7934 = vmatpush2.msra.mxu0 0.0
        %7935 = vmatprep.subr.mxu0 0.0
        %7936 = vmatpush2.msra.mxu0 0.0
        %7937 = vmatprep.subr.mxu0 0.0
        %7938 = vmatpush2.msra.mxu0 0.0
        %7939 = vmatprep.subr.mxu0 0.0
        %7940 = vmatpush2.msra.mxu0 0.0
        %7941 = vmatprep.subr.mxu0 0.0
        %7942 = vmatpush2.msra.mxu0 0.0
        %7943 = vmatprep.subr.mxu0 0.0
        %7944 = vmatpush2.msra.mxu0 0.0
        %7945 = vmatprep.subr.mxu0 0.0
        %7946 = vmatpush2.msra.mxu0 0.0
        %7947 = vmatprep.subr.mxu0 0.0
        %7948 = vmatpush2.msra.mxu0 0.0
        %7949 = vmatprep.subr.mxu0 0.0
        %7950 = vmatpush2.msra.mxu0 0.0
        %7951 = vmatprep.mubr.f32.mxu0 0.0
        %7952 = vmatmul.mubr.f32.gmra.mxu0 %v7885
        %v7953 = vpop.f32.mrf.mxu0
        %v7954 = vadd.f32 0.0, %v7953
        %v7955 = vpop.f32.mrf.mxu0
        %7956 = vdwg.mxu0
        %v7957 = vadd.f32 %v7874, %v7954
        %v7958 = vld [vmem:[#allocation3 + $0x20] sm:$0xf]
        %v7959 = vld [vmem:[%s5 + $0x200] sm:$0xff]
        %v7960 = vld [vmem:[%s5 + $0x208] sm:$0xff]
        %v7961 = vld [vmem:[%s5 + $0x210] sm:$0xff]
        %v7962 = vld [vmem:[%s5 + $0x218] sm:$0xff]
        %v7963 = vld [vmem:[%s5 + $0x220] sm:$0xff]
        %v7964 = vld [vmem:[%s5 + $0x228] sm:$0xff]
        %v7965 = vld [vmem:[%s5 + $0x230] sm:$0xff]
        %v7966 = vld [vmem:[%s5 + $0x238] sm:$0xff]
        %v7968 = vsel %vm5042, %v7958, 0
        %7970 = vmatprep.subr.mxu0 0.0
        %7971 = vmatpush1.msra.mxu0 0.0
        %7972 = vmatprep.subr.mxu0 0.0
        %7973 = vmatpush1.msra.mxu0 0.0
        %7974 = vmatprep.subr.mxu0 0.0
        %7975 = vmatpush1.msra.mxu0 0.0
        %7976 = vmatprep.subr.mxu0 0.0
        %7977 = vmatpush1.msra.mxu0 0.0
        %7978 = vmatprep.subr.mxu0 0.0
        %7979 = vmatpush1.msra.mxu0 0.0
        %7980 = vmatprep.subr.mxu0 0.0
        %7981 = vmatpush1.msra.mxu0 0.0
        %7982 = vmatprep.subr.mxu0 0.0
        %7983 = vmatpush1.msra.mxu0 0.0
        %7984 = vmatprep.subr.mxu0 0.0
        %7985 = vmatpush1.msra.mxu0 0.0
        %7986 = vmatprep.subr.mxu0 0.0
        %7987 = vmatpush1.msra.mxu0 %v7966
        %7988 = vmatprep.subr.mxu0 0.0
        %7989 = vmatpush1.msra.mxu0 %v7965
        %7990 = vmatprep.subr.mxu0 0.0
        %7991 = vmatpush1.msra.mxu0 %v7964
        %7992 = vmatprep.subr.mxu0 0.0
        %7993 = vmatpush1.msra.mxu0 %v7963
        %7994 = vmatprep.subr.mxu0 0.0
        %7995 = vmatpush1.msra.mxu0 %v7962
        %7996 = vmatprep.subr.mxu0 0.0
        %7997 = vmatpush1.msra.mxu0 %v7961
        %7998 = vmatprep.subr.mxu0 0.0
        %7999 = vmatpush1.msra.mxu0 %v7960
        %8000 = vmatprep.subr.mxu0 0.0
        %8001 = vmatpush1.msra.mxu0 %v7959
        %8002 = vmatprep.subr.mxu0 0.0
        %8003 = vmatpush2.msra.mxu0 0.0
        %8004 = vmatprep.subr.mxu0 0.0
        %8005 = vmatpush2.msra.mxu0 0.0
        %8006 = vmatprep.subr.mxu0 0.0
        %8007 = vmatpush2.msra.mxu0 0.0
        %8008 = vmatprep.subr.mxu0 0.0
        %8009 = vmatpush2.msra.mxu0 0.0
        %8010 = vmatprep.subr.mxu0 0.0
        %8011 = vmatpush2.msra.mxu0 0.0
        %8012 = vmatprep.subr.mxu0 0.0
        %8013 = vmatpush2.msra.mxu0 0.0
        %8014 = vmatprep.subr.mxu0 0.0
        %8015 = vmatpush2.msra.mxu0 0.0
        %8016 = vmatprep.subr.mxu0 0.0
        %8017 = vmatpush2.msra.mxu0 0.0
        %8018 = vmatprep.subr.mxu0 0.0
        %8019 = vmatpush2.msra.mxu0 0.0
        %8020 = vmatprep.subr.mxu0 0.0
        %8021 = vmatpush2.msra.mxu0 0.0
        %8022 = vmatprep.subr.mxu0 0.0
        %8023 = vmatpush2.msra.mxu0 0.0
        %8024 = vmatprep.subr.mxu0 0.0
        %8025 = vmatpush2.msra.mxu0 0.0
        %8026 = vmatprep.subr.mxu0 0.0
        %8027 = vmatpush2.msra.mxu0 0.0
        %8028 = vmatprep.subr.mxu0 0.0
        %8029 = vmatpush2.msra.mxu0 0.0
        %8030 = vmatprep.subr.mxu0 0.0
        %8031 = vmatpush2.msra.mxu0 0.0
        %8032 = vmatprep.subr.mxu0 0.0
        %8033 = vmatpush2.msra.mxu0 0.0
        %8034 = vmatprep.mubr.f32.mxu0 0.0
        %8035 = vmatmul.mubr.f32.gmra.mxu0 %v7968
        %v8036 = vpop.f32.mrf.mxu0
        %v8037 = vadd.f32 0.0, %v8036
        %v8038 = vpop.f32.mrf.mxu0
        %8039 = vdwg.mxu0
        %v8040 = vadd.f32 %v7957, %v8037
        %v8041 = vld [vmem:[%s6] sm:$0x1]
        %v8043 = vlaneseq
        %v8044 = vshrl.u32 %v8043, 7
        %v8045 = vsub.s32 0, %v8044
        %v8046 = vrot.slane %v8041, %v8045
        %v8048 = vadd.f32 %v8040, %v8046
        %vm8049 = vcmp.gt.f32.partialorder %v8048, 0.0
        %v8050 = vmul.f32 %v8048, 0.01
        %v8051 = vsel %vm8049, %v8048, %v8050
        %8052 = vst [vmem:[#allocation4 + $0xc] sm:$0xf] %v8051
        %v8053 = vld [vmem:[#allocation4] sm:$0x3]
        %v8054 = vld [vmem:[%s7] sm:$0xff]
        %v8055 = vld [vmem:[%s7 + $0x8] sm:$0xff]
        %v8056 = vld [vmem:[%s7 + $0x10] sm:$0xff]
        %v8057 = vld [vmem:[%s7 + $0x18] sm:$0xff]
        %v8058 = vld [vmem:[%s7 + $0x20] sm:$0xff]
        %v8059 = vld [vmem:[%s7 + $0x28] sm:$0xff]
        %v8060 = vld [vmem:[%s7 + $0x30] sm:$0xff]
        %v8061 = vld [vmem:[%s7 + $0x38] sm:$0xff]
        %v8062 = vld [vmem:[%s7 + $0x40] sm:$0xff]
        %v8063 = vld [vmem:[%s7 + $0x48] sm:$0xff]
        %v8064 = vld [vmem:[%s7 + $0x50] sm:$0xff]
        %v8065 = vld [vmem:[%s7 + $0x58] sm:$0xff]
        %v8066 = vld [vmem:[%s7 + $0x60] sm:$0xff]
        %v8067 = vld [vmem:[%s7 + $0x68] sm:$0xff]
        %v8068 = vld [vmem:[%s7 + $0x70] sm:$0xff]
        %v8069 = vld [vmem:[%s7 + $0x78] sm:$0xff]
        %v8070 = vld [vmem:[#allocation4 + $0x1] sm:$0x3]
        %v8071 = vld [vmem:[%s7 + $0x80] sm:$0xff]
        %v8072 = vld [vmem:[%s7 + $0x88] sm:$0xff]
        %v8073 = vld [vmem:[%s7 + $0x90] sm:$0xff]
        %v8074 = vld [vmem:[%s7 + $0x98] sm:$0xff]
        %v8075 = vld [vmem:[%s7 + $0xa0] sm:$0xff]
        %v8076 = vld [vmem:[%s7 + $0xa8] sm:$0xff]
        %v8077 = vld [vmem:[%s7 + $0xb0] sm:$0xff]
        %v8078 = vld [vmem:[%s7 + $0xb8] sm:$0xff]
        %v8079 = vld [vmem:[%s7 + $0xc0] sm:$0xff]
        %v8080 = vld [vmem:[%s7 + $0xc8] sm:$0xff]
        %v8081 = vld [vmem:[%s7 + $0xd0] sm:$0xff]
        %v8082 = vld [vmem:[%s7 + $0xd8] sm:$0xff]
        %v8083 = vld [vmem:[%s7 + $0xe0] sm:$0xff]
        %v8084 = vld [vmem:[%s7 + $0xe8] sm:$0xff]
        %v8085 = vld [vmem:[%s7 + $0xf0] sm:$0xff]
        %v8086 = vld [vmem:[%s7 + $0xf8] sm:$0xff]
        %8087 = vmatprep.subr.mxu0 0.0
        %8088 = vmatpush1.msra.mxu0 %v8086
        %8089 = vmatprep.subr.mxu0 0.0
        %8090 = vmatpush1.msra.mxu0 %v8085
        %8091 = vmatprep.subr.mxu0 0.0
        %8092 = vmatpush1.msra.mxu0 %v8084
        %8093 = vmatprep.subr.mxu0 0.0
        %8094 = vmatpush1.msra.mxu0 %v8083
        %8095 = vmatprep.subr.mxu0 0.0
        %8096 = vmatpush1.msra.mxu0 %v8082
        %8097 = vmatprep.subr.mxu0 0.0
        %8098 = vmatpush1.msra.mxu0 %v8081
        %8099 = vmatprep.subr.mxu0 0.0
        %8100 = vmatpush1.msra.mxu0 %v8080
        %8101 = vmatprep.subr.mxu0 0.0
        %8102 = vmatpush1.msra.mxu0 %v8079
        %8103 = vmatprep.subr.mxu0 0.0
        %8104 = vmatpush1.msra.mxu0 %v8078
        %8105 = vmatprep.subr.mxu0 0.0
        %8106 = vmatpush1.msra.mxu0 %v8077
        %8107 = vmatprep.subr.mxu0 0.0
        %8108 = vmatpush1.msra.mxu0 %v8076
        %8109 = vmatprep.subr.mxu0 0.0
        %8110 = vmatpush1.msra.mxu0 %v8075
        %8111 = vmatprep.subr.mxu0 0.0
        %8112 = vmatpush1.msra.mxu0 %v8074
        %8113 = vmatprep.subr.mxu0 0.0
        %8114 = vmatpush1.msra.mxu0 %v8073
        %8115 = vmatprep.subr.mxu0 0.0
        %8116 = vmatpush1.msra.mxu0 %v8072
        %8117 = vmatprep.subr.mxu0 0.0
        %8118 = vmatpush1.msra.mxu0 %v8071
        %8119 = vmatprep.subr.mxu0 0.0
        %8120 = vmatpush2.msra.mxu0 0.0
        %8121 = vmatprep.subr.mxu0 0.0
        %8122 = vmatpush2.msra.mxu0 0.0
        %8123 = vmatprep.subr.mxu0 0.0
        %8124 = vmatpush2.msra.mxu0 0.0
        %8125 = vmatprep.subr.mxu0 0.0
        %8126 = vmatpush2.msra.mxu0 0.0
        %8127 = vmatprep.subr.mxu0 0.0
        %8128 = vmatpush2.msra.mxu0 0.0
        %8129 = vmatprep.subr.mxu0 0.0
        %8130 = vmatpush2.msra.mxu0 0.0
        %8131 = vmatprep.subr.mxu0 0.0
        %8132 = vmatpush2.msra.mxu0 0.0
        %8133 = vmatprep.subr.mxu0 0.0
        %8134 = vmatpush2.msra.mxu0 0.0
        %8135 = vmatprep.subr.mxu0 0.0
        %8136 = vmatpush2.msra.mxu0 0.0
        %8137 = vmatprep.subr.mxu0 0.0
        %8138 = vmatpush2.msra.mxu0 0.0
        %8139 = vmatprep.subr.mxu0 0.0
        %8140 = vmatpush2.msra.mxu0 0.0
        %8141 = vmatprep.subr.mxu0 0.0
        %8142 = vmatpush2.msra.mxu0 0.0
        %8143 = vmatprep.subr.mxu0 0.0
        %8144 = vmatpush2.msra.mxu0 0.0
        %8145 = vmatprep.subr.mxu0 0.0
        %8146 = vmatpush2.msra.mxu0 0.0
        %8147 = vmatprep.subr.mxu0 0.0
        %8148 = vmatpush2.msra.mxu0 0.0
        %8149 = vmatprep.subr.mxu0 0.0
        %8150 = vmatpush2.msra.mxu0 0.0
        %8151 = vmatprep.mubr.f32.mxu0 0.0
        %8152 = vmatmul.mubr.f32.gmra.mxu0 %v8070
        %v8153 = vpop.f32.mrf.mxu0
        %v8154 = vadd.f32 0.0, %v8153
        %v8155 = vpop.f32.mrf.mxu0
        %8156 = vdwg.mxu0
        %8157 = vmatprep.subr.mxu0 0.0
        %8158 = vmatpush1.msra.mxu0 %v8069
        %8159 = vmatprep.subr.mxu0 0.0
        %8160 = vmatpush1.msra.mxu0 %v8068
        %8161 = vmatprep.subr.mxu0 0.0
        %8162 = vmatpush1.msra.mxu0 %v8067
        %8163 = vmatprep.subr.mxu0 0.0
        %8164 = vmatpush1.msra.mxu0 %v8066
        %8165 = vmatprep.subr.mxu0 0.0
        %8166 = vmatpush1.msra.mxu0 %v8065
        %8167 = vmatprep.subr.mxu0 0.0
        %8168 = vmatpush1.msra.mxu0 %v8064
        %8169 = vmatprep.subr.mxu0 0.0
        %8170 = vmatpush1.msra.mxu0 %v8063
        %8171 = vmatprep.subr.mxu0 0.0
        %8172 = vmatpush1.msra.mxu0 %v8062
        %8173 = vmatprep.subr.mxu0 0.0
        %8174 = vmatpush1.msra.mxu0 %v8061
        %8175 = vmatprep.subr.mxu0 0.0
        %8176 = vmatpush1.msra.mxu0 %v8060
        %8177 = vmatprep.subr.mxu0 0.0
        %8178 = vmatpush1.msra.mxu0 %v8059
        %8179 = vmatprep.subr.mxu0 0.0
        %8180 = vmatpush1.msra.mxu0 %v8058
        %8181 = vmatprep.subr.mxu0 0.0
        %8182 = vmatpush1.msra.mxu0 %v8057
        %8183 = vmatprep.subr.mxu0 0.0
        %8184 = vmatpush1.msra.mxu0 %v8056
        %8185 = vmatprep.subr.mxu0 0.0
        %8186 = vmatpush1.msra.mxu0 %v8055
        %8187 = vmatprep.subr.mxu0 0.0
        %8188 = vmatpush1.msra.mxu0 %v8054
        %8189 = vmatprep.subr.mxu0 0.0
        %8190 = vmatpush2.msra.mxu0 0.0
        %8191 = vmatprep.subr.mxu0 0.0
        %8192 = vmatpush2.msra.mxu0 0.0
        %8193 = vmatprep.subr.mxu0 0.0
        %8194 = vmatpush2.msra.mxu0 0.0
        %8195 = vmatprep.subr.mxu0 0.0
        %8196 = vmatpush2.msra.mxu0 0.0
        %8197 = vmatprep.subr.mxu0 0.0
        %8198 = vmatpush2.msra.mxu0 0.0
        %8199 = vmatprep.subr.mxu0 0.0
        %8200 = vmatpush2.msra.mxu0 0.0
        %8201 = vmatprep.subr.mxu0 0.0
        %8202 = vmatpush2.msra.mxu0 0.0
        %8203 = vmatprep.subr.mxu0 0.0
        %8204 = vmatpush2.msra.mxu0 0.0
        %8205 = vmatprep.subr.mxu0 0.0
        %8206 = vmatpush2.msra.mxu0 0.0
        %8207 = vmatprep.subr.mxu0 0.0
        %8208 = vmatpush2.msra.mxu0 0.0
        %8209 = vmatprep.subr.mxu0 0.0
        %8210 = vmatpush2.msra.mxu0 0.0
        %8211 = vmatprep.subr.mxu0 0.0
        %8212 = vmatpush2.msra.mxu0 0.0
        %8213 = vmatprep.subr.mxu0 0.0
        %8214 = vmatpush2.msra.mxu0 0.0
        %8215 = vmatprep.subr.mxu0 0.0
        %8216 = vmatpush2.msra.mxu0 0.0
        %8217 = vmatprep.subr.mxu0 0.0
        %8218 = vmatpush2.msra.mxu0 0.0
        %8219 = vmatprep.subr.mxu0 0.0
        %8220 = vmatpush2.msra.mxu0 0.0
        %8221 = vmatprep.mubr.f32.mxu0 0.0
        %8222 = vmatmul.mubr.f32.gmra.mxu0 %v8053
        %v8223 = vpop.f32.mrf.mxu0
        %v8224 = vadd.f32 %v8154, %v8223
        %v8225 = vpop.f32.mrf.mxu0
        %8226 = vdwg.mxu0
        %v8227 = vld [vmem:[#allocation4 + $0x2] sm:$0x3]
        %v8228 = vld [vmem:[%s7 + $0x100] sm:$0xff]
        %v8229 = vld [vmem:[%s7 + $0x108] sm:$0xff]
        %v8230 = vld [vmem:[%s7 + $0x110] sm:$0xff]
        %v8231 = vld [vmem:[%s7 + $0x118] sm:$0xff]
        %v8232 = vld [vmem:[%s7 + $0x120] sm:$0xff]
        %v8233 = vld [vmem:[%s7 + $0x128] sm:$0xff]
        %v8234 = vld [vmem:[%s7 + $0x130] sm:$0xff]
        %v8235 = vld [vmem:[%s7 + $0x138] sm:$0xff]
        %v8236 = vld [vmem:[%s7 + $0x140] sm:$0xff]
        %v8237 = vld [vmem:[%s7 + $0x148] sm:$0xff]
        %v8238 = vld [vmem:[%s7 + $0x150] sm:$0xff]
        %v8239 = vld [vmem:[%s7 + $0x158] sm:$0xff]
        %v8240 = vld [vmem:[%s7 + $0x160] sm:$0xff]
        %v8241 = vld [vmem:[%s7 + $0x168] sm:$0xff]
        %v8242 = vld [vmem:[%s7 + $0x170] sm:$0xff]
        %v8243 = vld [vmem:[%s7 + $0x178] sm:$0xff]
        %8244 = vmatprep.subr.mxu0 0.0
        %8245 = vmatpush1.msra.mxu0 %v8243
        %8246 = vmatprep.subr.mxu0 0.0
        %8247 = vmatpush1.msra.mxu0 %v8242
        %8248 = vmatprep.subr.mxu0 0.0
        %8249 = vmatpush1.msra.mxu0 %v8241
        %8250 = vmatprep.subr.mxu0 0.0
        %8251 = vmatpush1.msra.mxu0 %v8240
        %8252 = vmatprep.subr.mxu0 0.0
        %8253 = vmatpush1.msra.mxu0 %v8239
        %8254 = vmatprep.subr.mxu0 0.0
        %8255 = vmatpush1.msra.mxu0 %v8238
        %8256 = vmatprep.subr.mxu0 0.0
        %8257 = vmatpush1.msra.mxu0 %v8237
        %8258 = vmatprep.subr.mxu0 0.0
        %8259 = vmatpush1.msra.mxu0 %v8236
        %8260 = vmatprep.subr.mxu0 0.0
        %8261 = vmatpush1.msra.mxu0 %v8235
        %8262 = vmatprep.subr.mxu0 0.0
        %8263 = vmatpush1.msra.mxu0 %v8234
        %8264 = vmatprep.subr.mxu0 0.0
        %8265 = vmatpush1.msra.mxu0 %v8233
        %8266 = vmatprep.subr.mxu0 0.0
        %8267 = vmatpush1.msra.mxu0 %v8232
        %8268 = vmatprep.subr.mxu0 0.0
        %8269 = vmatpush1.msra.mxu0 %v8231
        %8270 = vmatprep.subr.mxu0 0.0
        %8271 = vmatpush1.msra.mxu0 %v8230
        %8272 = vmatprep.subr.mxu0 0.0
        %8273 = vmatpush1.msra.mxu0 %v8229
        %8274 = vmatprep.subr.mxu0 0.0
        %8275 = vmatpush1.msra.mxu0 %v8228
        %8276 = vmatprep.subr.mxu0 0.0
        %8277 = vmatpush2.msra.mxu0 0.0
        %8278 = vmatprep.subr.mxu0 0.0
        %8279 = vmatpush2.msra.mxu0 0.0
        %8280 = vmatprep.subr.mxu0 0.0
        %8281 = vmatpush2.msra.mxu0 0.0
        %8282 = vmatprep.subr.mxu0 0.0
        %8283 = vmatpush2.msra.mxu0 0.0
        %8284 = vmatprep.subr.mxu0 0.0
        %8285 = vmatpush2.msra.mxu0 0.0
        %8286 = vmatprep.subr.mxu0 0.0
        %8287 = vmatpush2.msra.mxu0 0.0
        %8288 = vmatprep.subr.mxu0 0.0
        %8289 = vmatpush2.msra.mxu0 0.0
        %8290 = vmatprep.subr.mxu0 0.0
        %8291 = vmatpush2.msra.mxu0 0.0
        %8292 = vmatprep.subr.mxu0 0.0
        %8293 = vmatpush2.msra.mxu0 0.0
        %8294 = vmatprep.subr.mxu0 0.0
        %8295 = vmatpush2.msra.mxu0 0.0
        %8296 = vmatprep.subr.mxu0 0.0
        %8297 = vmatpush2.msra.mxu0 0.0
        %8298 = vmatprep.subr.mxu0 0.0
        %8299 = vmatpush2.msra.mxu0 0.0
        %8300 = vmatprep.subr.mxu0 0.0
        %8301 = vmatpush2.msra.mxu0 0.0
        %8302 = vmatprep.subr.mxu0 0.0
        %8303 = vmatpush2.msra.mxu0 0.0
        %8304 = vmatprep.subr.mxu0 0.0
        %8305 = vmatpush2.msra.mxu0 0.0
        %8306 = vmatprep.subr.mxu0 0.0
        %8307 = vmatpush2.msra.mxu0 0.0
        %8308 = vmatprep.mubr.f32.mxu0 0.0
        %8309 = vmatmul.mubr.f32.gmra.mxu0 %v8227
        %v8310 = vpop.f32.mrf.mxu0
        %v8311 = vadd.f32 0.0, %v8310
        %v8312 = vpop.f32.mrf.mxu0
        %8313 = vdwg.mxu0
        %v8314 = vadd.f32 %v8224, %v8311
        %v8315 = vld [vmem:[#allocation4 + $0x4] sm:$0x3]
        %v8316 = vld [vmem:[%s7 + $0x180] sm:$0xff]
        %v8317 = vld [vmem:[%s7 + $0x188] sm:$0xff]
        %v8318 = vld [vmem:[%s7 + $0x190] sm:$0xff]
        %v8319 = vld [vmem:[%s7 + $0x198] sm:$0xff]
        %v8320 = vld [vmem:[%s7 + $0x1a0] sm:$0xff]
        %v8321 = vld [vmem:[%s7 + $0x1a8] sm:$0xff]
        %v8322 = vld [vmem:[%s7 + $0x1b0] sm:$0xff]
        %v8323 = vld [vmem:[%s7 + $0x1b8] sm:$0xff]
        %v8324 = vld [vmem:[%s7 + $0x1c0] sm:$0xff]
        %v8325 = vld [vmem:[%s7 + $0x1c8] sm:$0xff]
        %v8326 = vld [vmem:[%s7 + $0x1d0] sm:$0xff]
        %v8327 = vld [vmem:[%s7 + $0x1d8] sm:$0xff]
        %v8328 = vld [vmem:[%s7 + $0x1e0] sm:$0xff]
        %v8329 = vld [vmem:[%s7 + $0x1e8] sm:$0xff]
        %v8330 = vld [vmem:[%s7 + $0x1f0] sm:$0xff]
        %v8331 = vld [vmem:[%s7 + $0x1f8] sm:$0xff]
        %8332 = vmatprep.subr.mxu0 0.0
        %8333 = vmatpush1.msra.mxu0 %v8331
        %8334 = vmatprep.subr.mxu0 0.0
        %8335 = vmatpush1.msra.mxu0 %v8330
        %8336 = vmatprep.subr.mxu0 0.0
        %8337 = vmatpush1.msra.mxu0 %v8329
        %8338 = vmatprep.subr.mxu0 0.0
        %8339 = vmatpush1.msra.mxu0 %v8328
        %8340 = vmatprep.subr.mxu0 0.0
        %8341 = vmatpush1.msra.mxu0 %v8327
        %8342 = vmatprep.subr.mxu0 0.0
        %8343 = vmatpush1.msra.mxu0 %v8326
        %8344 = vmatprep.subr.mxu0 0.0
        %8345 = vmatpush1.msra.mxu0 %v8325
        %8346 = vmatprep.subr.mxu0 0.0
        %8347 = vmatpush1.msra.mxu0 %v8324
        %8348 = vmatprep.subr.mxu0 0.0
        %8349 = vmatpush1.msra.mxu0 %v8323
        %8350 = vmatprep.subr.mxu0 0.0
        %8351 = vmatpush1.msra.mxu0 %v8322
        %8352 = vmatprep.subr.mxu0 0.0
        %8353 = vmatpush1.msra.mxu0 %v8321
        %8354 = vmatprep.subr.mxu0 0.0
        %8355 = vmatpush1.msra.mxu0 %v8320
        %8356 = vmatprep.subr.mxu0 0.0
        %8357 = vmatpush1.msra.mxu0 %v8319
        %8358 = vmatprep.subr.mxu0 0.0
        %8359 = vmatpush1.msra.mxu0 %v8318
        %8360 = vmatprep.subr.mxu0 0.0
        %8361 = vmatpush1.msra.mxu0 %v8317
        %8362 = vmatprep.subr.mxu0 0.0
        %8363 = vmatpush1.msra.mxu0 %v8316
        %8364 = vmatprep.subr.mxu0 0.0
        %8365 = vmatpush2.msra.mxu0 0.0
        %8366 = vmatprep.subr.mxu0 0.0
        %8367 = vmatpush2.msra.mxu0 0.0
        %8368 = vmatprep.subr.mxu0 0.0
        %8369 = vmatpush2.msra.mxu0 0.0
        %8370 = vmatprep.subr.mxu0 0.0
        %8371 = vmatpush2.msra.mxu0 0.0
        %8372 = vmatprep.subr.mxu0 0.0
        %8373 = vmatpush2.msra.mxu0 0.0
        %8374 = vmatprep.subr.mxu0 0.0
        %8375 = vmatpush2.msra.mxu0 0.0
        %8376 = vmatprep.subr.mxu0 0.0
        %8377 = vmatpush2.msra.mxu0 0.0
        %8378 = vmatprep.subr.mxu0 0.0
        %8379 = vmatpush2.msra.mxu0 0.0
        %8380 = vmatprep.subr.mxu0 0.0
        %8381 = vmatpush2.msra.mxu0 0.0
        %8382 = vmatprep.subr.mxu0 0.0
        %8383 = vmatpush2.msra.mxu0 0.0
        %8384 = vmatprep.subr.mxu0 0.0
        %8385 = vmatpush2.msra.mxu0 0.0
        %8386 = vmatprep.subr.mxu0 0.0
        %8387 = vmatpush2.msra.mxu0 0.0
        %8388 = vmatprep.subr.mxu0 0.0
        %8389 = vmatpush2.msra.mxu0 0.0
        %8390 = vmatprep.subr.mxu0 0.0
        %8391 = vmatpush2.msra.mxu0 0.0
        %8392 = vmatprep.subr.mxu0 0.0
        %8393 = vmatpush2.msra.mxu0 0.0
        %8394 = vmatprep.subr.mxu0 0.0
        %8395 = vmatpush2.msra.mxu0 0.0
        %8396 = vmatprep.mubr.f32.mxu0 0.0
        %8397 = vmatmul.mubr.f32.gmra.mxu0 %v8315
        %v8398 = vpop.f32.mrf.mxu0
        %v8399 = vadd.f32 0.0, %v8398
        %v8400 = vpop.f32.mrf.mxu0
        %8401 = vdwg.mxu0
        %v8402 = vadd.f32 %v8314, %v8399
        %v8403 = vld [vmem:[#allocation4 + $0x5] sm:$0x3]
        %v8404 = vld [vmem:[%s7 + $0x200] sm:$0xff]
        %v8405 = vld [vmem:[%s7 + $0x208] sm:$0xff]
        %v8406 = vld [vmem:[%s7 + $0x210] sm:$0xff]
        %v8407 = vld [vmem:[%s7 + $0x218] sm:$0xff]
        %v8408 = vld [vmem:[%s7 + $0x220] sm:$0xff]
        %v8409 = vld [vmem:[%s7 + $0x228] sm:$0xff]
        %v8410 = vld [vmem:[%s7 + $0x230] sm:$0xff]
        %v8411 = vld [vmem:[%s7 + $0x238] sm:$0xff]
        %v8412 = vld [vmem:[%s7 + $0x240] sm:$0xff]
        %v8413 = vld [vmem:[%s7 + $0x248] sm:$0xff]
        %v8414 = vld [vmem:[%s7 + $0x250] sm:$0xff]
        %v8415 = vld [vmem:[%s7 + $0x258] sm:$0xff]
        %v8416 = vld [vmem:[%s7 + $0x260] sm:$0xff]
        %v8417 = vld [vmem:[%s7 + $0x268] sm:$0xff]
        %v8418 = vld [vmem:[%s7 + $0x270] sm:$0xff]
        %v8419 = vld [vmem:[%s7 + $0x278] sm:$0xff]
        %8420 = vmatprep.subr.mxu0 0.0
        %8421 = vmatpush1.msra.mxu0 %v8419
        %8422 = vmatprep.subr.mxu0 0.0
        %8423 = vmatpush1.msra.mxu0 %v8418
        %8424 = vmatprep.subr.mxu0 0.0
        %8425 = vmatpush1.msra.mxu0 %v8417
        %8426 = vmatprep.subr.mxu0 0.0
        %8427 = vmatpush1.msra.mxu0 %v8416
        %8428 = vmatprep.subr.mxu0 0.0
        %8429 = vmatpush1.msra.mxu0 %v8415
        %8430 = vmatprep.subr.mxu0 0.0
        %8431 = vmatpush1.msra.mxu0 %v8414
        %8432 = vmatprep.subr.mxu0 0.0
        %8433 = vmatpush1.msra.mxu0 %v8413
        %8434 = vmatprep.subr.mxu0 0.0
        %8435 = vmatpush1.msra.mxu0 %v8412
        %8436 = vmatprep.subr.mxu0 0.0
        %8437 = vmatpush1.msra.mxu0 %v8411
        %8438 = vmatprep.subr.mxu0 0.0
        %8439 = vmatpush1.msra.mxu0 %v8410
        %8440 = vmatprep.subr.mxu0 0.0
        %8441 = vmatpush1.msra.mxu0 %v8409
        %8442 = vmatprep.subr.mxu0 0.0
        %8443 = vmatpush1.msra.mxu0 %v8408
        %8444 = vmatprep.subr.mxu0 0.0
        %8445 = vmatpush1.msra.mxu0 %v8407
        %8446 = vmatprep.subr.mxu0 0.0
        %8447 = vmatpush1.msra.mxu0 %v8406
        %8448 = vmatprep.subr.mxu0 0.0
        %8449 = vmatpush1.msra.mxu0 %v8405
        %8450 = vmatprep.subr.mxu0 0.0
        %8451 = vmatpush1.msra.mxu0 %v8404
        %8452 = vmatprep.subr.mxu0 0.0
        %8453 = vmatpush2.msra.mxu0 0.0
        %8454 = vmatprep.subr.mxu0 0.0
        %8455 = vmatpush2.msra.mxu0 0.0
        %8456 = vmatprep.subr.mxu0 0.0
        %8457 = vmatpush2.msra.mxu0 0.0
        %8458 = vmatprep.subr.mxu0 0.0
        %8459 = vmatpush2.msra.mxu0 0.0
        %8460 = vmatprep.subr.mxu0 0.0
        %8461 = vmatpush2.msra.mxu0 0.0
        %8462 = vmatprep.subr.mxu0 0.0
        %8463 = vmatpush2.msra.mxu0 0.0
        %8464 = vmatprep.subr.mxu0 0.0
        %8465 = vmatpush2.msra.mxu0 0.0
        %8466 = vmatprep.subr.mxu0 0.0
        %8467 = vmatpush2.msra.mxu0 0.0
        %8468 = vmatprep.subr.mxu0 0.0
        %8469 = vmatpush2.msra.mxu0 0.0
        %8470 = vmatprep.subr.mxu0 0.0
        %8471 = vmatpush2.msra.mxu0 0.0
        %8472 = vmatprep.subr.mxu0 0.0
        %8473 = vmatpush2.msra.mxu0 0.0
        %8474 = vmatprep.subr.mxu0 0.0
        %8475 = vmatpush2.msra.mxu0 0.0
        %8476 = vmatprep.subr.mxu0 0.0
        %8477 = vmatpush2.msra.mxu0 0.0
        %8478 = vmatprep.subr.mxu0 0.0
        %8479 = vmatpush2.msra.mxu0 0.0
        %8480 = vmatprep.subr.mxu0 0.0
        %8481 = vmatpush2.msra.mxu0 0.0
        %8482 = vmatprep.subr.mxu0 0.0
        %8483 = vmatpush2.msra.mxu0 0.0
        %8484 = vmatprep.mubr.f32.mxu0 0.0
        %8485 = vmatmul.mubr.f32.gmra.mxu0 %v8403
        %v8486 = vpop.f32.mrf.mxu0
        %v8487 = vadd.f32 0.0, %v8486
        %v8488 = vpop.f32.mrf.mxu0
        %8489 = vdwg.mxu0
        %v8490 = vadd.f32 %v8402, %v8487
        %v8491 = vld [vmem:[#allocation4 + $0x6] sm:$0x3]
        %v8492 = vld [vmem:[%s7 + $0x280] sm:$0xff]
        %v8493 = vld [vmem:[%s7 + $0x288] sm:$0xff]
        %v8494 = vld [vmem:[%s7 + $0x290] sm:$0xff]
        %v8495 = vld [vmem:[%s7 + $0x298] sm:$0xff]
        %v8496 = vld [vmem:[%s7 + $0x2a0] sm:$0xff]
        %v8497 = vld [vmem:[%s7 + $0x2a8] sm:$0xff]
        %v8498 = vld [vmem:[%s7 + $0x2b0] sm:$0xff]
        %v8499 = vld [vmem:[%s7 + $0x2b8] sm:$0xff]
        %v8500 = vld [vmem:[%s7 + $0x2c0] sm:$0xff]
        %v8501 = vld [vmem:[%s7 + $0x2c8] sm:$0xff]
        %v8502 = vld [vmem:[%s7 + $0x2d0] sm:$0xff]
        %v8503 = vld [vmem:[%s7 + $0x2d8] sm:$0xff]
        %v8504 = vld [vmem:[%s7 + $0x2e0] sm:$0xff]
        %v8505 = vld [vmem:[%s7 + $0x2e8] sm:$0xff]
        %v8506 = vld [vmem:[%s7 + $0x2f0] sm:$0xff]
        %v8507 = vld [vmem:[%s7 + $0x2f8] sm:$0xff]
        %8508 = vmatprep.subr.mxu0 0.0
        %8509 = vmatpush1.msra.mxu0 %v8507
        %8510 = vmatprep.subr.mxu0 0.0
        %8511 = vmatpush1.msra.mxu0 %v8506
        %8512 = vmatprep.subr.mxu0 0.0
        %8513 = vmatpush1.msra.mxu0 %v8505
        %8514 = vmatprep.subr.mxu0 0.0
        %8515 = vmatpush1.msra.mxu0 %v8504
        %8516 = vmatprep.subr.mxu0 0.0
        %8517 = vmatpush1.msra.mxu0 %v8503
        %8518 = vmatprep.subr.mxu0 0.0
        %8519 = vmatpush1.msra.mxu0 %v8502
        %8520 = vmatprep.subr.mxu0 0.0
        %8521 = vmatpush1.msra.mxu0 %v8501
        %8522 = vmatprep.subr.mxu0 0.0
        %8523 = vmatpush1.msra.mxu0 %v8500
        %8524 = vmatprep.subr.mxu0 0.0
        %8525 = vmatpush1.msra.mxu0 %v8499
        %8526 = vmatprep.subr.mxu0 0.0
        %8527 = vmatpush1.msra.mxu0 %v8498
        %8528 = vmatprep.subr.mxu0 0.0
        %8529 = vmatpush1.msra.mxu0 %v8497
        %8530 = vmatprep.subr.mxu0 0.0
        %8531 = vmatpush1.msra.mxu0 %v8496
        %8532 = vmatprep.subr.mxu0 0.0
        %8533 = vmatpush1.msra.mxu0 %v8495
        %8534 = vmatprep.subr.mxu0 0.0
        %8535 = vmatpush1.msra.mxu0 %v8494
        %8536 = vmatprep.subr.mxu0 0.0
        %8537 = vmatpush1.msra.mxu0 %v8493
        %8538 = vmatprep.subr.mxu0 0.0
        %8539 = vmatpush1.msra.mxu0 %v8492
        %8540 = vmatprep.subr.mxu0 0.0
        %8541 = vmatpush2.msra.mxu0 0.0
        %8542 = vmatprep.subr.mxu0 0.0
        %8543 = vmatpush2.msra.mxu0 0.0
        %8544 = vmatprep.subr.mxu0 0.0
        %8545 = vmatpush2.msra.mxu0 0.0
        %8546 = vmatprep.subr.mxu0 0.0
        %8547 = vmatpush2.msra.mxu0 0.0
        %8548 = vmatprep.subr.mxu0 0.0
        %8549 = vmatpush2.msra.mxu0 0.0
        %8550 = vmatprep.subr.mxu0 0.0
        %8551 = vmatpush2.msra.mxu0 0.0
        %8552 = vmatprep.subr.mxu0 0.0
        %8553 = vmatpush2.msra.mxu0 0.0
        %8554 = vmatprep.subr.mxu0 0.0
        %8555 = vmatpush2.msra.mxu0 0.0
        %8556 = vmatprep.subr.mxu0 0.0
        %8557 = vmatpush2.msra.mxu0 0.0
        %8558 = vmatprep.subr.mxu0 0.0
        %8559 = vmatpush2.msra.mxu0 0.0
        %8560 = vmatprep.subr.mxu0 0.0
        %8561 = vmatpush2.msra.mxu0 0.0
        %8562 = vmatprep.subr.mxu0 0.0
        %8563 = vmatpush2.msra.mxu0 0.0
        %8564 = vmatprep.subr.mxu0 0.0
        %8565 = vmatpush2.msra.mxu0 0.0
        %8566 = vmatprep.subr.mxu0 0.0
        %8567 = vmatpush2.msra.mxu0 0.0
        %8568 = vmatprep.subr.mxu0 0.0
        %8569 = vmatpush2.msra.mxu0 0.0
        %8570 = vmatprep.subr.mxu0 0.0
        %8571 = vmatpush2.msra.mxu0 0.0
        %8572 = vmatprep.mubr.f32.mxu0 0.0
        %8573 = vmatmul.mubr.f32.gmra.mxu0 %v8491
        %v8574 = vpop.f32.mrf.mxu0
        %v8575 = vadd.f32 0.0, %v8574
        %v8576 = vpop.f32.mrf.mxu0
        %8577 = vdwg.mxu0
        %v8578 = vadd.f32 %v8490, %v8575
        %v8579 = vld [vmem:[#allocation4 + $0x8] sm:$0x3]
        %v8580 = vld [vmem:[%s7 + $0x300] sm:$0xff]
        %v8581 = vld [vmem:[%s7 + $0x308] sm:$0xff]
        %v8582 = vld [vmem:[%s7 + $0x310] sm:$0xff]
        %v8583 = vld [vmem:[%s7 + $0x318] sm:$0xff]
        %v8584 = vld [vmem:[%s7 + $0x320] sm:$0xff]
        %v8585 = vld [vmem:[%s7 + $0x328] sm:$0xff]
        %v8586 = vld [vmem:[%s7 + $0x330] sm:$0xff]
        %v8587 = vld [vmem:[%s7 + $0x338] sm:$0xff]
        %v8588 = vld [vmem:[%s7 + $0x340] sm:$0xff]
        %v8589 = vld [vmem:[%s7 + $0x348] sm:$0xff]
        %v8590 = vld [vmem:[%s7 + $0x350] sm:$0xff]
        %v8591 = vld [vmem:[%s7 + $0x358] sm:$0xff]
        %v8592 = vld [vmem:[%s7 + $0x360] sm:$0xff]
        %v8593 = vld [vmem:[%s7 + $0x368] sm:$0xff]
        %v8594 = vld [vmem:[%s7 + $0x370] sm:$0xff]
        %v8595 = vld [vmem:[%s7 + $0x378] sm:$0xff]
        %8596 = vmatprep.subr.mxu0 0.0
        %8597 = vmatpush1.msra.mxu0 %v8595
        %8598 = vmatprep.subr.mxu0 0.0
        %8599 = vmatpush1.msra.mxu0 %v8594
        %8600 = vmatprep.subr.mxu0 0.0
        %8601 = vmatpush1.msra.mxu0 %v8593
        %8602 = vmatprep.subr.mxu0 0.0
        %8603 = vmatpush1.msra.mxu0 %v8592
        %8604 = vmatprep.subr.mxu0 0.0
        %8605 = vmatpush1.msra.mxu0 %v8591
        %8606 = vmatprep.subr.mxu0 0.0
        %8607 = vmatpush1.msra.mxu0 %v8590
        %8608 = vmatprep.subr.mxu0 0.0
        %8609 = vmatpush1.msra.mxu0 %v8589
        %8610 = vmatprep.subr.mxu0 0.0
        %8611 = vmatpush1.msra.mxu0 %v8588
        %8612 = vmatprep.subr.mxu0 0.0
        %8613 = vmatpush1.msra.mxu0 %v8587
        %8614 = vmatprep.subr.mxu0 0.0
        %8615 = vmatpush1.msra.mxu0 %v8586
        %8616 = vmatprep.subr.mxu0 0.0
        %8617 = vmatpush1.msra.mxu0 %v8585
        %8618 = vmatprep.subr.mxu0 0.0
        %8619 = vmatpush1.msra.mxu0 %v8584
        %8620 = vmatprep.subr.mxu0 0.0
        %8621 = vmatpush1.msra.mxu0 %v8583
        %8622 = vmatprep.subr.mxu0 0.0
        %8623 = vmatpush1.msra.mxu0 %v8582
        %8624 = vmatprep.subr.mxu0 0.0
        %8625 = vmatpush1.msra.mxu0 %v8581
        %8626 = vmatprep.subr.mxu0 0.0
        %8627 = vmatpush1.msra.mxu0 %v8580
        %8628 = vmatprep.subr.mxu0 0.0
        %8629 = vmatpush2.msra.mxu0 0.0
        %8630 = vmatprep.subr.mxu0 0.0
        %8631 = vmatpush2.msra.mxu0 0.0
        %8632 = vmatprep.subr.mxu0 0.0
        %8633 = vmatpush2.msra.mxu0 0.0
        %8634 = vmatprep.subr.mxu0 0.0
        %8635 = vmatpush2.msra.mxu0 0.0
        %8636 = vmatprep.subr.mxu0 0.0
        %8637 = vmatpush2.msra.mxu0 0.0
        %8638 = vmatprep.subr.mxu0 0.0
        %8639 = vmatpush2.msra.mxu0 0.0
        %8640 = vmatprep.subr.mxu0 0.0
        %8641 = vmatpush2.msra.mxu0 0.0
        %8642 = vmatprep.subr.mxu0 0.0
        %8643 = vmatpush2.msra.mxu0 0.0
        %8644 = vmatprep.subr.mxu0 0.0
        %8645 = vmatpush2.msra.mxu0 0.0
        %8646 = vmatprep.subr.mxu0 0.0
        %8647 = vmatpush2.msra.mxu0 0.0
        %8648 = vmatprep.subr.mxu0 0.0
        %8649 = vmatpush2.msra.mxu0 0.0
        %8650 = vmatprep.subr.mxu0 0.0
        %8651 = vmatpush2.msra.mxu0 0.0
        %8652 = vmatprep.subr.mxu0 0.0
        %8653 = vmatpush2.msra.mxu0 0.0
        %8654 = vmatprep.subr.mxu0 0.0
        %8655 = vmatpush2.msra.mxu0 0.0
        %8656 = vmatprep.subr.mxu0 0.0
        %8657 = vmatpush2.msra.mxu0 0.0
        %8658 = vmatprep.subr.mxu0 0.0
        %8659 = vmatpush2.msra.mxu0 0.0
        %8660 = vmatprep.mubr.f32.mxu0 0.0
        %8661 = vmatmul.mubr.f32.gmra.mxu0 %v8579
        %v8662 = vpop.f32.mrf.mxu0
        %v8663 = vadd.f32 0.0, %v8662
        %v8664 = vpop.f32.mrf.mxu0
        %8665 = vdwg.mxu0
        %v8666 = vadd.f32 %v8578, %v8663
        %v8667 = vld [vmem:[#allocation4 + $0x9] sm:$0x3]
        %v8668 = vld [vmem:[%s7 + $0x380] sm:$0xff]
        %v8669 = vld [vmem:[%s7 + $0x388] sm:$0xff]
        %v8670 = vld [vmem:[%s7 + $0x390] sm:$0xff]
        %v8671 = vld [vmem:[%s7 + $0x398] sm:$0xff]
        %v8672 = vld [vmem:[%s7 + $0x3a0] sm:$0xff]
        %v8673 = vld [vmem:[%s7 + $0x3a8] sm:$0xff]
        %v8674 = vld [vmem:[%s7 + $0x3b0] sm:$0xff]
        %v8675 = vld [vmem:[%s7 + $0x3b8] sm:$0xff]
        %v8676 = vld [vmem:[%s7 + $0x3c0] sm:$0xff]
        %v8677 = vld [vmem:[%s7 + $0x3c8] sm:$0xff]
        %v8678 = vld [vmem:[%s7 + $0x3d0] sm:$0xff]
        %v8679 = vld [vmem:[%s7 + $0x3d8] sm:$0xff]
        %v8680 = vld [vmem:[%s7 + $0x3e0] sm:$0xff]
        %v8681 = vld [vmem:[%s7 + $0x3e8] sm:$0xff]
        %v8682 = vld [vmem:[%s7 + $0x3f0] sm:$0xff]
        %v8683 = vld [vmem:[%s7 + $0x3f8] sm:$0xff]
        %8684 = vmatprep.subr.mxu0 0.0
        %8685 = vmatpush1.msra.mxu0 %v8683
        %8686 = vmatprep.subr.mxu0 0.0
        %8687 = vmatpush1.msra.mxu0 %v8682
        %8688 = vmatprep.subr.mxu0 0.0
        %8689 = vmatpush1.msra.mxu0 %v8681
        %8690 = vmatprep.subr.mxu0 0.0
        %8691 = vmatpush1.msra.mxu0 %v8680
        %8692 = vmatprep.subr.mxu0 0.0
        %8693 = vmatpush1.msra.mxu0 %v8679
        %8694 = vmatprep.subr.mxu0 0.0
        %8695 = vmatpush1.msra.mxu0 %v8678
        %8696 = vmatprep.subr.mxu0 0.0
        %8697 = vmatpush1.msra.mxu0 %v8677
        %8698 = vmatprep.subr.mxu0 0.0
        %8699 = vmatpush1.msra.mxu0 %v8676
        %8700 = vmatprep.subr.mxu0 0.0
        %8701 = vmatpush1.msra.mxu0 %v8675
        %8702 = vmatprep.subr.mxu0 0.0
        %8703 = vmatpush1.msra.mxu0 %v8674
        %8704 = vmatprep.subr.mxu0 0.0
        %8705 = vmatpush1.msra.mxu0 %v8673
        %8706 = vmatprep.subr.mxu0 0.0
        %8707 = vmatpush1.msra.mxu0 %v8672
        %8708 = vmatprep.subr.mxu0 0.0
        %8709 = vmatpush1.msra.mxu0 %v8671
        %8710 = vmatprep.subr.mxu0 0.0
        %8711 = vmatpush1.msra.mxu0 %v8670
        %8712 = vmatprep.subr.mxu0 0.0
        %8713 = vmatpush1.msra.mxu0 %v8669
        %8714 = vmatprep.subr.mxu0 0.0
        %8715 = vmatpush1.msra.mxu0 %v8668
        %8716 = vmatprep.subr.mxu0 0.0
        %8717 = vmatpush2.msra.mxu0 0.0
        %8718 = vmatprep.subr.mxu0 0.0
        %8719 = vmatpush2.msra.mxu0 0.0
        %8720 = vmatprep.subr.mxu0 0.0
        %8721 = vmatpush2.msra.mxu0 0.0
        %8722 = vmatprep.subr.mxu0 0.0
        %8723 = vmatpush2.msra.mxu0 0.0
        %8724 = vmatprep.subr.mxu0 0.0
        %8725 = vmatpush2.msra.mxu0 0.0
        %8726 = vmatprep.subr.mxu0 0.0
        %8727 = vmatpush2.msra.mxu0 0.0
        %8728 = vmatprep.subr.mxu0 0.0
        %8729 = vmatpush2.msra.mxu0 0.0
        %8730 = vmatprep.subr.mxu0 0.0
        %8731 = vmatpush2.msra.mxu0 0.0
        %8732 = vmatprep.subr.mxu0 0.0
        %8733 = vmatpush2.msra.mxu0 0.0
        %8734 = vmatprep.subr.mxu0 0.0
        %8735 = vmatpush2.msra.mxu0 0.0
        %8736 = vmatprep.subr.mxu0 0.0
        %8737 = vmatpush2.msra.mxu0 0.0
        %8738 = vmatprep.subr.mxu0 0.0
        %8739 = vmatpush2.msra.mxu0 0.0
        %8740 = vmatprep.subr.mxu0 0.0
        %8741 = vmatpush2.msra.mxu0 0.0
        %8742 = vmatprep.subr.mxu0 0.0
        %8743 = vmatpush2.msra.mxu0 0.0
        %8744 = vmatprep.subr.mxu0 0.0
        %8745 = vmatpush2.msra.mxu0 0.0
        %8746 = vmatprep.subr.mxu0 0.0
        %8747 = vmatpush2.msra.mxu0 0.0
        %8748 = vmatprep.mubr.f32.mxu0 0.0
        %8749 = vmatmul.mubr.f32.gmra.mxu0 %v8667
        %v8750 = vpop.f32.mrf.mxu0
        %v8751 = vadd.f32 0.0, %v8750
        %v8752 = vpop.f32.mrf.mxu0
        %8753 = vdwg.mxu0
        %v8754 = vadd.f32 %v8666, %v8751
        %v8755 = vld [vmem:[#allocation4 + $0xa] sm:$0x3]
        %v8756 = vld [vmem:[%s7 + $0x400] sm:$0xff]
        %v8757 = vld [vmem:[%s7 + $0x408] sm:$0xff]
        %v8758 = vld [vmem:[%s7 + $0x410] sm:$0xff]
        %v8759 = vld [vmem:[%s7 + $0x418] sm:$0xff]
        %v8760 = vld [vmem:[%s7 + $0x420] sm:$0xff]
        %v8761 = vld [vmem:[%s7 + $0x428] sm:$0xff]
        %v8762 = vld [vmem:[%s7 + $0x430] sm:$0xff]
        %v8763 = vld [vmem:[%s7 + $0x438] sm:$0xff]
        %v8764 = vld [vmem:[%s7 + $0x440] sm:$0xff]
        %v8765 = vld [vmem:[%s7 + $0x448] sm:$0xff]
        %v8766 = vld [vmem:[%s7 + $0x450] sm:$0xff]
        %v8767 = vld [vmem:[%s7 + $0x458] sm:$0xff]
        %v8768 = vld [vmem:[%s7 + $0x460] sm:$0xff]
        %v8769 = vld [vmem:[%s7 + $0x468] sm:$0xff]
        %v8770 = vld [vmem:[%s7 + $0x470] sm:$0xff]
        %v8771 = vld [vmem:[%s7 + $0x478] sm:$0xff]
        %8772 = vmatprep.subr.mxu0 0.0
        %8773 = vmatpush1.msra.mxu0 %v8771
        %8774 = vmatprep.subr.mxu0 0.0
        %8775 = vmatpush1.msra.mxu0 %v8770
        %8776 = vmatprep.subr.mxu0 0.0
        %8777 = vmatpush1.msra.mxu0 %v8769
        %8778 = vmatprep.subr.mxu0 0.0
        %8779 = vmatpush1.msra.mxu0 %v8768
        %8780 = vmatprep.subr.mxu0 0.0
        %8781 = vmatpush1.msra.mxu0 %v8767
        %8782 = vmatprep.subr.mxu0 0.0
        %8783 = vmatpush1.msra.mxu0 %v8766
        %8784 = vmatprep.subr.mxu0 0.0
        %8785 = vmatpush1.msra.mxu0 %v8765
        %8786 = vmatprep.subr.mxu0 0.0
        %8787 = vmatpush1.msra.mxu0 %v8764
        %8788 = vmatprep.subr.mxu0 0.0
        %8789 = vmatpush1.msra.mxu0 %v8763
        %8790 = vmatprep.subr.mxu0 0.0
        %8791 = vmatpush1.msra.mxu0 %v8762
        %8792 = vmatprep.subr.mxu0 0.0
        %8793 = vmatpush1.msra.mxu0 %v8761
        %8794 = vmatprep.subr.mxu0 0.0
        %8795 = vmatpush1.msra.mxu0 %v8760
        %8796 = vmatprep.subr.mxu0 0.0
        %8797 = vmatpush1.msra.mxu0 %v8759
        %8798 = vmatprep.subr.mxu0 0.0
        %8799 = vmatpush1.msra.mxu0 %v8758
        %8800 = vmatprep.subr.mxu0 0.0
        %8801 = vmatpush1.msra.mxu0 %v8757
        %8802 = vmatprep.subr.mxu0 0.0
        %8803 = vmatpush1.msra.mxu0 %v8756
        %8804 = vmatprep.subr.mxu0 0.0
        %8805 = vmatpush2.msra.mxu0 0.0
        %8806 = vmatprep.subr.mxu0 0.0
        %8807 = vmatpush2.msra.mxu0 0.0
        %8808 = vmatprep.subr.mxu0 0.0
        %8809 = vmatpush2.msra.mxu0 0.0
        %8810 = vmatprep.subr.mxu0 0.0
        %8811 = vmatpush2.msra.mxu0 0.0
        %8812 = vmatprep.subr.mxu0 0.0
        %8813 = vmatpush2.msra.mxu0 0.0
        %8814 = vmatprep.subr.mxu0 0.0
        %8815 = vmatpush2.msra.mxu0 0.0
        %8816 = vmatprep.subr.mxu0 0.0
        %8817 = vmatpush2.msra.mxu0 0.0
        %8818 = vmatprep.subr.mxu0 0.0
        %8819 = vmatpush2.msra.mxu0 0.0
        %8820 = vmatprep.subr.mxu0 0.0
        %8821 = vmatpush2.msra.mxu0 0.0
        %8822 = vmatprep.subr.mxu0 0.0
        %8823 = vmatpush2.msra.mxu0 0.0
        %8824 = vmatprep.subr.mxu0 0.0
        %8825 = vmatpush2.msra.mxu0 0.0
        %8826 = vmatprep.subr.mxu0 0.0
        %8827 = vmatpush2.msra.mxu0 0.0
        %8828 = vmatprep.subr.mxu0 0.0
        %8829 = vmatpush2.msra.mxu0 0.0
        %8830 = vmatprep.subr.mxu0 0.0
        %8831 = vmatpush2.msra.mxu0 0.0
        %8832 = vmatprep.subr.mxu0 0.0
        %8833 = vmatpush2.msra.mxu0 0.0
        %8834 = vmatprep.subr.mxu0 0.0
        %8835 = vmatpush2.msra.mxu0 0.0
        %8836 = vmatprep.mubr.f32.mxu0 0.0
        %8837 = vmatmul.mubr.f32.gmra.mxu0 %v8755
        %v8838 = vpop.f32.mrf.mxu0
        %v8839 = vadd.f32 0.0, %v8838
        %v8840 = vpop.f32.mrf.mxu0
        %8841 = vdwg.mxu0
        %v8842 = vadd.f32 %v8754, %v8839
        %vm8843 = vcmask 1041408
        %v8844 = vsel %vm8843, %v8842, 0.0
        %v8845 = vrot.slane %v8844, 4
        %v8846 = vadd.f32 %v8844, %v8845
        %v8847 = vrot.slane %v8846, 2
        %v8848 = vadd.f32 %v8846, %v8847
        %v8849 = vrot.slane %v8848, 1
        %v8850 = vadd.f32 %v8848, %v8849
        %v8851 = vadd.f32 %v8850, 0.0
        %8852 = vmatprep.subr.mxu0 0.0
        %8853 = vmatpush1.msra.mxu0 %v8086
        %8854 = vmatprep.subr.mxu0 0.0
        %8855 = vmatpush1.msra.mxu0 %v8085
        %8856 = vmatprep.subr.mxu0 0.0
        %8857 = vmatpush1.msra.mxu0 %v8084
        %8858 = vmatprep.subr.mxu0 0.0
        %8859 = vmatpush1.msra.mxu0 %v8083
        %8860 = vmatprep.subr.mxu0 0.0
        %8861 = vmatpush1.msra.mxu0 %v8082
        %8862 = vmatprep.subr.mxu0 0.0
        %8863 = vmatpush1.msra.mxu0 %v8081
        %8864 = vmatprep.subr.mxu0 0.0
        %8865 = vmatpush1.msra.mxu0 %v8080
        %8866 = vmatprep.subr.mxu0 0.0
        %8867 = vmatpush1.msra.mxu0 %v8079
        %8868 = vmatprep.subr.mxu0 0.0
        %8869 = vmatpush1.msra.mxu0 %v8078
        %8870 = vmatprep.subr.mxu0 0.0
        %8871 = vmatpush1.msra.mxu0 %v8077
        %8872 = vmatprep.subr.mxu0 0.0
        %8873 = vmatpush1.msra.mxu0 %v8076
        %8874 = vmatprep.subr.mxu0 0.0
        %8875 = vmatpush1.msra.mxu0 %v8075
        %8876 = vmatprep.subr.mxu0 0.0
        %8877 = vmatpush1.msra.mxu0 %v8074
        %8878 = vmatprep.subr.mxu0 0.0
        %8879 = vmatpush1.msra.mxu0 %v8073
        %8880 = vmatprep.subr.mxu0 0.0
        %8881 = vmatpush1.msra.mxu0 %v8072
        %8882 = vmatprep.subr.mxu0 0.0
        %8883 = vmatpush1.msra.mxu0 %v8071
        %8884 = vmatprep.subr.mxu0 0.0
        %8885 = vmatpush2.msra.mxu0 0.0
        %8886 = vmatprep.subr.mxu0 0.0
        %8887 = vmatpush2.msra.mxu0 0.0
        %8888 = vmatprep.subr.mxu0 0.0
        %8889 = vmatpush2.msra.mxu0 0.0
        %8890 = vmatprep.subr.mxu0 0.0
        %8891 = vmatpush2.msra.mxu0 0.0
        %8892 = vmatprep.subr.mxu0 0.0
        %8893 = vmatpush2.msra.mxu0 0.0
        %8894 = vmatprep.subr.mxu0 0.0
        %8895 = vmatpush2.msra.mxu0 0.0
        %8896 = vmatprep.subr.mxu0 0.0
        %8897 = vmatpush2.msra.mxu0 0.0
        %8898 = vmatprep.subr.mxu0 0.0
        %8899 = vmatpush2.msra.mxu0 0.0
        %8900 = vmatprep.subr.mxu0 0.0
        %8901 = vmatpush2.msra.mxu0 0.0
        %8902 = vmatprep.subr.mxu0 0.0
        %8903 = vmatpush2.msra.mxu0 0.0
        %8904 = vmatprep.subr.mxu0 0.0
        %8905 = vmatpush2.msra.mxu0 0.0
        %8906 = vmatprep.subr.mxu0 0.0
        %8907 = vmatpush2.msra.mxu0 0.0
        %8908 = vmatprep.subr.mxu0 0.0
        %8909 = vmatpush2.msra.mxu0 0.0
        %8910 = vmatprep.subr.mxu0 0.0
        %8911 = vmatpush2.msra.mxu0 0.0
        %8912 = vmatprep.subr.mxu0 0.0
        %8913 = vmatpush2.msra.mxu0 0.0
        %8914 = vmatprep.subr.mxu0 0.0
        %8915 = vmatpush2.msra.mxu0 0.0
        %8916 = vmatprep.mubr.f32.mxu0 0.0
        %8917 = vmatmul.mubr.f32.gmra.mxu0 %v8403
        %v8918 = vpop.f32.mrf.mxu0
        %v8919 = vadd.f32 0.0, %v8918
        %v8920 = vpop.f32.mrf.mxu0
        %8921 = vdwg.mxu0
        %8922 = vmatprep.subr.mxu0 0.0
        %8923 = vmatpush1.msra.mxu0 %v8069
        %8924 = vmatprep.subr.mxu0 0.0
        %8925 = vmatpush1.msra.mxu0 %v8068
        %8926 = vmatprep.subr.mxu0 0.0
        %8927 = vmatpush1.msra.mxu0 %v8067
        %8928 = vmatprep.subr.mxu0 0.0
        %8929 = vmatpush1.msra.mxu0 %v8066
        %8930 = vmatprep.subr.mxu0 0.0
        %8931 = vmatpush1.msra.mxu0 %v8065
        %8932 = vmatprep.subr.mxu0 0.0
        %8933 = vmatpush1.msra.mxu0 %v8064
        %8934 = vmatprep.subr.mxu0 0.0
        %8935 = vmatpush1.msra.mxu0 %v8063
        %8936 = vmatprep.subr.mxu0 0.0
        %8937 = vmatpush1.msra.mxu0 %v8062
        %8938 = vmatprep.subr.mxu0 0.0
        %8939 = vmatpush1.msra.mxu0 %v8061
        %8940 = vmatprep.subr.mxu0 0.0
        %8941 = vmatpush1.msra.mxu0 %v8060
        %8942 = vmatprep.subr.mxu0 0.0
        %8943 = vmatpush1.msra.mxu0 %v8059
        %8944 = vmatprep.subr.mxu0 0.0
        %8945 = vmatpush1.msra.mxu0 %v8058
        %8946 = vmatprep.subr.mxu0 0.0
        %8947 = vmatpush1.msra.mxu0 %v8057
        %8948 = vmatprep.subr.mxu0 0.0
        %8949 = vmatpush1.msra.mxu0 %v8056
        %8950 = vmatprep.subr.mxu0 0.0
        %8951 = vmatpush1.msra.mxu0 %v8055
        %8952 = vmatprep.subr.mxu0 0.0
        %8953 = vmatpush1.msra.mxu0 %v8054
        %8954 = vmatprep.subr.mxu0 0.0
        %8955 = vmatpush2.msra.mxu0 0.0
        %8956 = vmatprep.subr.mxu0 0.0
        %8957 = vmatpush2.msra.mxu0 0.0
        %8958 = vmatprep.subr.mxu0 0.0
        %8959 = vmatpush2.msra.mxu0 0.0
        %8960 = vmatprep.subr.mxu0 0.0
        %8961 = vmatpush2.msra.mxu0 0.0
        %8962 = vmatprep.subr.mxu0 0.0
        %8963 = vmatpush2.msra.mxu0 0.0
        %8964 = vmatprep.subr.mxu0 0.0
        %8965 = vmatpush2.msra.mxu0 0.0
        %8966 = vmatprep.subr.mxu0 0.0
        %8967 = vmatpush2.msra.mxu0 0.0
        %8968 = vmatprep.subr.mxu0 0.0
        %8969 = vmatpush2.msra.mxu0 0.0
        %8970 = vmatprep.subr.mxu0 0.0
        %8971 = vmatpush2.msra.mxu0 0.0
        %8972 = vmatprep.subr.mxu0 0.0
        %8973 = vmatpush2.msra.mxu0 0.0
        %8974 = vmatprep.subr.mxu0 0.0
        %8975 = vmatpush2.msra.mxu0 0.0
        %8976 = vmatprep.subr.mxu0 0.0
        %8977 = vmatpush2.msra.mxu0 0.0
        %8978 = vmatprep.subr.mxu0 0.0
        %8979 = vmatpush2.msra.mxu0 0.0
        %8980 = vmatprep.subr.mxu0 0.0
        %8981 = vmatpush2.msra.mxu0 0.0
        %8982 = vmatprep.subr.mxu0 0.0
        %8983 = vmatpush2.msra.mxu0 0.0
        %8984 = vmatprep.subr.mxu0 0.0
        %8985 = vmatpush2.msra.mxu0 0.0
        %8986 = vmatprep.mubr.f32.mxu0 0.0
        %8987 = vmatmul.mubr.f32.gmra.mxu0 %v8315
        %v8988 = vpop.f32.mrf.mxu0
        %v8989 = vadd.f32 %v8919, %v8988
        %v8990 = vpop.f32.mrf.mxu0
        %8991 = vdwg.mxu0
        %8992 = vmatprep.subr.mxu0 0.0
        %8993 = vmatpush1.msra.mxu0 %v8243
        %8994 = vmatprep.subr.mxu0 0.0
        %8995 = vmatpush1.msra.mxu0 %v8242
        %8996 = vmatprep.subr.mxu0 0.0
        %8997 = vmatpush1.msra.mxu0 %v8241
        %8998 = vmatprep.subr.mxu0 0.0
        %8999 = vmatpush1.msra.mxu0 %v8240
        %9000 = vmatprep.subr.mxu0 0.0
        %9001 = vmatpush1.msra.mxu0 %v8239
        %9002 = vmatprep.subr.mxu0 0.0
        %9003 = vmatpush1.msra.mxu0 %v8238
        %9004 = vmatprep.subr.mxu0 0.0
        %9005 = vmatpush1.msra.mxu0 %v8237
        %9006 = vmatprep.subr.mxu0 0.0
        %9007 = vmatpush1.msra.mxu0 %v8236
        %9008 = vmatprep.subr.mxu0 0.0
        %9009 = vmatpush1.msra.mxu0 %v8235
        %9010 = vmatprep.subr.mxu0 0.0
        %9011 = vmatpush1.msra.mxu0 %v8234
        %9012 = vmatprep.subr.mxu0 0.0
        %9013 = vmatpush1.msra.mxu0 %v8233
        %9014 = vmatprep.subr.mxu0 0.0
        %9015 = vmatpush1.msra.mxu0 %v8232
        %9016 = vmatprep.subr.mxu0 0.0
        %9017 = vmatpush1.msra.mxu0 %v8231
        %9018 = vmatprep.subr.mxu0 0.0
        %9019 = vmatpush1.msra.mxu0 %v8230
        %9020 = vmatprep.subr.mxu0 0.0
        %9021 = vmatpush1.msra.mxu0 %v8229
        %9022 = vmatprep.subr.mxu0 0.0
        %9023 = vmatpush1.msra.mxu0 %v8228
        %9024 = vmatprep.subr.mxu0 0.0
        %9025 = vmatpush2.msra.mxu0 0.0
        %9026 = vmatprep.subr.mxu0 0.0
        %9027 = vmatpush2.msra.mxu0 0.0
        %9028 = vmatprep.subr.mxu0 0.0
        %9029 = vmatpush2.msra.mxu0 0.0
        %9030 = vmatprep.subr.mxu0 0.0
        %9031 = vmatpush2.msra.mxu0 0.0
        %9032 = vmatprep.subr.mxu0 0.0
        %9033 = vmatpush2.msra.mxu0 0.0
        %9034 = vmatprep.subr.mxu0 0.0
        %9035 = vmatpush2.msra.mxu0 0.0
        %9036 = vmatprep.subr.mxu0 0.0
        %9037 = vmatpush2.msra.mxu0 0.0
        %9038 = vmatprep.subr.mxu0 0.0
        %9039 = vmatpush2.msra.mxu0 0.0
        %9040 = vmatprep.subr.mxu0 0.0
        %9041 = vmatpush2.msra.mxu0 0.0
        %9042 = vmatprep.subr.mxu0 0.0
        %9043 = vmatpush2.msra.mxu0 0.0
        %9044 = vmatprep.subr.mxu0 0.0
        %9045 = vmatpush2.msra.mxu0 0.0
        %9046 = vmatprep.subr.mxu0 0.0
        %9047 = vmatpush2.msra.mxu0 0.0
        %9048 = vmatprep.subr.mxu0 0.0
        %9049 = vmatpush2.msra.mxu0 0.0
        %9050 = vmatprep.subr.mxu0 0.0
        %9051 = vmatpush2.msra.mxu0 0.0
        %9052 = vmatprep.subr.mxu0 0.0
        %9053 = vmatpush2.msra.mxu0 0.0
        %9054 = vmatprep.subr.mxu0 0.0
        %9055 = vmatpush2.msra.mxu0 0.0
        %9056 = vmatprep.mubr.f32.mxu0 0.0
        %9057 = vmatmul.mubr.f32.gmra.mxu0 %v8491
        %v9058 = vpop.f32.mrf.mxu0
        %v9059 = vadd.f32 0.0, %v9058
        %v9060 = vpop.f32.mrf.mxu0
        %9061 = vdwg.mxu0
        %v9062 = vadd.f32 %v8989, %v9059
        %9063 = vmatprep.subr.mxu0 0.0
        %9064 = vmatpush1.msra.mxu0 %v8331
        %9065 = vmatprep.subr.mxu0 0.0
        %9066 = vmatpush1.msra.mxu0 %v8330
        %9067 = vmatprep.subr.mxu0 0.0
        %9068 = vmatpush1.msra.mxu0 %v8329
        %9069 = vmatprep.subr.mxu0 0.0
        %9070 = vmatpush1.msra.mxu0 %v8328
        %9071 = vmatprep.subr.mxu0 0.0
        %9072 = vmatpush1.msra.mxu0 %v8327
        %9073 = vmatprep.subr.mxu0 0.0
        %9074 = vmatpush1.msra.mxu0 %v8326
        %9075 = vmatprep.subr.mxu0 0.0
        %9076 = vmatpush1.msra.mxu0 %v8325
        %9077 = vmatprep.subr.mxu0 0.0
        %9078 = vmatpush1.msra.mxu0 %v8324
        %9079 = vmatprep.subr.mxu0 0.0
        %9080 = vmatpush1.msra.mxu0 %v8323
        %9081 = vmatprep.subr.mxu0 0.0
        %9082 = vmatpush1.msra.mxu0 %v8322
        %9083 = vmatprep.subr.mxu0 0.0
        %9084 = vmatpush1.msra.mxu0 %v8321
        %9085 = vmatprep.subr.mxu0 0.0
        %9086 = vmatpush1.msra.mxu0 %v8320
        %9087 = vmatprep.subr.mxu0 0.0
        %9088 = vmatpush1.msra.mxu0 %v8319
        %9089 = vmatprep.subr.mxu0 0.0
        %9090 = vmatpush1.msra.mxu0 %v8318
        %9091 = vmatprep.subr.mxu0 0.0
        %9092 = vmatpush1.msra.mxu0 %v8317
        %9093 = vmatprep.subr.mxu0 0.0
        %9094 = vmatpush1.msra.mxu0 %v8316
        %9095 = vmatprep.subr.mxu0 0.0
        %9096 = vmatpush2.msra.mxu0 0.0
        %9097 = vmatprep.subr.mxu0 0.0
        %9098 = vmatpush2.msra.mxu0 0.0
        %9099 = vmatprep.subr.mxu0 0.0
        %9100 = vmatpush2.msra.mxu0 0.0
        %9101 = vmatprep.subr.mxu0 0.0
        %9102 = vmatpush2.msra.mxu0 0.0
        %9103 = vmatprep.subr.mxu0 0.0
        %9104 = vmatpush2.msra.mxu0 0.0
        %9105 = vmatprep.subr.mxu0 0.0
        %9106 = vmatpush2.msra.mxu0 0.0
        %9107 = vmatprep.subr.mxu0 0.0
        %9108 = vmatpush2.msra.mxu0 0.0
        %9109 = vmatprep.subr.mxu0 0.0
        %9110 = vmatpush2.msra.mxu0 0.0
        %9111 = vmatprep.subr.mxu0 0.0
        %9112 = vmatpush2.msra.mxu0 0.0
        %9113 = vmatprep.subr.mxu0 0.0
        %9114 = vmatpush2.msra.mxu0 0.0
        %9115 = vmatprep.subr.mxu0 0.0
        %9116 = vmatpush2.msra.mxu0 0.0
        %9117 = vmatprep.subr.mxu0 0.0
        %9118 = vmatpush2.msra.mxu0 0.0
        %9119 = vmatprep.subr.mxu0 0.0
        %9120 = vmatpush2.msra.mxu0 0.0
        %9121 = vmatprep.subr.mxu0 0.0
        %9122 = vmatpush2.msra.mxu0 0.0
        %9123 = vmatprep.subr.mxu0 0.0
        %9124 = vmatpush2.msra.mxu0 0.0
        %9125 = vmatprep.subr.mxu0 0.0
        %9126 = vmatpush2.msra.mxu0 0.0
        %9127 = vmatprep.mubr.f32.mxu0 0.0
        %9128 = vmatmul.mubr.f32.gmra.mxu0 %v8579
        %v9129 = vpop.f32.mrf.mxu0
        %v9130 = vadd.f32 0.0, %v9129
        %v9131 = vpop.f32.mrf.mxu0
        %9132 = vdwg.mxu0
        %v9133 = vadd.f32 %v9062, %v9130
        %9134 = vmatprep.subr.mxu0 0.0
        %9135 = vmatpush1.msra.mxu0 %v8419
        %9136 = vmatprep.subr.mxu0 0.0
        %9137 = vmatpush1.msra.mxu0 %v8418
        %9138 = vmatprep.subr.mxu0 0.0
        %9139 = vmatpush1.msra.mxu0 %v8417
        %9140 = vmatprep.subr.mxu0 0.0
        %9141 = vmatpush1.msra.mxu0 %v8416
        %9142 = vmatprep.subr.mxu0 0.0
        %9143 = vmatpush1.msra.mxu0 %v8415
        %9144 = vmatprep.subr.mxu0 0.0
        %9145 = vmatpush1.msra.mxu0 %v8414
        %9146 = vmatprep.subr.mxu0 0.0
        %9147 = vmatpush1.msra.mxu0 %v8413
        %9148 = vmatprep.subr.mxu0 0.0
        %9149 = vmatpush1.msra.mxu0 %v8412
        %9150 = vmatprep.subr.mxu0 0.0
        %9151 = vmatpush1.msra.mxu0 %v8411
        %9152 = vmatprep.subr.mxu0 0.0
        %9153 = vmatpush1.msra.mxu0 %v8410
        %9154 = vmatprep.subr.mxu0 0.0
        %9155 = vmatpush1.msra.mxu0 %v8409
        %9156 = vmatprep.subr.mxu0 0.0
        %9157 = vmatpush1.msra.mxu0 %v8408
        %9158 = vmatprep.subr.mxu0 0.0
        %9159 = vmatpush1.msra.mxu0 %v8407
        %9160 = vmatprep.subr.mxu0 0.0
        %9161 = vmatpush1.msra.mxu0 %v8406
        %9162 = vmatprep.subr.mxu0 0.0
        %9163 = vmatpush1.msra.mxu0 %v8405
        %9164 = vmatprep.subr.mxu0 0.0
        %9165 = vmatpush1.msra.mxu0 %v8404
        %9166 = vmatprep.subr.mxu0 0.0
        %9167 = vmatpush2.msra.mxu0 0.0
        %9168 = vmatprep.subr.mxu0 0.0
        %9169 = vmatpush2.msra.mxu0 0.0
        %9170 = vmatprep.subr.mxu0 0.0
        %9171 = vmatpush2.msra.mxu0 0.0
        %9172 = vmatprep.subr.mxu0 0.0
        %9173 = vmatpush2.msra.mxu0 0.0
        %9174 = vmatprep.subr.mxu0 0.0
        %9175 = vmatpush2.msra.mxu0 0.0
        %9176 = vmatprep.subr.mxu0 0.0
        %9177 = vmatpush2.msra.mxu0 0.0
        %9178 = vmatprep.subr.mxu0 0.0
        %9179 = vmatpush2.msra.mxu0 0.0
        %9180 = vmatprep.subr.mxu0 0.0
        %9181 = vmatpush2.msra.mxu0 0.0
        %9182 = vmatprep.subr.mxu0 0.0
        %9183 = vmatpush2.msra.mxu0 0.0
        %9184 = vmatprep.subr.mxu0 0.0
        %9185 = vmatpush2.msra.mxu0 0.0
        %9186 = vmatprep.subr.mxu0 0.0
        %9187 = vmatpush2.msra.mxu0 0.0
        %9188 = vmatprep.subr.mxu0 0.0
        %9189 = vmatpush2.msra.mxu0 0.0
        %9190 = vmatprep.subr.mxu0 0.0
        %9191 = vmatpush2.msra.mxu0 0.0
        %9192 = vmatprep.subr.mxu0 0.0
        %9193 = vmatpush2.msra.mxu0 0.0
        %9194 = vmatprep.subr.mxu0 0.0
        %9195 = vmatpush2.msra.mxu0 0.0
        %9196 = vmatprep.subr.mxu0 0.0
        %9197 = vmatpush2.msra.mxu0 0.0
        %9198 = vmatprep.mubr.f32.mxu0 0.0
        %9199 = vmatmul.mubr.f32.gmra.mxu0 %v8667
        %v9200 = vpop.f32.mrf.mxu0
        %v9201 = vadd.f32 0.0, %v9200
        %v9202 = vpop.f32.mrf.mxu0
        %9203 = vdwg.mxu0
        %v9204 = vadd.f32 %v9133, %v9201
        %9205 = vmatprep.subr.mxu0 0.0
        %9206 = vmatpush1.msra.mxu0 %v8507
        %9207 = vmatprep.subr.mxu0 0.0
        %9208 = vmatpush1.msra.mxu0 %v8506
        %9209 = vmatprep.subr.mxu0 0.0
        %9210 = vmatpush1.msra.mxu0 %v8505
        %9211 = vmatprep.subr.mxu0 0.0
        %9212 = vmatpush1.msra.mxu0 %v8504
        %9213 = vmatprep.subr.mxu0 0.0
        %9214 = vmatpush1.msra.mxu0 %v8503
        %9215 = vmatprep.subr.mxu0 0.0
        %9216 = vmatpush1.msra.mxu0 %v8502
        %9217 = vmatprep.subr.mxu0 0.0
        %9218 = vmatpush1.msra.mxu0 %v8501
        %9219 = vmatprep.subr.mxu0 0.0
        %9220 = vmatpush1.msra.mxu0 %v8500
        %9221 = vmatprep.subr.mxu0 0.0
        %9222 = vmatpush1.msra.mxu0 %v8499
        %9223 = vmatprep.subr.mxu0 0.0
        %9224 = vmatpush1.msra.mxu0 %v8498
        %9225 = vmatprep.subr.mxu0 0.0
        %9226 = vmatpush1.msra.mxu0 %v8497
        %9227 = vmatprep.subr.mxu0 0.0
        %9228 = vmatpush1.msra.mxu0 %v8496
        %9229 = vmatprep.subr.mxu0 0.0
        %9230 = vmatpush1.msra.mxu0 %v8495
        %9231 = vmatprep.subr.mxu0 0.0
        %9232 = vmatpush1.msra.mxu0 %v8494
        %9233 = vmatprep.subr.mxu0 0.0
        %9234 = vmatpush1.msra.mxu0 %v8493
        %9235 = vmatprep.subr.mxu0 0.0
        %9236 = vmatpush1.msra.mxu0 %v8492
        %9237 = vmatprep.subr.mxu0 0.0
        %9238 = vmatpush2.msra.mxu0 0.0
        %9239 = vmatprep.subr.mxu0 0.0
        %9240 = vmatpush2.msra.mxu0 0.0
        %9241 = vmatprep.subr.mxu0 0.0
        %9242 = vmatpush2.msra.mxu0 0.0
        %9243 = vmatprep.subr.mxu0 0.0
        %9244 = vmatpush2.msra.mxu0 0.0
        %9245 = vmatprep.subr.mxu0 0.0
        %9246 = vmatpush2.msra.mxu0 0.0
        %9247 = vmatprep.subr.mxu0 0.0
        %9248 = vmatpush2.msra.mxu0 0.0
        %9249 = vmatprep.subr.mxu0 0.0
        %9250 = vmatpush2.msra.mxu0 0.0
        %9251 = vmatprep.subr.mxu0 0.0
        %9252 = vmatpush2.msra.mxu0 0.0
        %9253 = vmatprep.subr.mxu0 0.0
        %9254 = vmatpush2.msra.mxu0 0.0
        %9255 = vmatprep.subr.mxu0 0.0
        %9256 = vmatpush2.msra.mxu0 0.0
        %9257 = vmatprep.subr.mxu0 0.0
        %9258 = vmatpush2.msra.mxu0 0.0
        %9259 = vmatprep.subr.mxu0 0.0
        %9260 = vmatpush2.msra.mxu0 0.0
        %9261 = vmatprep.subr.mxu0 0.0
        %9262 = vmatpush2.msra.mxu0 0.0
        %9263 = vmatprep.subr.mxu0 0.0
        %9264 = vmatpush2.msra.mxu0 0.0
        %9265 = vmatprep.subr.mxu0 0.0
        %9266 = vmatpush2.msra.mxu0 0.0
        %9267 = vmatprep.subr.mxu0 0.0
        %9268 = vmatpush2.msra.mxu0 0.0
        %9269 = vmatprep.mubr.f32.mxu0 0.0
        %9270 = vmatmul.mubr.f32.gmra.mxu0 %v8755
        %v9271 = vpop.f32.mrf.mxu0
        %v9272 = vadd.f32 0.0, %v9271
        %v9273 = vpop.f32.mrf.mxu0
        %9274 = vdwg.mxu0
        %v9275 = vadd.f32 %v9204, %v9272
        %v9276 = vld [vmem:[#allocation4 + $0xc] sm:$0x3]
        %9277 = vmatprep.subr.mxu0 0.0
        %9278 = vmatpush1.msra.mxu0 %v8595
        %9279 = vmatprep.subr.mxu0 0.0
        %9280 = vmatpush1.msra.mxu0 %v8594
        %9281 = vmatprep.subr.mxu0 0.0
        %9282 = vmatpush1.msra.mxu0 %v8593
        %9283 = vmatprep.subr.mxu0 0.0
        %9284 = vmatpush1.msra.mxu0 %v8592
        %9285 = vmatprep.subr.mxu0 0.0
        %9286 = vmatpush1.msra.mxu0 %v8591
        %9287 = vmatprep.subr.mxu0 0.0
        %9288 = vmatpush1.msra.mxu0 %v8590
        %9289 = vmatprep.subr.mxu0 0.0
        %9290 = vmatpush1.msra.mxu0 %v8589
        %9291 = vmatprep.subr.mxu0 0.0
        %9292 = vmatpush1.msra.mxu0 %v8588
        %9293 = vmatprep.subr.mxu0 0.0
        %9294 = vmatpush1.msra.mxu0 %v8587
        %9295 = vmatprep.subr.mxu0 0.0
        %9296 = vmatpush1.msra.mxu0 %v8586
        %9297 = vmatprep.subr.mxu0 0.0
        %9298 = vmatpush1.msra.mxu0 %v8585
        %9299 = vmatprep.subr.mxu0 0.0
        %9300 = vmatpush1.msra.mxu0 %v8584
        %9301 = vmatprep.subr.mxu0 0.0
        %9302 = vmatpush1.msra.mxu0 %v8583
        %9303 = vmatprep.subr.mxu0 0.0
        %9304 = vmatpush1.msra.mxu0 %v8582
        %9305 = vmatprep.subr.mxu0 0.0
        %9306 = vmatpush1.msra.mxu0 %v8581
        %9307 = vmatprep.subr.mxu0 0.0
        %9308 = vmatpush1.msra.mxu0 %v8580
        %9309 = vmatprep.subr.mxu0 0.0
        %9310 = vmatpush2.msra.mxu0 0.0
        %9311 = vmatprep.subr.mxu0 0.0
        %9312 = vmatpush2.msra.mxu0 0.0
        %9313 = vmatprep.subr.mxu0 0.0
        %9314 = vmatpush2.msra.mxu0 0.0
        %9315 = vmatprep.subr.mxu0 0.0
        %9316 = vmatpush2.msra.mxu0 0.0
        %9317 = vmatprep.subr.mxu0 0.0
        %9318 = vmatpush2.msra.mxu0 0.0
        %9319 = vmatprep.subr.mxu0 0.0
        %9320 = vmatpush2.msra.mxu0 0.0
        %9321 = vmatprep.subr.mxu0 0.0
        %9322 = vmatpush2.msra.mxu0 0.0
        %9323 = vmatprep.subr.mxu0 0.0
        %9324 = vmatpush2.msra.mxu0 0.0
        %9325 = vmatprep.subr.mxu0 0.0
        %9326 = vmatpush2.msra.mxu0 0.0
        %9327 = vmatprep.subr.mxu0 0.0
        %9328 = vmatpush2.msra.mxu0 0.0
        %9329 = vmatprep.subr.mxu0 0.0
        %9330 = vmatpush2.msra.mxu0 0.0
        %9331 = vmatprep.subr.mxu0 0.0
        %9332 = vmatpush2.msra.mxu0 0.0
        %9333 = vmatprep.subr.mxu0 0.0
        %9334 = vmatpush2.msra.mxu0 0.0
        %9335 = vmatprep.subr.mxu0 0.0
        %9336 = vmatpush2.msra.mxu0 0.0
        %9337 = vmatprep.subr.mxu0 0.0
        %9338 = vmatpush2.msra.mxu0 0.0
        %9339 = vmatprep.subr.mxu0 0.0
        %9340 = vmatpush2.msra.mxu0 0.0
        %9341 = vmatprep.mubr.f32.mxu0 0.0
        %9342 = vmatmul.mubr.f32.gmra.mxu0 %v9276
        %v9343 = vpop.f32.mrf.mxu0
        %v9344 = vadd.f32 0.0, %v9343
        %v9345 = vpop.f32.mrf.mxu0
        %9346 = vdwg.mxu0
        %v9347 = vadd.f32 %v9275, %v9344
        %v9348 = vld [vmem:[#allocation4 + $0xd] sm:$0x3]
        %9349 = vmatprep.subr.mxu0 0.0
        %9350 = vmatpush1.msra.mxu0 %v8683
        %9351 = vmatprep.subr.mxu0 0.0
        %9352 = vmatpush1.msra.mxu0 %v8682
        %9353 = vmatprep.subr.mxu0 0.0
        %9354 = vmatpush1.msra.mxu0 %v8681
        %9355 = vmatprep.subr.mxu0 0.0
        %9356 = vmatpush1.msra.mxu0 %v8680
        %9357 = vmatprep.subr.mxu0 0.0
        %9358 = vmatpush1.msra.mxu0 %v8679
        %9359 = vmatprep.subr.mxu0 0.0
        %9360 = vmatpush1.msra.mxu0 %v8678
        %9361 = vmatprep.subr.mxu0 0.0
        %9362 = vmatpush1.msra.mxu0 %v8677
        %9363 = vmatprep.subr.mxu0 0.0
        %9364 = vmatpush1.msra.mxu0 %v8676
        %9365 = vmatprep.subr.mxu0 0.0
        %9366 = vmatpush1.msra.mxu0 %v8675
        %9367 = vmatprep.subr.mxu0 0.0
        %9368 = vmatpush1.msra.mxu0 %v8674
        %9369 = vmatprep.subr.mxu0 0.0
        %9370 = vmatpush1.msra.mxu0 %v8673
        %9371 = vmatprep.subr.mxu0 0.0
        %9372 = vmatpush1.msra.mxu0 %v8672
        %9373 = vmatprep.subr.mxu0 0.0
        %9374 = vmatpush1.msra.mxu0 %v8671
        %9375 = vmatprep.subr.mxu0 0.0
        %9376 = vmatpush1.msra.mxu0 %v8670
        %9377 = vmatprep.subr.mxu0 0.0
        %9378 = vmatpush1.msra.mxu0 %v8669
        %9379 = vmatprep.subr.mxu0 0.0
        %9380 = vmatpush1.msra.mxu0 %v8668
        %9381 = vmatprep.subr.mxu0 0.0
        %9382 = vmatpush2.msra.mxu0 0.0
        %9383 = vmatprep.subr.mxu0 0.0
        %9384 = vmatpush2.msra.mxu0 0.0
        %9385 = vmatprep.subr.mxu0 0.0
        %9386 = vmatpush2.msra.mxu0 0.0
        %9387 = vmatprep.subr.mxu0 0.0
        %9388 = vmatpush2.msra.mxu0 0.0
        %9389 = vmatprep.subr.mxu0 0.0
        %9390 = vmatpush2.msra.mxu0 0.0
        %9391 = vmatprep.subr.mxu0 0.0
        %9392 = vmatpush2.msra.mxu0 0.0
        %9393 = vmatprep.subr.mxu0 0.0
        %9394 = vmatpush2.msra.mxu0 0.0
        %9395 = vmatprep.subr.mxu0 0.0
        %9396 = vmatpush2.msra.mxu0 0.0
        %9397 = vmatprep.subr.mxu0 0.0
        %9398 = vmatpush2.msra.mxu0 0.0
        %9399 = vmatprep.subr.mxu0 0.0
        %9400 = vmatpush2.msra.mxu0 0.0
        %9401 = vmatprep.subr.mxu0 0.0
        %9402 = vmatpush2.msra.mxu0 0.0
        %9403 = vmatprep.subr.mxu0 0.0
        %9404 = vmatpush2.msra.mxu0 0.0
        %9405 = vmatprep.subr.mxu0 0.0
        %9406 = vmatpush2.msra.mxu0 0.0
        %9407 = vmatprep.subr.mxu0 0.0
        %9408 = vmatpush2.msra.mxu0 0.0
        %9409 = vmatprep.subr.mxu0 0.0
        %9410 = vmatpush2.msra.mxu0 0.0
        %9411 = vmatprep.subr.mxu0 0.0
        %9412 = vmatpush2.msra.mxu0 0.0
        %9413 = vmatprep.mubr.f32.mxu0 0.0
        %9414 = vmatmul.mubr.f32.gmra.mxu0 %v9348
        %v9415 = vpop.f32.mrf.mxu0
        %v9416 = vadd.f32 0.0, %v9415
        %v9417 = vpop.f32.mrf.mxu0
        %9418 = vdwg.mxu0
        %v9419 = vadd.f32 %v9347, %v9416
        %v9420 = vld [vmem:[#allocation4 + $0xe] sm:$0x3]
        %9421 = vmatprep.subr.mxu0 0.0
        %9422 = vmatpush1.msra.mxu0 %v8771
        %9423 = vmatprep.subr.mxu0 0.0
        %9424 = vmatpush1.msra.mxu0 %v8770
        %9425 = vmatprep.subr.mxu0 0.0
        %9426 = vmatpush1.msra.mxu0 %v8769
        %9427 = vmatprep.subr.mxu0 0.0
        %9428 = vmatpush1.msra.mxu0 %v8768
        %9429 = vmatprep.subr.mxu0 0.0
        %9430 = vmatpush1.msra.mxu0 %v8767
        %9431 = vmatprep.subr.mxu0 0.0
        %9432 = vmatpush1.msra.mxu0 %v8766
        %9433 = vmatprep.subr.mxu0 0.0
        %9434 = vmatpush1.msra.mxu0 %v8765
        %9435 = vmatprep.subr.mxu0 0.0
        %9436 = vmatpush1.msra.mxu0 %v8764
        %9437 = vmatprep.subr.mxu0 0.0
        %9438 = vmatpush1.msra.mxu0 %v8763
        %9439 = vmatprep.subr.mxu0 0.0
        %9440 = vmatpush1.msra.mxu0 %v8762
        %9441 = vmatprep.subr.mxu0 0.0
        %9442 = vmatpush1.msra.mxu0 %v8761
        %9443 = vmatprep.subr.mxu0 0.0
        %9444 = vmatpush1.msra.mxu0 %v8760
        %9445 = vmatprep.subr.mxu0 0.0
        %9446 = vmatpush1.msra.mxu0 %v8759
        %9447 = vmatprep.subr.mxu0 0.0
        %9448 = vmatpush1.msra.mxu0 %v8758
        %9449 = vmatprep.subr.mxu0 0.0
        %9450 = vmatpush1.msra.mxu0 %v8757
        %9451 = vmatprep.subr.mxu0 0.0
        %9452 = vmatpush1.msra.mxu0 %v8756
        %9453 = vmatprep.subr.mxu0 0.0
        %9454 = vmatpush2.msra.mxu0 0.0
        %9455 = vmatprep.subr.mxu0 0.0
        %9456 = vmatpush2.msra.mxu0 0.0
        %9457 = vmatprep.subr.mxu0 0.0
        %9458 = vmatpush2.msra.mxu0 0.0
        %9459 = vmatprep.subr.mxu0 0.0
        %9460 = vmatpush2.msra.mxu0 0.0
        %9461 = vmatprep.subr.mxu0 0.0
        %9462 = vmatpush2.msra.mxu0 0.0
        %9463 = vmatprep.subr.mxu0 0.0
        %9464 = vmatpush2.msra.mxu0 0.0
        %9465 = vmatprep.subr.mxu0 0.0
        %9466 = vmatpush2.msra.mxu0 0.0
        %9467 = vmatprep.subr.mxu0 0.0
        %9468 = vmatpush2.msra.mxu0 0.0
        %9469 = vmatprep.subr.mxu0 0.0
        %9470 = vmatpush2.msra.mxu0 0.0
        %9471 = vmatprep.subr.mxu0 0.0
        %9472 = vmatpush2.msra.mxu0 0.0
        %9473 = vmatprep.subr.mxu0 0.0
        %9474 = vmatpush2.msra.mxu0 0.0
        %9475 = vmatprep.subr.mxu0 0.0
        %9476 = vmatpush2.msra.mxu0 0.0
        %9477 = vmatprep.subr.mxu0 0.0
        %9478 = vmatpush2.msra.mxu0 0.0
        %9479 = vmatprep.subr.mxu0 0.0
        %9480 = vmatpush2.msra.mxu0 0.0
        %9481 = vmatprep.subr.mxu0 0.0
        %9482 = vmatpush2.msra.mxu0 0.0
        %9483 = vmatprep.subr.mxu0 0.0
        %9484 = vmatpush2.msra.mxu0 0.0
        %9485 = vmatprep.mubr.f32.mxu0 0.0
        %9486 = vmatmul.mubr.f32.gmra.mxu0 %v9420
        %v9487 = vpop.f32.mrf.mxu0
        %v9488 = vadd.f32 0.0, %v9487
        %v9489 = vpop.f32.mrf.mxu0
        %9490 = vdwg.mxu0
        %v9491 = vadd.f32 %v9419, %v9488
        %v9492 = vsel %vm8843, %v9491, 0.0
        %v9493 = vrot.slane %v9492, 4
        %v9494 = vadd.f32 %v9492, %v9493
        %v9495 = vrot.slane %v9494, 2
        %v9496 = vadd.f32 %v9494, %v9495
        %v9497 = vrot.slane %v9496, 1
        %v9498 = vadd.f32 %v9496, %v9497
        %v9499 = vadd.f32 %v8851, %v9498
        %v9500 = vmul.f32 %v9499, 0.25
        %v9501 = vld [vmem:[%s8] sm:$0x1]
        %v9502 = vadd.f32 %v9500, %v9501
        %9503 = vst [vmem:[%s324] sm:$0x1] %v9502
        %s9504 = sand.u32 %s225, 1
        %s9505 = scalar_lea.sflag [#allocation6], %s9504
        %s9506 = sand.u32 %s225, 1
        %s9507 = scalar_lea.vmem [#allocation5], %s9506
        // Predicated region
        $region57: #{forward.1} parent=55 // pred_check
          %p9508 = pneg %p235
        $region58: #{forward.1} parent=55 // pred_check_branch
          %9510 = sbr.rel (%p9508) target = $region60
        $region59: #{forward.1} parent=55 // pred_region
          %s9512 = ssub.s32 16, 16
          %9513 = vsyncadd %s9505, %s9512
          %s9514 = smul.addr %s23, 16
          %s9515 = scalar_lea.hbm %s9, %s9514
          %s9517 = sshll.u32 %s9507, 4
          %s9518 = int_to_ptr.vmem [resolvable:$true] %s9517
          %9520 = dma.vmem_to_hbm [thread:$0]  %s9518, 16, %s9515, %s9505
        $region60: #{forward.1} parent=55 // pred_fallthru
          _
      $region56: #{forward.1} parent=5 // pred_fallthru
        _
      %p9521 = scmp.le.s32.totalorder 2, %s18
      // Predicated region
      $region61: #{forward.1} parent=5 // pred_check
        %p9522 = pneg %p9521
      $region62: #{forward.1} parent=5 // pred_check_branch
        %9524 = sbr.rel (%p9522) target = $region64
      $region63: #{forward.1} parent=5 // pred_region
        %s9525 = ssub.s32 %s18, 2
        // Predicated region
        $region65: #{forward.1} parent=63 // pred_check
          %p9526 = pneg %p241
        $region66: #{forward.1} parent=63 // pred_check_branch
          %9528 = sbr.rel (%p9526) target = $region68
        $region67: #{forward.1} parent=63 // pred_region
          %s9529 = sand.u32 %s226, 1
          %s9530 = scalar_lea.sflag [#allocation6], %s9529
          %s9531 = sand.u32 %s226, 1
          %s9532 = scalar_lea.vmem [#allocation5], %s9531
          %9533 = dma.done %s9530, 16
        $region68: #{forward.1} parent=63 // pred_fallthru
          _
      $region64: #{forward.1} parent=5 // pred_fallthru
        _
    $region6: #{forward.1} parent=1 // loop_footer
      %s22 = sadd.s32 1, %s18
    $region7: #{forward.1} parent=1 // loop_footer_branch
      %17 = sbr.rel target = $region3
    $region8: #{forward.1} parent=1 // loop_exit
      _
    %9534 = vsyncpa [#allocation6], 1
    %s9535 = scalar_lea.sflag [#allocation6], 1
    %9536 = vsyncpa %s9535, 1

</llo_original>
